<compile_context>
chip_gen: v7x
topology: tpu7x:2x2x1
jax: 0.10.0
libtpu: 0.0.40
codegen_flags: <defaults>
</compile_context>

<pallas_src>
import functools
import math

import numpy as np

import jax
import jax.numpy as jnp
from jax import lax
from jax.experimental import pallas as pl
from jax.experimental.pallas import tpu as pltpu

LN_EPS = 1e-5                       # torch.nn.LayerNorm default
INV_SQRT2 = 0.7071067811865476


# ----------------------------------------------------------------------------------
# Generation-aware VMEM budgeting
# ----------------------------------------------------------------------------------
@functools.lru_cache(maxsize=None)
def _vmem_capacity_bytes():
    try:
        return int(getattr(pltpu.get_tpu_info(), "vmem_capacity_bytes", 64 * 1024 * 1024))
    except Exception:                                # pragma: no cover - conservative fallback
        return 64 * 1024 * 1024


@functools.lru_cache(maxsize=None)
def _budgets():
    """(scoped vmem_limit_bytes, per-grid-step block working-set budget)."""
    cap = _vmem_capacity_bytes()
    if cap >= 96 * 1024 * 1024:                      # v5e / v6e: 128 MiB physical VMEM
        return 80 * 1024 * 1024, 20 * 1024 * 1024
    return 40 * 1024 * 1024, 10 * 1024 * 1024        # v7x: 64 MiB per TensorCore


def _divisors(n):
    ds = set()
    d = 1
    while d * d <= n:
        if n % d == 0:
            ds.add(d)
            ds.add(n // d)
        d += 1
    return sorted(ds)


def pick_bn(n, seq, per_row_bytes, fixed_bytes=0):
    """Pick a token-block size bn (divisor of n).

    per_row_bytes / fixed_bytes already include the 2x double-buffering of every
    BlockSpec'd tensor. Keeps >=2 grid steps when possible (DMA pipelining + v7x
    megacore) and prefers bn*seq aligned to the MXU row granule."""
    _, block_budget = _budgets()
    avail = max(block_budget - fixed_bytes, per_row_bytes)
    limit = max(1, avail // max(per_row_bytes, 1))
    if n > 1:
        limit = min(limit, n // 2)                   # at least 2 grid steps
    cands = [d for d in _divisors(n) if d <= limit]
    if not cands:
        return 1
    best = max(cands)
    for granule in (256, 128):                       # MXU row granule (v6e/v7x, then v5e)
        aligned = [d for d in cands if (d * seq) % granule == 0]
        if aligned and 2 * max(aligned) >= best:
            return max(aligned)
    return best


# ----------------------------------------------------------------------------------
# Pallas kernels
# ----------------------------------------------------------------------------------
def _layernorm2d(v, g, b):
    mu = jnp.mean(v, axis=-1, keepdims=True)
    var = jnp.mean((v - mu) ** 2, axis=-1, keepdims=True)
    return (v - mu) * lax.rsqrt(var + LN_EPS) * g + b


def attn_block_kernel(x_ref, g1_ref, b1_ref, wqkv_ref, bqkv_ref, wo_ref, bo_ref,
                      g2_ref, b2_ref, xnew_ref, cur_ref, *, num_heads, c_pad):
    """Fused: cur = LN1(x); y = MHA(cur); x_new = x + y; cur_out = LN2(x_new) (bf16)."""
    x = x_ref[...]                                   # (bn, S, C) f32
    bn, S, C = x.shape
    hd = C // num_heads
    scale = 1.0 / math.sqrt(hd)

    x2d = x.reshape(bn * S, C)                       # leading-dim merge only (no relayout)
    cur2d = _layernorm2d(x2d, g1_ref[...], b1_ref[...])

    # Fused QKV projection: one MXU push, bf16 operands, f32 accumulation.
    # Q/K/V columns each start on a 128-lane boundary (c_pad), so the splits below
    # are whole-lane-group views rather than masked lane extracts.
    qkv = jnp.dot(cur2d.astype(jnp.bfloat16), wqkv_ref[...],
                  preferred_element_type=jnp.float32) + bqkv_ref[...]

    out2d = None
    for h in range(num_heads):                       # static, small head loop
        lo, hi = h * hd, (h + 1) * hd
        q_h = (qkv[:, lo:hi] * scale).reshape(bn, S, hd).astype(jnp.bfloat16)
        k_h = qkv[:, c_pad + lo:c_pad + hi].reshape(bn, S, hd).astype(jnp.bfloat16)
        v_h = qkv[:, 2 * c_pad + lo:2 * c_pad + hi].reshape(bn, S, hd).astype(jnp.bfloat16)

        s = jnp.einsum('bqd,bkd->bqk', q_h, k_h, preferred_element_type=jnp.float32)
        s = s - jnp.max(s, axis=-1, keepdims=True)
        p = jnp.exp(s)
        p = p * pl.reciprocal(jnp.sum(p, axis=-1, keepdims=True), approx=True)
        ctx = jnp.einsum('bqk,bkd->bqd', p.astype(jnp.bfloat16), v_h,
                         preferred_element_type=jnp.float32)

        # Row-split output projection: no lane-axis concat of the head contexts.
        contrib = jnp.dot(ctx.reshape(bn * S, hd).astype(jnp.bfloat16),
                          wo_ref[lo:hi, :], preferred_element_type=jnp.float32)
        out2d = contrib if out2d is None else out2d + contrib
    out2d = out2d + bo_ref[...]

    xnew2d = x2d + out2d                                              # residual (f32)
    xnew_ref[...] = xnew2d.reshape(bn, S, C)
    cur_ref[...] = _layernorm2d(xnew2d, g2_ref[...], b2_ref[...]
                                ).reshape(bn, S, C).astype(jnp.bfloat16)


def mlp_block_kernel(cur_ref, upa_ref, upb_ref, xres_ref,
                     w1a_ref, w1b_ref, w1c_ref, b1_ref, w2_ref, b2_ref, out_ref):
    """Fused: out = x_res + fc2(gelu(fc1(cat(cur, up_a, up_b)))) with fc1 row-split,
    so the 3x-wide cat tensor never exists in HBM or VMEM. cur/up_a/up_b are bf16."""
    bn, S, _ = xres_ref.shape
    a = cur_ref[...].reshape(bn * S, -1)             # bf16 straight off HBM
    b = upa_ref[...].reshape(bn * S, -1)
    c = upb_ref[...].reshape(bn * S, -1)
    h = (jnp.dot(a, w1a_ref[...], preferred_element_type=jnp.float32)
         + jnp.dot(b, w1b_ref[...], preferred_element_type=jnp.float32)
         + jnp.dot(c, w1c_ref[...], preferred_element_type=jnp.float32)
         + b1_ref[...])
    h = 0.5 * h * (1.0 + lax.erf(h * INV_SQRT2))     # exact (erf) GELU, torch default, f32
    o = jnp.dot(h.astype(jnp.bfloat16), w2_ref[...],
                preferred_element_type=jnp.float32) + b2_ref[...]
    out_ref[...] = xres_ref[...] + o.reshape(bn, S, -1)


# ----------------------------------------------------------------------------------
# pallas_call wrappers
# ----------------------------------------------------------------------------------
def _param_bytes(params):
    return sum(int(np.prod(w.shape)) * w.dtype.itemsize for w in params)


def run_attn(x, p, num_heads):
    N, S, C = x.shape
    c_pad = p['wqkv'].shape[1] // 3
    vmem_limit, _ = _budgets()

    params = [p['g1'], p['b1'], p['wqkv'], p['bqkv'], p['wo'], p['bo'], p['g2'], p['b2']]
    fixed = 2 * _param_bytes(params)                      # weights are double-buffered too
    per_row = (2 * (S * C * 4 + S * C * 4 + S * C * 2)    # x in / xnew out (f32) / cur out (bf16), x2 bufs
               + 4 * S * C * 4                            # x2d, cur2d, out2d, xnew2d (f32)
               + S * 3 * c_pad * (4 + 2)                  # padded qkv f32 + bf16 head slices
               + num_heads * S * S * 8                    # per-head scores + probs (f32)
               + S * C * 4)                               # ctx (f32)
    bn = pick_bn(N, S, per_row, fixed)

    tok_spec = pl.BlockSpec((bn, S, C), lambda i: (i, 0, 0))
    w_specs = [pl.BlockSpec(w.shape, lambda i: (0, 0)) for w in params]
    kernel = functools.partial(attn_block_kernel, num_heads=num_heads, c_pad=c_pad)
    out_shape = (jax.ShapeDtypeStruct((N, S, C), jnp.float32),    # x + attn (residual path)
                 jax.ShapeDtypeStruct((N, S, C), jnp.bfloat16))   # LN2 output (feeds MLP + interp)
    return pl.pallas_call(
        kernel,
        out_shape=out_shape,
        grid=(N // bn,),
        in_specs=[tok_spec] + w_specs,
        out_specs=(tok_spec, tok_spec),
        compiler_params=pltpu.CompilerParams(
            dimension_semantics=("parallel",),            # independent token blocks: both TCs on v7x
            vmem_limit_bytes=vmem_limit),
    )(x, *params)


def run_mlp(cur, upa, upb, xres, p):
    N, S, Ca = cur.shape
    Cb, Cc = upa.shape[-1], upb.shape[-1]
    Cout = xres.shape[-1]
    M = p['w1'].shape[-1]
    vmem_limit, _ = _budgets()

    # row-split fc1 matching the concat order (cur, up_a, up_b)
    w1a = p['w1'][:Ca]
    w1b = p['w1'][Ca:Ca + Cb]
    w1c = p['w1'][Ca + Cb:]
    params = [w1a, w1b, w1c, p['b1'], p['w2'], p['b2']]
    fixed = 2 * _param_bytes(params)

    per_row = (2 * (S * (Ca + Cb + Cc) * 2 + 2 * S * Cout * 4)  # bf16 ins + f32 xres/out, x2 bufs
               + S * (Ca + Cb + Cc) * 2                         # in-kernel 2-D views (bf16)
               + S * M * (4 + 2)                                # h (f32) + h (bf16)
               + 2 * S * Cout * 4)                              # o + residual sum (f32)
    bn = pick_bn(N, S, per_row, fixed)

    def tok_spec(c):
        return pl.BlockSpec((bn, S, c), lambda i: (i, 0, 0))

    w_specs = [pl.BlockSpec(w.shape, lambda i: (0, 0)) for w in params]
    return pl.pallas_call(
        mlp_block_kernel,
        out_shape=jax.ShapeDtypeStruct((N, S, Cout), jnp.float32),
        grid=(N // bn,),
        in_specs=[tok_spec(Ca), tok_spec(Cb), tok_spec(Cc), tok_spec(Cout)] + w_specs,
        out_specs=tok_spec(Cout),
        compiler_params=pltpu.CompilerParams(
            dimension_semantics=("parallel",),
            vmem_limit_bytes=vmem_limit),
    )(cur, upa, upb, xres, *params)


# ----------------------------------------------------------------------------------
# Plain-JAX glue: trilinear interpolation matching torch F.interpolate(align_corners=False)
# via static per-axis interpolation matrices (MXU matmuls, no dynamic gathers), plus the
# module's (quirky) reshape plumbing around it.
# TODO(synk): the cross-scale resample stays in plain JAX/XLA; folding it into the MLP
#             kernel as extra row-split operands is left as a follow-up.
# ----------------------------------------------------------------------------------
def _interp_matrix(in_len, out_len):
    """(out_len, in_len) linear interpolation matrix, torch align_corners=False."""
    if in_len == out_len:
        return None
    scale = in_len / out_len
    o = np.arange(out_len, dtype=np.float64)
    src = np.maximum((o + 0.5) * scale - 0.5, 0.0)
    i0 = np.minimum(np.floor(src).astype(np.int64), in_len - 1)
    i1 = np.minimum(i0 + 1, in_len - 1)
    w1 = src - i0
    w0 = 1.0 - w1
    m = np.zeros((out_len, in_len), dtype=np.float32)
    np.add.at(m, (np.arange(out_len), i0), w0)
    np.add.at(m, (np.arange(out_len), i1), w1)
    return jnp.asarray(m)


def trilinear_resize(x, size):                    # x: (B, C, S, H, W) f32
    ms = _interp_matrix(x.shape[2], size[0])
    mh = _interp_matrix(x.shape[3], size[1])
    mw = _interp_matrix(x.shape[4], size[2])
    if ms is not None:
        x = jnp.einsum('os,bcshw->bcohw', ms, x)
    if mh is not None:
        x = jnp.einsum('ph,bcshw->bcspw', mh, x)
    if mw is not None:
        x = jnp.einsum('qw,bcshw->bcshq', mw, x)
    return x


def interpolate_like_torch(x, scale_size, input_size):
    # exactly mirrors ParallelBlock_CAT.interpolate (including its reshapes)
    N, _, C = x.shape
    S, H, W = input_size
    t = jnp.swapaxes(x, 1, 2).astype(jnp.float32) # (N, C, S)
    t = t.reshape(-1, C, S, H, W)                 # (B, C, S, H, W)
    t = trilinear_resize(t, scale_size)           # (B, C, S', H', W')
    out = t.reshape(-1, C, scale_size[0])         # (B*H'*W', C, S')
    return jnp.swapaxes(out, 1, 2).astype(jnp.bfloat16)   # (B*H'*W', S', C), bf16 for the MLP


def to_tokens(x):                                 # 'b c s h w -> (b h w) s c'
    B, C, S, H, W = x.shape
    return jnp.transpose(x, (0, 3, 4, 2, 1)).reshape(B * H * W, S, C)


def from_tokens(x, B, H, W):                      # '(b p1 p2) s c -> b c s p1 p2'
    N, S, C = x.shape
    return jnp.transpose(x.reshape(B, H, W, S, C), (0, 4, 3, 1, 2))


# ----------------------------------------------------------------------------------
# Parameters & forward
# ----------------------------------------------------------------------------------
def init_params(key, dims, mlp_ratios):
    C2, C3, C4 = dims[1], dims[2], dims[3]
    Dcat = C2 + C3 + C4
    keys = iter(jax.random.split(key, 64))

    def lin(k, din, dout, scale=0.05):
        k1, k2 = jax.random.split(k)
        w = (jax.random.normal(k1, (din, dout), jnp.float32) * scale).astype(jnp.bfloat16)
        b = jax.random.normal(k2, (1, dout), jnp.float32) * scale
        return w, b

    params = {}
    for lvl, C, ratio in ((2, C2, mlp_ratios[1]), (3, C3, mlp_ratios[2]),
                          (4, C4, mlp_ratios[3])):
        c_pad = ((C + 127) // 128) * 128
        wq, bq = lin(next(keys), C, C)
        wk, bk = lin(next(keys), C, C)
        wv, bv = lin(next(keys), C, C)
        # fused QKV weight with Q/K/V each zero-padded to a 128-lane boundary
        wqkv = jnp.zeros((C, 3 * c_pad), jnp.bfloat16)
        wqkv = wqkv.at[:, 0:C].set(wq)
        wqkv = wqkv.at[:, c_pad:c_pad + C].set(wk)
        wqkv = wqkv.at[:, 2 * c_pad:2 * c_pad + C].set(wv)
        bqkv = jnp.zeros((1, 3 * c_pad), jnp.float32)
        bqkv = bqkv.at[:, 0:C].set(bq)
        bqkv = bqkv.at[:, c_pad:c_pad + C].set(bk)
        bqkv = bqkv.at[:, 2 * c_pad:2 * c_pad + C].set(bv)
        wo, bo = lin(next(keys), C, C)
        M = int(C * ratio)
        w1, b1 = lin(next(keys), Dcat, M)
        w2, b2 = lin(next(keys), M, C)
        params[lvl] = dict(
            attn=dict(g1=jnp.ones((1, C), jnp.float32), b1=jnp.zeros((1, C), jnp.float32),
                      wqkv=wqkv, bqkv=bqkv, wo=wo, bo=bo,
                      g2=jnp.ones((1, C), jnp.float32), b2=jnp.zeros((1, C), jnp.float32)),
            mlp=dict(w1=w1, b1=b1, w2=w2, b2=b2))
    return params


def parallel_block_cat_forward(x1, x2, x3, x4, params, num_heads):
    _, _, S2, H2, W2 = x2.shape
    _, _, S3, H3, W3 = x3.shape
    _, _, S4, H4, W4 = x4.shape
    B = x2.shape[0]

    t2, t3, t4 = to_tokens(x2), to_tokens(x3), to_tokens(x4)

    # attention branch (LN1 + MHA + residual, then LN2) — inside Pallas
    x2n, cur2 = run_attn(t2, params[2]['attn'], num_heads)
    x3n, cur3 = run_attn(t3, params[3]['attn'], num_heads)
    x4n, cur4 = run_attn(t4, params[4]['attn'], num_heads)

    # cross-scale trilinear resampling (static interpolation-matrix matmuls, bf16 out)
    up3_2 = interpolate_like_torch(cur3, (S2, H2, W2), (S3, H3, W3))
    up4_3 = interpolate_like_torch(cur4, (S3, H3, W3), (S4, H4, W4))
    up4_2 = interpolate_like_torch(cur4, (S2, H2, W2), (S4, H4, W4))
    dn2_3 = interpolate_like_torch(cur2, (S3, H3, W3), (S2, H2, W2))
    dn3_4 = interpolate_like_torch(cur3, (S4, H4, W4), (S3, H3, W3))
    dn2_4 = interpolate_like_torch(cur2, (S4, H4, W4), (S2, H2, W2))

    # concat-MLP branch + residual — concat fused into the Pallas MLP kernel (split fc1)
    x2n = run_mlp(cur2, up3_2, up4_2, x2n, params[2]['mlp'])
    x3n = run_mlp(cur3, up4_3, dn2_3, x3n, params[3]['mlp'])
    x4n = run_mlp(cur4, dn3_4, dn2_4, x4n, params[4]['mlp'])

    return (x1,
            from_tokens(x2n, B, H2, W2),
            from_tokens(x3n, B, H3, W3),
            from_tokens(x4n, B, H4, W4))


# ----------------------------------------------------------------------------------
if __name__ == "__main__":
    dims = [8, 16, 32, 64]
    num_heads = 2
    mlp_ratios = [1, 2, 2, 2]

    key = jax.random.PRNGKey(0)
    k1, k2, k3, k4, kp = jax.random.split(key, 5)
    # NCSHW (PyTorch layout): x1 is passed through untouched.
    x1 = jax.random.normal(k1, (1, dims[0], 8, 4, 4), jnp.float32)
    x2 = jax.random.normal(k2, (1, dims[1], 8, 4, 4), jnp.float32)
    x3 = jax.random.normal(k3, (1, dims[2], 4, 2, 2), jnp.float32)
    x4 = jax.random.normal(k4, (1, dims[3], 2, 2, 2), jnp.float32)

    params = init_params(kp, dims, mlp_ratios)

    fwd = jax.jit(functools.partial(parallel_block_cat_forward, num_heads=num_heads))
    outs = jax.block_until_ready(fwd(x1, x2, x3, x4, params))

    assert outs[0].shape == x1.shape
    assert outs[1].shape == x2.shape
    assert outs[2].shape == x3.shape
    assert outs[3].shape == x4.shape
    assert all(bool(jnp.all(jnp.isfinite(o))) for o in outs)
    print("KERNEL_OK")
</pallas_src>

<mosaic_0001>
module attributes {stable_mosaic.version = 11 : i64} {
  func.func @attn_block_kernel(%arg0: i32, %arg1: memref<2x2x64xf32, #tpu.memory_space<vmem>>, %arg2: memref<1x64xf32, #tpu.memory_space<vmem>>, %arg3: memref<1x64xf32, #tpu.memory_space<vmem>>, %arg4: memref<64x384xbf16, #tpu.memory_space<vmem>>, %arg5: memref<1x384xf32, #tpu.memory_space<vmem>>, %arg6: memref<64x64xbf16, #tpu.memory_space<vmem>>, %arg7: memref<1x64xf32, #tpu.memory_space<vmem>>, %arg8: memref<1x64xf32, #tpu.memory_space<vmem>>, %arg9: memref<1x64xf32, #tpu.memory_space<vmem>>, %arg10: memref<2x2x64xf32, #tpu.memory_space<vmem>>, %arg11: memref<2x2x64xbf16, #tpu.memory_space<vmem>>) attributes {dimension_semantics = [#tpu.dimension_semantics<parallel>], iteration_bounds = array<i64: 2>, scalar_prefetch = 0 : i64, scratch_operands = 0 : i64, tpu.core_type = #tpu.core_type<tc>, window_params = [{transform_indices = @transform_0, window_bounds = array<i64: 2, 2, 64>}, {pipeline_mode = #tpu.pipeline_mode<synchronous>, transform_indices = @transform_1, window_bounds = array<i64: 1, 64>}, {pipeline_mode = #tpu.pipeline_mode<synchronous>, transform_indices = @transform_2, window_bounds = array<i64: 1, 64>}, {pipeline_mode = #tpu.pipeline_mode<synchronous>, transform_indices = @transform_3, window_bounds = array<i64: 64, 384>}, {pipeline_mode = #tpu.pipeline_mode<synchronous>, transform_indices = @transform_4, window_bounds = array<i64: 1, 384>}, {pipeline_mode = #tpu.pipeline_mode<synchronous>, transform_indices = @transform_5, window_bounds = array<i64: 64, 64>}, {pipeline_mode = #tpu.pipeline_mode<synchronous>, transform_indices = @transform_6, window_bounds = array<i64: 1, 64>}, {pipeline_mode = #tpu.pipeline_mode<synchronous>, transform_indices = @transform_7, window_bounds = array<i64: 1, 64>}, {pipeline_mode = #tpu.pipeline_mode<synchronous>, transform_indices = @transform_8, window_bounds = array<i64: 1, 64>}, {transform_indices = @transform_9, window_bounds = array<i64: 2, 2, 64>}, {transform_indices = @transform_10, window_bounds = array<i64: 2, 2, 64>}]} {
    %c0 = arith.constant 0 : index
    %c0_0 = arith.constant 0 : index
    %c0_1 = arith.constant 0 : index
    %0 = vector.load %arg1[%c0, %c0_0, %c0_1] : memref<2x2x64xf32, #tpu.memory_space<vmem>>, vector<2x2x64xf32>
    %1 = vector.shape_cast %0 : vector<2x2x64xf32> to vector<4x64xf32>
    %c0_2 = arith.constant 0 : index
    %c0_3 = arith.constant 0 : index
    %2 = vector.load %arg2[%c0_2, %c0_3] : memref<1x64xf32, #tpu.memory_space<vmem>>, vector<1x64xf32>
    %c0_4 = arith.constant 0 : index
    %c0_5 = arith.constant 0 : index
    %3 = vector.load %arg3[%c0_4, %c0_5] : memref<1x64xf32, #tpu.memory_space<vmem>>, vector<1x64xf32>
    %cst = arith.constant dense<0.000000e+00> : vector<4xf32>
    %4 = vector.multi_reduction <add>, %1, %cst [1] : vector<4x64xf32> to vector<4xf32>
    %5 = vector.shape_cast %4 : vector<4xf32> to vector<4x1xf32>
    %cst_6 = arith.constant 6.400000e+01 : f32
    %6 = vector.broadcast %cst_6 : f32 to vector<4x1xf32>
    %7 = arith.divf %5, %6 : vector<4x1xf32>
    %8 = vector.broadcast %7 : vector<4x1xf32> to vector<4x64xf32>
    %9 = arith.subf %1, %8 : vector<4x64xf32>
    %10 = arith.mulf %9, %9 : vector<4x64xf32>
    %cst_7 = arith.constant dense<0.000000e+00> : vector<4xf32>
    %11 = vector.multi_reduction <add>, %10, %cst_7 [1] : vector<4x64xf32> to vector<4xf32>
    %12 = vector.shape_cast %11 : vector<4xf32> to vector<4x1xf32>
    %cst_8 = arith.constant 6.400000e+01 : f32
    %13 = vector.broadcast %cst_8 : f32 to vector<4x1xf32>
    %14 = arith.divf %12, %13 : vector<4x1xf32>
    %15 = vector.broadcast %7 : vector<4x1xf32> to vector<4x64xf32>
    %16 = arith.subf %1, %15 : vector<4x64xf32>
    %cst_9 = arith.constant 9.99999974E-6 : f32
    %17 = vector.broadcast %cst_9 : f32 to vector<4x1xf32>
    %18 = arith.addf %14, %17 : vector<4x1xf32>
    %19 = math.rsqrt %18 : vector<4x1xf32>
    %20 = vector.broadcast %19 : vector<4x1xf32> to vector<4x64xf32>
    %21 = arith.mulf %16, %20 : vector<4x64xf32>
    %22 = vector.broadcast %2 : vector<1x64xf32> to vector<4x64xf32>
    %23 = arith.mulf %21, %22 : vector<4x64xf32>
    %24 = vector.broadcast %3 : vector<1x64xf32> to vector<4x64xf32>
    %25 = arith.addf %23, %24 : vector<4x64xf32>
    %26 = arith.truncf %25 : vector<4x64xf32> to vector<4x64xbf16>
    %c0_10 = arith.constant 0 : index
    %c0_11 = arith.constant 0 : index
    %27 = vector.load %arg4[%c0_10, %c0_11] : memref<64x384xbf16, #tpu.memory_space<vmem>>, vector<64x384xbf16>
    %cst_12 = arith.constant dense<0.000000e+00> : vector<4x384xf32>
    %28 = tpu.matmul %26, %27, %cst_12 {dimension_numbers = #tpu.dot_dimension_numbers<[1], [0], [0], [1], [0, 0, 1, 1], [], []>} : vector<4x64xbf16>, vector<64x384xbf16>, vector<4x384xf32> -> vector<4x384xf32>
    %c0_13 = arith.constant 0 : index
    %c0_14 = arith.constant 0 : index
    %29 = vector.load %arg5[%c0_13, %c0_14] : memref<1x384xf32, #tpu.memory_space<vmem>>, vector<1x384xf32>
    %30 = vector.broadcast %29 : vector<1x384xf32> to vector<4x384xf32>
    %31 = arith.addf %28, %30 : vector<4x384xf32>
    %32 = vector.extract_strided_slice %31 {offsets = [0, 0], sizes = [4, 32], strides = [1, 1]} : vector<4x384xf32> to vector<4x32xf32>
    %cst_15 = arith.constant 0.176776692 : f32
    %33 = vector.broadcast %cst_15 : f32 to vector<4x32xf32>
    %34 = arith.mulf %32, %33 : vector<4x32xf32>
    %35 = vector.shape_cast %34 : vector<4x32xf32> to vector<2x2x32xf32>
    %36 = arith.truncf %35 : vector<2x2x32xf32> to vector<2x2x32xbf16>
    %37 = vector.extract_strided_slice %31 {offsets = [0, 128], sizes = [4, 32], strides = [1, 1]} : vector<4x384xf32> to vector<4x32xf32>
    %38 = vector.shape_cast %37 : vector<4x32xf32> to vector<2x2x32xf32>
    %39 = arith.truncf %38 : vector<2x2x32xf32> to vector<2x2x32xbf16>
    %40 = vector.extract_strided_slice %31 {offsets = [0, 256], sizes = [4, 32], strides = [1, 1]} : vector<4x384xf32> to vector<4x32xf32>
    %41 = vector.shape_cast %40 : vector<4x32xf32> to vector<2x2x32xf32>
    %42 = arith.truncf %41 : vector<2x2x32xf32> to vector<2x2x32xbf16>
    "tpu.trace_start"() <{level = 10 : i32, message = "bqd,bkd->bqk"}> : () -> ()
    %cst_16 = arith.constant dense<0.000000e+00> : vector<2x2x2xf32>
    %43 = tpu.matmul %36, %39, %cst_16 {dimension_numbers = #tpu.dot_dimension_numbers<[2], [2], [1], [1], [0, 0, 0, 1, 1, 1], [0], [0]>} : vector<2x2x32xbf16>, vector<2x2x32xbf16>, vector<2x2x2xf32> -> vector<2x2x2xf32>
    "tpu.trace_stop"() : () -> ()
    %cst_17 = arith.constant dense<0xFF800000> : vector<2x2xf32>
    %44 = vector.multi_reduction <maximumf>, %43, %cst_17 [2] : vector<2x2x2xf32> to vector<2x2xf32>
    %45 = vector.shape_cast %44 : vector<2x2xf32> to vector<2x2x1xf32>
    %46 = vector.broadcast %45 : vector<2x2x1xf32> to vector<2x2x2xf32>
    %47 = arith.subf %43, %46 : vector<2x2x2xf32>
    %48 = math.exp %47 : vector<2x2x2xf32>
    %cst_18 = arith.constant dense<0.000000e+00> : vector<2x2xf32>
    %49 = vector.multi_reduction <add>, %48, %cst_18 [2] : vector<2x2x2xf32> to vector<2x2xf32>
    %50 = vector.shape_cast %49 : vector<2x2xf32> to vector<2x2x1xf32>
    %51 = tpu.reciprocal %50 {approx = true} : vector<2x2x1xf32> -> vector<2x2x1xf32>
    %52 = vector.broadcast %51 : vector<2x2x1xf32> to vector<2x2x2xf32>
    %53 = arith.mulf %48, %52 : vector<2x2x2xf32>
    %54 = arith.truncf %53 : vector<2x2x2xf32> to vector<2x2x2xbf16>
    "tpu.trace_start"() <{level = 10 : i32, message = "bqk,bkd->bqd"}> : () -> ()
    %cst_19 = arith.constant dense<0.000000e+00> : vector<2x2x32xf32>
    %55 = tpu.matmul %54, %42, %cst_19 {dimension_numbers = #tpu.dot_dimension_numbers<[2], [1], [1], [2], [0, 0, 0, 1, 1, 2], [0], [0]>} : vector<2x2x2xbf16>, vector<2x2x32xbf16>, vector<2x2x32xf32> -> vector<2x2x32xf32>
    "tpu.trace_stop"() : () -> ()
    %56 = vector.shape_cast %55 : vector<2x2x32xf32> to vector<4x32xf32>
    %57 = arith.truncf %56 : vector<4x32xf32> to vector<4x32xbf16>
    %c0_20 = arith.constant 0 : index
    %c0_21 = arith.constant 0 : index
    %58 = vector.load %arg6[%c0_20, %c0_21] : memref<64x64xbf16, #tpu.memory_space<vmem>>, vector<32x64xbf16>
    %cst_22 = arith.constant dense<0.000000e+00> : vector<4x64xf32>
    %59 = tpu.matmul %57, %58, %cst_22 {dimension_numbers = #tpu.dot_dimension_numbers<[1], [0], [0], [1], [0, 0, 1, 1], [], []>} : vector<4x32xbf16>, vector<32x64xbf16>, vector<4x64xf32> -> vector<4x64xf32>
    %60 = vector.extract_strided_slice %31 {offsets = [0, 32], sizes = [4, 32], strides = [1, 1]} : vector<4x384xf32> to vector<4x32xf32>
    %cst_23 = arith.constant 0.176776692 : f32
    %61 = vector.broadcast %cst_23 : f32 to vector<4x32xf32>
    %62 = arith.mulf %60, %61 : vector<4x32xf32>
    %63 = vector.shape_cast %62 : vector<4x32xf32> to vector<2x2x32xf32>
    %64 = arith.truncf %63 : vector<2x2x32xf32> to vector<2x2x32xbf16>
    %65 = vector.extract_strided_slice %31 {offsets = [0, 160], sizes = [4, 32], strides = [1, 1]} : vector<4x384xf32> to vector<4x32xf32>
    %66 = vector.shape_cast %65 : vector<4x32xf32> to vector<2x2x32xf32>
    %67 = arith.truncf %66 : vector<2x2x32xf32> to vector<2x2x32xbf16>
    %68 = vector.extract_strided_slice %31 {offsets = [0, 288], sizes = [4, 32], strides = [1, 1]} : vector<4x384xf32> to vector<4x32xf32>
    %69 = vector.shape_cast %68 : vector<4x32xf32> to vector<2x2x32xf32>
    %70 = arith.truncf %69 : vector<2x2x32xf32> to vector<2x2x32xbf16>
    "tpu.trace_start"() <{level = 10 : i32, message = "bqd,bkd->bqk"}> : () -> ()
    %cst_24 = arith.constant dense<0.000000e+00> : vector<2x2x2xf32>
    %71 = tpu.matmul %64, %67, %cst_24 {dimension_numbers = #tpu.dot_dimension_numbers<[2], [2], [1], [1], [0, 0, 0, 1, 1, 1], [0], [0]>} : vector<2x2x32xbf16>, vector<2x2x32xbf16>, vector<2x2x2xf32> -> vector<2x2x2xf32>
    "tpu.trace_stop"() : () -> ()
    %cst_25 = arith.constant dense<0xFF800000> : vector<2x2xf32>
    %72 = vector.multi_reduction <maximumf>, %71, %cst_25 [2] : vector<2x2x2xf32> to vector<2x2xf32>
    %73 = vector.shape_cast %72 : vector<2x2xf32> to vector<2x2x1xf32>
    %74 = vector.broadcast %73 : vector<2x2x1xf32> to vector<2x2x2xf32>
    %75 = arith.subf %71, %74 : vector<2x2x2xf32>
    %76 = math.exp %75 : vector<2x2x2xf32>
    %cst_26 = arith.constant dense<0.000000e+00> : vector<2x2xf32>
    %77 = vector.multi_reduction <add>, %76, %cst_26 [2] : vector<2x2x2xf32> to vector<2x2xf32>
    %78 = vector.shape_cast %77 : vector<2x2xf32> to vector<2x2x1xf32>
    %79 = tpu.reciprocal %78 {approx = true} : vector<2x2x1xf32> -> vector<2x2x1xf32>
    %80 = vector.broadcast %79 : vector<2x2x1xf32> to vector<2x2x2xf32>
    %81 = arith.mulf %76, %80 : vector<2x2x2xf32>
    %82 = arith.truncf %81 : vector<2x2x2xf32> to vector<2x2x2xbf16>
    "tpu.trace_start"() <{level = 10 : i32, message = "bqk,bkd->bqd"}> : () -> ()
    %cst_27 = arith.constant dense<0.000000e+00> : vector<2x2x32xf32>
    %83 = tpu.matmul %82, %70, %cst_27 {dimension_numbers = #tpu.dot_dimension_numbers<[2], [1], [1], [2], [0, 0, 0, 1, 1, 2], [0], [0]>} : vector<2x2x2xbf16>, vector<2x2x32xbf16>, vector<2x2x32xf32> -> vector<2x2x32xf32>
    "tpu.trace_stop"() : () -> ()
    %84 = vector.shape_cast %83 : vector<2x2x32xf32> to vector<4x32xf32>
    %85 = arith.truncf %84 : vector<4x32xf32> to vector<4x32xbf16>
    %c32 = arith.constant 32 : index
    %c0_28 = arith.constant 0 : index
    %86 = vector.load %arg6[%c32, %c0_28] : memref<64x64xbf16, #tpu.memory_space<vmem>>, vector<32x64xbf16>
    %cst_29 = arith.constant dense<0.000000e+00> : vector<4x64xf32>
    %87 = tpu.matmul %85, %86, %cst_29 {dimension_numbers = #tpu.dot_dimension_numbers<[1], [0], [0], [1], [0, 0, 1, 1], [], []>} : vector<4x32xbf16>, vector<32x64xbf16>, vector<4x64xf32> -> vector<4x64xf32>
    %88 = arith.addf %59, %87 : vector<4x64xf32>
    %c0_30 = arith.constant 0 : index
    %c0_31 = arith.constant 0 : index
    %89 = vector.load %arg7[%c0_30, %c0_31] : memref<1x64xf32, #tpu.memory_space<vmem>>, vector<1x64xf32>
    %90 = vector.broadcast %89 : vector<1x64xf32> to vector<4x64xf32>
    %91 = arith.addf %88, %90 : vector<4x64xf32>
    %92 = arith.addf %1, %91 : vector<4x64xf32>
    %93 = vector.shape_cast %92 : vector<4x64xf32> to vector<2x2x64xf32>
    %c0_32 = arith.constant 0 : index
    %c0_33 = arith.constant 0 : index
    %c0_34 = arith.constant 0 : index
    %94 = vector.load %arg10[%c0_32, %c0_33, %c0_34] : memref<2x2x64xf32, #tpu.memory_space<vmem>>, vector<2x2x64xf32>
    tpu.vector_store %arg10[%c0_32, %c0_33, %c0_34], %93 {strides = array<i32>} : memref<2x2x64xf32, #tpu.memory_space<vmem>>, vector<2x2x64xf32>,
    %c0_35 = arith.constant 0 : index
    %c0_36 = arith.constant 0 : index
    %95 = vector.load %arg8[%c0_35, %c0_36] : memref<1x64xf32, #tpu.memory_space<vmem>>, vector<1x64xf32>
    %c0_37 = arith.constant 0 : index
    %c0_38 = arith.constant 0 : index
    %96 = vector.load %arg9[%c0_37, %c0_38] : memref<1x64xf32, #tpu.memory_space<vmem>>, vector<1x64xf32>
    %cst_39 = arith.constant dense<0.000000e+00> : vector<4xf32>
    %97 = vector.multi_reduction <add>, %92, %cst_39 [1] : vector<4x64xf32> to vector<4xf32>
    %98 = vector.shape_cast %97 : vector<4xf32> to vector<4x1xf32>
    %cst_40 = arith.constant 6.400000e+01 : f32
    %99 = vector.broadcast %cst_40 : f32 to vector<4x1xf32>
    %100 = arith.divf %98, %99 : vector<4x1xf32>
    %101 = vector.broadcast %100 : vector<4x1xf32> to vector<4x64xf32>
    %102 = arith.subf %92, %101 : vector<4x64xf32>
    %103 = arith.mulf %102, %102 : vector<4x64xf32>
    %cst_41 = arith.constant dense<0.000000e+00> : vector<4xf32>
    %104 = vector.multi_reduction <add>, %103, %cst_41 [1] : vector<4x64xf32> to vector<4xf32>
    %105 = vector.shape_cast %104 : vector<4xf32> to vector<4x1xf32>
    %cst_42 = arith.constant 6.400000e+01 : f32
    %106 = vector.broadcast %cst_42 : f32 to vector<4x1xf32>
    %107 = arith.divf %105, %106 : vector<4x1xf32>
    %108 = vector.broadcast %100 : vector<4x1xf32> to vector<4x64xf32>
    %109 = arith.subf %92, %108 : vector<4x64xf32>
    %cst_43 = arith.constant 9.99999974E-6 : f32
    %110 = vector.broadcast %cst_43 : f32 to vector<4x1xf32>
    %111 = arith.addf %107, %110 : vector<4x1xf32>
    %112 = math.rsqrt %111 : vector<4x1xf32>
    %113 = vector.broadcast %112 : vector<4x1xf32> to vector<4x64xf32>
    %114 = arith.mulf %109, %113 : vector<4x64xf32>
    %115 = vector.broadcast %95 : vector<1x64xf32> to vector<4x64xf32>
    %116 = arith.mulf %114, %115 : vector<4x64xf32>
    %117 = vector.broadcast %96 : vector<1x64xf32> to vector<4x64xf32>
    %118 = arith.addf %116, %117 : vector<4x64xf32>
    %119 = vector.shape_cast %118 : vector<4x64xf32> to vector<2x2x64xf32>
    %120 = arith.truncf %119 : vector<2x2x64xf32> to vector<2x2x64xbf16>
    %c0_44 = arith.constant 0 : index
    %c0_45 = arith.constant 0 : index
    %c0_46 = arith.constant 0 : index
    %121 = vector.load %arg11[%c0_44, %c0_45, %c0_46] : memref<2x2x64xbf16, #tpu.memory_space<vmem>>, vector<2x2x64xbf16>
    tpu.vector_store %arg11[%c0_44, %c0_45, %c0_46], %120 {strides = array<i32>} : memref<2x2x64xbf16, #tpu.memory_space<vmem>>, vector<2x2x64xbf16>,
    return
  }
  func.func @transform_0(%arg0: i32) -> (i32, i32, i32) {
    %c0_i32 = arith.constant 0 : i32
    %c0_i32_0 = arith.constant 0 : i32
    %c0_i32_1 = arith.constant 0 : i32
    return %arg0, %c0_i32, %c0_i32_0 : i32, i32, i32
  }
  func.func @transform_1(%arg0: i32) -> (i32, i32) {
    %c0_i32 = arith.constant 0 : i32
    %c0_i32_0 = arith.constant 0 : i32
    %c0_i32_1 = arith.constant 0 : i32
    return %c0_i32, %c0_i32_0 : i32, i32
  }
  func.func @transform_2(%arg0: i32) -> (i32, i32) {
    %c0_i32 = arith.constant 0 : i32
    %c0_i32_0 = arith.constant 0 : i32
    %c0_i32_1 = arith.constant 0 : i32
    return %c0_i32, %c0_i32_0 : i32, i32
  }
  func.func @transform_3(%arg0: i32) -> (i32, i32) {
    %c0_i32 = arith.constant 0 : i32
    %c0_i32_0 = arith.constant 0 : i32
    %c0_i32_1 = arith.constant 0 : i32
    return %c0_i32, %c0_i32_0 : i32, i32
  }
  func.func @transform_4(%arg0: i32) -> (i32, i32) {
    %c0_i32 = arith.constant 0 : i32
    %c0_i32_0 = arith.constant 0 : i32
    %c0_i32_1 = arith.constant 0 : i32
    return %c0_i32, %c0_i32_0 : i32, i32
  }
  func.func @transform_5(%arg0: i32) -> (i32, i32) {
    %c0_i32 = arith.constant 0 : i32
    %c0_i32_0 = arith.constant 0 : i32
    %c0_i32_1 = arith.constant 0 : i32
    return %c0_i32, %c0_i32_0 : i32, i32
  }
  func.func @transform_6(%arg0: i32) -> (i32, i32) {
    %c0_i32 = arith.constant 0 : i32
    %c0_i32_0 = arith.constant 0 : i32
    %c0_i32_1 = arith.constant 0 : i32
    return %c0_i32, %c0_i32_0 : i32, i32
  }
  func.func @transform_7(%arg0: i32) -> (i32, i32) {
    %c0_i32 = arith.constant 0 : i32
    %c0_i32_0 = arith.constant 0 : i32
    %c0_i32_1 = arith.constant 0 : i32
    return %c0_i32, %c0_i32_0 : i32, i32
  }
  func.func @transform_8(%arg0: i32) -> (i32, i32) {
    %c0_i32 = arith.constant 0 : i32
    %c0_i32_0 = arith.constant 0 : i32
    %c0_i32_1 = arith.constant 0 : i32
    return %c0_i32, %c0_i32_0 : i32, i32
  }
  func.func @transform_9(%arg0: i32) -> (i32, i32, i32) {
    %c0_i32 = arith.constant 0 : i32
    %c0_i32_0 = arith.constant 0 : i32
    %c0_i32_1 = arith.constant 0 : i32
    return %arg0, %c0_i32, %c0_i32_0 : i32, i32, i32
  }
  func.func @transform_10(%arg0: i32) -> (i32, i32, i32) {
    %c0_i32 = arith.constant 0 : i32
    %c0_i32_0 = arith.constant 0 : i32
    %c0_i32_1 = arith.constant 0 : i32
    return %arg0, %c0_i32, %c0_i32_0 : i32, i32, i32
  }
}

module attributes {stable_mosaic.version = 11 : i64} {
  func.func @attn_block_kernel(%arg0: i32, %arg1: memref<2x4x32xf32, #tpu.memory_space<vmem>>, %arg2: memref<1x32xf32, #tpu.memory_space<vmem>>, %arg3: memref<1x32xf32, #tpu.memory_space<vmem>>, %arg4: memref<32x384xbf16, #tpu.memory_space<vmem>>, %arg5: memref<1x384xf32, #tpu.memory_space<vmem>>, %arg6: memref<32x32xbf16, #tpu.memory_space<vmem>>, %arg7: memref<1x32xf32, #tpu.memory_space<vmem>>, %arg8: memref<1x32xf32, #tpu.memory_space<vmem>>, %arg9: memref<1x32xf32, #tpu.memory_space<vmem>>, %arg10: memref<2x4x32xf32, #tpu.memory_space<vmem>>, %arg11: memref<2x4x32xbf16, #tpu.memory_space<vmem>>) attributes {dimension_semantics = [#tpu.dimension_semantics<parallel>], iteration_bounds = array<i64: 2>, scalar_prefetch = 0 : i64, scratch_operands = 0 : i64, tpu.core_type = #tpu.core_type<tc>, window_params = [{transform_indices = @transform_0, window_bounds = array<i64: 2, 4, 32>}, {pipeline_mode = #tpu.pipeline_mode<synchronous>, transform_indices = @transform_1, window_bounds = array<i64: 1, 32>}, {pipeline_mode = #tpu.pipeline_mode<synchronous>, transform_indices = @transform_2, window_bounds = array<i64: 1, 32>}, {pipeline_mode = #tpu.pipeline_mode<synchronous>, transform_indices = @transform_3, window_bounds = array<i64: 32, 384>}, {pipeline_mode = #tpu.pipeline_mode<synchronous>, transform_indices = @transform_4, window_bounds = array<i64: 1, 384>}, {pipeline_mode = #tpu.pipeline_mode<synchronous>, transform_indices = @transform_5, window_bounds = array<i64: 32, 32>}, {pipeline_mode = #tpu.pipeline_mode<synchronous>, transform_indices = @transform_6, window_bounds = array<i64: 1, 32>}, {pipeline_mode = #tpu.pipeline_mode<synchronous>, transform_indices = @transform_7, window_bounds = array<i64: 1, 32>}, {pipeline_mode = #tpu.pipeline_mode<synchronous>, transform_indices = @transform_8, window_bounds = array<i64: 1, 32>}, {transform_indices = @transform_9, window_bounds = array<i64: 2, 4, 32>}, {transform_indices = @transform_10, window_bounds = array<i64: 2, 4, 32>}]} {
    %c0 = arith.constant 0 : index
    %c0_0 = arith.constant 0 : index
    %c0_1 = arith.constant 0 : index
    %0 = vector.load %arg1[%c0, %c0_0, %c0_1] : memref<2x4x32xf32, #tpu.memory_space<vmem>>, vector<2x4x32xf32>
    %1 = vector.shape_cast %0 : vector<2x4x32xf32> to vector<8x32xf32>
    %c0_2 = arith.constant 0 : index
    %c0_3 = arith.constant 0 : index
    %2 = vector.load %arg2[%c0_2, %c0_3] : memref<1x32xf32, #tpu.memory_space<vmem>>, vector<1x32xf32>
    %c0_4 = arith.constant 0 : index
    %c0_5 = arith.constant 0 : index
    %3 = vector.load %arg3[%c0_4, %c0_5] : memref<1x32xf32, #tpu.memory_space<vmem>>, vector<1x32xf32>
    %cst = arith.constant dense<0.000000e+00> : vector<8xf32>
    %4 = vector.multi_reduction <add>, %1, %cst [1] : vector<8x32xf32> to vector<8xf32>
    %5 = vector.shape_cast %4 : vector<8xf32> to vector<8x1xf32>
    %cst_6 = arith.constant 3.200000e+01 : f32
    %6 = vector.broadcast %cst_6 : f32 to vector<8x1xf32>
    %7 = arith.divf %5, %6 : vector<8x1xf32>
    %8 = vector.broadcast %7 : vector<8x1xf32> to vector<8x32xf32>
    %9 = arith.subf %1, %8 : vector<8x32xf32>
    %10 = arith.mulf %9, %9 : vector<8x32xf32>
    %cst_7 = arith.constant dense<0.000000e+00> : vector<8xf32>
    %11 = vector.multi_reduction <add>, %10, %cst_7 [1] : vector<8x32xf32> to vector<8xf32>
    %12 = vector.shape_cast %11 : vector<8xf32> to vector<8x1xf32>
    %cst_8 = arith.constant 3.200000e+01 : f32
    %13 = vector.broadcast %cst_8 : f32 to vector<8x1xf32>
    %14 = arith.divf %12, %13 : vector<8x1xf32>
    %15 = vector.broadcast %7 : vector<8x1xf32> to vector<8x32xf32>
    %16 = arith.subf %1, %15 : vector<8x32xf32>
    %cst_9 = arith.constant 9.99999974E-6 : f32
    %17 = vector.broadcast %cst_9 : f32 to vector<8x1xf32>
    %18 = arith.addf %14, %17 : vector<8x1xf32>
    %19 = math.rsqrt %18 : vector<8x1xf32>
    %20 = vector.broadcast %19 : vector<8x1xf32> to vector<8x32xf32>
    %21 = arith.mulf %16, %20 : vector<8x32xf32>
    %22 = vector.broadcast %2 : vector<1x32xf32> to vector<8x32xf32>
    %23 = arith.mulf %21, %22 : vector<8x32xf32>
    %24 = vector.broadcast %3 : vector<1x32xf32> to vector<8x32xf32>
    %25 = arith.addf %23, %24 : vector<8x32xf32>
    %26 = arith.truncf %25 : vector<8x32xf32> to vector<8x32xbf16>
    %c0_10 = arith.constant 0 : index
    %c0_11 = arith.constant 0 : index
    %27 = vector.load %arg4[%c0_10, %c0_11] : memref<32x384xbf16, #tpu.memory_space<vmem>>, vector<32x384xbf16>
    %cst_12 = arith.constant dense<0.000000e+00> : vector<8x384xf32>
    %28 = tpu.matmul %26, %27, %cst_12 {dimension_numbers = #tpu.dot_dimension_numbers<[1], [0], [0], [1], [0, 0, 1, 1], [], []>} : vector<8x32xbf16>, vector<32x384xbf16>, vector<8x384xf32> -> vector<8x384xf32>
    %c0_13 = arith.constant 0 : index
    %c0_14 = arith.constant 0 : index
    %29 = vector.load %arg5[%c0_13, %c0_14] : memref<1x384xf32, #tpu.memory_space<vmem>>, vector<1x384xf32>
    %30 = vector.broadcast %29 : vector<1x384xf32> to vector<8x384xf32>
    %31 = arith.addf %28, %30 : vector<8x384xf32>
    %32 = vector.extract_strided_slice %31 {offsets = [0, 0], sizes = [8, 16], strides = [1, 1]} : vector<8x384xf32> to vector<8x16xf32>
    %cst_15 = arith.constant 2.500000e-01 : f32
    %33 = vector.broadcast %cst_15 : f32 to vector<8x16xf32>
    %34 = arith.mulf %32, %33 : vector<8x16xf32>
    %35 = vector.shape_cast %34 : vector<8x16xf32> to vector<2x4x16xf32>
    %36 = arith.truncf %35 : vector<2x4x16xf32> to vector<2x4x16xbf16>
    %37 = vector.extract_strided_slice %31 {offsets = [0, 128], sizes = [8, 16], strides = [1, 1]} : vector<8x384xf32> to vector<8x16xf32>
    %38 = vector.shape_cast %37 : vector<8x16xf32> to vector<2x4x16xf32>
    %39 = arith.truncf %38 : vector<2x4x16xf32> to vector<2x4x16xbf16>
    %40 = vector.extract_strided_slice %31 {offsets = [0, 256], sizes = [8, 16], strides = [1, 1]} : vector<8x384xf32> to vector<8x16xf32>
    %41 = vector.shape_cast %40 : vector<8x16xf32> to vector<2x4x16xf32>
    %42 = arith.truncf %41 : vector<2x4x16xf32> to vector<2x4x16xbf16>
    "tpu.trace_start"() <{level = 10 : i32, message = "bqd,bkd->bqk"}> : () -> ()
    %cst_16 = arith.constant dense<0.000000e+00> : vector<2x4x4xf32>
    %43 = tpu.matmul %36, %39, %cst_16 {dimension_numbers = #tpu.dot_dimension_numbers<[2], [2], [1], [1], [0, 0, 0, 1, 1, 1], [0], [0]>} : vector<2x4x16xbf16>, vector<2x4x16xbf16>, vector<2x4x4xf32> -> vector<2x4x4xf32>
    "tpu.trace_stop"() : () -> ()
    %cst_17 = arith.constant dense<0xFF800000> : vector<2x4xf32>
    %44 = vector.multi_reduction <maximumf>, %43, %cst_17 [2] : vector<2x4x4xf32> to vector<2x4xf32>
    %45 = vector.shape_cast %44 : vector<2x4xf32> to vector<2x4x1xf32>
    %46 = vector.broadcast %45 : vector<2x4x1xf32> to vector<2x4x4xf32>
    %47 = arith.subf %43, %46 : vector<2x4x4xf32>
    %48 = math.exp %47 : vector<2x4x4xf32>
    %cst_18 = arith.constant dense<0.000000e+00> : vector<2x4xf32>
    %49 = vector.multi_reduction <add>, %48, %cst_18 [2] : vector<2x4x4xf32> to vector<2x4xf32>
    %50 = vector.shape_cast %49 : vector<2x4xf32> to vector<2x4x1xf32>
    %51 = tpu.reciprocal %50 {approx = true} : vector<2x4x1xf32> -> vector<2x4x1xf32>
    %52 = vector.broadcast %51 : vector<2x4x1xf32> to vector<2x4x4xf32>
    %53 = arith.mulf %48, %52 : vector<2x4x4xf32>
    %54 = arith.truncf %53 : vector<2x4x4xf32> to vector<2x4x4xbf16>
    "tpu.trace_start"() <{level = 10 : i32, message = "bqk,bkd->bqd"}> : () -> ()
    %cst_19 = arith.constant dense<0.000000e+00> : vector<2x4x16xf32>
    %55 = tpu.matmul %54, %42, %cst_19 {dimension_numbers = #tpu.dot_dimension_numbers<[2], [1], [1], [2], [0, 0, 0, 1, 1, 2], [0], [0]>} : vector<2x4x4xbf16>, vector<2x4x16xbf16>, vector<2x4x16xf32> -> vector<2x4x16xf32>
    "tpu.trace_stop"() : () -> ()
    %56 = vector.shape_cast %55 : vector<2x4x16xf32> to vector<8x16xf32>
    %57 = arith.truncf %56 : vector<8x16xf32> to vector<8x16xbf16>
    %c0_20 = arith.constant 0 : index
    %c0_21 = arith.constant 0 : index
    %58 = vector.load %arg6[%c0_20, %c0_21] : memref<32x32xbf16, #tpu.memory_space<vmem>>, vector<16x32xbf16>
    %cst_22 = arith.constant dense<0.000000e+00> : vector<8x32xf32>
    %59 = tpu.matmul %57, %58, %cst_22 {dimension_numbers = #tpu.dot_dimension_numbers<[1], [0], [0], [1], [0, 0, 1, 1], [], []>} : vector<8x16xbf16>, vector<16x32xbf16>, vector<8x32xf32> -> vector<8x32xf32>
    %60 = vector.extract_strided_slice %31 {offsets = [0, 16], sizes = [8, 16], strides = [1, 1]} : vector<8x384xf32> to vector<8x16xf32>
    %cst_23 = arith.constant 2.500000e-01 : f32
    %61 = vector.broadcast %cst_23 : f32 to vector<8x16xf32>
    %62 = arith.mulf %60, %61 : vector<8x16xf32>
    %63 = vector.shape_cast %62 : vector<8x16xf32> to vector<2x4x16xf32>
    %64 = arith.truncf %63 : vector<2x4x16xf32> to vector<2x4x16xbf16>
    %65 = vector.extract_strided_slice %31 {offsets = [0, 144], sizes = [8, 16], strides = [1, 1]} : vector<8x384xf32> to vector<8x16xf32>
    %66 = vector.shape_cast %65 : vector<8x16xf32> to vector<2x4x16xf32>
    %67 = arith.truncf %66 : vector<2x4x16xf32> to vector<2x4x16xbf16>
    %68 = vector.extract_strided_slice %31 {offsets = [0, 272], sizes = [8, 16], strides = [1, 1]} : vector<8x384xf32> to vector<8x16xf32>
    %69 = vector.shape_cast %68 : vector<8x16xf32> to vector<2x4x16xf32>
    %70 = arith.truncf %69 : vector<2x4x16xf32> to vector<2x4x16xbf16>
    "tpu.trace_start"() <{level = 10 : i32, message = "bqd,bkd->bqk"}> : () -> ()
    %cst_24 = arith.constant dense<0.000000e+00> : vector<2x4x4xf32>
    %71 = tpu.matmul %64, %67, %cst_24 {dimension_numbers = #tpu.dot_dimension_numbers<[2], [2], [1], [1], [0, 0, 0, 1, 1, 1], [0], [0]>} : vector<2x4x16xbf16>, vector<2x4x16xbf16>, vector<2x4x4xf32> -> vector<2x4x4xf32>
    "tpu.trace_stop"() : () -> ()
    %cst_25 = arith.constant dense<0xFF800000> : vector<2x4xf32>
    %72 = vector.multi_reduction <maximumf>, %71, %cst_25 [2] : vector<2x4x4xf32> to vector<2x4xf32>
    %73 = vector.shape_cast %72 : vector<2x4xf32> to vector<2x4x1xf32>
    %74 = vector.broadcast %73 : vector<2x4x1xf32> to vector<2x4x4xf32>
    %75 = arith.subf %71, %74 : vector<2x4x4xf32>
    %76 = math.exp %75 : vector<2x4x4xf32>
    %cst_26 = arith.constant dense<0.000000e+00> : vector<2x4xf32>
    %77 = vector.multi_reduction <add>, %76, %cst_26 [2] : vector<2x4x4xf32> to vector<2x4xf32>
    %78 = vector.shape_cast %77 : vector<2x4xf32> to vector<2x4x1xf32>
    %79 = tpu.reciprocal %78 {approx = true} : vector<2x4x1xf32> -> vector<2x4x1xf32>
    %80 = vector.broadcast %79 : vector<2x4x1xf32> to vector<2x4x4xf32>
    %81 = arith.mulf %76, %80 : vector<2x4x4xf32>
    %82 = arith.truncf %81 : vector<2x4x4xf32> to vector<2x4x4xbf16>
    "tpu.trace_start"() <{level = 10 : i32, message = "bqk,bkd->bqd"}> : () -> ()
    %cst_27 = arith.constant dense<0.000000e+00> : vector<2x4x16xf32>
    %83 = tpu.matmul %82, %70, %cst_27 {dimension_numbers = #tpu.dot_dimension_numbers<[2], [1], [1], [2], [0, 0, 0, 1, 1, 2], [0], [0]>} : vector<2x4x4xbf16>, vector<2x4x16xbf16>, vector<2x4x16xf32> -> vector<2x4x16xf32>
    "tpu.trace_stop"() : () -> ()
    %84 = vector.shape_cast %83 : vector<2x4x16xf32> to vector<8x16xf32>
    %85 = arith.truncf %84 : vector<8x16xf32> to vector<8x16xbf16>
    %c16 = arith.constant 16 : index
    %c0_28 = arith.constant 0 : index
    %86 = vector.load %arg6[%c16, %c0_28] : memref<32x32xbf16, #tpu.memory_space<vmem>>, vector<16x32xbf16>
    %cst_29 = arith.constant dense<0.000000e+00> : vector<8x32xf32>
    %87 = tpu.matmul %85, %86, %cst_29 {dimension_numbers = #tpu.dot_dimension_numbers<[1], [0], [0], [1], [0, 0, 1, 1], [], []>} : vector<8x16xbf16>, vector<16x32xbf16>, vector<8x32xf32> -> vector<8x32xf32>
    %88 = arith.addf %59, %87 : vector<8x32xf32>
    %c0_30 = arith.constant 0 : index
    %c0_31 = arith.constant 0 : index
    %89 = vector.load %arg7[%c0_30, %c0_31] : memref<1x32xf32, #tpu.memory_space<vmem>>, vector<1x32xf32>
    %90 = vector.broadcast %89 : vector<1x32xf32> to vector<8x32xf32>
    %91 = arith.addf %88, %90 : vector<8x32xf32>
    %92 = arith.addf %1, %91 : vector<8x32xf32>
    %93 = vector.shape_cast %92 : vector<8x32xf32> to vector<2x4x32xf32>
    %c0_32 = arith.constant 0 : index
    %c0_33 = arith.constant 0 : index
    %c0_34 = arith.constant 0 : index
    %94 = vector.load %arg10[%c0_32, %c0_33, %c0_34] : memref<2x4x32xf32, #tpu.memory_space<vmem>>, vector<2x4x32xf32>
    tpu.vector_store %arg10[%c0_32, %c0_33, %c0_34], %93 {strides = array<i32>} : memref<2x4x32xf32, #tpu.memory_space<vmem>>, vector<2x4x32xf32>,
    %c0_35 = arith.constant 0 : index
    %c0_36 = arith.constant 0 : index
    %95 = vector.load %arg8[%c0_35, %c0_36] : memref<1x32xf32, #tpu.memory_space<vmem>>, vector<1x32xf32>
    %c0_37 = arith.constant 0 : index
    %c0_38 = arith.constant 0 : index
    %96 = vector.load %arg9[%c0_37, %c0_38] : memref<1x32xf32, #tpu.memory_space<vmem>>, vector<1x32xf32>
    %cst_39 = arith.constant dense<0.000000e+00> : vector<8xf32>
    %97 = vector.multi_reduction <add>, %92, %cst_39 [1] : vector<8x32xf32> to vector<8xf32>
    %98 = vector.shape_cast %97 : vector<8xf32> to vector<8x1xf32>
    %cst_40 = arith.constant 3.200000e+01 : f32
    %99 = vector.broadcast %cst_40 : f32 to vector<8x1xf32>
    %100 = arith.divf %98, %99 : vector<8x1xf32>
    %101 = vector.broadcast %100 : vector<8x1xf32> to vector<8x32xf32>
    %102 = arith.subf %92, %101 : vector<8x32xf32>
    %103 = arith.mulf %102, %102 : vector<8x32xf32>
    %cst_41 = arith.constant dense<0.000000e+00> : vector<8xf32>
    %104 = vector.multi_reduction <add>, %103, %cst_41 [1] : vector<8x32xf32> to vector<8xf32>
    %105 = vector.shape_cast %104 : vector<8xf32> to vector<8x1xf32>
    %cst_42 = arith.constant 3.200000e+01 : f32
    %106 = vector.broadcast %cst_42 : f32 to vector<8x1xf32>
    %107 = arith.divf %105, %106 : vector<8x1xf32>
    %108 = vector.broadcast %100 : vector<8x1xf32> to vector<8x32xf32>
    %109 = arith.subf %92, %108 : vector<8x32xf32>
    %cst_43 = arith.constant 9.99999974E-6 : f32
    %110 = vector.broadcast %cst_43 : f32 to vector<8x1xf32>
    %111 = arith.addf %107, %110 : vector<8x1xf32>
    %112 = math.rsqrt %111 : vector<8x1xf32>
    %113 = vector.broadcast %112 : vector<8x1xf32> to vector<8x32xf32>
    %114 = arith.mulf %109, %113 : vector<8x32xf32>
    %115 = vector.broadcast %95 : vector<1x32xf32> to vector<8x32xf32>
    %116 = arith.mulf %114, %115 : vector<8x32xf32>
    %117 = vector.broadcast %96 : vector<1x32xf32> to vector<8x32xf32>
    %118 = arith.addf %116, %117 : vector<8x32xf32>
    %119 = vector.shape_cast %118 : vector<8x32xf32> to vector<2x4x32xf32>
    %120 = arith.truncf %119 : vector<2x4x32xf32> to vector<2x4x32xbf16>
    %c0_44 = arith.constant 0 : index
    %c0_45 = arith.constant 0 : index
    %c0_46 = arith.constant 0 : index
    %121 = vector.load %arg11[%c0_44, %c0_45, %c0_46] : memref<2x4x32xbf16, #tpu.memory_space<vmem>>, vector<2x4x32xbf16>
    tpu.vector_store %arg11[%c0_44, %c0_45, %c0_46], %120 {strides = array<i32>} : memref<2x4x32xbf16, #tpu.memory_space<vmem>>, vector<2x4x32xbf16>,
    return
  }
  func.func @transform_0(%arg0: i32) -> (i32, i32, i32) {
    %c0_i32 = arith.constant 0 : i32
    %c0_i32_0 = arith.constant 0 : i32
    %c0_i32_1 = arith.constant 0 : i32
    return %arg0, %c0_i32, %c0_i32_0 : i32, i32, i32
  }
  func.func @transform_1(%arg0: i32) -> (i32, i32) {
    %c0_i32 = arith.constant 0 : i32
    %c0_i32_0 = arith.constant 0 : i32
    %c0_i32_1 = arith.constant 0 : i32
    return %c0_i32, %c0_i32_0 : i32, i32
  }
  func.func @transform_2(%arg0: i32) -> (i32, i32) {
    %c0_i32 = arith.constant 0 : i32
    %c0_i32_0 = arith.constant 0 : i32
    %c0_i32_1 = arith.constant 0 : i32
    return %c0_i32, %c0_i32_0 : i32, i32
  }
  func.func @transform_3(%arg0: i32) -> (i32, i32) {
    %c0_i32 = arith.constant 0 : i32
    %c0_i32_0 = arith.constant 0 : i32
    %c0_i32_1 = arith.constant 0 : i32
    return %c0_i32, %c0_i32_0 : i32, i32
  }
  func.func @transform_4(%arg0: i32) -> (i32, i32) {
    %c0_i32 = arith.constant 0 : i32
    %c0_i32_0 = arith.constant 0 : i32
    %c0_i32_1 = arith.constant 0 : i32
    return %c0_i32, %c0_i32_0 : i32, i32
  }
  func.func @transform_5(%arg0: i32) -> (i32, i32) {
    %c0_i32 = arith.constant 0 : i32
    %c0_i32_0 = arith.constant 0 : i32
    %c0_i32_1 = arith.constant 0 : i32
    return %c0_i32, %c0_i32_0 : i32, i32
  }
  func.func @transform_6(%arg0: i32) -> (i32, i32) {
    %c0_i32 = arith.constant 0 : i32
    %c0_i32_0 = arith.constant 0 : i32
    %c0_i32_1 = arith.constant 0 : i32
    return %c0_i32, %c0_i32_0 : i32, i32
  }
  func.func @transform_7(%arg0: i32) -> (i32, i32) {
    %c0_i32 = arith.constant 0 : i32
    %c0_i32_0 = arith.constant 0 : i32
    %c0_i32_1 = arith.constant 0 : i32
    return %c0_i32, %c0_i32_0 : i32, i32
  }
  func.func @transform_8(%arg0: i32) -> (i32, i32) {
    %c0_i32 = arith.constant 0 : i32
    %c0_i32_0 = arith.constant 0 : i32
    %c0_i32_1 = arith.constant 0 : i32
    return %c0_i32, %c0_i32_0 : i32, i32
  }
  func.func @transform_9(%arg0: i32) -> (i32, i32, i32) {
    %c0_i32 = arith.constant 0 : i32
    %c0_i32_0 = arith.constant 0 : i32
    %c0_i32_1 = arith.constant 0 : i32
    return %arg0, %c0_i32, %c0_i32_0 : i32, i32, i32
  }
  func.func @transform_10(%arg0: i32) -> (i32, i32, i32) {
    %c0_i32 = arith.constant 0 : i32
    %c0_i32_0 = arith.constant 0 : i32
    %c0_i32_1 = arith.constant 0 : i32
    return %arg0, %c0_i32, %c0_i32_0 : i32, i32, i32
  }
}

module attributes {stable_mosaic.version = 11 : i64} {
  func.func @attn_block_kernel(%arg0: i32, %arg1: memref<8x8x16xf32, #tpu.memory_space<vmem>>, %arg2: memref<1x16xf32, #tpu.memory_space<vmem>>, %arg3: memref<1x16xf32, #tpu.memory_space<vmem>>, %arg4: memref<16x384xbf16, #tpu.memory_space<vmem>>, %arg5: memref<1x384xf32, #tpu.memory_space<vmem>>, %arg6: memref<16x16xbf16, #tpu.memory_space<vmem>>, %arg7: memref<1x16xf32, #tpu.memory_space<vmem>>, %arg8: memref<1x16xf32, #tpu.memory_space<vmem>>, %arg9: memref<1x16xf32, #tpu.memory_space<vmem>>, %arg10: memref<8x8x16xf32, #tpu.memory_space<vmem>>, %arg11: memref<8x8x16xbf16, #tpu.memory_space<vmem>>) attributes {dimension_semantics = [#tpu.dimension_semantics<parallel>], iteration_bounds = array<i64: 2>, scalar_prefetch = 0 : i64, scratch_operands = 0 : i64, tpu.core_type = #tpu.core_type<tc>, window_params = [{transform_indices = @transform_0, window_bounds = array<i64: 8, 8, 16>}, {pipeline_mode = #tpu.pipeline_mode<synchronous>, transform_indices = @transform_1, window_bounds = array<i64: 1, 16>}, {pipeline_mode = #tpu.pipeline_mode<synchronous>, transform_indices = @transform_2, window_bounds = array<i64: 1, 16>}, {pipeline_mode = #tpu.pipeline_mode<synchronous>, transform_indices = @transform_3, window_bounds = array<i64: 16, 384>}, {pipeline_mode = #tpu.pipeline_mode<synchronous>, transform_indices = @transform_4, window_bounds = array<i64: 1, 384>}, {pipeline_mode = #tpu.pipeline_mode<synchronous>, transform_indices = @transform_5, window_bounds = array<i64: 16, 16>}, {pipeline_mode = #tpu.pipeline_mode<synchronous>, transform_indices = @transform_6, window_bounds = array<i64: 1, 16>}, {pipeline_mode = #tpu.pipeline_mode<synchronous>, transform_indices = @transform_7, window_bounds = array<i64: 1, 16>}, {pipeline_mode = #tpu.pipeline_mode<synchronous>, transform_indices = @transform_8, window_bounds = array<i64: 1, 16>}, {transform_indices = @transform_9, window_bounds = array<i64: 8, 8, 16>}, {transform_indices = @transform_10, window_bounds = array<i64: 8, 8, 16>}]} {
    %c0 = arith.constant 0 : index
    %c0_0 = arith.constant 0 : index
    %c0_1 = arith.constant 0 : index
    %0 = vector.load %arg1[%c0, %c0_0, %c0_1] : memref<8x8x16xf32, #tpu.memory_space<vmem>>, vector<8x8x16xf32>
    %1 = vector.shape_cast %0 : vector<8x8x16xf32> to vector<64x16xf32>
    %c0_2 = arith.constant 0 : index
    %c0_3 = arith.constant 0 : index
    %2 = vector.load %arg2[%c0_2, %c0_3] : memref<1x16xf32, #tpu.memory_space<vmem>>, vector<1x16xf32>
    %c0_4 = arith.constant 0 : index
    %c0_5 = arith.constant 0 : index
    %3 = vector.load %arg3[%c0_4, %c0_5] : memref<1x16xf32, #tpu.memory_space<vmem>>, vector<1x16xf32>
    %cst = arith.constant dense<0.000000e+00> : vector<64xf32>
    %4 = vector.multi_reduction <add>, %1, %cst [1] : vector<64x16xf32> to vector<64xf32>
    %5 = vector.shape_cast %4 : vector<64xf32> to vector<64x1xf32>
    %cst_6 = arith.constant 1.600000e+01 : f32
    %6 = vector.broadcast %cst_6 : f32 to vector<64x1xf32>
    %7 = arith.divf %5, %6 : vector<64x1xf32>
    %8 = vector.broadcast %7 : vector<64x1xf32> to vector<64x16xf32>
    %9 = arith.subf %1, %8 : vector<64x16xf32>
    %10 = arith.mulf %9, %9 : vector<64x16xf32>
    %cst_7 = arith.constant dense<0.000000e+00> : vector<64xf32>
    %11 = vector.multi_reduction <add>, %10, %cst_7 [1] : vector<64x16xf32> to vector<64xf32>
    %12 = vector.shape_cast %11 : vector<64xf32> to vector<64x1xf32>
    %cst_8 = arith.constant 1.600000e+01 : f32
    %13 = vector.broadcast %cst_8 : f32 to vector<64x1xf32>
    %14 = arith.divf %12, %13 : vector<64x1xf32>
    %15 = vector.broadcast %7 : vector<64x1xf32> to vector<64x16xf32>
    %16 = arith.subf %1, %15 : vector<64x16xf32>
    %cst_9 = arith.constant 9.99999974E-6 : f32
    %17 = vector.broadcast %cst_9 : f32 to vector<64x1xf32>
    %18 = arith.addf %14, %17 : vector<64x1xf32>
    %19 = math.rsqrt %18 : vector<64x1xf32>
    %20 = vector.broadcast %19 : vector<64x1xf32> to vector<64x16xf32>
    %21 = arith.mulf %16, %20 : vector<64x16xf32>
    %22 = vector.broadcast %2 : vector<1x16xf32> to vector<64x16xf32>
    %23 = arith.mulf %21, %22 : vector<64x16xf32>
    %24 = vector.broadcast %3 : vector<1x16xf32> to vector<64x16xf32>
    %25 = arith.addf %23, %24 : vector<64x16xf32>
    %26 = arith.truncf %25 : vector<64x16xf32> to vector<64x16xbf16>
    %c0_10 = arith.constant 0 : index
    %c0_11 = arith.constant 0 : index
    %27 = vector.load %arg4[%c0_10, %c0_11] : memref<16x384xbf16, #tpu.memory_space<vmem>>, vector<16x384xbf16>
    %cst_12 = arith.constant dense<0.000000e+00> : vector<64x384xf32>
    %28 = tpu.matmul %26, %27, %cst_12 {dimension_numbers = #tpu.dot_dimension_numbers<[1], [0], [0], [1], [0, 0, 1, 1], [], []>} : vector<64x16xbf16>, vector<16x384xbf16>, vector<64x384xf32> -> vector<64x384xf32>
    %c0_13 = arith.constant 0 : index
    %c0_14 = arith.constant 0 : index
    %29 = vector.load %arg5[%c0_13, %c0_14] : memref<1x384xf32, #tpu.memory_space<vmem>>, vector<1x384xf32>
    %30 = vector.broadcast %29 : vector<1x384xf32> to vector<64x384xf32>
    %31 = arith.addf %28, %30 : vector<64x384xf32>
    %32 = vector.extract_strided_slice %31 {offsets = [0, 0], sizes = [64, 8], strides = [1, 1]} : vector<64x384xf32> to vector<64x8xf32>
    %cst_15 = arith.constant 0.353553385 : f32
    %33 = vector.broadcast %cst_15 : f32 to vector<64x8xf32>
    %34 = arith.mulf %32, %33 : vector<64x8xf32>
    %35 = vector.shape_cast %34 : vector<64x8xf32> to vector<8x8x8xf32>
    %36 = arith.truncf %35 : vector<8x8x8xf32> to vector<8x8x8xbf16>
    %37 = vector.extract_strided_slice %31 {offsets = [0, 128], sizes = [64, 8], strides = [1, 1]} : vector<64x384xf32> to vector<64x8xf32>
    %38 = vector.shape_cast %37 : vector<64x8xf32> to vector<8x8x8xf32>
    %39 = arith.truncf %38 : vector<8x8x8xf32> to vector<8x8x8xbf16>
    %40 = vector.extract_strided_slice %31 {offsets = [0, 256], sizes = [64, 8], strides = [1, 1]} : vector<64x384xf32> to vector<64x8xf32>
    %41 = vector.shape_cast %40 : vector<64x8xf32> to vector<8x8x8xf32>
    %42 = arith.truncf %41 : vector<8x8x8xf32> to vector<8x8x8xbf16>
    "tpu.trace_start"() <{level = 10 : i32, message = "bqd,bkd->bqk"}> : () -> ()
    %cst_16 = arith.constant dense<0.000000e+00> : vector<8x8x8xf32>
    %43 = tpu.matmul %36, %39, %cst_16 {dimension_numbers = #tpu.dot_dimension_numbers<[2], [2], [1], [1], [0, 0, 0, 1, 1, 1], [0], [0]>} : vector<8x8x8xbf16>, vector<8x8x8xbf16>, vector<8x8x8xf32> -> vector<8x8x8xf32>
    "tpu.trace_stop"() : () -> ()
    %cst_17 = arith.constant dense<0xFF800000> : vector<8x8xf32>
    %44 = vector.multi_reduction <maximumf>, %43, %cst_17 [2] : vector<8x8x8xf32> to vector<8x8xf32>
    %45 = vector.shape_cast %44 : vector<8x8xf32> to vector<8x8x1xf32>
    %46 = vector.broadcast %45 : vector<8x8x1xf32> to vector<8x8x8xf32>
    %47 = arith.subf %43, %46 : vector<8x8x8xf32>
    %48 = math.exp %47 : vector<8x8x8xf32>
    %cst_18 = arith.constant dense<0.000000e+00> : vector<8x8xf32>
    %49 = vector.multi_reduction <add>, %48, %cst_18 [2] : vector<8x8x8xf32> to vector<8x8xf32>
    %50 = vector.shape_cast %49 : vector<8x8xf32> to vector<8x8x1xf32>
    %51 = tpu.reciprocal %50 {approx = true} : vector<8x8x1xf32> -> vector<8x8x1xf32>
    %52 = vector.broadcast %51 : vector<8x8x1xf32> to vector<8x8x8xf32>
    %53 = arith.mulf %48, %52 : vector<8x8x8xf32>
    %54 = arith.truncf %53 : vector<8x8x8xf32> to vector<8x8x8xbf16>
    "tpu.trace_start"() <{level = 10 : i32, message = "bqk,bkd->bqd"}> : () -> ()
    %cst_19 = arith.constant dense<0.000000e+00> : vector<8x8x8xf32>
    %55 = tpu.matmul %54, %42, %cst_19 {dimension_numbers = #tpu.dot_dimension_numbers<[2], [1], [1], [2], [0, 0, 0, 1, 1, 2], [0], [0]>} : vector<8x8x8xbf16>, vector<8x8x8xbf16>, vector<8x8x8xf32> -> vector<8x8x8xf32>
    "tpu.trace_stop"() : () -> ()
    %56 = vector.shape_cast %55 : vector<8x8x8xf32> to vector<64x8xf32>
    %57 = arith.truncf %56 : vector<64x8xf32> to vector<64x8xbf16>
    %c0_20 = arith.constant 0 : index
    %c0_21 = arith.constant 0 : index
    %58 = vector.load %arg6[%c0_20, %c0_21] : memref<16x16xbf16, #tpu.memory_space<vmem>>, vector<8x16xbf16>
    %cst_22 = arith.constant dense<0.000000e+00> : vector<64x16xf32>
    %59 = tpu.matmul %57, %58, %cst_22 {dimension_numbers = #tpu.dot_dimension_numbers<[1], [0], [0], [1], [0, 0, 1, 1], [], []>} : vector<64x8xbf16>, vector<8x16xbf16>, vector<64x16xf32> -> vector<64x16xf32>
    %60 = vector.extract_strided_slice %31 {offsets = [0, 8], sizes = [64, 8], strides = [1, 1]} : vector<64x384xf32> to vector<64x8xf32>
    %cst_23 = arith.constant 0.353553385 : f32
    %61 = vector.broadcast %cst_23 : f32 to vector<64x8xf32>
    %62 = arith.mulf %60, %61 : vector<64x8xf32>
    %63 = vector.shape_cast %62 : vector<64x8xf32> to vector<8x8x8xf32>
    %64 = arith.truncf %63 : vector<8x8x8xf32> to vector<8x8x8xbf16>
    %65 = vector.extract_strided_slice %31 {offsets = [0, 136], sizes = [64, 8], strides = [1, 1]} : vector<64x384xf32> to vector<64x8xf32>
    %66 = vector.shape_cast %65 : vector<64x8xf32> to vector<8x8x8xf32>
    %67 = arith.truncf %66 : vector<8x8x8xf32> to vector<8x8x8xbf16>
    %68 = vector.extract_strided_slice %31 {offsets = [0, 264], sizes = [64, 8], strides = [1, 1]} : vector<64x384xf32> to vector<64x8xf32>
    %69 = vector.shape_cast %68 : vector<64x8xf32> to vector<8x8x8xf32>
    %70 = arith.truncf %69 : vector<8x8x8xf32> to vector<8x8x8xbf16>
    "tpu.trace_start"() <{level = 10 : i32, message = "bqd,bkd->bqk"}> : () -> ()
    %cst_24 = arith.constant dense<0.000000e+00> : vector<8x8x8xf32>
    %71 = tpu.matmul %64, %67, %cst_24 {dimension_numbers = #tpu.dot_dimension_numbers<[2], [2], [1], [1], [0, 0, 0, 1, 1, 1], [0], [0]>} : vector<8x8x8xbf16>, vector<8x8x8xbf16>, vector<8x8x8xf32> -> vector<8x8x8xf32>
    "tpu.trace_stop"() : () -> ()
    %cst_25 = arith.constant dense<0xFF800000> : vector<8x8xf32>
    %72 = vector.multi_reduction <maximumf>, %71, %cst_25 [2] : vector<8x8x8xf32> to vector<8x8xf32>
    %73 = vector.shape_cast %72 : vector<8x8xf32> to vector<8x8x1xf32>
    %74 = vector.broadcast %73 : vector<8x8x1xf32> to vector<8x8x8xf32>
    %75 = arith.subf %71, %74 : vector<8x8x8xf32>
    %76 = math.exp %75 : vector<8x8x8xf32>
    %cst_26 = arith.constant dense<0.000000e+00> : vector<8x8xf32>
    %77 = vector.multi_reduction <add>, %76, %cst_26 [2] : vector<8x8x8xf32> to vector<8x8xf32>
    %78 = vector.shape_cast %77 : vector<8x8xf32> to vector<8x8x1xf32>
    %79 = tpu.reciprocal %78 {approx = true} : vector<8x8x1xf32> -> vector<8x8x1xf32>
    %80 = vector.broadcast %79 : vector<8x8x1xf32> to vector<8x8x8xf32>
    %81 = arith.mulf %76, %80 : vector<8x8x8xf32>
    %82 = arith.truncf %81 : vector<8x8x8xf32> to vector<8x8x8xbf16>
    "tpu.trace_start"() <{level = 10 : i32, message = "bqk,bkd->bqd"}> : () -> ()
    %cst_27 = arith.constant dense<0.000000e+00> : vector<8x8x8xf32>
    %83 = tpu.matmul %82, %70, %cst_27 {dimension_numbers = #tpu.dot_dimension_numbers<[2], [1], [1], [2], [0, 0, 0, 1, 1, 2], [0], [0]>} : vector<8x8x8xbf16>, vector<8x8x8xbf16>, vector<8x8x8xf32> -> vector<8x8x8xf32>
    "tpu.trace_stop"() : () -> ()
    %84 = vector.shape_cast %83 : vector<8x8x8xf32> to vector<64x8xf32>
    %85 = arith.truncf %84 : vector<64x8xf32> to vector<64x8xbf16>
    %c8 = arith.constant 8 : index
    %c0_28 = arith.constant 0 : index
    %86 = vector.load %arg6[%c8, %c0_28] : memref<16x16xbf16, #tpu.memory_space<vmem>>, vector<8x16xbf16>
    %cst_29 = arith.constant dense<0.000000e+00> : vector<64x16xf32>
    %87 = tpu.matmul %85, %86, %cst_29 {dimension_numbers = #tpu.dot_dimension_numbers<[1], [0], [0], [1], [0, 0, 1, 1], [], []>} : vector<64x8xbf16>, vector<8x16xbf16>, vector<64x16xf32> -> vector<64x16xf32>
    %88 = arith.addf %59, %87 : vector<64x16xf32>
    %c0_30 = arith.constant 0 : index
    %c0_31 = arith.constant 0 : index
    %89 = vector.load %arg7[%c0_30, %c0_31] : memref<1x16xf32, #tpu.memory_space<vmem>>, vector<1x16xf32>
    %90 = vector.broadcast %89 : vector<1x16xf32> to vector<64x16xf32>
    %91 = arith.addf %88, %90 : vector<64x16xf32>
    %92 = arith.addf %1, %91 : vector<64x16xf32>
    %93 = vector.shape_cast %92 : vector<64x16xf32> to vector<8x8x16xf32>
    %c0_32 = arith.constant 0 : index
    %c0_33 = arith.constant 0 : index
    %c0_34 = arith.constant 0 : index
    %94 = vector.load %arg10[%c0_32, %c0_33, %c0_34] : memref<8x8x16xf32, #tpu.memory_space<vmem>>, vector<8x8x16xf32>
    tpu.vector_store %arg10[%c0_32, %c0_33, %c0_34], %93 {strides = array<i32>} : memref<8x8x16xf32, #tpu.memory_space<vmem>>, vector<8x8x16xf32>,
    %c0_35 = arith.constant 0 : index
    %c0_36 = arith.constant 0 : index
    %95 = vector.load %arg8[%c0_35, %c0_36] : memref<1x16xf32, #tpu.memory_space<vmem>>, vector<1x16xf32>
    %c0_37 = arith.constant 0 : index
    %c0_38 = arith.constant 0 : index
    %96 = vector.load %arg9[%c0_37, %c0_38] : memref<1x16xf32, #tpu.memory_space<vmem>>, vector<1x16xf32>
    %cst_39 = arith.constant dense<0.000000e+00> : vector<64xf32>
    %97 = vector.multi_reduction <add>, %92, %cst_39 [1] : vector<64x16xf32> to vector<64xf32>
    %98 = vector.shape_cast %97 : vector<64xf32> to vector<64x1xf32>
    %cst_40 = arith.constant 1.600000e+01 : f32
    %99 = vector.broadcast %cst_40 : f32 to vector<64x1xf32>
    %100 = arith.divf %98, %99 : vector<64x1xf32>
    %101 = vector.broadcast %100 : vector<64x1xf32> to vector<64x16xf32>
    %102 = arith.subf %92, %101 : vector<64x16xf32>
    %103 = arith.mulf %102, %102 : vector<64x16xf32>
    %cst_41 = arith.constant dense<0.000000e+00> : vector<64xf32>
    %104 = vector.multi_reduction <add>, %103, %cst_41 [1] : vector<64x16xf32> to vector<64xf32>
    %105 = vector.shape_cast %104 : vector<64xf32> to vector<64x1xf32>
    %cst_42 = arith.constant 1.600000e+01 : f32
    %106 = vector.broadcast %cst_42 : f32 to vector<64x1xf32>
    %107 = arith.divf %105, %106 : vector<64x1xf32>
    %108 = vector.broadcast %100 : vector<64x1xf32> to vector<64x16xf32>
    %109 = arith.subf %92, %108 : vector<64x16xf32>
    %cst_43 = arith.constant 9.99999974E-6 : f32
    %110 = vector.broadcast %cst_43 : f32 to vector<64x1xf32>
    %111 = arith.addf %107, %110 : vector<64x1xf32>
    %112 = math.rsqrt %111 : vector<64x1xf32>
    %113 = vector.broadcast %112 : vector<64x1xf32> to vector<64x16xf32>
    %114 = arith.mulf %109, %113 : vector<64x16xf32>
    %115 = vector.broadcast %95 : vector<1x16xf32> to vector<64x16xf32>
    %116 = arith.mulf %114, %115 : vector<64x16xf32>
    %117 = vector.broadcast %96 : vector<1x16xf32> to vector<64x16xf32>
    %118 = arith.addf %116, %117 : vector<64x16xf32>
    %119 = vector.shape_cast %118 : vector<64x16xf32> to vector<8x8x16xf32>
    %120 = arith.truncf %119 : vector<8x8x16xf32> to vector<8x8x16xbf16>
    %c0_44 = arith.constant 0 : index
    %c0_45 = arith.constant 0 : index
    %c0_46 = arith.constant 0 : index
    %121 = vector.load %arg11[%c0_44, %c0_45, %c0_46] : memref<8x8x16xbf16, #tpu.memory_space<vmem>>, vector<8x8x16xbf16>
    tpu.vector_store %arg11[%c0_44, %c0_45, %c0_46], %120 {strides = array<i32>} : memref<8x8x16xbf16, #tpu.memory_space<vmem>>, vector<8x8x16xbf16>,
    return
  }
  func.func @transform_0(%arg0: i32) -> (i32, i32, i32) {
    %c0_i32 = arith.constant 0 : i32
    %c0_i32_0 = arith.constant 0 : i32
    %c0_i32_1 = arith.constant 0 : i32
    return %arg0, %c0_i32, %c0_i32_0 : i32, i32, i32
  }
  func.func @transform_1(%arg0: i32) -> (i32, i32) {
    %c0_i32 = arith.constant 0 : i32
    %c0_i32_0 = arith.constant 0 : i32
    %c0_i32_1 = arith.constant 0 : i32
    return %c0_i32, %c0_i32_0 : i32, i32
  }
  func.func @transform_2(%arg0: i32) -> (i32, i32) {
    %c0_i32 = arith.constant 0 : i32
    %c0_i32_0 = arith.constant 0 : i32
    %c0_i32_1 = arith.constant 0 : i32
    return %c0_i32, %c0_i32_0 : i32, i32
  }
  func.func @transform_3(%arg0: i32) -> (i32, i32) {
    %c0_i32 = arith.constant 0 : i32
    %c0_i32_0 = arith.constant 0 : i32
    %c0_i32_1 = arith.constant 0 : i32
    return %c0_i32, %c0_i32_0 : i32, i32
  }
  func.func @transform_4(%arg0: i32) -> (i32, i32) {
    %c0_i32 = arith.constant 0 : i32
    %c0_i32_0 = arith.constant 0 : i32
    %c0_i32_1 = arith.constant 0 : i32
    return %c0_i32, %c0_i32_0 : i32, i32
  }
  func.func @transform_5(%arg0: i32) -> (i32, i32) {
    %c0_i32 = arith.constant 0 : i32
    %c0_i32_0 = arith.constant 0 : i32
    %c0_i32_1 = arith.constant 0 : i32
    return %c0_i32, %c0_i32_0 : i32, i32
  }
  func.func @transform_6(%arg0: i32) -> (i32, i32) {
    %c0_i32 = arith.constant 0 : i32
    %c0_i32_0 = arith.constant 0 : i32
    %c0_i32_1 = arith.constant 0 : i32
    return %c0_i32, %c0_i32_0 : i32, i32
  }
  func.func @transform_7(%arg0: i32) -> (i32, i32) {
    %c0_i32 = arith.constant 0 : i32
    %c0_i32_0 = arith.constant 0 : i32
    %c0_i32_1 = arith.constant 0 : i32
    return %c0_i32, %c0_i32_0 : i32, i32
  }
  func.func @transform_8(%arg0: i32) -> (i32, i32) {
    %c0_i32 = arith.constant 0 : i32
    %c0_i32_0 = arith.constant 0 : i32
    %c0_i32_1 = arith.constant 0 : i32
    return %c0_i32, %c0_i32_0 : i32, i32
  }
  func.func @transform_9(%arg0: i32) -> (i32, i32, i32) {
    %c0_i32 = arith.constant 0 : i32
    %c0_i32_0 = arith.constant 0 : i32
    %c0_i32_1 = arith.constant 0 : i32
    return %arg0, %c0_i32, %c0_i32_0 : i32, i32, i32
  }
  func.func @transform_10(%arg0: i32) -> (i32, i32, i32) {
    %c0_i32 = arith.constant 0 : i32
    %c0_i32_0 = arith.constant 0 : i32
    %c0_i32_1 = arith.constant 0 : i32
    return %arg0, %c0_i32, %c0_i32_0 : i32, i32, i32
  }
}

module attributes {stable_mosaic.version = 11 : i64} {
  func.func @mlp_block_kernel(%arg0: i32, %arg1: memref<8x8x16xbf16, #tpu.memory_space<vmem>>, %arg2: memref<8x8x32xbf16, #tpu.memory_space<vmem>>, %arg3: memref<8x8x64xbf16, #tpu.memory_space<vmem>>, %arg4: memref<8x8x16xf32, #tpu.memory_space<vmem>>, %arg5: memref<16x32xbf16, #tpu.memory_space<vmem>>, %arg6: memref<32x32xbf16, #tpu.memory_space<vmem>>, %arg7: memref<64x32xbf16, #tpu.memory_space<vmem>>, %arg8: memref<1x32xf32, #tpu.memory_space<vmem>>, %arg9: memref<32x16xbf16, #tpu.memory_space<vmem>>, %arg10: memref<1x16xf32, #tpu.memory_space<vmem>>, %arg11: memref<8x8x16xf32, #tpu.memory_space<vmem>>) attributes {dimension_semantics = [#tpu.dimension_semantics<parallel>], iteration_bounds = array<i64: 2>, scalar_prefetch = 0 : i64, scratch_operands = 0 : i64, tpu.core_type = #tpu.core_type<tc>, window_params = [{transform_indices = @transform_0, window_bounds = array<i64: 8, 8, 16>}, {transform_indices = @transform_1, window_bounds = array<i64: 8, 8, 32>}, {transform_indices = @transform_2, window_bounds = array<i64: 8, 8, 64>}, {transform_indices = @transform_3, window_bounds = array<i64: 8, 8, 16>}, {pipeline_mode = #tpu.pipeline_mode<synchronous>, transform_indices = @transform_4, window_bounds = array<i64: 16, 32>}, {pipeline_mode = #tpu.pipeline_mode<synchronous>, transform_indices = @transform_5, window_bounds = array<i64: 32, 32>}, {pipeline_mode = #tpu.pipeline_mode<synchronous>, transform_indices = @transform_6, window_bounds = array<i64: 64, 32>}, {pipeline_mode = #tpu.pipeline_mode<synchronous>, transform_indices = @transform_7, window_bounds = array<i64: 1, 32>}, {pipeline_mode = #tpu.pipeline_mode<synchronous>, transform_indices = @transform_8, window_bounds = array<i64: 32, 16>}, {pipeline_mode = #tpu.pipeline_mode<synchronous>, transform_indices = @transform_9, window_bounds = array<i64: 1, 16>}, {transform_indices = @transform_10, window_bounds = array<i64: 8, 8, 16>}]} {
    %c0 = arith.constant 0 : index
    %c0_0 = arith.constant 0 : index
    %c0_1 = arith.constant 0 : index
    %0 = vector.load %arg1[%c0, %c0_0, %c0_1] : memref<8x8x16xbf16, #tpu.memory_space<vmem>>, vector<8x8x16xbf16>
    %1 = vector.shape_cast %0 : vector<8x8x16xbf16> to vector<64x16xbf16>
    %c0_2 = arith.constant 0 : index
    %c0_3 = arith.constant 0 : index
    %c0_4 = arith.constant 0 : index
    %2 = vector.load %arg2[%c0_2, %c0_3, %c0_4] : memref<8x8x32xbf16, #tpu.memory_space<vmem>>, vector<8x8x32xbf16>
    %3 = vector.shape_cast %2 : vector<8x8x32xbf16> to vector<64x32xbf16>
    %c0_5 = arith.constant 0 : index
    %c0_6 = arith.constant 0 : index
    %c0_7 = arith.constant 0 : index
    %4 = vector.load %arg3[%c0_5, %c0_6, %c0_7] : memref<8x8x64xbf16, #tpu.memory_space<vmem>>, vector<8x8x64xbf16>
    %5 = vector.shape_cast %4 : vector<8x8x64xbf16> to vector<64x64xbf16>
    %c0_8 = arith.constant 0 : index
    %c0_9 = arith.constant 0 : index
    %6 = vector.load %arg5[%c0_8, %c0_9] : memref<16x32xbf16, #tpu.memory_space<vmem>>, vector<16x32xbf16>
    %cst = arith.constant dense<0.000000e+00> : vector<64x32xf32>
    %7 = tpu.matmul %1, %6, %cst {dimension_numbers = #tpu.dot_dimension_numbers<[1], [0], [0], [1], [0, 0, 1, 1], [], []>} : vector<64x16xbf16>, vector<16x32xbf16>, vector<64x32xf32> -> vector<64x32xf32>
    %c0_10 = arith.constant 0 : index
    %c0_11 = arith.constant 0 : index
    %8 = vector.load %arg6[%c0_10, %c0_11] : memref<32x32xbf16, #tpu.memory_space<vmem>>, vector<32x32xbf16>
    %cst_12 = arith.constant dense<0.000000e+00> : vector<64x32xf32>
    %9 = tpu.matmul %3, %8, %cst_12 {dimension_numbers = #tpu.dot_dimension_numbers<[1], [0], [0], [1], [0, 0, 1, 1], [], []>} : vector<64x32xbf16>, vector<32x32xbf16>, vector<64x32xf32> -> vector<64x32xf32>
    %10 = arith.addf %7, %9 : vector<64x32xf32>
    %c0_13 = arith.constant 0 : index
    %c0_14 = arith.constant 0 : index
    %11 = vector.load %arg7[%c0_13, %c0_14] : memref<64x32xbf16, #tpu.memory_space<vmem>>, vector<64x32xbf16>
    %cst_15 = arith.constant dense<0.000000e+00> : vector<64x32xf32>
    %12 = tpu.matmul %5, %11, %cst_15 {dimension_numbers = #tpu.dot_dimension_numbers<[1], [0], [0], [1], [0, 0, 1, 1], [], []>} : vector<64x64xbf16>, vector<64x32xbf16>, vector<64x32xf32> -> vector<64x32xf32>
    %13 = arith.addf %10, %12 : vector<64x32xf32>
    %c0_16 = arith.constant 0 : index
    %c0_17 = arith.constant 0 : index
    %14 = vector.load %arg8[%c0_16, %c0_17] : memref<1x32xf32, #tpu.memory_space<vmem>>, vector<1x32xf32>
    %15 = vector.broadcast %14 : vector<1x32xf32> to vector<64x32xf32>
    %16 = arith.addf %13, %15 : vector<64x32xf32>
    %cst_18 = arith.constant 5.000000e-01 : f32
    %17 = vector.broadcast %cst_18 : f32 to vector<64x32xf32>
    %18 = arith.mulf %17, %16 : vector<64x32xf32>
    %cst_19 = arith.constant 0.707106769 : f32
    %19 = vector.broadcast %cst_19 : f32 to vector<64x32xf32>
    %20 = arith.mulf %16, %19 : vector<64x32xf32>
    %21 = math.erf %20 : vector<64x32xf32>
    %cst_20 = arith.constant 1.000000e+00 : f32
    %22 = vector.broadcast %cst_20 : f32 to vector<64x32xf32>
    %23 = arith.addf %22, %21 : vector<64x32xf32>
    %24 = arith.mulf %18, %23 : vector<64x32xf32>
    %25 = arith.truncf %24 : vector<64x32xf32> to vector<64x32xbf16>
    %c0_21 = arith.constant 0 : index
    %c0_22 = arith.constant 0 : index
    %26 = vector.load %arg9[%c0_21, %c0_22] : memref<32x16xbf16, #tpu.memory_space<vmem>>, vector<32x16xbf16>
    %cst_23 = arith.constant dense<0.000000e+00> : vector<64x16xf32>
    %27 = tpu.matmul %25, %26, %cst_23 {dimension_numbers = #tpu.dot_dimension_numbers<[1], [0], [0], [1], [0, 0, 1, 1], [], []>} : vector<64x32xbf16>, vector<32x16xbf16>, vector<64x16xf32> -> vector<64x16xf32>
    %c0_24 = arith.constant 0 : index
    %c0_25 = arith.constant 0 : index
    %28 = vector.load %arg10[%c0_24, %c0_25] : memref<1x16xf32, #tpu.memory_space<vmem>>, vector<1x16xf32>
    %29 = vector.broadcast %28 : vector<1x16xf32> to vector<64x16xf32>
    %30 = arith.addf %27, %29 : vector<64x16xf32>
    %c0_26 = arith.constant 0 : index
    %c0_27 = arith.constant 0 : index
    %c0_28 = arith.constant 0 : index
    %31 = vector.load %arg4[%c0_26, %c0_27, %c0_28] : memref<8x8x16xf32, #tpu.memory_space<vmem>>, vector<8x8x16xf32>
    %32 = vector.shape_cast %30 : vector<64x16xf32> to vector<8x8x16xf32>
    %33 = arith.addf %31, %32 : vector<8x8x16xf32>
    %c0_29 = arith.constant 0 : index
    %c0_30 = arith.constant 0 : index
    %c0_31 = arith.constant 0 : index
    %34 = vector.load %arg11[%c0_29, %c0_30, %c0_31] : memref<8x8x16xf32, #tpu.memory_space<vmem>>, vector<8x8x16xf32>
    tpu.vector_store %arg11[%c0_29, %c0_30, %c0_31], %33 {strides = array<i32>} : memref<8x8x16xf32, #tpu.memory_space<vmem>>, vector<8x8x16xf32>,
    return
  }
  func.func @transform_0(%arg0: i32) -> (i32, i32, i32) {
    %c0_i32 = arith.constant 0 : i32
    %c0_i32_0 = arith.constant 0 : i32
    %c0_i32_1 = arith.constant 0 : i32
    return %arg0, %c0_i32, %c0_i32_0 : i32, i32, i32
  }
  func.func @transform_1(%arg0: i32) -> (i32, i32, i32) {
    %c0_i32 = arith.constant 0 : i32
    %c0_i32_0 = arith.constant 0 : i32
    %c0_i32_1 = arith.constant 0 : i32
    return %arg0, %c0_i32, %c0_i32_0 : i32, i32, i32
  }
  func.func @transform_2(%arg0: i32) -> (i32, i32, i32) {
    %c0_i32 = arith.constant 0 : i32
    %c0_i32_0 = arith.constant 0 : i32
    %c0_i32_1 = arith.constant 0 : i32
    return %arg0, %c0_i32, %c0_i32_0 : i32, i32, i32
  }
  func.func @transform_3(%arg0: i32) -> (i32, i32, i32) {
    %c0_i32 = arith.constant 0 : i32
    %c0_i32_0 = arith.constant 0 : i32
    %c0_i32_1 = arith.constant 0 : i32
    return %arg0, %c0_i32, %c0_i32_0 : i32, i32, i32
  }
  func.func @transform_4(%arg0: i32) -> (i32, i32) {
    %c0_i32 = arith.constant 0 : i32
    %c0_i32_0 = arith.constant 0 : i32
    %c0_i32_1 = arith.constant 0 : i32
    return %c0_i32, %c0_i32_0 : i32, i32
  }
  func.func @transform_5(%arg0: i32) -> (i32, i32) {
    %c0_i32 = arith.constant 0 : i32
    %c0_i32_0 = arith.constant 0 : i32
    %c0_i32_1 = arith.constant 0 : i32
    return %c0_i32, %c0_i32_0 : i32, i32
  }
  func.func @transform_6(%arg0: i32) -> (i32, i32) {
    %c0_i32 = arith.constant 0 : i32
    %c0_i32_0 = arith.constant 0 : i32
    %c0_i32_1 = arith.constant 0 : i32
    return %c0_i32, %c0_i32_0 : i32, i32
  }
  func.func @transform_7(%arg0: i32) -> (i32, i32) {
    %c0_i32 = arith.constant 0 : i32
    %c0_i32_0 = arith.constant 0 : i32
    %c0_i32_1 = arith.constant 0 : i32
    return %c0_i32, %c0_i32_0 : i32, i32
  }
  func.func @transform_8(%arg0: i32) -> (i32, i32) {
    %c0_i32 = arith.constant 0 : i32
    %c0_i32_0 = arith.constant 0 : i32
    %c0_i32_1 = arith.constant 0 : i32
    return %c0_i32, %c0_i32_0 : i32, i32
  }
  func.func @transform_9(%arg0: i32) -> (i32, i32) {
    %c0_i32 = arith.constant 0 : i32
    %c0_i32_0 = arith.constant 0 : i32
    %c0_i32_1 = arith.constant 0 : i32
    return %c0_i32, %c0_i32_0 : i32, i32
  }
  func.func @transform_10(%arg0: i32) -> (i32, i32, i32) {
    %c0_i32 = arith.constant 0 : i32
    %c0_i32_0 = arith.constant 0 : i32
    %c0_i32_1 = arith.constant 0 : i32
    return %arg0, %c0_i32, %c0_i32_0 : i32, i32, i32
  }
}

module attributes {stable_mosaic.version = 11 : i64} {
  func.func @mlp_block_kernel(%arg0: i32, %arg1: memref<2x4x32xbf16, #tpu.memory_space<vmem>>, %arg2: memref<2x4x64xbf16, #tpu.memory_space<vmem>>, %arg3: memref<2x4x16xbf16, #tpu.memory_space<vmem>>, %arg4: memref<2x4x32xf32, #tpu.memory_space<vmem>>, %arg5: memref<32x64xbf16, #tpu.memory_space<vmem>>, %arg6: memref<64x64xbf16, #tpu.memory_space<vmem>>, %arg7: memref<16x64xbf16, #tpu.memory_space<vmem>>, %arg8: memref<1x64xf32, #tpu.memory_space<vmem>>, %arg9: memref<64x32xbf16, #tpu.memory_space<vmem>>, %arg10: memref<1x32xf32, #tpu.memory_space<vmem>>, %arg11: memref<2x4x32xf32, #tpu.memory_space<vmem>>) attributes {dimension_semantics = [#tpu.dimension_semantics<parallel>], iteration_bounds = array<i64: 2>, scalar_prefetch = 0 : i64, scratch_operands = 0 : i64, tpu.core_type = #tpu.core_type<tc>, window_params = [{transform_indices = @transform_0, window_bounds = array<i64: 2, 4, 32>}, {transform_indices = @transform_1, window_bounds = array<i64: 2, 4, 64>}, {transform_indices = @transform_2, window_bounds = array<i64: 2, 4, 16>}, {transform_indices = @transform_3, window_bounds = array<i64: 2, 4, 32>}, {pipeline_mode = #tpu.pipeline_mode<synchronous>, transform_indices = @transform_4, window_bounds = array<i64: 32, 64>}, {pipeline_mode = #tpu.pipeline_mode<synchronous>, transform_indices = @transform_5, window_bounds = array<i64: 64, 64>}, {pipeline_mode = #tpu.pipeline_mode<synchronous>, transform_indices = @transform_6, window_bounds = array<i64: 16, 64>}, {pipeline_mode = #tpu.pipeline_mode<synchronous>, transform_indices = @transform_7, window_bounds = array<i64: 1, 64>}, {pipeline_mode = #tpu.pipeline_mode<synchronous>, transform_indices = @transform_8, window_bounds = array<i64: 64, 32>}, {pipeline_mode = #tpu.pipeline_mode<synchronous>, transform_indices = @transform_9, window_bounds = array<i64: 1, 32>}, {transform_indices = @transform_10, window_bounds = array<i64: 2, 4, 32>}]} {
    %c0 = arith.constant 0 : index
    %c0_0 = arith.constant 0 : index
    %c0_1 = arith.constant 0 : index
    %0 = vector.load %arg1[%c0, %c0_0, %c0_1] : memref<2x4x32xbf16, #tpu.memory_space<vmem>>, vector<2x4x32xbf16>
    %1 = vector.shape_cast %0 : vector<2x4x32xbf16> to vector<8x32xbf16>
    %c0_2 = arith.constant 0 : index
    %c0_3 = arith.constant 0 : index
    %c0_4 = arith.constant 0 : index
    %2 = vector.load %arg2[%c0_2, %c0_3, %c0_4] : memref<2x4x64xbf16, #tpu.memory_space<vmem>>, vector<2x4x64xbf16>
    %3 = vector.shape_cast %2 : vector<2x4x64xbf16> to vector<8x64xbf16>
    %c0_5 = arith.constant 0 : index
    %c0_6 = arith.constant 0 : index
    %c0_7 = arith.constant 0 : index
    %4 = vector.load %arg3[%c0_5, %c0_6, %c0_7] : memref<2x4x16xbf16, #tpu.memory_space<vmem>>, vector<2x4x16xbf16>
    %5 = vector.shape_cast %4 : vector<2x4x16xbf16> to vector<8x16xbf16>
    %c0_8 = arith.constant 0 : index
    %c0_9 = arith.constant 0 : index
    %6 = vector.load %arg5[%c0_8, %c0_9] : memref<32x64xbf16, #tpu.memory_space<vmem>>, vector<32x64xbf16>
    %cst = arith.constant dense<0.000000e+00> : vector<8x64xf32>
    %7 = tpu.matmul %1, %6, %cst {dimension_numbers = #tpu.dot_dimension_numbers<[1], [0], [0], [1], [0, 0, 1, 1], [], []>} : vector<8x32xbf16>, vector<32x64xbf16>, vector<8x64xf32> -> vector<8x64xf32>
    %c0_10 = arith.constant 0 : index
    %c0_11 = arith.constant 0 : index
    %8 = vector.load %arg6[%c0_10, %c0_11] : memref<64x64xbf16, #tpu.memory_space<vmem>>, vector<64x64xbf16>
    %cst_12 = arith.constant dense<0.000000e+00> : vector<8x64xf32>
    %9 = tpu.matmul %3, %8, %cst_12 {dimension_numbers = #tpu.dot_dimension_numbers<[1], [0], [0], [1], [0, 0, 1, 1], [], []>} : vector<8x64xbf16>, vector<64x64xbf16>, vector<8x64xf32> -> vector<8x64xf32>
    %10 = arith.addf %7, %9 : vector<8x64xf32>
    %c0_13 = arith.constant 0 : index
    %c0_14 = arith.constant 0 : index
    %11 = vector.load %arg7[%c0_13, %c0_14] : memref<16x64xbf16, #tpu.memory_space<vmem>>, vector<16x64xbf16>
    %cst_15 = arith.constant dense<0.000000e+00> : vector<8x64xf32>
    %12 = tpu.matmul %5, %11, %cst_15 {dimension_numbers = #tpu.dot_dimension_numbers<[1], [0], [0], [1], [0, 0, 1, 1], [], []>} : vector<8x16xbf16>, vector<16x64xbf16>, vector<8x64xf32> -> vector<8x64xf32>
    %13 = arith.addf %10, %12 : vector<8x64xf32>
    %c0_16 = arith.constant 0 : index
    %c0_17 = arith.constant 0 : index
    %14 = vector.load %arg8[%c0_16, %c0_17] : memref<1x64xf32, #tpu.memory_space<vmem>>, vector<1x64xf32>
    %15 = vector.broadcast %14 : vector<1x64xf32> to vector<8x64xf32>
    %16 = arith.addf %13, %15 : vector<8x64xf32>
    %cst_18 = arith.constant 5.000000e-01 : f32
    %17 = vector.broadcast %cst_18 : f32 to vector<8x64xf32>
    %18 = arith.mulf %17, %16 : vector<8x64xf32>
    %cst_19 = arith.constant 0.707106769 : f32
    %19 = vector.broadcast %cst_19 : f32 to vector<8x64xf32>
    %20 = arith.mulf %16, %19 : vector<8x64xf32>
    %21 = math.erf %20 : vector<8x64xf32>
    %cst_20 = arith.constant 1.000000e+00 : f32
    %22 = vector.broadcast %cst_20 : f32 to vector<8x64xf32>
    %23 = arith.addf %22, %21 : vector<8x64xf32>
    %24 = arith.mulf %18, %23 : vector<8x64xf32>
    %25 = arith.truncf %24 : vector<8x64xf32> to vector<8x64xbf16>
    %c0_21 = arith.constant 0 : index
    %c0_22 = arith.constant 0 : index
    %26 = vector.load %arg9[%c0_21, %c0_22] : memref<64x32xbf16, #tpu.memory_space<vmem>>, vector<64x32xbf16>
    %cst_23 = arith.constant dense<0.000000e+00> : vector<8x32xf32>
    %27 = tpu.matmul %25, %26, %cst_23 {dimension_numbers = #tpu.dot_dimension_numbers<[1], [0], [0], [1], [0, 0, 1, 1], [], []>} : vector<8x64xbf16>, vector<64x32xbf16>, vector<8x32xf32> -> vector<8x32xf32>
    %c0_24 = arith.constant 0 : index
    %c0_25 = arith.constant 0 : index
    %28 = vector.load %arg10[%c0_24, %c0_25] : memref<1x32xf32, #tpu.memory_space<vmem>>, vector<1x32xf32>
    %29 = vector.broadcast %28 : vector<1x32xf32> to vector<8x32xf32>
    %30 = arith.addf %27, %29 : vector<8x32xf32>
    %c0_26 = arith.constant 0 : index
    %c0_27 = arith.constant 0 : index
    %c0_28 = arith.constant 0 : index
    %31 = vector.load %arg4[%c0_26, %c0_27, %c0_28] : memref<2x4x32xf32, #tpu.memory_space<vmem>>, vector<2x4x32xf32>
    %32 = vector.shape_cast %30 : vector<8x32xf32> to vector<2x4x32xf32>
    %33 = arith.addf %31, %32 : vector<2x4x32xf32>
    %c0_29 = arith.constant 0 : index
    %c0_30 = arith.constant 0 : index
    %c0_31 = arith.constant 0 : index
    %34 = vector.load %arg11[%c0_29, %c0_30, %c0_31] : memref<2x4x32xf32, #tpu.memory_space<vmem>>, vector<2x4x32xf32>
    tpu.vector_store %arg11[%c0_29, %c0_30, %c0_31], %33 {strides = array<i32>} : memref<2x4x32xf32, #tpu.memory_space<vmem>>, vector<2x4x32xf32>,
    return
  }
  func.func @transform_0(%arg0: i32) -> (i32, i32, i32) {
    %c0_i32 = arith.constant 0 : i32
    %c0_i32_0 = arith.constant 0 : i32
    %c0_i32_1 = arith.constant 0 : i32
    return %arg0, %c0_i32, %c0_i32_0 : i32, i32, i32
  }
  func.func @transform_1(%arg0: i32) -> (i32, i32, i32) {
    %c0_i32 = arith.constant 0 : i32
    %c0_i32_0 = arith.constant 0 : i32
    %c0_i32_1 = arith.constant 0 : i32
    return %arg0, %c0_i32, %c0_i32_0 : i32, i32, i32
  }
  func.func @transform_2(%arg0: i32) -> (i32, i32, i32) {
    %c0_i32 = arith.constant 0 : i32
    %c0_i32_0 = arith.constant 0 : i32
    %c0_i32_1 = arith.constant 0 : i32
    return %arg0, %c0_i32, %c0_i32_0 : i32, i32, i32
  }
  func.func @transform_3(%arg0: i32) -> (i32, i32, i32) {
    %c0_i32 = arith.constant 0 : i32
    %c0_i32_0 = arith.constant 0 : i32
    %c0_i32_1 = arith.constant 0 : i32
    return %arg0, %c0_i32, %c0_i32_0 : i32, i32, i32
  }
  func.func @transform_4(%arg0: i32) -> (i32, i32) {
    %c0_i32 = arith.constant 0 : i32
    %c0_i32_0 = arith.constant 0 : i32
    %c0_i32_1 = arith.constant 0 : i32
    return %c0_i32, %c0_i32_0 : i32, i32
  }
  func.func @transform_5(%arg0: i32) -> (i32, i32) {
    %c0_i32 = arith.constant 0 : i32
    %c0_i32_0 = arith.constant 0 : i32
    %c0_i32_1 = arith.constant 0 : i32
    return %c0_i32, %c0_i32_0 : i32, i32
  }
  func.func @transform_6(%arg0: i32) -> (i32, i32) {
    %c0_i32 = arith.constant 0 : i32
    %c0_i32_0 = arith.constant 0 : i32
    %c0_i32_1 = arith.constant 0 : i32
    return %c0_i32, %c0_i32_0 : i32, i32
  }
  func.func @transform_7(%arg0: i32) -> (i32, i32) {
    %c0_i32 = arith.constant 0 : i32
    %c0_i32_0 = arith.constant 0 : i32
    %c0_i32_1 = arith.constant 0 : i32
    return %c0_i32, %c0_i32_0 : i32, i32
  }
  func.func @transform_8(%arg0: i32) -> (i32, i32) {
    %c0_i32 = arith.constant 0 : i32
    %c0_i32_0 = arith.constant 0 : i32
    %c0_i32_1 = arith.constant 0 : i32
    return %c0_i32, %c0_i32_0 : i32, i32
  }
  func.func @transform_9(%arg0: i32) -> (i32, i32) {
    %c0_i32 = arith.constant 0 : i32
    %c0_i32_0 = arith.constant 0 : i32
    %c0_i32_1 = arith.constant 0 : i32
    return %c0_i32, %c0_i32_0 : i32, i32
  }
  func.func @transform_10(%arg0: i32) -> (i32, i32, i32) {
    %c0_i32 = arith.constant 0 : i32
    %c0_i32_0 = arith.constant 0 : i32
    %c0_i32_1 = arith.constant 0 : i32
    return %arg0, %c0_i32, %c0_i32_0 : i32, i32, i32
  }
}

module attributes {stable_mosaic.version = 11 : i64} {
  func.func @mlp_block_kernel(%arg0: i32, %arg1: memref<2x2x64xbf16, #tpu.memory_space<vmem>>, %arg2: memref<2x2x32xbf16, #tpu.memory_space<vmem>>, %arg3: memref<2x2x16xbf16, #tpu.memory_space<vmem>>, %arg4: memref<2x2x64xf32, #tpu.memory_space<vmem>>, %arg5: memref<64x128xbf16, #tpu.memory_space<vmem>>, %arg6: memref<32x128xbf16, #tpu.memory_space<vmem>>, %arg7: memref<16x128xbf16, #tpu.memory_space<vmem>>, %arg8: memref<1x128xf32, #tpu.memory_space<vmem>>, %arg9: memref<128x64xbf16, #tpu.memory_space<vmem>>, %arg10: memref<1x64xf32, #tpu.memory_space<vmem>>, %arg11: memref<2x2x64xf32, #tpu.memory_space<vmem>>) attributes {dimension_semantics = [#tpu.dimension_semantics<parallel>], iteration_bounds = array<i64: 2>, scalar_prefetch = 0 : i64, scratch_operands = 0 : i64, tpu.core_type = #tpu.core_type<tc>, window_params = [{transform_indices = @transform_0, window_bounds = array<i64: 2, 2, 64>}, {transform_indices = @transform_1, window_bounds = array<i64: 2, 2, 32>}, {transform_indices = @transform_2, window_bounds = array<i64: 2, 2, 16>}, {transform_indices = @transform_3, window_bounds = array<i64: 2, 2, 64>}, {pipeline_mode = #tpu.pipeline_mode<synchronous>, transform_indices = @transform_4, window_bounds = array<i64: 64, 128>}, {pipeline_mode = #tpu.pipeline_mode<synchronous>, transform_indices = @transform_5, window_bounds = array<i64: 32, 128>}, {pipeline_mode = #tpu.pipeline_mode<synchronous>, transform_indices = @transform_6, window_bounds = array<i64: 16, 128>}, {pipeline_mode = #tpu.pipeline_mode<synchronous>, transform_indices = @transform_7, window_bounds = array<i64: 1, 128>}, {pipeline_mode = #tpu.pipeline_mode<synchronous>, transform_indices = @transform_8, window_bounds = array<i64: 128, 64>}, {pipeline_mode = #tpu.pipeline_mode<synchronous>, transform_indices = @transform_9, window_bounds = array<i64: 1, 64>}, {transform_indices = @transform_10, window_bounds = array<i64: 2, 2, 64>}]} {
    %c0 = arith.constant 0 : index
    %c0_0 = arith.constant 0 : index
    %c0_1 = arith.constant 0 : index
    %0 = vector.load %arg1[%c0, %c0_0, %c0_1] : memref<2x2x64xbf16, #tpu.memory_space<vmem>>, vector<2x2x64xbf16>
    %1 = vector.shape_cast %0 : vector<2x2x64xbf16> to vector<4x64xbf16>
    %c0_2 = arith.constant 0 : index
    %c0_3 = arith.constant 0 : index
    %c0_4 = arith.constant 0 : index
    %2 = vector.load %arg2[%c0_2, %c0_3, %c0_4] : memref<2x2x32xbf16, #tpu.memory_space<vmem>>, vector<2x2x32xbf16>
    %3 = vector.shape_cast %2 : vector<2x2x32xbf16> to vector<4x32xbf16>
    %c0_5 = arith.constant 0 : index
    %c0_6 = arith.constant 0 : index
    %c0_7 = arith.constant 0 : index
    %4 = vector.load %arg3[%c0_5, %c0_6, %c0_7] : memref<2x2x16xbf16, #tpu.memory_space<vmem>>, vector<2x2x16xbf16>
    %5 = vector.shape_cast %4 : vector<2x2x16xbf16> to vector<4x16xbf16>
    %c0_8 = arith.constant 0 : index
    %c0_9 = arith.constant 0 : index
    %6 = vector.load %arg5[%c0_8, %c0_9] : memref<64x128xbf16, #tpu.memory_space<vmem>>, vector<64x128xbf16>
    %cst = arith.constant dense<0.000000e+00> : vector<4x128xf32>
    %7 = tpu.matmul %1, %6, %cst {dimension_numbers = #tpu.dot_dimension_numbers<[1], [0], [0], [1], [0, 0, 1, 1], [], []>} : vector<4x64xbf16>, vector<64x128xbf16>, vector<4x128xf32> -> vector<4x128xf32>
    %c0_10 = arith.constant 0 : index
    %c0_11 = arith.constant 0 : index
    %8 = vector.load %arg6[%c0_10, %c0_11] : memref<32x128xbf16, #tpu.memory_space<vmem>>, vector<32x128xbf16>
    %cst_12 = arith.constant dense<0.000000e+00> : vector<4x128xf32>
    %9 = tpu.matmul %3, %8, %cst_12 {dimension_numbers = #tpu.dot_dimension_numbers<[1], [0], [0], [1], [0, 0, 1, 1], [], []>} : vector<4x32xbf16>, vector<32x128xbf16>, vector<4x128xf32> -> vector<4x128xf32>
    %10 = arith.addf %7, %9 : vector<4x128xf32>
    %c0_13 = arith.constant 0 : index
    %c0_14 = arith.constant 0 : index
    %11 = vector.load %arg7[%c0_13, %c0_14] : memref<16x128xbf16, #tpu.memory_space<vmem>>, vector<16x128xbf16>
    %cst_15 = arith.constant dense<0.000000e+00> : vector<4x128xf32>
    %12 = tpu.matmul %5, %11, %cst_15 {dimension_numbers = #tpu.dot_dimension_numbers<[1], [0], [0], [1], [0, 0, 1, 1], [], []>} : vector<4x16xbf16>, vector<16x128xbf16>, vector<4x128xf32> -> vector<4x128xf32>
    %13 = arith.addf %10, %12 : vector<4x128xf32>
    %c0_16 = arith.constant 0 : index
    %c0_17 = arith.constant 0 : index
    %14 = vector.load %arg8[%c0_16, %c0_17] : memref<1x128xf32, #tpu.memory_space<vmem>>, vector<1x128xf32>
    %15 = vector.broadcast %14 : vector<1x128xf32> to vector<4x128xf32>
    %16 = arith.addf %13, %15 : vector<4x128xf32>
    %cst_18 = arith.constant 5.000000e-01 : f32
    %17 = vector.broadcast %cst_18 : f32 to vector<4x128xf32>
    %18 = arith.mulf %17, %16 : vector<4x128xf32>
    %cst_19 = arith.constant 0.707106769 : f32
    %19 = vector.broadcast %cst_19 : f32 to vector<4x128xf32>
    %20 = arith.mulf %16, %19 : vector<4x128xf32>
    %21 = math.erf %20 : vector<4x128xf32>
    %cst_20 = arith.constant 1.000000e+00 : f32
    %22 = vector.broadcast %cst_20 : f32 to vector<4x128xf32>
    %23 = arith.addf %22, %21 : vector<4x128xf32>
    %24 = arith.mulf %18, %23 : vector<4x128xf32>
    %25 = arith.truncf %24 : vector<4x128xf32> to vector<4x128xbf16>
    %c0_21 = arith.constant 0 : index
    %c0_22 = arith.constant 0 : index
    %26 = vector.load %arg9[%c0_21, %c0_22] : memref<128x64xbf16, #tpu.memory_space<vmem>>, vector<128x64xbf16>
    %cst_23 = arith.constant dense<0.000000e+00> : vector<4x64xf32>
    %27 = tpu.matmul %25, %26, %cst_23 {dimension_numbers = #tpu.dot_dimension_numbers<[1], [0], [0], [1], [0, 0, 1, 1], [], []>} : vector<4x128xbf16>, vector<128x64xbf16>, vector<4x64xf32> -> vector<4x64xf32>
    %c0_24 = arith.constant 0 : index
    %c0_25 = arith.constant 0 : index
    %28 = vector.load %arg10[%c0_24, %c0_25] : memref<1x64xf32, #tpu.memory_space<vmem>>, vector<1x64xf32>
    %29 = vector.broadcast %28 : vector<1x64xf32> to vector<4x64xf32>
    %30 = arith.addf %27, %29 : vector<4x64xf32>
    %c0_26 = arith.constant 0 : index
    %c0_27 = arith.constant 0 : index
    %c0_28 = arith.constant 0 : index
    %31 = vector.load %arg4[%c0_26, %c0_27, %c0_28] : memref<2x2x64xf32, #tpu.memory_space<vmem>>, vector<2x2x64xf32>
    %32 = vector.shape_cast %30 : vector<4x64xf32> to vector<2x2x64xf32>
    %33 = arith.addf %31, %32 : vector<2x2x64xf32>
    %c0_29 = arith.constant 0 : index
    %c0_30 = arith.constant 0 : index
    %c0_31 = arith.constant 0 : index
    %34 = vector.load %arg11[%c0_29, %c0_30, %c0_31] : memref<2x2x64xf32, #tpu.memory_space<vmem>>, vector<2x2x64xf32>
    tpu.vector_store %arg11[%c0_29, %c0_30, %c0_31], %33 {strides = array<i32>} : memref<2x2x64xf32, #tpu.memory_space<vmem>>, vector<2x2x64xf32>,
    return
  }
  func.func @transform_0(%arg0: i32) -> (i32, i32, i32) {
    %c0_i32 = arith.constant 0 : i32
    %c0_i32_0 = arith.constant 0 : i32
    %c0_i32_1 = arith.constant 0 : i32
    return %arg0, %c0_i32, %c0_i32_0 : i32, i32, i32
  }
  func.func @transform_1(%arg0: i32) -> (i32, i32, i32) {
    %c0_i32 = arith.constant 0 : i32
    %c0_i32_0 = arith.constant 0 : i32
    %c0_i32_1 = arith.constant 0 : i32
    return %arg0, %c0_i32, %c0_i32_0 : i32, i32, i32
  }
  func.func @transform_2(%arg0: i32) -> (i32, i32, i32) {
    %c0_i32 = arith.constant 0 : i32
    %c0_i32_0 = arith.constant 0 : i32
    %c0_i32_1 = arith.constant 0 : i32
    return %arg0, %c0_i32, %c0_i32_0 : i32, i32, i32
  }
  func.func @transform_3(%arg0: i32) -> (i32, i32, i32) {
    %c0_i32 = arith.constant 0 : i32
    %c0_i32_0 = arith.constant 0 : i32
    %c0_i32_1 = arith.constant 0 : i32
    return %arg0, %c0_i32, %c0_i32_0 : i32, i32, i32
  }
  func.func @transform_4(%arg0: i32) -> (i32, i32) {
    %c0_i32 = arith.constant 0 : i32
    %c0_i32_0 = arith.constant 0 : i32
    %c0_i32_1 = arith.constant 0 : i32
    return %c0_i32, %c0_i32_0 : i32, i32
  }
  func.func @transform_5(%arg0: i32) -> (i32, i32) {
    %c0_i32 = arith.constant 0 : i32
    %c0_i32_0 = arith.constant 0 : i32
    %c0_i32_1 = arith.constant 0 : i32
    return %c0_i32, %c0_i32_0 : i32, i32
  }
  func.func @transform_6(%arg0: i32) -> (i32, i32) {
    %c0_i32 = arith.constant 0 : i32
    %c0_i32_0 = arith.constant 0 : i32
    %c0_i32_1 = arith.constant 0 : i32
    return %c0_i32, %c0_i32_0 : i32, i32
  }
  func.func @transform_7(%arg0: i32) -> (i32, i32) {
    %c0_i32 = arith.constant 0 : i32
    %c0_i32_0 = arith.constant 0 : i32
    %c0_i32_1 = arith.constant 0 : i32
    return %c0_i32, %c0_i32_0 : i32, i32
  }
  func.func @transform_8(%arg0: i32) -> (i32, i32) {
    %c0_i32 = arith.constant 0 : i32
    %c0_i32_0 = arith.constant 0 : i32
    %c0_i32_1 = arith.constant 0 : i32
    return %c0_i32, %c0_i32_0 : i32, i32
  }
  func.func @transform_9(%arg0: i32) -> (i32, i32) {
    %c0_i32 = arith.constant 0 : i32
    %c0_i32_0 = arith.constant 0 : i32
    %c0_i32_1 = arith.constant 0 : i32
    return %c0_i32, %c0_i32_0 : i32, i32
  }
  func.func @transform_10(%arg0: i32) -> (i32, i32, i32) {
    %c0_i32 = arith.constant 0 : i32
    %c0_i32_0 = arith.constant 0 : i32
    %c0_i32_1 = arith.constant 0 : i32
    return %arg0, %c0_i32, %c0_i32_0 : i32, i32, i32
  }
}

</mosaic_0001>

<llo_original>
// kernel: parallel_block_cat_forward.8
$region0: #{parallel_block_cat_forward.8}
  #allocation0 [shape = 'u32[]', space=smem, size = 0x4, offset = 0x4, fixed_abs, tag = 'smem constant byte address 0x4 - core index']
  #allocation1 [shape = 'u32[144,128]{1,0:T(1,128)}', space=vmem, size = 0x12000, scoped, tag = 'internal scratch']
  %s0 = inlined_call_operand.vmem [shape: f32[4,2,64], index: 0, kind: input, shape index: {}]
  %s1 = inlined_call_operand.vmem [shape: f32[1,64], index: 1, kind: input, shape index: {}]
  %s2 = inlined_call_operand.vmem [shape: f32[1,64], index: 2, kind: input, shape index: {}]
  %s3 = inlined_call_operand.vmem [shape: bf16[64,384], index: 3, kind: input, shape index: {}]
  %s4 = inlined_call_operand.vmem [shape: f32[1,384], index: 4, kind: input, shape index: {}]
  %s5 = inlined_call_operand.vmem [shape: bf16[64,64], index: 5, kind: input, shape index: {}]
  %s6 = inlined_call_operand.vmem [shape: f32[1,64], index: 6, kind: input, shape index: {}]
  %s7 = inlined_call_operand.vmem [shape: f32[1,64], index: 7, kind: input, shape index: {}]
  %s8 = inlined_call_operand.vmem [shape: f32[1,64], index: 8, kind: input, shape index: {}]
  %s9 = inlined_call_operand.vmem [shape: f32[4,2,64], index: 9, kind: output, shape index: {0}]
  %s10 = inlined_call_operand.vmem [shape: bf16[4,2,64], index: 10, kind: output, shape index: {1}]
  %11 = xla_tuple %s9, %s10
  %s12 = sld [smem:[#allocation0]]
  $region77: #{parallel_block_cat_forward.8} parent=0
    _
  %s14 = ssub.s32 1, %s12
  %s15 = scalar_select 0, %s14, %s12
  loop: start=0, step=1, limit=4
  $region2: #{parallel_block_cat_forward.8} parent=0 // loop_pre_header
    _
  $region3: #{parallel_block_cat_forward.8} parent=0 // loop_header
    %s17 = sphi 0, %s21
    %p18 = scmp.ge.s32.totalorder %s17, 4
    %s27 = sphi 0, %s29
    %s30 = sphi 0, %s27
    %s31 = sphi 0, %s30
    %s47 = sphi 0, %s31
    %s51 = sphi 0, %s51
    %s53 = sphi 0, %s51
    %s54 = sphi 0, %s53
    %s68 = sphi 0, %s54
    %s72 = sphi 0, %s72
    %s74 = sphi 0, %s72
    %s75 = sphi 0, %s74
    %s89 = sphi 0, %s75
    %s93 = sphi 0, %s93
    %s95 = sphi 0, %s93
    %s96 = sphi 0, %s95
    %s110 = sphi 0, %s96
    %s114 = sphi 0, %s114
    %s116 = sphi 0, %s114
    %s117 = sphi 0, %s116
    %s131 = sphi 0, %s117
    %s135 = sphi 0, %s135
    %s137 = sphi 0, %s135
    %s138 = sphi 0, %s137
    %s152 = sphi 0, %s138
    %s156 = sphi 0, %s156
    %s158 = sphi 0, %s156
    %s159 = sphi 0, %s158
    %s173 = sphi 0, %s159
    %s177 = sphi 0, %s177
    %s179 = sphi 0, %s177
    %s180 = sphi 0, %s179
    %s194 = sphi 0, %s180
    %s198 = sphi 0, %s198
    %s200 = sphi 0, %s198
    %s201 = sphi 0, %s200
    %s215 = sphi 0, %s201
    %s221 = sphi 0, %s223
    %s224 = sphi 0, %s221
    %s225 = sphi 0, %s224
    %s241 = sphi 0, %s225
    %s247 = sphi 0, %s249
    %s250 = sphi 0, %s247
    %s251 = sphi 0, %s250
    %s267 = sphi 0, %s251
  $region4: #{parallel_block_cat_forward.8} parent=0 // loop_header_branch
    %20 = sbr.rel (%p18) target = $region8
  $region5: #{parallel_block_cat_forward.8} parent=0 // loop_body
    %s22 = ssub.s32 %s17, 1
    %s23 = ssub.s32 %s17, 2
    %s24 = sadd.s32 %s17, 1
    %s25 = ssub.s32 %s17, %s24
    %p26 = scmp.eq.s32.totalorder %s25, 0
    %s28 = sadd.s32 %s27, 1
    %s29 = scalar_select %p26, %s27, %s28
    %p32 = pneg %p26
    %p33 = scmp.eq.s32.totalorder %s17, 1
    %p34 = por %p32, %p33
    %p35 = scmp.ne.s32.totalorder %s27, %s30
    %p36 = scmp.eq.s32.totalorder %s17, 0
    %p37 = por %p35, %p36
    %p38 = scmp.ne.s32.totalorder %s27, %s30
    %p39 = scmp.eq.s32.totalorder %s22, 1
    %p40 = por %p38, %p39
    %p41 = scmp.ne.s32.totalorder %s30, %s31
    %p42 = scmp.eq.s32.totalorder %s22, 0
    %p43 = por %p41, %p42
    %p44 = scmp.ne.s32.totalorder %s30, %s31
    %p45 = scmp.eq.s32.totalorder %s23, 1
    %p46 = por %p44, %p45
    %p48 = scmp.ne.s32.totalorder %s31, %s47
    %p49 = scmp.eq.s32.totalorder %s23, 0
    %p50 = por %p48, %p49
    %s52 = sadd.s32 %s51, 1
    %p55 = scmp.eq.s32.totalorder %s17, 1
    %p56 = scmp.ne.s32.totalorder %s51, %s53
    %p57 = scmp.eq.s32.totalorder %s17, 0
    %p58 = por %p56, %p57
    %p59 = scmp.ne.s32.totalorder %s51, %s53
    %p60 = scmp.eq.s32.totalorder %s22, 1
    %p61 = por %p59, %p60
    %p62 = scmp.ne.s32.totalorder %s53, %s54
    %p63 = scmp.eq.s32.totalorder %s22, 0
    %p64 = por %p62, %p63
    %p65 = scmp.ne.s32.totalorder %s53, %s54
    %p66 = scmp.eq.s32.totalorder %s23, 1
    %p67 = por %p65, %p66
    %p69 = scmp.ne.s32.totalorder %s54, %s68
    %p70 = scmp.eq.s32.totalorder %s23, 0
    %p71 = por %p69, %p70
    %s73 = sadd.s32 %s72, 1
    %p76 = scmp.eq.s32.totalorder %s17, 1
    %p77 = scmp.ne.s32.totalorder %s72, %s74
    %p78 = scmp.eq.s32.totalorder %s17, 0
    %p79 = por %p77, %p78
    %p80 = scmp.ne.s32.totalorder %s72, %s74
    %p81 = scmp.eq.s32.totalorder %s22, 1
    %p82 = por %p80, %p81
    %p83 = scmp.ne.s32.totalorder %s74, %s75
    %p84 = scmp.eq.s32.totalorder %s22, 0
    %p85 = por %p83, %p84
    %p86 = scmp.ne.s32.totalorder %s74, %s75
    %p87 = scmp.eq.s32.totalorder %s23, 1
    %p88 = por %p86, %p87
    %p90 = scmp.ne.s32.totalorder %s75, %s89
    %p91 = scmp.eq.s32.totalorder %s23, 0
    %p92 = por %p90, %p91
    %s94 = sadd.s32 %s93, 1
    %p97 = scmp.eq.s32.totalorder %s17, 1
    %p98 = scmp.ne.s32.totalorder %s93, %s95
    %p99 = scmp.eq.s32.totalorder %s17, 0
    %p100 = por %p98, %p99
    %p101 = scmp.ne.s32.totalorder %s93, %s95
    %p102 = scmp.eq.s32.totalorder %s22, 1
    %p103 = por %p101, %p102
    %p104 = scmp.ne.s32.totalorder %s95, %s96
    %p105 = scmp.eq.s32.totalorder %s22, 0
    %p106 = por %p104, %p105
    %p107 = scmp.ne.s32.totalorder %s95, %s96
    %p108 = scmp.eq.s32.totalorder %s23, 1
    %p109 = por %p107, %p108
    %p111 = scmp.ne.s32.totalorder %s96, %s110
    %p112 = scmp.eq.s32.totalorder %s23, 0
    %p113 = por %p111, %p112
    %s115 = sadd.s32 %s114, 1
    %p118 = scmp.eq.s32.totalorder %s17, 1
    %p119 = scmp.ne.s32.totalorder %s114, %s116
    %p120 = scmp.eq.s32.totalorder %s17, 0
    %p121 = por %p119, %p120
    %p122 = scmp.ne.s32.totalorder %s114, %s116
    %p123 = scmp.eq.s32.totalorder %s22, 1
    %p124 = por %p122, %p123
    %p125 = scmp.ne.s32.totalorder %s116, %s117
    %p126 = scmp.eq.s32.totalorder %s22, 0
    %p127 = por %p125, %p126
    %p128 = scmp.ne.s32.totalorder %s116, %s117
    %p129 = scmp.eq.s32.totalorder %s23, 1
    %p130 = por %p128, %p129
    %p132 = scmp.ne.s32.totalorder %s117, %s131
    %p133 = scmp.eq.s32.totalorder %s23, 0
    %p134 = por %p132, %p133
    %s136 = sadd.s32 %s135, 1
    %p139 = scmp.eq.s32.totalorder %s17, 1
    %p140 = scmp.ne.s32.totalorder %s135, %s137
    %p141 = scmp.eq.s32.totalorder %s17, 0
    %p142 = por %p140, %p141
    %p143 = scmp.ne.s32.totalorder %s135, %s137
    %p144 = scmp.eq.s32.totalorder %s22, 1
    %p145 = por %p143, %p144
    %p146 = scmp.ne.s32.totalorder %s137, %s138
    %p147 = scmp.eq.s32.totalorder %s22, 0
    %p148 = por %p146, %p147
    %p149 = scmp.ne.s32.totalorder %s137, %s138
    %p150 = scmp.eq.s32.totalorder %s23, 1
    %p151 = por %p149, %p150
    %p153 = scmp.ne.s32.totalorder %s138, %s152
    %p154 = scmp.eq.s32.totalorder %s23, 0
    %p155 = por %p153, %p154
    %s157 = sadd.s32 %s156, 1
    %p160 = scmp.eq.s32.totalorder %s17, 1
    %p161 = scmp.ne.s32.totalorder %s156, %s158
    %p162 = scmp.eq.s32.totalorder %s17, 0
    %p163 = por %p161, %p162
    %p164 = scmp.ne.s32.totalorder %s156, %s158
    %p165 = scmp.eq.s32.totalorder %s22, 1
    %p166 = por %p164, %p165
    %p167 = scmp.ne.s32.totalorder %s158, %s159
    %p168 = scmp.eq.s32.totalorder %s22, 0
    %p169 = por %p167, %p168
    %p170 = scmp.ne.s32.totalorder %s158, %s159
    %p171 = scmp.eq.s32.totalorder %s23, 1
    %p172 = por %p170, %p171
    %p174 = scmp.ne.s32.totalorder %s159, %s173
    %p175 = scmp.eq.s32.totalorder %s23, 0
    %p176 = por %p174, %p175
    %s178 = sadd.s32 %s177, 1
    %p181 = scmp.eq.s32.totalorder %s17, 1
    %p182 = scmp.ne.s32.totalorder %s177, %s179
    %p183 = scmp.eq.s32.totalorder %s17, 0
    %p184 = por %p182, %p183
    %p185 = scmp.ne.s32.totalorder %s177, %s179
    %p186 = scmp.eq.s32.totalorder %s22, 1
    %p187 = por %p185, %p186
    %p188 = scmp.ne.s32.totalorder %s179, %s180
    %p189 = scmp.eq.s32.totalorder %s22, 0
    %p190 = por %p188, %p189
    %p191 = scmp.ne.s32.totalorder %s179, %s180
    %p192 = scmp.eq.s32.totalorder %s23, 1
    %p193 = por %p191, %p192
    %p195 = scmp.ne.s32.totalorder %s180, %s194
    %p196 = scmp.eq.s32.totalorder %s23, 0
    %p197 = por %p195, %p196
    %s199 = sadd.s32 %s198, 1
    %p202 = scmp.eq.s32.totalorder %s17, 1
    %p203 = scmp.ne.s32.totalorder %s198, %s200
    %p204 = scmp.eq.s32.totalorder %s17, 0
    %p205 = por %p203, %p204
    %p206 = scmp.ne.s32.totalorder %s198, %s200
    %p207 = scmp.eq.s32.totalorder %s22, 1
    %p208 = por %p206, %p207
    %p209 = scmp.ne.s32.totalorder %s200, %s201
    %p210 = scmp.eq.s32.totalorder %s22, 0
    %p211 = por %p209, %p210
    %p212 = scmp.ne.s32.totalorder %s200, %s201
    %p213 = scmp.eq.s32.totalorder %s23, 1
    %p214 = por %p212, %p213
    %p216 = scmp.ne.s32.totalorder %s201, %s215
    %p217 = scmp.eq.s32.totalorder %s23, 0
    %p218 = por %p216, %p217
    %s219 = ssub.s32 %s17, %s24
    %p220 = scmp.eq.s32.totalorder %s219, 0
    %s222 = sadd.s32 %s221, 1
    %s223 = scalar_select %p220, %s221, %s222
    %p226 = pneg %p220
    %p227 = scmp.eq.s32.totalorder %s17, 1
    %p228 = por %p226, %p227
    %p229 = scmp.ne.s32.totalorder %s221, %s224
    %p230 = scmp.eq.s32.totalorder %s17, 0
    %p231 = por %p229, %p230
    %p232 = scmp.ne.s32.totalorder %s221, %s224
    %p233 = scmp.eq.s32.totalorder %s22, 1
    %p234 = por %p232, %p233
    %p235 = scmp.ne.s32.totalorder %s224, %s225
    %p236 = scmp.eq.s32.totalorder %s22, 0
    %p237 = por %p235, %p236
    %p238 = scmp.ne.s32.totalorder %s224, %s225
    %p239 = scmp.eq.s32.totalorder %s23, 1
    %p240 = por %p238, %p239
    %p242 = scmp.ne.s32.totalorder %s225, %s241
    %p243 = scmp.eq.s32.totalorder %s23, 0
    %p244 = por %p242, %p243
    %s245 = ssub.s32 %s17, %s24
    %p246 = scmp.eq.s32.totalorder %s245, 0
    %s248 = sadd.s32 %s247, 1
    %s249 = scalar_select %p246, %s247, %s248
    %p252 = pneg %p246
    %p253 = scmp.eq.s32.totalorder %s17, 1
    %p254 = por %p252, %p253
    %p255 = scmp.ne.s32.totalorder %s247, %s250
    %p256 = scmp.eq.s32.totalorder %s17, 0
    %p257 = por %p255, %p256
    %p258 = scmp.ne.s32.totalorder %s247, %s250
    %p259 = scmp.eq.s32.totalorder %s22, 1
    %p260 = por %p258, %p259
    %p261 = scmp.ne.s32.totalorder %s250, %s251
    %p262 = scmp.eq.s32.totalorder %s22, 0
    %p263 = por %p261, %p262
    %p264 = scmp.ne.s32.totalorder %s250, %s251
    %p265 = scmp.eq.s32.totalorder %s23, 1
    %p266 = por %p264, %p265
    %p268 = scmp.ne.s32.totalorder %s251, %s267
    %p269 = scmp.eq.s32.totalorder %s23, 0
    %p270 = por %p268, %p269
    %p271 = scmp.le.s32.totalorder 1, %s17
    %p272 = scmp.lt.s32.totalorder %s17, 3
    %p273 = pnand %p271, %p272
    %p274 = pneg %p273
    // Predicated region
    $region9: #{parallel_block_cat_forward.8} parent=5 // pred_check
      _
    $region10: #{parallel_block_cat_forward.8} parent=5 // pred_check_branch
      %276 = sbr.rel (%p273) target = $region12
    $region11: #{parallel_block_cat_forward.8} parent=5 // pred_region
      %s277 = ssub.s32 %s17, 1
      // Predicated region
      $region13: #{parallel_block_cat_forward.8} parent=11 // pred_check
        %p278 = pneg %p64
      $region14: #{parallel_block_cat_forward.8} parent=11 // pred_check_branch
        %280 = sbr.rel (%p278) target = $region16
      $region15: #{parallel_block_cat_forward.8} parent=11 // pred_region
        _
      $region16: #{parallel_block_cat_forward.8} parent=11 // pred_fallthru
        _
      // Predicated region
      $region17: #{parallel_block_cat_forward.8} parent=11 // pred_check
        %p281 = pneg %p85
      $region18: #{parallel_block_cat_forward.8} parent=11 // pred_check_branch
        %283 = sbr.rel (%p281) target = $region20
      $region19: #{parallel_block_cat_forward.8} parent=11 // pred_region
        _
      $region20: #{parallel_block_cat_forward.8} parent=11 // pred_fallthru
        _
      // Predicated region
      $region21: #{parallel_block_cat_forward.8} parent=11 // pred_check
        %p284 = pneg %p106
      $region22: #{parallel_block_cat_forward.8} parent=11 // pred_check_branch
        %286 = sbr.rel (%p284) target = $region24
      $region23: #{parallel_block_cat_forward.8} parent=11 // pred_region
        _
      $region24: #{parallel_block_cat_forward.8} parent=11 // pred_fallthru
        _
      // Predicated region
      $region25: #{parallel_block_cat_forward.8} parent=11 // pred_check
        %p287 = pneg %p127
      $region26: #{parallel_block_cat_forward.8} parent=11 // pred_check_branch
        %289 = sbr.rel (%p287) target = $region28
      $region27: #{parallel_block_cat_forward.8} parent=11 // pred_region
        _
      $region28: #{parallel_block_cat_forward.8} parent=11 // pred_fallthru
        _
      // Predicated region
      $region29: #{parallel_block_cat_forward.8} parent=11 // pred_check
        %p290 = pneg %p148
      $region30: #{parallel_block_cat_forward.8} parent=11 // pred_check_branch
        %292 = sbr.rel (%p290) target = $region32
      $region31: #{parallel_block_cat_forward.8} parent=11 // pred_region
        _
      $region32: #{parallel_block_cat_forward.8} parent=11 // pred_fallthru
        _
      // Predicated region
      $region33: #{parallel_block_cat_forward.8} parent=11 // pred_check
        %p293 = pneg %p169
      $region34: #{parallel_block_cat_forward.8} parent=11 // pred_check_branch
        %295 = sbr.rel (%p293) target = $region36
      $region35: #{parallel_block_cat_forward.8} parent=11 // pred_region
        _
      $region36: #{parallel_block_cat_forward.8} parent=11 // pred_fallthru
        _
      // Predicated region
      $region37: #{parallel_block_cat_forward.8} parent=11 // pred_check
        %p296 = pneg %p190
      $region38: #{parallel_block_cat_forward.8} parent=11 // pred_check_branch
        %298 = sbr.rel (%p296) target = $region40
      $region39: #{parallel_block_cat_forward.8} parent=11 // pred_region
        _
      $region40: #{parallel_block_cat_forward.8} parent=11 // pred_fallthru
        _
      // Predicated region
      $region41: #{parallel_block_cat_forward.8} parent=11 // pred_check
        %p299 = pneg %p211
      $region42: #{parallel_block_cat_forward.8} parent=11 // pred_check_branch
        %301 = sbr.rel (%p299) target = $region44
      $region43: #{parallel_block_cat_forward.8} parent=11 // pred_region
        _
      $region44: #{parallel_block_cat_forward.8} parent=11 // pred_fallthru
        _
    $region12: #{parallel_block_cat_forward.8} parent=5 // pred_fallthru
      _
    %p302 = scmp.lt.s32.totalorder %s17, 2
    // Predicated region
    $region45: #{parallel_block_cat_forward.8} parent=5 // pred_check
      %p303 = pneg %p302
    $region46: #{parallel_block_cat_forward.8} parent=5 // pred_check_branch
      %305 = sbr.rel (%p303) target = $region48
    $region47: #{parallel_block_cat_forward.8} parent=5 // pred_region
      // Predicated region
      $region49: #{parallel_block_cat_forward.8} parent=47 // pred_check
        %p306 = pneg %p37
      $region50: #{parallel_block_cat_forward.8} parent=47 // pred_check_branch
        %308 = sbr.rel (%p306) target = $region52
      $region51: #{parallel_block_cat_forward.8} parent=47 // pred_region
        %s309 = smul.u32 2, %s17
        %p310 = scmp.lt.s32.totalorder %s309, 3
        %s311 = scalar_select %p310, %s309, 3
        %s312 = smul.addr %s311, 2
        %s313 = scalar_lea.vmem %s0, %s312
        %s314 = smul.u32 2, %s17
      $region52: #{parallel_block_cat_forward.8} parent=47 // pred_fallthru
        _
    $region48: #{parallel_block_cat_forward.8} parent=5 // pred_fallthru
      _
    %p315 = scmp.le.s32.totalorder 1, %s17
    %p316 = scmp.lt.s32.totalorder %s17, 3
    %p317 = pnand %p315, %p316
    %p318 = pneg %p317
    // Predicated region
    $region53: #{parallel_block_cat_forward.8} parent=5 // pred_check
      _
    $region54: #{parallel_block_cat_forward.8} parent=5 // pred_check_branch
      %320 = sbr.rel (%p317) target = $region56
    $region55: #{parallel_block_cat_forward.8} parent=5 // pred_region
      %s321 = ssub.s32 %s17, 1
      %s322 = smul.u32 2, %s22
      %p323 = scmp.lt.s32.totalorder %s322, 3
      %s324 = scalar_select %p323, %s322, 3
      %s325 = smul.addr %s324, 2
      %s326 = scalar_lea.vmem %s0, %s325
      %p327 = pneg %p43
      %p328 = pneg %p40
      %p329 = pneg %p64
      %p330 = pneg %p61
      %p331 = pneg %p85
      %p332 = pneg %p82
      %p333 = pneg %p106
      %p334 = pneg %p103
      %p335 = pneg %p127
      %p336 = pneg %p124
      %p337 = pneg %p148
      %p338 = pneg %p145
      %p339 = pneg %p169
      %p340 = pneg %p166
      %p341 = pneg %p190
      %p342 = pneg %p187
      %p343 = pneg %p211
      %p344 = pneg %p208
      %p345 = pneg %p237
      %p346 = pneg %p234
      %s347 = smul.u32 2, %s22
      %p348 = scmp.lt.s32.totalorder %s347, 3
      %s349 = scalar_select %p348, %s347, 3
      %s350 = smul.addr %s349, 2
      %s351 = scalar_lea.vmem %s9, %s350
      %p352 = pneg %p263
      %p353 = pneg %p260
      %s354 = smul.u32 2, %s22
      %p355 = scmp.lt.s32.totalorder %s354, 3
      %s356 = scalar_select %p355, %s354, 3
      %s357 = scalar_lea.vmem %s10, %s356
      %s358 = smul.u32 2, %s22
      %p359 = scmp.lt.s32.totalorder %s358, 3
      %s360 = scalar_select %p359, %s358, 3
      %s361 = smul.addr %s360, 2
      %s362 = scalar_lea.vmem %s0, %s361
      %s363 = smul.u32 2, %s22
      %s364 = smul.u32 2, %s22
      %p365 = scmp.lt.s32.totalorder %s364, 3
      %s366 = scalar_select %p365, %s364, 3
      %s367 = smul.addr %s366, 2
      %s368 = scalar_lea.vmem %s9, %s367
      %s369 = smul.u32 2, %s22
      %s370 = smul.u32 2, %s22
      %p371 = scmp.lt.s32.totalorder %s370, 3
      %s372 = scalar_select %p371, %s370, 3
      %s373 = scalar_lea.vmem %s10, %s372
      %s374 = smul.u32 2, %s22
      %v376 = vld [vmem:[%s362] sm:$0x3]
      %v377 = vld [vmem:[%s362 + $0x2] sm:$0x3]
      %v378 = vld [vmem:[%s1] sm:$0x1]
      %v379 = vld [vmem:[%s2] sm:$0x1]
      %v382 = vcombine.low %v376, %v377
      %v384 = vunpack.c.l.s4 1983009808
      %v385 = vunpack.c.0.s8 %v384
      %v386 = vlaneseq
      %v387 = vshrl.u32 %v386, 7
      %v388 = vsub.s32 %v385, %v387
      %v389 = vrot.slane %v382, %v388
      %vm391 = vcmask 519168
      %v392 = vsel %vm391, %v389, 0.0
      %393 = vadd.xlane.f32.xlu0 %v392
      %v394 = vpop.xlane.xlu0 %393
      %v395 = vrcp.pop 64.0
      %v396 = vmul.f32 %v394, %v395
      %v399 = vunpack.c.l.s4 269488144
      %v400 = vunpack.c.0.s8 %v399
      %v401 = vlaneseq
      %v402 = vshrl.u32 %v401, 7
      %v403 = vsub.s32 %v400, %v402
      %v404 = vrot.slane %v396, %v403
      %v406 = vunpack.c.l.s4 842150450
      %v407 = vunpack.c.0.s8 %v406
      %v408 = vlaneseq
      %v409 = vshrl.u32 %v408, 7
      %v410 = vsub.s32 %v407, %v409
      %v411 = vrot.slane %v396, %v410
      %v414 = vsub.f32 %v376, %v404
      %v415 = vsub.f32 %v377, %v411
      %v416 = vmul.f32 %v414, %v414
      %v417 = vmul.f32 %v415, %v415
      %v420 = vcombine.low %v416, %v417
      %v422 = vunpack.c.l.s4 1983009808
      %v423 = vunpack.c.0.s8 %v422
      %v424 = vlaneseq
      %v425 = vshrl.u32 %v424, 7
      %v426 = vsub.s32 %v423, %v425
      %v427 = vrot.slane %v420, %v426
      %v429 = vsel %vm391, %v427, 0.0
      %430 = vadd.xlane.f32.xlu0 %v429
      %v431 = vpop.xlane.xlu0 %430
      %v432 = vmul.f32 %v431, %v395
      %v433 = vadd.f32 %v432, 1e-05
      %v434 = vrsqrt.pop %v433
      %v437 = vunpack.c.l.s4 269488144
      %v438 = vunpack.c.0.s8 %v437
      %v439 = vlaneseq
      %v440 = vshrl.u32 %v439, 7
      %v441 = vsub.s32 %v438, %v440
      %v442 = vrot.slane %v434, %v441
      %v444 = vunpack.c.l.s4 842150450
      %v445 = vunpack.c.0.s8 %v444
      %v446 = vlaneseq
      %v447 = vshrl.u32 %v446, 7
      %v448 = vsub.s32 %v445, %v447
      %v449 = vrot.slane %v434, %v448
      %v452 = vmul.f32 %v414, %v442
      %v453 = vmul.f32 %v415, %v449
      %v455 = vlaneseq
      %v456 = vshrl.u32 %v455, 7
      %v457 = vsub.s32 0, %v456
      %v458 = vrot.slane %v378, %v457
      %v460 = vunpack.c.l.s4 1983009808
      %v461 = vunpack.c.0.s8 %v460
      %v462 = vlaneseq
      %v463 = vshrl.u32 %v462, 7
      %v464 = vsub.s32 %v461, %v463
      %v465 = vrot.slane %v458, %v464
      %v466 = vcombine.high %v465, %v465
      %v469 = vmul.f32 %v452, %v465
      %v470 = vmul.f32 %v453, %v466
      %v472 = vlaneseq
      %v473 = vshrl.u32 %v472, 7
      %v474 = vsub.s32 0, %v473
      %v475 = vrot.slane %v379, %v474
      %v477 = vunpack.c.l.s4 1983009808
      %v478 = vunpack.c.0.s8 %v477
      %v479 = vlaneseq
      %v480 = vshrl.u32 %v479, 7
      %v481 = vsub.s32 %v478, %v480
      %v482 = vrot.slane %v475, %v481
      %v483 = vcombine.high %v482, %v482
      %v486 = vadd.f32 %v469, %v482
      %v487 = vadd.f32 %v470, %v483
      %v490 = vcombine.low %v486, %v487
      %v492 = vunpack.c.l.s4 1983009808
      %v493 = vunpack.c.0.s8 %v492
      %v494 = vlaneseq
      %v495 = vshrl.u32 %v494, 7
      %v496 = vsub.s32 %v493, %v495
      %v497 = vrot.slane %v490, %v496
      %v499 = vpack.c.bf16 %v497, %v497
      %v500 = vld [vmem:[%s3] sm:$0xff]
      %v501 = vld [vmem:[%s3 + $0x8] sm:$0xf]
      %v502 = vld [vmem:[%s3 + $0xc] sm:$0xff]
      %v503 = vld [vmem:[%s3 + $0x14] sm:$0xf]
      %v504 = vld [vmem:[%s3 + $0x18] sm:$0xff]
      %v505 = vld [vmem:[%s3 + $0x20] sm:$0xf]
      %v506 = vld [vmem:[%s3 + $0x24] sm:$0xff]
      %v507 = vld [vmem:[%s3 + $0x2c] sm:$0xf]
      %v508 = vld [vmem:[%s3 + $0x30] sm:$0xff]
      %v509 = vld [vmem:[%s3 + $0x38] sm:$0xf]
      %v510 = vld [vmem:[%s3 + $0x3c] sm:$0xff]
      %v511 = vld [vmem:[%s3 + $0x44] sm:$0xf]
      %v512 = vld [vmem:[%s3 + $0x48] sm:$0xff]
      %v513 = vld [vmem:[%s3 + $0x50] sm:$0xf]
      %v514 = vld [vmem:[%s3 + $0x54] sm:$0xff]
      %v515 = vld [vmem:[%s3 + $0x5c] sm:$0xf]
      %v516 = vld [vmem:[%s4] sm:$0x7]
      %v518 = vlaneseq
      %v519 = vshrl.u32 %v518, 7
      %v520 = vsub.s32 0, %v519
      %v521 = vrot.slane %v516, %v520
      %v522 = vlaneseq
      %v523 = vshrl.u32 %v522, 7
      %v524 = vsub.s32 1, %v523
      %v525 = vrot.slane %v516, %v524
      %v526 = vlaneseq
      %v527 = vshrl.u32 %v526, 7
      %v528 = vsub.s32 2, %v527
      %v529 = vrot.slane %v516, %v528
      %v549 = vunpack.c.l.b16 %v500
      %v550 = vunpack.c.h.b16 %v500
      %v551 = vunpack.c.l.b16 %v501
      %v552 = vunpack.c.l.b16 %v502
      %v553 = vunpack.c.h.b16 %v502
      %v554 = vunpack.c.l.b16 %v503
      %v555 = vunpack.c.l.b16 %v504
      %v556 = vunpack.c.h.b16 %v504
      %v557 = vunpack.c.l.b16 %v505
      %v558 = vunpack.c.l.b16 %v506
      %v559 = vunpack.c.h.b16 %v506
      %v560 = vunpack.c.l.b16 %v507
      %v561 = vunpack.c.l.b16 %v508
      %v562 = vunpack.c.h.b16 %v508
      %v563 = vunpack.c.l.b16 %v509
      %v564 = vunpack.c.l.b16 %v510
      %v565 = vunpack.c.h.b16 %v510
      %v566 = vunpack.c.l.b16 %v511
      %v567 = vunpack.c.l.b16 %v512
      %v568 = vunpack.c.h.b16 %v512
      %v569 = vunpack.c.l.b16 %v513
      %v570 = vunpack.c.l.b16 %v514
      %v571 = vunpack.c.h.b16 %v514
      %v572 = vunpack.c.l.b16 %v515
      %v573 = vpack.c.b16 %v552, %v549
      %v574 = vpack.c.b16 %v553, %v550
      %v575 = vpack.c.b16 %v554, %v551
      %v576 = vpack.c.b16 %v558, %v555
      %v577 = vpack.c.b16 %v559, %v556
      %v578 = vpack.c.b16 %v560, %v557
      %v579 = vpack.c.b16 %v564, %v561
      %v580 = vpack.c.b16 %v565, %v562
      %v581 = vpack.c.b16 %v566, %v563
      %v582 = vpack.c.b16 %v570, %v567
      %v583 = vpack.c.b16 %v571, %v568
      %v584 = vpack.c.b16 %v572, %v569
      %vm597 = vcmask 523264
      %v599 = vsel %vm597, %v499, 0
      %601 = vmatprep.subr.bf16.mxu0 %v574
      %602 = vmatpush1.bf16.msra.mxu0 %v573
      %603 = vmatprep.subr.bf16.mxu0 %v577
      %604 = vmatpush1.bf16.msra.mxu0 %v576
      %605 = vmatprep.subr.bf16.mxu0 %v580
      %606 = vmatpush1.bf16.msra.mxu0 %v579
      %607 = vmatprep.subr.bf16.mxu0 %v583
      %608 = vmatpush1.bf16.msra.mxu0 %v582
      %609 = vmatprep.subr.bf16.mxu0 0
      %610 = vmatpush1.bf16.msra.mxu0 0
      %611 = vmatprep.subr.bf16.mxu0 0
      %612 = vmatpush1.bf16.msra.mxu0 0
      %613 = vmatprep.subr.bf16.mxu0 0
      %614 = vmatpush1.bf16.msra.mxu0 0
      %615 = vmatprep.subr.bf16.mxu0 0
      %616 = vmatpush1.bf16.msra.mxu0 0
      %617 = vmatprep.subr.bf16.mxu0 0
      %618 = vmatpush1.bf16.msra.mxu0 0
      %619 = vmatprep.subr.bf16.mxu0 0
      %620 = vmatpush1.bf16.msra.mxu0 0
      %621 = vmatprep.subr.bf16.mxu0 0
      %622 = vmatpush1.bf16.msra.mxu0 0
      %623 = vmatprep.subr.bf16.mxu0 0
      %624 = vmatpush1.bf16.msra.mxu0 0
      %625 = vmatprep.subr.bf16.mxu0 0
      %626 = vmatpush1.bf16.msra.mxu0 0
      %627 = vmatprep.subr.bf16.mxu0 0
      %628 = vmatpush1.bf16.msra.mxu0 0
      %629 = vmatprep.subr.bf16.mxu0 0
      %630 = vmatpush1.bf16.msra.mxu0 0
      %631 = vmatprep.subr.bf16.mxu0 0
      %632 = vmatpush1.bf16.msra.mxu0 0
      %633 = vmatprep.mubr.bf16.mxu0 0
      %634 = vmatmul.mubr.bf16.gmra.mrb[0].mxu0 %v599
      %v635 = vpop.f32.mrb[0].mxu0
      %v636 = vadd.f32 %v521, %v635
      %v637 = vpop.f32.mrb[0].mxu0
      %v638 = vadd.f32 %v525, %v637
      %v639 = vpop.f32.mrb[0].mxu0
      %v640 = vpop.f32.mrb[0].mxu0
      %641 = vdwg.mxu0
      %642 = vmatprep.subr.bf16.mxu0 0
      %643 = vmatpush1.bf16.msra.mxu0 %v575
      %644 = vmatprep.subr.bf16.mxu0 0
      %645 = vmatpush1.bf16.msra.mxu0 %v578
      %646 = vmatprep.subr.bf16.mxu0 0
      %647 = vmatpush1.bf16.msra.mxu0 %v581
      %648 = vmatprep.subr.bf16.mxu0 0
      %649 = vmatpush1.bf16.msra.mxu0 %v584
      %650 = vmatprep.subr.bf16.mxu0 0
      %651 = vmatpush1.bf16.msra.mxu0 0
      %652 = vmatprep.subr.bf16.mxu0 0
      %653 = vmatpush1.bf16.msra.mxu0 0
      %654 = vmatprep.subr.bf16.mxu0 0
      %655 = vmatpush1.bf16.msra.mxu0 0
      %656 = vmatprep.subr.bf16.mxu0 0
      %657 = vmatpush1.bf16.msra.mxu0 0
      %658 = vmatprep.subr.bf16.mxu0 0
      %659 = vmatpush1.bf16.msra.mxu0 0
      %660 = vmatprep.subr.bf16.mxu0 0
      %661 = vmatpush1.bf16.msra.mxu0 0
      %662 = vmatprep.subr.bf16.mxu0 0
      %663 = vmatpush1.bf16.msra.mxu0 0
      %664 = vmatprep.subr.bf16.mxu0 0
      %665 = vmatpush1.bf16.msra.mxu0 0
      %666 = vmatprep.subr.bf16.mxu0 0
      %667 = vmatpush1.bf16.msra.mxu0 0
      %668 = vmatprep.subr.bf16.mxu0 0
      %669 = vmatpush1.bf16.msra.mxu0 0
      %670 = vmatprep.subr.bf16.mxu0 0
      %671 = vmatpush1.bf16.msra.mxu0 0
      %672 = vmatprep.subr.bf16.mxu0 0
      %673 = vmatpush1.bf16.msra.mxu0 0
      %674 = vmatprep.mubr.bf16.mxu0 0
      %675 = vmatmul.mubr.bf16.gmra.mrb[0].mxu0 %v599
      %v676 = vpop.f32.mrb[0].mxu0
      %v677 = vadd.f32 %v529, %v676
      %v678 = vpop.f32.mrb[0].mxu0
      %v679 = vpop.f32.mrb[0].mxu0
      %v680 = vpop.f32.mrb[0].mxu0
      %681 = vdwg.mxu0
      %v682 = vmul.f32 %v636, 0.17677669
      %v685 = vunpack.c.l.s4 1983009808
      %v686 = vunpack.c.0.s8 %v685
      %v687 = vlaneseq
      %v688 = vshrl.u32 %v687, 7
      %v689 = vsub.s32 %v686, %v688
      %v690 = vrot.slane %v682, %v689
      %v691 = vcombine.high %v690, %v690
      %v694 = vpack.c.bf16 %v690, %v690
      %v695 = vpack.c.bf16 %v691, %v691
      %v698 = vunpack.c.l.s4 1983009808
      %v699 = vunpack.c.0.s8 %v698
      %v700 = vlaneseq
      %v701 = vshrl.u32 %v700, 7
      %v702 = vsub.s32 %v699, %v701
      %v703 = vrot.slane %v638, %v702
      %v704 = vcombine.high %v703, %v703
      %v707 = vpack.c.bf16 %v703, %v703
      %v708 = vpack.c.bf16 %v704, %v704
      %v711 = vunpack.c.l.s4 1983009808
      %v712 = vunpack.c.0.s8 %v711
      %v713 = vlaneseq
      %v714 = vshrl.u32 %v713, 7
      %v715 = vsub.s32 %v712, %v714
      %v716 = vrot.slane %v677, %v715
      %v717 = vcombine.high %v716, %v716
      %v720 = vpack.c.bf16 %v716, %v716
      %v721 = vpack.c.bf16 %v717, %v717
      %vm722 = vcmask 261120
      %v724 = vsel %vm722, %v694, 0
      %v727 = vsel %vm722, %v707, 0
      %729 = vmatprep.subr.bf16.mxu0 0
      %730 = vmatpush1.bf16.xpose.msra.mxu0 %v727
      %731 = vmatprep.subr.bf16.mxu0 0
      %732 = vmatpush1.bf16.xpose.msra.mxu0 0
      %733 = vmatprep.subr.bf16.mxu0 0
      %734 = vmatpush1.bf16.xpose.msra.mxu0 0
      %735 = vmatprep.subr.bf16.mxu0 0
      %736 = vmatpush1.bf16.xpose.msra.mxu0 0
      %737 = vmatprep.subr.bf16.mxu0 0
      %738 = vmatpush1.bf16.xpose.msra.mxu0 0
      %739 = vmatprep.subr.bf16.mxu0 0
      %740 = vmatpush1.bf16.xpose.msra.mxu0 0
      %741 = vmatprep.subr.bf16.mxu0 0
      %742 = vmatpush1.bf16.xpose.msra.mxu0 0
      %743 = vmatprep.subr.bf16.mxu0 0
      %744 = vmatpush1.bf16.xpose.msra.mxu0 0
      %745 = vmatprep.subr.bf16.mxu0 0
      %746 = vmatpush1.bf16.xpose.msra.mxu0 0
      %747 = vmatprep.subr.bf16.mxu0 0
      %748 = vmatpush1.bf16.xpose.msra.mxu0 0
      %749 = vmatprep.subr.bf16.mxu0 0
      %750 = vmatpush1.bf16.xpose.msra.mxu0 0
      %751 = vmatprep.subr.bf16.mxu0 0
      %752 = vmatpush1.bf16.xpose.msra.mxu0 0
      %753 = vmatprep.subr.bf16.mxu0 0
      %754 = vmatpush1.bf16.xpose.msra.mxu0 0
      %755 = vmatprep.subr.bf16.mxu0 0
      %756 = vmatpush1.bf16.xpose.msra.mxu0 0
      %757 = vmatprep.subr.bf16.mxu0 0
      %758 = vmatpush1.bf16.xpose.msra.mxu0 0
      %759 = vmatprep.subr.bf16.mxu0 0
      %760 = vmatpush1.bf16.xpose.msra.mxu0 0
      %761 = vmatprep.mubr.bf16.mxu0 0
      %762 = vmatmul.mubr.bf16.gmra.mrb[0].mxu0 %v724
      %v763 = vpop.f32.mrb[0].mxu0
      %v764 = vadd.f32 0.0, %v763
      %v765 = vpop.f32.mrb[0].mxu0
      %v766 = vpop.f32.mrb[0].mxu0
      %v767 = vpop.f32.mrb[0].mxu0
      %768 = vdwg.mxu0
      %v770 = vsel %vm722, %v695, 0
      %v773 = vsel %vm722, %v708, 0
      %775 = vmatprep.subr.bf16.mxu0 0
      %776 = vmatpush1.bf16.xpose.msra.mxu0 %v773
      %777 = vmatprep.subr.bf16.mxu0 0
      %778 = vmatpush1.bf16.xpose.msra.mxu0 0
      %779 = vmatprep.subr.bf16.mxu0 0
      %780 = vmatpush1.bf16.xpose.msra.mxu0 0
      %781 = vmatprep.subr.bf16.mxu0 0
      %782 = vmatpush1.bf16.xpose.msra.mxu0 0
      %783 = vmatprep.subr.bf16.mxu0 0
      %784 = vmatpush1.bf16.xpose.msra.mxu0 0
      %785 = vmatprep.subr.bf16.mxu0 0
      %786 = vmatpush1.bf16.xpose.msra.mxu0 0
      %787 = vmatprep.subr.bf16.mxu0 0
      %788 = vmatpush1.bf16.xpose.msra.mxu0 0
      %789 = vmatprep.subr.bf16.mxu0 0
      %790 = vmatpush1.bf16.xpose.msra.mxu0 0
      %791 = vmatprep.subr.bf16.mxu0 0
      %792 = vmatpush1.bf16.xpose.msra.mxu0 0
      %793 = vmatprep.subr.bf16.mxu0 0
      %794 = vmatpush1.bf16.xpose.msra.mxu0 0
      %795 = vmatprep.subr.bf16.mxu0 0
      %796 = vmatpush1.bf16.xpose.msra.mxu0 0
      %797 = vmatprep.subr.bf16.mxu0 0
      %798 = vmatpush1.bf16.xpose.msra.mxu0 0
      %799 = vmatprep.subr.bf16.mxu0 0
      %800 = vmatpush1.bf16.xpose.msra.mxu0 0
      %801 = vmatprep.subr.bf16.mxu0 0
      %802 = vmatpush1.bf16.xpose.msra.mxu0 0
      %803 = vmatprep.subr.bf16.mxu0 0
      %804 = vmatpush1.bf16.xpose.msra.mxu0 0
      %805 = vmatprep.subr.bf16.mxu0 0
      %806 = vmatpush1.bf16.xpose.msra.mxu0 0
      %807 = vmatprep.mubr.bf16.mxu0 0
      %808 = vmatmul.mubr.bf16.gmra.mrb[0].mxu0 %v770
      %v809 = vpop.f32.mrb[0].mxu0
      %v810 = vadd.f32 0.0, %v809
      %v811 = vpop.f32.mrb[0].mxu0
      %v812 = vpop.f32.mrb[0].mxu0
      %v813 = vpop.f32.mrb[0].mxu0
      %814 = vdwg.mxu0
      %vm815 = vcmask 9216
      %v816 = vsel %vm815, %v764, -inf
      %817 = vmax.xlane.f32.xlu0 %v816
      %v818 = vpop.xlane.xlu0 %817
      %v819 = vsel %vm815, %v810, -inf
      %820 = vmax.xlane.f32.xlu0 %v819
      %v821 = vpop.xlane.xlu0 %820
      %v822 = vsub.f32 %v764, %v818
      %v823 = vsub.f32 %v810, %v821
      %v824 = vmul.f32 %v822, 1.442695
      %v825 = vpow.pop %v824
      %v826 = vmul.f32 %v823, 1.442695
      %v827 = vpow.pop %v826
      %v828 = vsel %vm815, %v825, 0.0
      %829 = vadd.xlane.f32.xlu0 %v828
      %v830 = vpop.xlane.xlu0 %829
      %v831 = vsel %vm815, %v827, 0.0
      %832 = vadd.xlane.f32.xlu0 %v831
      %v833 = vpop.xlane.xlu0 %832
      %v834 = vrcp.pop %v830
      %v835 = vrcp.pop %v833
      %v836 = vmul.f32 %v825, %v834
      %v837 = vmul.f32 %v827, %v835
      %v838 = vpack.c.bf16 %v836, %v836
      %v839 = vpack.c.bf16 %v837, %v837
      %vm840 = vcmask 15360
      %v842 = vsel %vm840, %v838, 0
      %vm844 = vcmask 1040384
      %v846 = vsel %vm844, %v720, 0
      %848 = vmatprep.subr.bf16.mxu0 0
      %849 = vmatpush1.bf16.msra.mxu0 %v846
      %850 = vmatprep.subr.bf16.mxu0 0
      %851 = vmatpush1.bf16.msra.mxu0 0
      %852 = vmatprep.subr.bf16.mxu0 0
      %853 = vmatpush1.bf16.msra.mxu0 0
      %854 = vmatprep.subr.bf16.mxu0 0
      %855 = vmatpush1.bf16.msra.mxu0 0
      %856 = vmatprep.subr.bf16.mxu0 0
      %857 = vmatpush1.bf16.msra.mxu0 0
      %858 = vmatprep.subr.bf16.mxu0 0
      %859 = vmatpush1.bf16.msra.mxu0 0
      %860 = vmatprep.subr.bf16.mxu0 0
      %861 = vmatpush1.bf16.msra.mxu0 0
      %862 = vmatprep.subr.bf16.mxu0 0
      %863 = vmatpush1.bf16.msra.mxu0 0
      %864 = vmatprep.subr.bf16.mxu0 0
      %865 = vmatpush1.bf16.msra.mxu0 0
      %866 = vmatprep.subr.bf16.mxu0 0
      %867 = vmatpush1.bf16.msra.mxu0 0
      %868 = vmatprep.subr.bf16.mxu0 0
      %869 = vmatpush1.bf16.msra.mxu0 0
      %870 = vmatprep.subr.bf16.mxu0 0
      %871 = vmatpush1.bf16.msra.mxu0 0
      %872 = vmatprep.subr.bf16.mxu0 0
      %873 = vmatpush1.bf16.msra.mxu0 0
      %874 = vmatprep.subr.bf16.mxu0 0
      %875 = vmatpush1.bf16.msra.mxu0 0
      %876 = vmatprep.subr.bf16.mxu0 0
      %877 = vmatpush1.bf16.msra.mxu0 0
      %878 = vmatprep.subr.bf16.mxu0 0
      %879 = vmatpush1.bf16.msra.mxu0 0
      %880 = vmatprep.mubr.bf16.mxu0 0
      %881 = vmatmul.mubr.bf16.gmra.mrb[0].mxu0 %v842
      %v882 = vpop.f32.mrb[0].mxu0
      %v883 = vadd.f32 0.0, %v882
      %v884 = vpop.f32.mrb[0].mxu0
      %v885 = vpop.f32.mrb[0].mxu0
      %v886 = vpop.f32.mrb[0].mxu0
      %887 = vdwg.mxu0
      %v889 = vsel %vm840, %v839, 0
      %v892 = vsel %vm844, %v721, 0
      %894 = vmatprep.subr.bf16.mxu0 0
      %895 = vmatpush1.bf16.msra.mxu0 %v892
      %896 = vmatprep.subr.bf16.mxu0 0
      %897 = vmatpush1.bf16.msra.mxu0 0
      %898 = vmatprep.subr.bf16.mxu0 0
      %899 = vmatpush1.bf16.msra.mxu0 0
      %900 = vmatprep.subr.bf16.mxu0 0
      %901 = vmatpush1.bf16.msra.mxu0 0
      %902 = vmatprep.subr.bf16.mxu0 0
      %903 = vmatpush1.bf16.msra.mxu0 0
      %904 = vmatprep.subr.bf16.mxu0 0
      %905 = vmatpush1.bf16.msra.mxu0 0
      %906 = vmatprep.subr.bf16.mxu0 0
      %907 = vmatpush1.bf16.msra.mxu0 0
      %908 = vmatprep.subr.bf16.mxu0 0
      %909 = vmatpush1.bf16.msra.mxu0 0
      %910 = vmatprep.subr.bf16.mxu0 0
      %911 = vmatpush1.bf16.msra.mxu0 0
      %912 = vmatprep.subr.bf16.mxu0 0
      %913 = vmatpush1.bf16.msra.mxu0 0
      %914 = vmatprep.subr.bf16.mxu0 0
      %915 = vmatpush1.bf16.msra.mxu0 0
      %916 = vmatprep.subr.bf16.mxu0 0
      %917 = vmatpush1.bf16.msra.mxu0 0
      %918 = vmatprep.subr.bf16.mxu0 0
      %919 = vmatpush1.bf16.msra.mxu0 0
      %920 = vmatprep.subr.bf16.mxu0 0
      %921 = vmatpush1.bf16.msra.mxu0 0
      %922 = vmatprep.subr.bf16.mxu0 0
      %923 = vmatpush1.bf16.msra.mxu0 0
      %924 = vmatprep.subr.bf16.mxu0 0
      %925 = vmatpush1.bf16.msra.mxu0 0
      %926 = vmatprep.mubr.bf16.mxu0 0
      %927 = vmatmul.mubr.bf16.gmra.mrb[0].mxu0 %v889
      %v928 = vpop.f32.mrb[0].mxu0
      %v929 = vadd.f32 0.0, %v928
      %v930 = vpop.f32.mrb[0].mxu0
      %v931 = vpop.f32.mrb[0].mxu0
      %v932 = vpop.f32.mrb[0].mxu0
      %933 = vdwg.mxu0
      %v936 = vcombine.low %v883, %v929
      %v938 = vunpack.c.l.s4 1983009808
      %v939 = vunpack.c.0.s8 %v938
      %v940 = vlaneseq
      %v941 = vshrl.u32 %v940, 7
      %v942 = vsub.s32 %v939, %v941
      %v943 = vrot.slane %v936, %v942
      %v945 = vpack.c.bf16 %v943, %v943
      %v946 = vld [vmem:[%s5] sm:$0xf]
      %v947 = vld [vmem:[%s5 + $0x4] sm:$0xf]
      %v948 = vld [vmem:[%s5 + $0x8] sm:$0xf]
      %v949 = vld [vmem:[%s5 + $0xc] sm:$0xf]
      %951 = vrot.lane.b32.xlu0 %v694, 96
      %v952 = vpop.permute.xlu0 %951
      %954 = vrot.lane.b32.xlu0 %v707, 96
      %v955 = vpop.permute.xlu0 %954
      %v957 = vsel %vm722, %v952, 0
      %v960 = vsel %vm722, %v955, 0
      %962 = vmatprep.subr.bf16.mxu0 0
      %963 = vmatpush1.bf16.xpose.msra.mxu0 %v960
      %964 = vmatprep.subr.bf16.mxu0 0
      %965 = vmatpush1.bf16.xpose.msra.mxu0 0
      %966 = vmatprep.subr.bf16.mxu0 0
      %967 = vmatpush1.bf16.xpose.msra.mxu0 0
      %968 = vmatprep.subr.bf16.mxu0 0
      %969 = vmatpush1.bf16.xpose.msra.mxu0 0
      %970 = vmatprep.subr.bf16.mxu0 0
      %971 = vmatpush1.bf16.xpose.msra.mxu0 0
      %972 = vmatprep.subr.bf16.mxu0 0
      %973 = vmatpush1.bf16.xpose.msra.mxu0 0
      %974 = vmatprep.subr.bf16.mxu0 0
      %975 = vmatpush1.bf16.xpose.msra.mxu0 0
      %976 = vmatprep.subr.bf16.mxu0 0
      %977 = vmatpush1.bf16.xpose.msra.mxu0 0
      %978 = vmatprep.subr.bf16.mxu0 0
      %979 = vmatpush1.bf16.xpose.msra.mxu0 0
      %980 = vmatprep.subr.bf16.mxu0 0
      %981 = vmatpush1.bf16.xpose.msra.mxu0 0
      %982 = vmatprep.subr.bf16.mxu0 0
      %983 = vmatpush1.bf16.xpose.msra.mxu0 0
      %984 = vmatprep.subr.bf16.mxu0 0
      %985 = vmatpush1.bf16.xpose.msra.mxu0 0
      %986 = vmatprep.subr.bf16.mxu0 0
      %987 = vmatpush1.bf16.xpose.msra.mxu0 0
      %988 = vmatprep.subr.bf16.mxu0 0
      %989 = vmatpush1.bf16.xpose.msra.mxu0 0
      %990 = vmatprep.subr.bf16.mxu0 0
      %991 = vmatpush1.bf16.xpose.msra.mxu0 0
      %992 = vmatprep.subr.bf16.mxu0 0
      %993 = vmatpush1.bf16.xpose.msra.mxu0 0
      %994 = vmatprep.mubr.bf16.mxu0 0
      %995 = vmatmul.mubr.bf16.gmra.mrb[0].mxu0 %v957
      %v996 = vpop.f32.mrb[0].mxu0
      %v997 = vadd.f32 0.0, %v996
      %v998 = vpop.f32.mrb[0].mxu0
      %v999 = vpop.f32.mrb[0].mxu0
      %v1000 = vpop.f32.mrb[0].mxu0
      %1001 = vdwg.mxu0
      %1003 = vrot.lane.b32.xlu0 %v695, 96
      %v1004 = vpop.permute.xlu0 %1003
      %1006 = vrot.lane.b32.xlu0 %v708, 96
      %v1007 = vpop.permute.xlu0 %1006
      %v1009 = vsel %vm722, %v1004, 0
      %v1012 = vsel %vm722, %v1007, 0
      %1014 = vmatprep.subr.bf16.mxu0 0
      %1015 = vmatpush1.bf16.xpose.msra.mxu0 %v1012
      %1016 = vmatprep.subr.bf16.mxu0 0
      %1017 = vmatpush1.bf16.xpose.msra.mxu0 0
      %1018 = vmatprep.subr.bf16.mxu0 0
      %1019 = vmatpush1.bf16.xpose.msra.mxu0 0
      %1020 = vmatprep.subr.bf16.mxu0 0
      %1021 = vmatpush1.bf16.xpose.msra.mxu0 0
      %1022 = vmatprep.subr.bf16.mxu0 0
      %1023 = vmatpush1.bf16.xpose.msra.mxu0 0
      %1024 = vmatprep.subr.bf16.mxu0 0
      %1025 = vmatpush1.bf16.xpose.msra.mxu0 0
      %1026 = vmatprep.subr.bf16.mxu0 0
      %1027 = vmatpush1.bf16.xpose.msra.mxu0 0
      %1028 = vmatprep.subr.bf16.mxu0 0
      %1029 = vmatpush1.bf16.xpose.msra.mxu0 0
      %1030 = vmatprep.subr.bf16.mxu0 0
      %1031 = vmatpush1.bf16.xpose.msra.mxu0 0
      %1032 = vmatprep.subr.bf16.mxu0 0
      %1033 = vmatpush1.bf16.xpose.msra.mxu0 0
      %1034 = vmatprep.subr.bf16.mxu0 0
      %1035 = vmatpush1.bf16.xpose.msra.mxu0 0
      %1036 = vmatprep.subr.bf16.mxu0 0
      %1037 = vmatpush1.bf16.xpose.msra.mxu0 0
      %1038 = vmatprep.subr.bf16.mxu0 0
      %1039 = vmatpush1.bf16.xpose.msra.mxu0 0
      %1040 = vmatprep.subr.bf16.mxu0 0
      %1041 = vmatpush1.bf16.xpose.msra.mxu0 0
      %1042 = vmatprep.subr.bf16.mxu0 0
      %1043 = vmatpush1.bf16.xpose.msra.mxu0 0
      %1044 = vmatprep.subr.bf16.mxu0 0
      %1045 = vmatpush1.bf16.xpose.msra.mxu0 0
      %1046 = vmatprep.mubr.bf16.mxu0 0
      %1047 = vmatmul.mubr.bf16.gmra.mrb[0].mxu0 %v1009
      %v1048 = vpop.f32.mrb[0].mxu0
      %v1049 = vadd.f32 0.0, %v1048
      %v1050 = vpop.f32.mrb[0].mxu0
      %v1051 = vpop.f32.mrb[0].mxu0
      %v1052 = vpop.f32.mrb[0].mxu0
      %1053 = vdwg.mxu0
      %v1054 = vsel %vm815, %v997, -inf
      %1055 = vmax.xlane.f32.xlu0 %v1054
      %v1056 = vpop.xlane.xlu0 %1055
      %v1057 = vsel %vm815, %v1049, -inf
      %1058 = vmax.xlane.f32.xlu0 %v1057
      %v1059 = vpop.xlane.xlu0 %1058
      %v1060 = vsub.f32 %v997, %v1056
      %v1061 = vsub.f32 %v1049, %v1059
      %v1062 = vmul.f32 %v1060, 1.442695
      %v1063 = vpow.pop %v1062
      %v1064 = vmul.f32 %v1061, 1.442695
      %v1065 = vpow.pop %v1064
      %v1066 = vsel %vm815, %v1063, 0.0
      %1067 = vadd.xlane.f32.xlu0 %v1066
      %v1068 = vpop.xlane.xlu0 %1067
      %v1069 = vsel %vm815, %v1065, 0.0
      %1070 = vadd.xlane.f32.xlu0 %v1069
      %v1071 = vpop.xlane.xlu0 %1070
      %v1072 = vrcp.pop %v1068
      %v1073 = vrcp.pop %v1071
      %v1074 = vmul.f32 %v1063, %v1072
      %v1075 = vmul.f32 %v1065, %v1073
      %v1076 = vpack.c.bf16 %v1074, %v1074
      %v1077 = vpack.c.bf16 %v1075, %v1075
      %1079 = vrot.lane.b32.xlu0 %v720, 96
      %v1080 = vpop.permute.xlu0 %1079
      %v1082 = vsel %vm840, %v1076, 0
      %v1085 = vsel %vm844, %v1080, 0
      %1087 = vmatprep.subr.bf16.mxu0 0
      %1088 = vmatpush1.bf16.msra.mxu0 %v1085
      %1089 = vmatprep.subr.bf16.mxu0 0
      %1090 = vmatpush1.bf16.msra.mxu0 0
      %1091 = vmatprep.subr.bf16.mxu0 0
      %1092 = vmatpush1.bf16.msra.mxu0 0
      %1093 = vmatprep.subr.bf16.mxu0 0
      %1094 = vmatpush1.bf16.msra.mxu0 0
      %1095 = vmatprep.subr.bf16.mxu0 0
      %1096 = vmatpush1.bf16.msra.mxu0 0
      %1097 = vmatprep.subr.bf16.mxu0 0
      %1098 = vmatpush1.bf16.msra.mxu0 0
      %1099 = vmatprep.subr.bf16.mxu0 0
      %1100 = vmatpush1.bf16.msra.mxu0 0
      %1101 = vmatprep.subr.bf16.mxu0 0
      %1102 = vmatpush1.bf16.msra.mxu0 0
      %1103 = vmatprep.subr.bf16.mxu0 0
      %1104 = vmatpush1.bf16.msra.mxu0 0
      %1105 = vmatprep.subr.bf16.mxu0 0
      %1106 = vmatpush1.bf16.msra.mxu0 0
      %1107 = vmatprep.subr.bf16.mxu0 0
      %1108 = vmatpush1.bf16.msra.mxu0 0
      %1109 = vmatprep.subr.bf16.mxu0 0
      %1110 = vmatpush1.bf16.msra.mxu0 0
      %1111 = vmatprep.subr.bf16.mxu0 0
      %1112 = vmatpush1.bf16.msra.mxu0 0
      %1113 = vmatprep.subr.bf16.mxu0 0
      %1114 = vmatpush1.bf16.msra.mxu0 0
      %1115 = vmatprep.subr.bf16.mxu0 0
      %1116 = vmatpush1.bf16.msra.mxu0 0
      %1117 = vmatprep.subr.bf16.mxu0 0
      %1118 = vmatpush1.bf16.msra.mxu0 0
      %1119 = vmatprep.mubr.bf16.mxu0 0
      %1120 = vmatmul.mubr.bf16.gmra.mrb[0].mxu0 %v1082
      %v1121 = vpop.f32.mrb[0].mxu0
      %v1122 = vadd.f32 0.0, %v1121
      %v1123 = vpop.f32.mrb[0].mxu0
      %v1124 = vpop.f32.mrb[0].mxu0
      %v1125 = vpop.f32.mrb[0].mxu0
      %1126 = vdwg.mxu0
      %1128 = vrot.lane.b32.xlu0 %v721, 96
      %v1129 = vpop.permute.xlu0 %1128
      %v1131 = vsel %vm840, %v1077, 0
      %v1134 = vsel %vm844, %v1129, 0
      %1136 = vmatprep.subr.bf16.mxu0 0
      %1137 = vmatpush1.bf16.msra.mxu0 %v1134
      %1138 = vmatprep.subr.bf16.mxu0 0
      %1139 = vmatpush1.bf16.msra.mxu0 0
      %1140 = vmatprep.subr.bf16.mxu0 0
      %1141 = vmatpush1.bf16.msra.mxu0 0
      %1142 = vmatprep.subr.bf16.mxu0 0
      %1143 = vmatpush1.bf16.msra.mxu0 0
      %1144 = vmatprep.subr.bf16.mxu0 0
      %1145 = vmatpush1.bf16.msra.mxu0 0
      %1146 = vmatprep.subr.bf16.mxu0 0
      %1147 = vmatpush1.bf16.msra.mxu0 0
      %1148 = vmatprep.subr.bf16.mxu0 0
      %1149 = vmatpush1.bf16.msra.mxu0 0
      %1150 = vmatprep.subr.bf16.mxu0 0
      %1151 = vmatpush1.bf16.msra.mxu0 0
      %1152 = vmatprep.subr.bf16.mxu0 0
      %1153 = vmatpush1.bf16.msra.mxu0 0
      %1154 = vmatprep.subr.bf16.mxu0 0
      %1155 = vmatpush1.bf16.msra.mxu0 0
      %1156 = vmatprep.subr.bf16.mxu0 0
      %1157 = vmatpush1.bf16.msra.mxu0 0
      %1158 = vmatprep.subr.bf16.mxu0 0
      %1159 = vmatpush1.bf16.msra.mxu0 0
      %1160 = vmatprep.subr.bf16.mxu0 0
      %1161 = vmatpush1.bf16.msra.mxu0 0
      %1162 = vmatprep.subr.bf16.mxu0 0
      %1163 = vmatpush1.bf16.msra.mxu0 0
      %1164 = vmatprep.subr.bf16.mxu0 0
      %1165 = vmatpush1.bf16.msra.mxu0 0
      %1166 = vmatprep.subr.bf16.mxu0 0
      %1167 = vmatpush1.bf16.msra.mxu0 0
      %1168 = vmatprep.mubr.bf16.mxu0 0
      %1169 = vmatmul.mubr.bf16.gmra.mrb[0].mxu0 %v1131
      %v1170 = vpop.f32.mrb[0].mxu0
      %v1171 = vadd.f32 0.0, %v1170
      %v1172 = vpop.f32.mrb[0].mxu0
      %v1173 = vpop.f32.mrb[0].mxu0
      %v1174 = vpop.f32.mrb[0].mxu0
      %1175 = vdwg.mxu0
      %v1178 = vcombine.low %v1122, %v1171
      %v1180 = vunpack.c.l.s4 1983009808
      %v1181 = vunpack.c.0.s8 %v1180
      %v1182 = vlaneseq
      %v1183 = vshrl.u32 %v1182, 7
      %v1184 = vsub.s32 %v1181, %v1183
      %v1185 = vrot.slane %v1178, %v1184
      %v1187 = vpack.c.bf16 %v1185, %v1185
      %v1188 = vld [vmem:[%s5 + $0x10] sm:$0xf]
      %v1189 = vld [vmem:[%s5 + $0x14] sm:$0xf]
      %v1190 = vld [vmem:[%s5 + $0x18] sm:$0xf]
      %v1191 = vld [vmem:[%s5 + $0x1c] sm:$0xf]
      %v1196 = vunpack.c.l.b16 %v1188
      %v1197 = vunpack.c.l.b16 %v1189
      %v1198 = vunpack.c.l.b16 %v1190
      %v1199 = vunpack.c.l.b16 %v1191
      %v1200 = vpack.c.b16 %v1197, %v1196
      %v1201 = vpack.c.b16 %v1199, %v1198
      %v1205 = vsel %vm722, %v1187, 0
      %1207 = vmatprep.subr.bf16.mxu0 0
      %1208 = vmatpush1.bf16.msra.mxu0 %v1200
      %1209 = vmatprep.subr.bf16.mxu0 0
      %1210 = vmatpush1.bf16.msra.mxu0 %v1201
      %1211 = vmatprep.subr.bf16.mxu0 0
      %1212 = vmatpush1.bf16.msra.mxu0 0
      %1213 = vmatprep.subr.bf16.mxu0 0
      %1214 = vmatpush1.bf16.msra.mxu0 0
      %1215 = vmatprep.subr.bf16.mxu0 0
      %1216 = vmatpush1.bf16.msra.mxu0 0
      %1217 = vmatprep.subr.bf16.mxu0 0
      %1218 = vmatpush1.bf16.msra.mxu0 0
      %1219 = vmatprep.subr.bf16.mxu0 0
      %1220 = vmatpush1.bf16.msra.mxu0 0
      %1221 = vmatprep.subr.bf16.mxu0 0
      %1222 = vmatpush1.bf16.msra.mxu0 0
      %1223 = vmatprep.subr.bf16.mxu0 0
      %1224 = vmatpush1.bf16.msra.mxu0 0
      %1225 = vmatprep.subr.bf16.mxu0 0
      %1226 = vmatpush1.bf16.msra.mxu0 0
      %1227 = vmatprep.subr.bf16.mxu0 0
      %1228 = vmatpush1.bf16.msra.mxu0 0
      %1229 = vmatprep.subr.bf16.mxu0 0
      %1230 = vmatpush1.bf16.msra.mxu0 0
      %1231 = vmatprep.subr.bf16.mxu0 0
      %1232 = vmatpush1.bf16.msra.mxu0 0
      %1233 = vmatprep.subr.bf16.mxu0 0
      %1234 = vmatpush1.bf16.msra.mxu0 0
      %1235 = vmatprep.subr.bf16.mxu0 0
      %1236 = vmatpush1.bf16.msra.mxu0 0
      %1237 = vmatprep.subr.bf16.mxu0 0
      %1238 = vmatpush1.bf16.msra.mxu0 0
      %1239 = vmatprep.mubr.bf16.mxu0 0
      %1240 = vmatmul.mubr.bf16.gmra.mrb[0].mxu0 %v1205
      %v1241 = vpop.f32.mrb[0].mxu0
      %v1242 = vadd.f32 0.0, %v1241
      %v1243 = vpop.f32.mrb[0].mxu0
      %v1244 = vpop.f32.mrb[0].mxu0
      %v1245 = vpop.f32.mrb[0].mxu0
      %1246 = vdwg.mxu0
      %v1251 = vunpack.c.l.b16 %v946
      %v1252 = vunpack.c.l.b16 %v947
      %v1253 = vunpack.c.l.b16 %v948
      %v1254 = vunpack.c.l.b16 %v949
      %v1255 = vpack.c.b16 %v1252, %v1251
      %v1256 = vpack.c.b16 %v1254, %v1253
      %v1260 = vsel %vm722, %v945, 0
      %1262 = vmatprep.subr.bf16.mxu0 0
      %1263 = vmatpush1.bf16.msra.mxu0 %v1255
      %1264 = vmatprep.subr.bf16.mxu0 0
      %1265 = vmatpush1.bf16.msra.mxu0 %v1256
      %1266 = vmatprep.subr.bf16.mxu0 0
      %1267 = vmatpush1.bf16.msra.mxu0 0
      %1268 = vmatprep.subr.bf16.mxu0 0
      %1269 = vmatpush1.bf16.msra.mxu0 0
      %1270 = vmatprep.subr.bf16.mxu0 0
      %1271 = vmatpush1.bf16.msra.mxu0 0
      %1272 = vmatprep.subr.bf16.mxu0 0
      %1273 = vmatpush1.bf16.msra.mxu0 0
      %1274 = vmatprep.subr.bf16.mxu0 0
      %1275 = vmatpush1.bf16.msra.mxu0 0
      %1276 = vmatprep.subr.bf16.mxu0 0
      %1277 = vmatpush1.bf16.msra.mxu0 0
      %1278 = vmatprep.subr.bf16.mxu0 0
      %1279 = vmatpush1.bf16.msra.mxu0 0
      %1280 = vmatprep.subr.bf16.mxu0 0
      %1281 = vmatpush1.bf16.msra.mxu0 0
      %1282 = vmatprep.subr.bf16.mxu0 0
      %1283 = vmatpush1.bf16.msra.mxu0 0
      %1284 = vmatprep.subr.bf16.mxu0 0
      %1285 = vmatpush1.bf16.msra.mxu0 0
      %1286 = vmatprep.subr.bf16.mxu0 0
      %1287 = vmatpush1.bf16.msra.mxu0 0
      %1288 = vmatprep.subr.bf16.mxu0 0
      %1289 = vmatpush1.bf16.msra.mxu0 0
      %1290 = vmatprep.subr.bf16.mxu0 0
      %1291 = vmatpush1.bf16.msra.mxu0 0
      %1292 = vmatprep.subr.bf16.mxu0 0
      %1293 = vmatpush1.bf16.msra.mxu0 0
      %1294 = vmatprep.mubr.bf16.mxu0 0
      %1295 = vmatmul.mubr.bf16.gmra.mrb[0].mxu0 %v1260
      %v1296 = vpop.f32.mrb[0].mxu0
      %v1297 = vadd.f32 %v1242, %v1296
      %v1298 = vpop.f32.mrb[0].mxu0
      %v1299 = vpop.f32.mrb[0].mxu0
      %v1300 = vpop.f32.mrb[0].mxu0
      %1301 = vdwg.mxu0
      %v1302 = vld [vmem:[%s6] sm:$0x1]
      %v1304 = vlaneseq
      %v1305 = vshrl.u32 %v1304, 7
      %v1306 = vsub.s32 0, %v1305
      %v1307 = vrot.slane %v1302, %v1306
      %v1309 = vadd.f32 %v1297, %v1307
      %v1312 = vunpack.c.l.s4 1983009808
      %v1313 = vunpack.c.0.s8 %v1312
      %v1314 = vlaneseq
      %v1315 = vshrl.u32 %v1314, 7
      %v1316 = vsub.s32 %v1313, %v1315
      %v1317 = vrot.slane %v1309, %v1316
      %v1318 = vcombine.high %v1317, %v1317
      %v1321 = vadd.f32 %v376, %v1317
      %v1322 = vadd.f32 %v377, %v1318
      %vm1323 = vcmask 517120
      %1324 = vst.msk [vmem:[%s368] sm:$0x3] %vm1323, %v1321
      %1325 = vst.msk [vmem:[%s368 + $0x2] sm:$0x3] %vm1323, %v1322
      %v1326 = vld [vmem:[%s7] sm:$0x1]
      %v1327 = vld [vmem:[%s8] sm:$0x1]
      %v1330 = vcombine.low %v1321, %v1322
      %v1332 = vunpack.c.l.s4 1983009808
      %v1333 = vunpack.c.0.s8 %v1332
      %v1334 = vlaneseq
      %v1335 = vshrl.u32 %v1334, 7
      %v1336 = vsub.s32 %v1333, %v1335
      %v1337 = vrot.slane %v1330, %v1336
      %v1339 = vsel %vm391, %v1337, 0.0
      %1340 = vadd.xlane.f32.xlu0 %v1339
      %v1341 = vpop.xlane.xlu0 %1340
      %v1342 = vmul.f32 %v1341, %v395
      %v1345 = vunpack.c.l.s4 269488144
      %v1346 = vunpack.c.0.s8 %v1345
      %v1347 = vlaneseq
      %v1348 = vshrl.u32 %v1347, 7
      %v1349 = vsub.s32 %v1346, %v1348
      %v1350 = vrot.slane %v1342, %v1349
      %v1352 = vunpack.c.l.s4 842150450
      %v1353 = vunpack.c.0.s8 %v1352
      %v1354 = vlaneseq
      %v1355 = vshrl.u32 %v1354, 7
      %v1356 = vsub.s32 %v1353, %v1355
      %v1357 = vrot.slane %v1342, %v1356
      %v1360 = vsub.f32 %v1321, %v1350
      %v1361 = vsub.f32 %v1322, %v1357
      %v1362 = vmul.f32 %v1360, %v1360
      %v1363 = vmul.f32 %v1361, %v1361
      %v1366 = vcombine.low %v1362, %v1363
      %v1368 = vunpack.c.l.s4 1983009808
      %v1369 = vunpack.c.0.s8 %v1368
      %v1370 = vlaneseq
      %v1371 = vshrl.u32 %v1370, 7
      %v1372 = vsub.s32 %v1369, %v1371
      %v1373 = vrot.slane %v1366, %v1372
      %v1375 = vsel %vm391, %v1373, 0.0
      %1376 = vadd.xlane.f32.xlu0 %v1375
      %v1377 = vpop.xlane.xlu0 %1376
      %v1378 = vmul.f32 %v1377, %v395
      %v1379 = vadd.f32 %v1378, 1e-05
      %v1380 = vrsqrt.pop %v1379
      %v1383 = vunpack.c.l.s4 269488144
      %v1384 = vunpack.c.0.s8 %v1383
      %v1385 = vlaneseq
      %v1386 = vshrl.u32 %v1385, 7
      %v1387 = vsub.s32 %v1384, %v1386
      %v1388 = vrot.slane %v1380, %v1387
      %v1390 = vunpack.c.l.s4 842150450
      %v1391 = vunpack.c.0.s8 %v1390
      %v1392 = vlaneseq
      %v1393 = vshrl.u32 %v1392, 7
      %v1394 = vsub.s32 %v1391, %v1393
      %v1395 = vrot.slane %v1380, %v1394
      %v1398 = vmul.f32 %v1360, %v1388
      %v1399 = vmul.f32 %v1361, %v1395
      %v1401 = vlaneseq
      %v1402 = vshrl.u32 %v1401, 7
      %v1403 = vsub.s32 0, %v1402
      %v1404 = vrot.slane %v1326, %v1403
      %v1406 = vunpack.c.l.s4 1983009808
      %v1407 = vunpack.c.0.s8 %v1406
      %v1408 = vlaneseq
      %v1409 = vshrl.u32 %v1408, 7
      %v1410 = vsub.s32 %v1407, %v1409
      %v1411 = vrot.slane %v1404, %v1410
      %v1412 = vcombine.high %v1411, %v1411
      %v1415 = vmul.f32 %v1398, %v1411
      %v1416 = vmul.f32 %v1399, %v1412
      %v1418 = vlaneseq
      %v1419 = vshrl.u32 %v1418, 7
      %v1420 = vsub.s32 0, %v1419
      %v1421 = vrot.slane %v1327, %v1420
      %v1423 = vunpack.c.l.s4 1983009808
      %v1424 = vunpack.c.0.s8 %v1423
      %v1425 = vlaneseq
      %v1426 = vshrl.u32 %v1425, 7
      %v1427 = vsub.s32 %v1424, %v1426
      %v1428 = vrot.slane %v1421, %v1427
      %v1429 = vcombine.high %v1428, %v1428
      %v1432 = vadd.f32 %v1415, %v1428
      %v1433 = vadd.f32 %v1416, %v1429
      %v1434 = vpack.c.bf16 %v1432, %v1432
      %v1435 = vpack.c.bf16 %v1433, %v1433
      %vm1436 = vcmask 516096
      %1437 = vst.msk [vmem:[%s373] sm:$0x1] %vm1436, %v1434
      %1438 = vst.msk [vmem:[%s373 + $0x1] sm:$0x1] %vm1436, %v1435
      %s1439 = smul.u32 2, %s22
      %p1440 = scmp.lt.s32.totalorder %s1439, 3
      %s1441 = scalar_select %p1440, %s1439, 3
      %s1442 = smul.addr %s1441, 2
      %s1443 = scalar_lea.vmem %s9, %s1442
      %s1444 = smul.u32 2, %s22
      %p1445 = scmp.lt.s32.totalorder %s1444, 3
      %s1446 = scalar_select %p1445, %s1444, 3
      %s1447 = scalar_lea.vmem %s10, %s1446
      // Predicated region
      $region57: #{parallel_block_cat_forward.8} parent=55 // pred_check
        %p1448 = pneg %p234
      $region58: #{parallel_block_cat_forward.8} parent=55 // pred_check_branch
        %1450 = sbr.rel (%p1448) target = $region60
      $region59: #{parallel_block_cat_forward.8} parent=55 // pred_region
        %s1451 = smul.u32 2, %s22
      $region60: #{parallel_block_cat_forward.8} parent=55 // pred_fallthru
        _
      // Predicated region
      $region61: #{parallel_block_cat_forward.8} parent=55 // pred_check
        %p1452 = pneg %p260
      $region62: #{parallel_block_cat_forward.8} parent=55 // pred_check_branch
        %1454 = sbr.rel (%p1452) target = $region64
      $region63: #{parallel_block_cat_forward.8} parent=55 // pred_region
        %s1455 = smul.u32 2, %s22
      $region64: #{parallel_block_cat_forward.8} parent=55 // pred_fallthru
        _
    $region56: #{parallel_block_cat_forward.8} parent=5 // pred_fallthru
      _
    %p1456 = scmp.le.s32.totalorder 2, %s17
    // Predicated region
    $region65: #{parallel_block_cat_forward.8} parent=5 // pred_check
      %p1457 = pneg %p1456
    $region66: #{parallel_block_cat_forward.8} parent=5 // pred_check_branch
      %1459 = sbr.rel (%p1457) target = $region68
    $region67: #{parallel_block_cat_forward.8} parent=5 // pred_region
      %s1460 = ssub.s32 %s17, 2
      // Predicated region
      $region69: #{parallel_block_cat_forward.8} parent=67 // pred_check
        %p1461 = pneg %p240
      $region70: #{parallel_block_cat_forward.8} parent=67 // pred_check_branch
        %1463 = sbr.rel (%p1461) target = $region72
      $region71: #{parallel_block_cat_forward.8} parent=67 // pred_region
        %s1464 = smul.u32 2, %s23
        %p1465 = scmp.lt.s32.totalorder %s1464, 3
        %s1466 = scalar_select %p1465, %s1464, 3
        %s1467 = smul.addr %s1466, 2
        %s1468 = scalar_lea.vmem %s9, %s1467
      $region72: #{parallel_block_cat_forward.8} parent=67 // pred_fallthru
        _
      // Predicated region
      $region73: #{parallel_block_cat_forward.8} parent=67 // pred_check
        %p1469 = pneg %p266
      $region74: #{parallel_block_cat_forward.8} parent=67 // pred_check_branch
        %1471 = sbr.rel (%p1469) target = $region76
      $region75: #{parallel_block_cat_forward.8} parent=67 // pred_region
        %s1472 = smul.u32 2, %s23
        %p1473 = scmp.lt.s32.totalorder %s1472, 3
        %s1474 = scalar_select %p1473, %s1472, 3
        %s1475 = scalar_lea.vmem %s10, %s1474
      $region76: #{parallel_block_cat_forward.8} parent=67 // pred_fallthru
        _
    $region68: #{parallel_block_cat_forward.8} parent=5 // pred_fallthru
      _
  $region6: #{parallel_block_cat_forward.8} parent=0 // loop_footer
    %s21 = sadd.s32 1, %s17
  $region7: #{parallel_block_cat_forward.8} parent=0 // loop_footer_branch
    %16 = sbr.rel target = $region3
  $region8: #{parallel_block_cat_forward.8} parent=0 // loop_exit
    _

// kernel: parallel_block_cat_forward.7
$region0: #{parallel_block_cat_forward.7}
  #allocation0 [shape = 'u32[]', space=smem, size = 0x4, offset = 0x4, fixed_abs, tag = 'smem constant byte address 0x4 - core index']
  #allocation1 [shape = 'u32[144,128]{1,0:T(1,128)}', space=vmem, size = 0x12000, scoped, tag = 'internal scratch']
  %s0 = inlined_call_operand.vmem [shape: f32[4,4,32], index: 0, kind: input, shape index: {}]
  %s1 = inlined_call_operand.vmem [shape: f32[1,32], index: 1, kind: input, shape index: {}]
  %s2 = inlined_call_operand.vmem [shape: f32[1,32], index: 2, kind: input, shape index: {}]
  %s3 = inlined_call_operand.vmem [shape: bf16[32,384], index: 3, kind: input, shape index: {}]
  %s4 = inlined_call_operand.vmem [shape: f32[1,384], index: 4, kind: input, shape index: {}]
  %s5 = inlined_call_operand.vmem [shape: bf16[32,32], index: 5, kind: input, shape index: {}]
  %s6 = inlined_call_operand.vmem [shape: f32[1,32], index: 6, kind: input, shape index: {}]
  %s7 = inlined_call_operand.vmem [shape: f32[1,32], index: 7, kind: input, shape index: {}]
  %s8 = inlined_call_operand.vmem [shape: f32[1,32], index: 8, kind: input, shape index: {}]
  %s9 = inlined_call_operand.vmem [shape: f32[4,4,32], index: 9, kind: output, shape index: {0}]
  %s10 = inlined_call_operand.vmem [shape: bf16[4,4,32], index: 10, kind: output, shape index: {1}]
  %11 = xla_tuple %s9, %s10
  %s12 = sld [smem:[#allocation0]]
  $region77: #{parallel_block_cat_forward.7} parent=0
    _
  %s14 = ssub.s32 1, %s12
  %s15 = scalar_select 0, %s14, %s12
  loop: start=0, step=1, limit=4
  $region2: #{parallel_block_cat_forward.7} parent=0 // loop_pre_header
    _
  $region3: #{parallel_block_cat_forward.7} parent=0 // loop_header
    %s17 = sphi 0, %s21
    %p18 = scmp.ge.s32.totalorder %s17, 4
    %s27 = sphi 0, %s29
    %s30 = sphi 0, %s27
    %s31 = sphi 0, %s30
    %s47 = sphi 0, %s31
    %s51 = sphi 0, %s51
    %s53 = sphi 0, %s51
    %s54 = sphi 0, %s53
    %s68 = sphi 0, %s54
    %s72 = sphi 0, %s72
    %s74 = sphi 0, %s72
    %s75 = sphi 0, %s74
    %s89 = sphi 0, %s75
    %s93 = sphi 0, %s93
    %s95 = sphi 0, %s93
    %s96 = sphi 0, %s95
    %s110 = sphi 0, %s96
    %s114 = sphi 0, %s114
    %s116 = sphi 0, %s114
    %s117 = sphi 0, %s116
    %s131 = sphi 0, %s117
    %s135 = sphi 0, %s135
    %s137 = sphi 0, %s135
    %s138 = sphi 0, %s137
    %s152 = sphi 0, %s138
    %s156 = sphi 0, %s156
    %s158 = sphi 0, %s156
    %s159 = sphi 0, %s158
    %s173 = sphi 0, %s159
    %s177 = sphi 0, %s177
    %s179 = sphi 0, %s177
    %s180 = sphi 0, %s179
    %s194 = sphi 0, %s180
    %s198 = sphi 0, %s198
    %s200 = sphi 0, %s198
    %s201 = sphi 0, %s200
    %s215 = sphi 0, %s201
    %s221 = sphi 0, %s223
    %s224 = sphi 0, %s221
    %s225 = sphi 0, %s224
    %s241 = sphi 0, %s225
    %s247 = sphi 0, %s249
    %s250 = sphi 0, %s247
    %s251 = sphi 0, %s250
    %s267 = sphi 0, %s251
  $region4: #{parallel_block_cat_forward.7} parent=0 // loop_header_branch
    %20 = sbr.rel (%p18) target = $region8
  $region5: #{parallel_block_cat_forward.7} parent=0 // loop_body
    %s22 = ssub.s32 %s17, 1
    %s23 = ssub.s32 %s17, 2
    %s24 = sadd.s32 %s17, 1
    %s25 = ssub.s32 %s17, %s24
    %p26 = scmp.eq.s32.totalorder %s25, 0
    %s28 = sadd.s32 %s27, 1
    %s29 = scalar_select %p26, %s27, %s28
    %p32 = pneg %p26
    %p33 = scmp.eq.s32.totalorder %s17, 1
    %p34 = por %p32, %p33
    %p35 = scmp.ne.s32.totalorder %s27, %s30
    %p36 = scmp.eq.s32.totalorder %s17, 0
    %p37 = por %p35, %p36
    %p38 = scmp.ne.s32.totalorder %s27, %s30
    %p39 = scmp.eq.s32.totalorder %s22, 1
    %p40 = por %p38, %p39
    %p41 = scmp.ne.s32.totalorder %s30, %s31
    %p42 = scmp.eq.s32.totalorder %s22, 0
    %p43 = por %p41, %p42
    %p44 = scmp.ne.s32.totalorder %s30, %s31
    %p45 = scmp.eq.s32.totalorder %s23, 1
    %p46 = por %p44, %p45
    %p48 = scmp.ne.s32.totalorder %s31, %s47
    %p49 = scmp.eq.s32.totalorder %s23, 0
    %p50 = por %p48, %p49
    %s52 = sadd.s32 %s51, 1
    %p55 = scmp.eq.s32.totalorder %s17, 1
    %p56 = scmp.ne.s32.totalorder %s51, %s53
    %p57 = scmp.eq.s32.totalorder %s17, 0
    %p58 = por %p56, %p57
    %p59 = scmp.ne.s32.totalorder %s51, %s53
    %p60 = scmp.eq.s32.totalorder %s22, 1
    %p61 = por %p59, %p60
    %p62 = scmp.ne.s32.totalorder %s53, %s54
    %p63 = scmp.eq.s32.totalorder %s22, 0
    %p64 = por %p62, %p63
    %p65 = scmp.ne.s32.totalorder %s53, %s54
    %p66 = scmp.eq.s32.totalorder %s23, 1
    %p67 = por %p65, %p66
    %p69 = scmp.ne.s32.totalorder %s54, %s68
    %p70 = scmp.eq.s32.totalorder %s23, 0
    %p71 = por %p69, %p70
    %s73 = sadd.s32 %s72, 1
    %p76 = scmp.eq.s32.totalorder %s17, 1
    %p77 = scmp.ne.s32.totalorder %s72, %s74
    %p78 = scmp.eq.s32.totalorder %s17, 0
    %p79 = por %p77, %p78
    %p80 = scmp.ne.s32.totalorder %s72, %s74
    %p81 = scmp.eq.s32.totalorder %s22, 1
    %p82 = por %p80, %p81
    %p83 = scmp.ne.s32.totalorder %s74, %s75
    %p84 = scmp.eq.s32.totalorder %s22, 0
    %p85 = por %p83, %p84
    %p86 = scmp.ne.s32.totalorder %s74, %s75
    %p87 = scmp.eq.s32.totalorder %s23, 1
    %p88 = por %p86, %p87
    %p90 = scmp.ne.s32.totalorder %s75, %s89
    %p91 = scmp.eq.s32.totalorder %s23, 0
    %p92 = por %p90, %p91
    %s94 = sadd.s32 %s93, 1
    %p97 = scmp.eq.s32.totalorder %s17, 1
    %p98 = scmp.ne.s32.totalorder %s93, %s95
    %p99 = scmp.eq.s32.totalorder %s17, 0
    %p100 = por %p98, %p99
    %p101 = scmp.ne.s32.totalorder %s93, %s95
    %p102 = scmp.eq.s32.totalorder %s22, 1
    %p103 = por %p101, %p102
    %p104 = scmp.ne.s32.totalorder %s95, %s96
    %p105 = scmp.eq.s32.totalorder %s22, 0
    %p106 = por %p104, %p105
    %p107 = scmp.ne.s32.totalorder %s95, %s96
    %p108 = scmp.eq.s32.totalorder %s23, 1
    %p109 = por %p107, %p108
    %p111 = scmp.ne.s32.totalorder %s96, %s110
    %p112 = scmp.eq.s32.totalorder %s23, 0
    %p113 = por %p111, %p112
    %s115 = sadd.s32 %s114, 1
    %p118 = scmp.eq.s32.totalorder %s17, 1
    %p119 = scmp.ne.s32.totalorder %s114, %s116
    %p120 = scmp.eq.s32.totalorder %s17, 0
    %p121 = por %p119, %p120
    %p122 = scmp.ne.s32.totalorder %s114, %s116
    %p123 = scmp.eq.s32.totalorder %s22, 1
    %p124 = por %p122, %p123
    %p125 = scmp.ne.s32.totalorder %s116, %s117
    %p126 = scmp.eq.s32.totalorder %s22, 0
    %p127 = por %p125, %p126
    %p128 = scmp.ne.s32.totalorder %s116, %s117
    %p129 = scmp.eq.s32.totalorder %s23, 1
    %p130 = por %p128, %p129
    %p132 = scmp.ne.s32.totalorder %s117, %s131
    %p133 = scmp.eq.s32.totalorder %s23, 0
    %p134 = por %p132, %p133
    %s136 = sadd.s32 %s135, 1
    %p139 = scmp.eq.s32.totalorder %s17, 1
    %p140 = scmp.ne.s32.totalorder %s135, %s137
    %p141 = scmp.eq.s32.totalorder %s17, 0
    %p142 = por %p140, %p141
    %p143 = scmp.ne.s32.totalorder %s135, %s137
    %p144 = scmp.eq.s32.totalorder %s22, 1
    %p145 = por %p143, %p144
    %p146 = scmp.ne.s32.totalorder %s137, %s138
    %p147 = scmp.eq.s32.totalorder %s22, 0
    %p148 = por %p146, %p147
    %p149 = scmp.ne.s32.totalorder %s137, %s138
    %p150 = scmp.eq.s32.totalorder %s23, 1
    %p151 = por %p149, %p150
    %p153 = scmp.ne.s32.totalorder %s138, %s152
    %p154 = scmp.eq.s32.totalorder %s23, 0
    %p155 = por %p153, %p154
    %s157 = sadd.s32 %s156, 1
    %p160 = scmp.eq.s32.totalorder %s17, 1
    %p161 = scmp.ne.s32.totalorder %s156, %s158
    %p162 = scmp.eq.s32.totalorder %s17, 0
    %p163 = por %p161, %p162
    %p164 = scmp.ne.s32.totalorder %s156, %s158
    %p165 = scmp.eq.s32.totalorder %s22, 1
    %p166 = por %p164, %p165
    %p167 = scmp.ne.s32.totalorder %s158, %s159
    %p168 = scmp.eq.s32.totalorder %s22, 0
    %p169 = por %p167, %p168
    %p170 = scmp.ne.s32.totalorder %s158, %s159
    %p171 = scmp.eq.s32.totalorder %s23, 1
    %p172 = por %p170, %p171
    %p174 = scmp.ne.s32.totalorder %s159, %s173
    %p175 = scmp.eq.s32.totalorder %s23, 0
    %p176 = por %p174, %p175
    %s178 = sadd.s32 %s177, 1
    %p181 = scmp.eq.s32.totalorder %s17, 1
    %p182 = scmp.ne.s32.totalorder %s177, %s179
    %p183 = scmp.eq.s32.totalorder %s17, 0
    %p184 = por %p182, %p183
    %p185 = scmp.ne.s32.totalorder %s177, %s179
    %p186 = scmp.eq.s32.totalorder %s22, 1
    %p187 = por %p185, %p186
    %p188 = scmp.ne.s32.totalorder %s179, %s180
    %p189 = scmp.eq.s32.totalorder %s22, 0
    %p190 = por %p188, %p189
    %p191 = scmp.ne.s32.totalorder %s179, %s180
    %p192 = scmp.eq.s32.totalorder %s23, 1
    %p193 = por %p191, %p192
    %p195 = scmp.ne.s32.totalorder %s180, %s194
    %p196 = scmp.eq.s32.totalorder %s23, 0
    %p197 = por %p195, %p196
    %s199 = sadd.s32 %s198, 1
    %p202 = scmp.eq.s32.totalorder %s17, 1
    %p203 = scmp.ne.s32.totalorder %s198, %s200
    %p204 = scmp.eq.s32.totalorder %s17, 0
    %p205 = por %p203, %p204
    %p206 = scmp.ne.s32.totalorder %s198, %s200
    %p207 = scmp.eq.s32.totalorder %s22, 1
    %p208 = por %p206, %p207
    %p209 = scmp.ne.s32.totalorder %s200, %s201
    %p210 = scmp.eq.s32.totalorder %s22, 0
    %p211 = por %p209, %p210
    %p212 = scmp.ne.s32.totalorder %s200, %s201
    %p213 = scmp.eq.s32.totalorder %s23, 1
    %p214 = por %p212, %p213
    %p216 = scmp.ne.s32.totalorder %s201, %s215
    %p217 = scmp.eq.s32.totalorder %s23, 0
    %p218 = por %p216, %p217
    %s219 = ssub.s32 %s17, %s24
    %p220 = scmp.eq.s32.totalorder %s219, 0
    %s222 = sadd.s32 %s221, 1
    %s223 = scalar_select %p220, %s221, %s222
    %p226 = pneg %p220
    %p227 = scmp.eq.s32.totalorder %s17, 1
    %p228 = por %p226, %p227
    %p229 = scmp.ne.s32.totalorder %s221, %s224
    %p230 = scmp.eq.s32.totalorder %s17, 0
    %p231 = por %p229, %p230
    %p232 = scmp.ne.s32.totalorder %s221, %s224
    %p233 = scmp.eq.s32.totalorder %s22, 1
    %p234 = por %p232, %p233
    %p235 = scmp.ne.s32.totalorder %s224, %s225
    %p236 = scmp.eq.s32.totalorder %s22, 0
    %p237 = por %p235, %p236
    %p238 = scmp.ne.s32.totalorder %s224, %s225
    %p239 = scmp.eq.s32.totalorder %s23, 1
    %p240 = por %p238, %p239
    %p242 = scmp.ne.s32.totalorder %s225, %s241
    %p243 = scmp.eq.s32.totalorder %s23, 0
    %p244 = por %p242, %p243
    %s245 = ssub.s32 %s17, %s24
    %p246 = scmp.eq.s32.totalorder %s245, 0
    %s248 = sadd.s32 %s247, 1
    %s249 = scalar_select %p246, %s247, %s248
    %p252 = pneg %p246
    %p253 = scmp.eq.s32.totalorder %s17, 1
    %p254 = por %p252, %p253
    %p255 = scmp.ne.s32.totalorder %s247, %s250
    %p256 = scmp.eq.s32.totalorder %s17, 0
    %p257 = por %p255, %p256
    %p258 = scmp.ne.s32.totalorder %s247, %s250
    %p259 = scmp.eq.s32.totalorder %s22, 1
    %p260 = por %p258, %p259
    %p261 = scmp.ne.s32.totalorder %s250, %s251
    %p262 = scmp.eq.s32.totalorder %s22, 0
    %p263 = por %p261, %p262
    %p264 = scmp.ne.s32.totalorder %s250, %s251
    %p265 = scmp.eq.s32.totalorder %s23, 1
    %p266 = por %p264, %p265
    %p268 = scmp.ne.s32.totalorder %s251, %s267
    %p269 = scmp.eq.s32.totalorder %s23, 0
    %p270 = por %p268, %p269
    %p271 = scmp.le.s32.totalorder 1, %s17
    %p272 = scmp.lt.s32.totalorder %s17, 3
    %p273 = pnand %p271, %p272
    %p274 = pneg %p273
    // Predicated region
    $region9: #{parallel_block_cat_forward.7} parent=5 // pred_check
      _
    $region10: #{parallel_block_cat_forward.7} parent=5 // pred_check_branch
      %276 = sbr.rel (%p273) target = $region12
    $region11: #{parallel_block_cat_forward.7} parent=5 // pred_region
      %s277 = ssub.s32 %s17, 1
      // Predicated region
      $region13: #{parallel_block_cat_forward.7} parent=11 // pred_check
        %p278 = pneg %p64
      $region14: #{parallel_block_cat_forward.7} parent=11 // pred_check_branch
        %280 = sbr.rel (%p278) target = $region16
      $region15: #{parallel_block_cat_forward.7} parent=11 // pred_region
        _
      $region16: #{parallel_block_cat_forward.7} parent=11 // pred_fallthru
        _
      // Predicated region
      $region17: #{parallel_block_cat_forward.7} parent=11 // pred_check
        %p281 = pneg %p85
      $region18: #{parallel_block_cat_forward.7} parent=11 // pred_check_branch
        %283 = sbr.rel (%p281) target = $region20
      $region19: #{parallel_block_cat_forward.7} parent=11 // pred_region
        _
      $region20: #{parallel_block_cat_forward.7} parent=11 // pred_fallthru
        _
      // Predicated region
      $region21: #{parallel_block_cat_forward.7} parent=11 // pred_check
        %p284 = pneg %p106
      $region22: #{parallel_block_cat_forward.7} parent=11 // pred_check_branch
        %286 = sbr.rel (%p284) target = $region24
      $region23: #{parallel_block_cat_forward.7} parent=11 // pred_region
        _
      $region24: #{parallel_block_cat_forward.7} parent=11 // pred_fallthru
        _
      // Predicated region
      $region25: #{parallel_block_cat_forward.7} parent=11 // pred_check
        %p287 = pneg %p127
      $region26: #{parallel_block_cat_forward.7} parent=11 // pred_check_branch
        %289 = sbr.rel (%p287) target = $region28
      $region27: #{parallel_block_cat_forward.7} parent=11 // pred_region
        _
      $region28: #{parallel_block_cat_forward.7} parent=11 // pred_fallthru
        _
      // Predicated region
      $region29: #{parallel_block_cat_forward.7} parent=11 // pred_check
        %p290 = pneg %p148
      $region30: #{parallel_block_cat_forward.7} parent=11 // pred_check_branch
        %292 = sbr.rel (%p290) target = $region32
      $region31: #{parallel_block_cat_forward.7} parent=11 // pred_region
        _
      $region32: #{parallel_block_cat_forward.7} parent=11 // pred_fallthru
        _
      // Predicated region
      $region33: #{parallel_block_cat_forward.7} parent=11 // pred_check
        %p293 = pneg %p169
      $region34: #{parallel_block_cat_forward.7} parent=11 // pred_check_branch
        %295 = sbr.rel (%p293) target = $region36
      $region35: #{parallel_block_cat_forward.7} parent=11 // pred_region
        _
      $region36: #{parallel_block_cat_forward.7} parent=11 // pred_fallthru
        _
      // Predicated region
      $region37: #{parallel_block_cat_forward.7} parent=11 // pred_check
        %p296 = pneg %p190
      $region38: #{parallel_block_cat_forward.7} parent=11 // pred_check_branch
        %298 = sbr.rel (%p296) target = $region40
      $region39: #{parallel_block_cat_forward.7} parent=11 // pred_region
        _
      $region40: #{parallel_block_cat_forward.7} parent=11 // pred_fallthru
        _
      // Predicated region
      $region41: #{parallel_block_cat_forward.7} parent=11 // pred_check
        %p299 = pneg %p211
      $region42: #{parallel_block_cat_forward.7} parent=11 // pred_check_branch
        %301 = sbr.rel (%p299) target = $region44
      $region43: #{parallel_block_cat_forward.7} parent=11 // pred_region
        _
      $region44: #{parallel_block_cat_forward.7} parent=11 // pred_fallthru
        _
    $region12: #{parallel_block_cat_forward.7} parent=5 // pred_fallthru
      _
    %p302 = scmp.lt.s32.totalorder %s17, 2
    // Predicated region
    $region45: #{parallel_block_cat_forward.7} parent=5 // pred_check
      %p303 = pneg %p302
    $region46: #{parallel_block_cat_forward.7} parent=5 // pred_check_branch
      %305 = sbr.rel (%p303) target = $region48
    $region47: #{parallel_block_cat_forward.7} parent=5 // pred_region
      // Predicated region
      $region49: #{parallel_block_cat_forward.7} parent=47 // pred_check
        %p306 = pneg %p37
      $region50: #{parallel_block_cat_forward.7} parent=47 // pred_check_branch
        %308 = sbr.rel (%p306) target = $region52
      $region51: #{parallel_block_cat_forward.7} parent=47 // pred_region
        %s309 = smul.u32 2, %s17
        %p310 = scmp.lt.s32.totalorder %s309, 3
        %s311 = scalar_select %p310, %s309, 3
        %s312 = smul.addr %s311, 4
        %s313 = scalar_lea.vmem %s0, %s312
        %s314 = smul.u32 2, %s17
      $region52: #{parallel_block_cat_forward.7} parent=47 // pred_fallthru
        _
    $region48: #{parallel_block_cat_forward.7} parent=5 // pred_fallthru
      _
    %p315 = scmp.le.s32.totalorder 1, %s17
    %p316 = scmp.lt.s32.totalorder %s17, 3
    %p317 = pnand %p315, %p316
    %p318 = pneg %p317
    // Predicated region
    $region53: #{parallel_block_cat_forward.7} parent=5 // pred_check
      _
    $region54: #{parallel_block_cat_forward.7} parent=5 // pred_check_branch
      %320 = sbr.rel (%p317) target = $region56
    $region55: #{parallel_block_cat_forward.7} parent=5 // pred_region
      %s321 = ssub.s32 %s17, 1
      %s322 = smul.u32 2, %s22
      %p323 = scmp.lt.s32.totalorder %s322, 3
      %s324 = scalar_select %p323, %s322, 3
      %s325 = smul.addr %s324, 4
      %s326 = scalar_lea.vmem %s0, %s325
      %p327 = pneg %p43
      %p328 = pneg %p40
      %p329 = pneg %p64
      %p330 = pneg %p61
      %p331 = pneg %p85
      %p332 = pneg %p82
      %p333 = pneg %p106
      %p334 = pneg %p103
      %p335 = pneg %p127
      %p336 = pneg %p124
      %p337 = pneg %p148
      %p338 = pneg %p145
      %p339 = pneg %p169
      %p340 = pneg %p166
      %p341 = pneg %p190
      %p342 = pneg %p187
      %p343 = pneg %p211
      %p344 = pneg %p208
      %p345 = pneg %p237
      %p346 = pneg %p234
      %s347 = smul.u32 2, %s22
      %p348 = scmp.lt.s32.totalorder %s347, 3
      %s349 = scalar_select %p348, %s347, 3
      %s350 = smul.addr %s349, 4
      %s351 = scalar_lea.vmem %s9, %s350
      %p352 = pneg %p263
      %p353 = pneg %p260
      %s354 = smul.u32 2, %s22
      %p355 = scmp.lt.s32.totalorder %s354, 3
      %s356 = scalar_select %p355, %s354, 3
      %s357 = smul.addr %s356, 2
      %s358 = scalar_lea.vmem %s10, %s357
      %s359 = smul.u32 2, %s22
      %p360 = scmp.lt.s32.totalorder %s359, 3
      %s361 = scalar_select %p360, %s359, 3
      %s362 = smul.addr %s361, 4
      %s363 = scalar_lea.vmem %s0, %s362
      %s364 = smul.u32 2, %s22
      %s365 = smul.u32 2, %s22
      %p366 = scmp.lt.s32.totalorder %s365, 3
      %s367 = scalar_select %p366, %s365, 3
      %s368 = smul.addr %s367, 4
      %s369 = scalar_lea.vmem %s9, %s368
      %s370 = smul.u32 2, %s22
      %s371 = smul.u32 2, %s22
      %p372 = scmp.lt.s32.totalorder %s371, 3
      %s373 = scalar_select %p372, %s371, 3
      %s374 = smul.addr %s373, 2
      %s375 = scalar_lea.vmem %s10, %s374
      %s376 = smul.u32 2, %s22
      %v378 = vld [vmem:[%s363] sm:$0xf]
      %v379 = vld [vmem:[%s363 + $0x4] sm:$0xf]
      %v380 = vld [vmem:[%s1] sm:$0x1]
      %v381 = vld [vmem:[%s2] sm:$0x1]
      %v384 = vcombine.low %v378, %v379
      %vm386 = vcmask 261120
      %v387 = vsel %vm386, %v384, 0.0
      %388 = vadd.xlane.f32.xlu0 %v387
      %v389 = vpop.xlane.xlu0 %388
      %v390 = vrcp.pop 32.0
      %v391 = vmul.f32 %v389, %v390
      %v394 = vunpack.c.l.s4 839922192
      %v395 = vunpack.c.0.s8 %v394
      %v396 = vlaneseq
      %v397 = vshrl.u32 %v396, 7
      %v398 = vsub.s32 %v395, %v397
      %v399 = vrot.slane %v391, %v398
      %v401 = vunpack.c.l.s4 1985246804
      %v402 = vunpack.c.0.s8 %v401
      %v403 = vlaneseq
      %v404 = vshrl.u32 %v403, 7
      %v405 = vsub.s32 %v402, %v404
      %v406 = vrot.slane %v391, %v405
      %v409 = vsub.f32 %v378, %v399
      %v410 = vsub.f32 %v379, %v406
      %v411 = vmul.f32 %v409, %v409
      %v412 = vmul.f32 %v410, %v410
      %v415 = vcombine.low %v411, %v412
      %v417 = vsel %vm386, %v415, 0.0
      %418 = vadd.xlane.f32.xlu0 %v417
      %v419 = vpop.xlane.xlu0 %418
      %v420 = vmul.f32 %v419, %v390
      %v421 = vadd.f32 %v420, 1e-05
      %v422 = vrsqrt.pop %v421
      %v425 = vunpack.c.l.s4 839922192
      %v426 = vunpack.c.0.s8 %v425
      %v427 = vlaneseq
      %v428 = vshrl.u32 %v427, 7
      %v429 = vsub.s32 %v426, %v428
      %v430 = vrot.slane %v422, %v429
      %v432 = vunpack.c.l.s4 1985246804
      %v433 = vunpack.c.0.s8 %v432
      %v434 = vlaneseq
      %v435 = vshrl.u32 %v434, 7
      %v436 = vsub.s32 %v433, %v435
      %v437 = vrot.slane %v422, %v436
      %v440 = vmul.f32 %v409, %v430
      %v441 = vmul.f32 %v410, %v437
      %v443 = vlaneseq
      %v444 = vshrl.u32 %v443, 7
      %v445 = vsub.s32 0, %v444
      %v446 = vrot.slane %v380, %v445
      %v448 = vcombine.high %v446, %v446
      %v450 = vmul.f32 %v440, %v446
      %v451 = vmul.f32 %v441, %v448
      %v453 = vlaneseq
      %v454 = vshrl.u32 %v453, 7
      %v455 = vsub.s32 0, %v454
      %v456 = vrot.slane %v381, %v455
      %v458 = vcombine.high %v456, %v456
      %v460 = vadd.f32 %v450, %v456
      %v461 = vadd.f32 %v451, %v458
      %v464 = vcombine.low %v460, %v461
      %v466 = vpack.c.bf16 %v464, %v464
      %v467 = vld [vmem:[%s3] sm:$0xff]
      %v468 = vld [vmem:[%s3 + $0x8] sm:$0xf]
      %v469 = vld [vmem:[%s3 + $0xc] sm:$0xff]
      %v470 = vld [vmem:[%s3 + $0x14] sm:$0xf]
      %v471 = vld [vmem:[%s3 + $0x18] sm:$0xff]
      %v472 = vld [vmem:[%s3 + $0x20] sm:$0xf]
      %v473 = vld [vmem:[%s3 + $0x24] sm:$0xff]
      %v474 = vld [vmem:[%s3 + $0x2c] sm:$0xf]
      %v475 = vld [vmem:[%s4] sm:$0x7]
      %v477 = vlaneseq
      %v478 = vshrl.u32 %v477, 7
      %v479 = vsub.s32 0, %v478
      %v480 = vrot.slane %v475, %v479
      %v481 = vlaneseq
      %v482 = vshrl.u32 %v481, 7
      %v483 = vsub.s32 1, %v482
      %v484 = vrot.slane %v475, %v483
      %v485 = vlaneseq
      %v486 = vshrl.u32 %v485, 7
      %v487 = vsub.s32 2, %v486
      %v488 = vrot.slane %v475, %v487
      %v500 = vunpack.c.l.b16 %v467
      %v501 = vunpack.c.h.b16 %v467
      %v502 = vunpack.c.l.b16 %v468
      %v503 = vunpack.c.l.b16 %v469
      %v504 = vunpack.c.h.b16 %v469
      %v505 = vunpack.c.l.b16 %v470
      %v506 = vunpack.c.l.b16 %v471
      %v507 = vunpack.c.h.b16 %v471
      %v508 = vunpack.c.l.b16 %v472
      %v509 = vunpack.c.l.b16 %v473
      %v510 = vunpack.c.h.b16 %v473
      %v511 = vunpack.c.l.b16 %v474
      %v512 = vpack.c.b16 %v503, %v500
      %v513 = vpack.c.b16 %v504, %v501
      %v514 = vpack.c.b16 %v505, %v502
      %v515 = vpack.c.b16 %v509, %v506
      %v516 = vpack.c.b16 %v510, %v507
      %v517 = vpack.c.b16 %v511, %v508
      %v525 = vsel %vm386, %v466, 0
      %527 = vmatprep.subr.bf16.mxu0 %v513
      %528 = vmatpush1.bf16.msra.mxu0 %v512
      %529 = vmatprep.subr.bf16.mxu0 %v516
      %530 = vmatpush1.bf16.msra.mxu0 %v515
      %531 = vmatprep.subr.bf16.mxu0 0
      %532 = vmatpush1.bf16.msra.mxu0 0
      %533 = vmatprep.subr.bf16.mxu0 0
      %534 = vmatpush1.bf16.msra.mxu0 0
      %535 = vmatprep.subr.bf16.mxu0 0
      %536 = vmatpush1.bf16.msra.mxu0 0
      %537 = vmatprep.subr.bf16.mxu0 0
      %538 = vmatpush1.bf16.msra.mxu0 0
      %539 = vmatprep.subr.bf16.mxu0 0
      %540 = vmatpush1.bf16.msra.mxu0 0
      %541 = vmatprep.subr.bf16.mxu0 0
      %542 = vmatpush1.bf16.msra.mxu0 0
      %543 = vmatprep.subr.bf16.mxu0 0
      %544 = vmatpush1.bf16.msra.mxu0 0
      %545 = vmatprep.subr.bf16.mxu0 0
      %546 = vmatpush1.bf16.msra.mxu0 0
      %547 = vmatprep.subr.bf16.mxu0 0
      %548 = vmatpush1.bf16.msra.mxu0 0
      %549 = vmatprep.subr.bf16.mxu0 0
      %550 = vmatpush1.bf16.msra.mxu0 0
      %551 = vmatprep.subr.bf16.mxu0 0
      %552 = vmatpush1.bf16.msra.mxu0 0
      %553 = vmatprep.subr.bf16.mxu0 0
      %554 = vmatpush1.bf16.msra.mxu0 0
      %555 = vmatprep.subr.bf16.mxu0 0
      %556 = vmatpush1.bf16.msra.mxu0 0
      %557 = vmatprep.subr.bf16.mxu0 0
      %558 = vmatpush1.bf16.msra.mxu0 0
      %559 = vmatprep.mubr.bf16.mxu0 0
      %560 = vmatmul.mubr.bf16.gmra.mrb[0].mxu0 %v525
      %v561 = vpop.f32.mrb[0].mxu0
      %v562 = vadd.f32 %v480, %v561
      %v563 = vpop.f32.mrb[0].mxu0
      %v564 = vadd.f32 %v484, %v563
      %v565 = vpop.f32.mrb[0].mxu0
      %v566 = vpop.f32.mrb[0].mxu0
      %567 = vdwg.mxu0
      %568 = vmatprep.subr.bf16.mxu0 0
      %569 = vmatpush1.bf16.msra.mxu0 %v514
      %570 = vmatprep.subr.bf16.mxu0 0
      %571 = vmatpush1.bf16.msra.mxu0 %v517
      %572 = vmatprep.subr.bf16.mxu0 0
      %573 = vmatpush1.bf16.msra.mxu0 0
      %574 = vmatprep.subr.bf16.mxu0 0
      %575 = vmatpush1.bf16.msra.mxu0 0
      %576 = vmatprep.subr.bf16.mxu0 0
      %577 = vmatpush1.bf16.msra.mxu0 0
      %578 = vmatprep.subr.bf16.mxu0 0
      %579 = vmatpush1.bf16.msra.mxu0 0
      %580 = vmatprep.subr.bf16.mxu0 0
      %581 = vmatpush1.bf16.msra.mxu0 0
      %582 = vmatprep.subr.bf16.mxu0 0
      %583 = vmatpush1.bf16.msra.mxu0 0
      %584 = vmatprep.subr.bf16.mxu0 0
      %585 = vmatpush1.bf16.msra.mxu0 0
      %586 = vmatprep.subr.bf16.mxu0 0
      %587 = vmatpush1.bf16.msra.mxu0 0
      %588 = vmatprep.subr.bf16.mxu0 0
      %589 = vmatpush1.bf16.msra.mxu0 0
      %590 = vmatprep.subr.bf16.mxu0 0
      %591 = vmatpush1.bf16.msra.mxu0 0
      %592 = vmatprep.subr.bf16.mxu0 0
      %593 = vmatpush1.bf16.msra.mxu0 0
      %594 = vmatprep.subr.bf16.mxu0 0
      %595 = vmatpush1.bf16.msra.mxu0 0
      %596 = vmatprep.subr.bf16.mxu0 0
      %597 = vmatpush1.bf16.msra.mxu0 0
      %598 = vmatprep.subr.bf16.mxu0 0
      %599 = vmatpush1.bf16.msra.mxu0 0
      %600 = vmatprep.mubr.bf16.mxu0 0
      %601 = vmatmul.mubr.bf16.gmra.mrb[0].mxu0 %v525
      %v602 = vpop.f32.mrb[0].mxu0
      %v603 = vadd.f32 %v488, %v602
      %v604 = vpop.f32.mrb[0].mxu0
      %v605 = vpop.f32.mrb[0].mxu0
      %v606 = vpop.f32.mrb[0].mxu0
      %607 = vdwg.mxu0
      %v608 = vmul.f32 %v562, 0.25
      %v610 = vcombine.high %v608, %v608
      %v612 = vpack.c.bf16 %v608, %v608
      %v613 = vpack.c.bf16 %v610, %v610
      %v615 = vcombine.high %v564, %v564
      %v617 = vpack.c.bf16 %v564, %v564
      %v618 = vpack.c.bf16 %v615, %v615
      %v620 = vcombine.high %v603, %v603
      %v622 = vpack.c.bf16 %v603, %v603
      %v623 = vpack.c.bf16 %v620, %v620
      %vm624 = vcmask 130048
      %v626 = vsel %vm624, %v612, 0
      %v629 = vsel %vm624, %v617, 0
      %631 = vmatprep.subr.bf16.mxu0 0
      %632 = vmatpush1.bf16.xpose.msra.mxu0 %v629
      %633 = vmatprep.subr.bf16.mxu0 0
      %634 = vmatpush1.bf16.xpose.msra.mxu0 0
      %635 = vmatprep.subr.bf16.mxu0 0
      %636 = vmatpush1.bf16.xpose.msra.mxu0 0
      %637 = vmatprep.subr.bf16.mxu0 0
      %638 = vmatpush1.bf16.xpose.msra.mxu0 0
      %639 = vmatprep.subr.bf16.mxu0 0
      %640 = vmatpush1.bf16.xpose.msra.mxu0 0
      %641 = vmatprep.subr.bf16.mxu0 0
      %642 = vmatpush1.bf16.xpose.msra.mxu0 0
      %643 = vmatprep.subr.bf16.mxu0 0
      %644 = vmatpush1.bf16.xpose.msra.mxu0 0
      %645 = vmatprep.subr.bf16.mxu0 0
      %646 = vmatpush1.bf16.xpose.msra.mxu0 0
      %647 = vmatprep.subr.bf16.mxu0 0
      %648 = vmatpush1.bf16.xpose.msra.mxu0 0
      %649 = vmatprep.subr.bf16.mxu0 0
      %650 = vmatpush1.bf16.xpose.msra.mxu0 0
      %651 = vmatprep.subr.bf16.mxu0 0
      %652 = vmatpush1.bf16.xpose.msra.mxu0 0
      %653 = vmatprep.subr.bf16.mxu0 0
      %654 = vmatpush1.bf16.xpose.msra.mxu0 0
      %655 = vmatprep.subr.bf16.mxu0 0
      %656 = vmatpush1.bf16.xpose.msra.mxu0 0
      %657 = vmatprep.subr.bf16.mxu0 0
      %658 = vmatpush1.bf16.xpose.msra.mxu0 0
      %659 = vmatprep.subr.bf16.mxu0 0
      %660 = vmatpush1.bf16.xpose.msra.mxu0 0
      %661 = vmatprep.subr.bf16.mxu0 0
      %662 = vmatpush1.bf16.xpose.msra.mxu0 0
      %663 = vmatprep.mubr.bf16.mxu0 0
      %664 = vmatmul.mubr.bf16.gmra.mrb[0].mxu0 %v626
      %v665 = vpop.f32.mrb[0].mxu0
      %v666 = vadd.f32 0.0, %v665
      %v667 = vpop.f32.mrb[0].mxu0
      %v668 = vpop.f32.mrb[0].mxu0
      %v669 = vpop.f32.mrb[0].mxu0
      %670 = vdwg.mxu0
      %v672 = vsel %vm624, %v613, 0
      %v675 = vsel %vm624, %v618, 0
      %677 = vmatprep.subr.bf16.mxu0 0
      %678 = vmatpush1.bf16.xpose.msra.mxu0 %v675
      %679 = vmatprep.subr.bf16.mxu0 0
      %680 = vmatpush1.bf16.xpose.msra.mxu0 0
      %681 = vmatprep.subr.bf16.mxu0 0
      %682 = vmatpush1.bf16.xpose.msra.mxu0 0
      %683 = vmatprep.subr.bf16.mxu0 0
      %684 = vmatpush1.bf16.xpose.msra.mxu0 0
      %685 = vmatprep.subr.bf16.mxu0 0
      %686 = vmatpush1.bf16.xpose.msra.mxu0 0
      %687 = vmatprep.subr.bf16.mxu0 0
      %688 = vmatpush1.bf16.xpose.msra.mxu0 0
      %689 = vmatprep.subr.bf16.mxu0 0
      %690 = vmatpush1.bf16.xpose.msra.mxu0 0
      %691 = vmatprep.subr.bf16.mxu0 0
      %692 = vmatpush1.bf16.xpose.msra.mxu0 0
      %693 = vmatprep.subr.bf16.mxu0 0
      %694 = vmatpush1.bf16.xpose.msra.mxu0 0
      %695 = vmatprep.subr.bf16.mxu0 0
      %696 = vmatpush1.bf16.xpose.msra.mxu0 0
      %697 = vmatprep.subr.bf16.mxu0 0
      %698 = vmatpush1.bf16.xpose.msra.mxu0 0
      %699 = vmatprep.subr.bf16.mxu0 0
      %700 = vmatpush1.bf16.xpose.msra.mxu0 0
      %701 = vmatprep.subr.bf16.mxu0 0
      %702 = vmatpush1.bf16.xpose.msra.mxu0 0
      %703 = vmatprep.subr.bf16.mxu0 0
      %704 = vmatpush1.bf16.xpose.msra.mxu0 0
      %705 = vmatprep.subr.bf16.mxu0 0
      %706 = vmatpush1.bf16.xpose.msra.mxu0 0
      %707 = vmatprep.subr.bf16.mxu0 0
      %708 = vmatpush1.bf16.xpose.msra.mxu0 0
      %709 = vmatprep.mubr.bf16.mxu0 0
      %710 = vmatmul.mubr.bf16.gmra.mrb[0].mxu0 %v672
      %v711 = vpop.f32.mrb[0].mxu0
      %v712 = vadd.f32 0.0, %v711
      %v713 = vpop.f32.mrb[0].mxu0
      %v714 = vpop.f32.mrb[0].mxu0
      %v715 = vpop.f32.mrb[0].mxu0
      %716 = vdwg.mxu0
      %vm717 = vcmask 27648
      %v718 = vsel %vm717, %v666, -inf
      %719 = vmax.xlane.f32.xlu0 %v718
      %v720 = vpop.xlane.xlu0 %719
      %v721 = vsel %vm717, %v712, -inf
      %722 = vmax.xlane.f32.xlu0 %v721
      %v723 = vpop.xlane.xlu0 %722
      %v724 = vsub.f32 %v666, %v720
      %v725 = vsub.f32 %v712, %v723
      %v726 = vmul.f32 %v724, 1.442695
      %v727 = vpow.pop %v726
      %v728 = vmul.f32 %v725, 1.442695
      %v729 = vpow.pop %v728
      %v730 = vsel %vm717, %v727, 0.0
      %731 = vadd.xlane.f32.xlu0 %v730
      %v732 = vpop.xlane.xlu0 %731
      %v733 = vsel %vm717, %v729, 0.0
      %734 = vadd.xlane.f32.xlu0 %v733
      %v735 = vpop.xlane.xlu0 %734
      %v736 = vrcp.pop %v732
      %v737 = vrcp.pop %v735
      %v738 = vmul.f32 %v727, %v736
      %v739 = vmul.f32 %v729, %v737
      %v740 = vpack.c.bf16 %v738, %v738
      %v741 = vpack.c.bf16 %v739, %v739
      %vm742 = vcmask 31744
      %v744 = vsel %vm742, %v740, 0
      %vm746 = vcmask 1041408
      %v748 = vsel %vm746, %v622, 0
      %750 = vmatprep.subr.bf16.mxu0 0
      %751 = vmatpush1.bf16.msra.mxu0 %v748
      %752 = vmatprep.subr.bf16.mxu0 0
      %753 = vmatpush1.bf16.msra.mxu0 0
      %754 = vmatprep.subr.bf16.mxu0 0
      %755 = vmatpush1.bf16.msra.mxu0 0
      %756 = vmatprep.subr.bf16.mxu0 0
      %757 = vmatpush1.bf16.msra.mxu0 0
      %758 = vmatprep.subr.bf16.mxu0 0
      %759 = vmatpush1.bf16.msra.mxu0 0
      %760 = vmatprep.subr.bf16.mxu0 0
      %761 = vmatpush1.bf16.msra.mxu0 0
      %762 = vmatprep.subr.bf16.mxu0 0
      %763 = vmatpush1.bf16.msra.mxu0 0
      %764 = vmatprep.subr.bf16.mxu0 0
      %765 = vmatpush1.bf16.msra.mxu0 0
      %766 = vmatprep.subr.bf16.mxu0 0
      %767 = vmatpush1.bf16.msra.mxu0 0
      %768 = vmatprep.subr.bf16.mxu0 0
      %769 = vmatpush1.bf16.msra.mxu0 0
      %770 = vmatprep.subr.bf16.mxu0 0
      %771 = vmatpush1.bf16.msra.mxu0 0
      %772 = vmatprep.subr.bf16.mxu0 0
      %773 = vmatpush1.bf16.msra.mxu0 0
      %774 = vmatprep.subr.bf16.mxu0 0
      %775 = vmatpush1.bf16.msra.mxu0 0
      %776 = vmatprep.subr.bf16.mxu0 0
      %777 = vmatpush1.bf16.msra.mxu0 0
      %778 = vmatprep.subr.bf16.mxu0 0
      %779 = vmatpush1.bf16.msra.mxu0 0
      %780 = vmatprep.subr.bf16.mxu0 0
      %781 = vmatpush1.bf16.msra.mxu0 0
      %782 = vmatprep.mubr.bf16.mxu0 0
      %783 = vmatmul.mubr.bf16.gmra.mrb[0].mxu0 %v744
      %v784 = vpop.f32.mrb[0].mxu0
      %v785 = vadd.f32 0.0, %v784
      %v786 = vpop.f32.mrb[0].mxu0
      %v787 = vpop.f32.mrb[0].mxu0
      %v788 = vpop.f32.mrb[0].mxu0
      %789 = vdwg.mxu0
      %v791 = vsel %vm742, %v741, 0
      %v794 = vsel %vm746, %v623, 0
      %796 = vmatprep.subr.bf16.mxu0 0
      %797 = vmatpush1.bf16.msra.mxu0 %v794
      %798 = vmatprep.subr.bf16.mxu0 0
      %799 = vmatpush1.bf16.msra.mxu0 0
      %800 = vmatprep.subr.bf16.mxu0 0
      %801 = vmatpush1.bf16.msra.mxu0 0
      %802 = vmatprep.subr.bf16.mxu0 0
      %803 = vmatpush1.bf16.msra.mxu0 0
      %804 = vmatprep.subr.bf16.mxu0 0
      %805 = vmatpush1.bf16.msra.mxu0 0
      %806 = vmatprep.subr.bf16.mxu0 0
      %807 = vmatpush1.bf16.msra.mxu0 0
      %808 = vmatprep.subr.bf16.mxu0 0
      %809 = vmatpush1.bf16.msra.mxu0 0
      %810 = vmatprep.subr.bf16.mxu0 0
      %811 = vmatpush1.bf16.msra.mxu0 0
      %812 = vmatprep.subr.bf16.mxu0 0
      %813 = vmatpush1.bf16.msra.mxu0 0
      %814 = vmatprep.subr.bf16.mxu0 0
      %815 = vmatpush1.bf16.msra.mxu0 0
      %816 = vmatprep.subr.bf16.mxu0 0
      %817 = vmatpush1.bf16.msra.mxu0 0
      %818 = vmatprep.subr.bf16.mxu0 0
      %819 = vmatpush1.bf16.msra.mxu0 0
      %820 = vmatprep.subr.bf16.mxu0 0
      %821 = vmatpush1.bf16.msra.mxu0 0
      %822 = vmatprep.subr.bf16.mxu0 0
      %823 = vmatpush1.bf16.msra.mxu0 0
      %824 = vmatprep.subr.bf16.mxu0 0
      %825 = vmatpush1.bf16.msra.mxu0 0
      %826 = vmatprep.subr.bf16.mxu0 0
      %827 = vmatpush1.bf16.msra.mxu0 0
      %828 = vmatprep.mubr.bf16.mxu0 0
      %829 = vmatmul.mubr.bf16.gmra.mrb[0].mxu0 %v791
      %v830 = vpop.f32.mrb[0].mxu0
      %v831 = vadd.f32 0.0, %v830
      %v832 = vpop.f32.mrb[0].mxu0
      %v833 = vpop.f32.mrb[0].mxu0
      %v834 = vpop.f32.mrb[0].mxu0
      %835 = vdwg.mxu0
      %v838 = vcombine.low %v785, %v831
      %v840 = vpack.c.bf16 %v838, %v838
      %v841 = vld [vmem:[%s5] sm:$0xf]
      %v842 = vld [vmem:[%s5 + $0x4] sm:$0xf]
      %844 = vrot.lane.b32.xlu0 %v612, 112
      %v845 = vpop.permute.xlu0 %844
      %847 = vrot.lane.b32.xlu0 %v617, 112
      %v848 = vpop.permute.xlu0 %847
      %v850 = vsel %vm624, %v845, 0
      %v853 = vsel %vm624, %v848, 0
      %855 = vmatprep.subr.bf16.mxu0 0
      %856 = vmatpush1.bf16.xpose.msra.mxu0 %v853
      %857 = vmatprep.subr.bf16.mxu0 0
      %858 = vmatpush1.bf16.xpose.msra.mxu0 0
      %859 = vmatprep.subr.bf16.mxu0 0
      %860 = vmatpush1.bf16.xpose.msra.mxu0 0
      %861 = vmatprep.subr.bf16.mxu0 0
      %862 = vmatpush1.bf16.xpose.msra.mxu0 0
      %863 = vmatprep.subr.bf16.mxu0 0
      %864 = vmatpush1.bf16.xpose.msra.mxu0 0
      %865 = vmatprep.subr.bf16.mxu0 0
      %866 = vmatpush1.bf16.xpose.msra.mxu0 0
      %867 = vmatprep.subr.bf16.mxu0 0
      %868 = vmatpush1.bf16.xpose.msra.mxu0 0
      %869 = vmatprep.subr.bf16.mxu0 0
      %870 = vmatpush1.bf16.xpose.msra.mxu0 0
      %871 = vmatprep.subr.bf16.mxu0 0
      %872 = vmatpush1.bf16.xpose.msra.mxu0 0
      %873 = vmatprep.subr.bf16.mxu0 0
      %874 = vmatpush1.bf16.xpose.msra.mxu0 0
      %875 = vmatprep.subr.bf16.mxu0 0
      %876 = vmatpush1.bf16.xpose.msra.mxu0 0
      %877 = vmatprep.subr.bf16.mxu0 0
      %878 = vmatpush1.bf16.xpose.msra.mxu0 0
      %879 = vmatprep.subr.bf16.mxu0 0
      %880 = vmatpush1.bf16.xpose.msra.mxu0 0
      %881 = vmatprep.subr.bf16.mxu0 0
      %882 = vmatpush1.bf16.xpose.msra.mxu0 0
      %883 = vmatprep.subr.bf16.mxu0 0
      %884 = vmatpush1.bf16.xpose.msra.mxu0 0
      %885 = vmatprep.subr.bf16.mxu0 0
      %886 = vmatpush1.bf16.xpose.msra.mxu0 0
      %887 = vmatprep.mubr.bf16.mxu0 0
      %888 = vmatmul.mubr.bf16.gmra.mrb[0].mxu0 %v850
      %v889 = vpop.f32.mrb[0].mxu0
      %v890 = vadd.f32 0.0, %v889
      %v891 = vpop.f32.mrb[0].mxu0
      %v892 = vpop.f32.mrb[0].mxu0
      %v893 = vpop.f32.mrb[0].mxu0
      %894 = vdwg.mxu0
      %896 = vrot.lane.b32.xlu0 %v613, 112
      %v897 = vpop.permute.xlu0 %896
      %899 = vrot.lane.b32.xlu0 %v618, 112
      %v900 = vpop.permute.xlu0 %899
      %v902 = vsel %vm624, %v897, 0
      %v905 = vsel %vm624, %v900, 0
      %907 = vmatprep.subr.bf16.mxu0 0
      %908 = vmatpush1.bf16.xpose.msra.mxu0 %v905
      %909 = vmatprep.subr.bf16.mxu0 0
      %910 = vmatpush1.bf16.xpose.msra.mxu0 0
      %911 = vmatprep.subr.bf16.mxu0 0
      %912 = vmatpush1.bf16.xpose.msra.mxu0 0
      %913 = vmatprep.subr.bf16.mxu0 0
      %914 = vmatpush1.bf16.xpose.msra.mxu0 0
      %915 = vmatprep.subr.bf16.mxu0 0
      %916 = vmatpush1.bf16.xpose.msra.mxu0 0
      %917 = vmatprep.subr.bf16.mxu0 0
      %918 = vmatpush1.bf16.xpose.msra.mxu0 0
      %919 = vmatprep.subr.bf16.mxu0 0
      %920 = vmatpush1.bf16.xpose.msra.mxu0 0
      %921 = vmatprep.subr.bf16.mxu0 0
      %922 = vmatpush1.bf16.xpose.msra.mxu0 0
      %923 = vmatprep.subr.bf16.mxu0 0
      %924 = vmatpush1.bf16.xpose.msra.mxu0 0
      %925 = vmatprep.subr.bf16.mxu0 0
      %926 = vmatpush1.bf16.xpose.msra.mxu0 0
      %927 = vmatprep.subr.bf16.mxu0 0
      %928 = vmatpush1.bf16.xpose.msra.mxu0 0
      %929 = vmatprep.subr.bf16.mxu0 0
      %930 = vmatpush1.bf16.xpose.msra.mxu0 0
      %931 = vmatprep.subr.bf16.mxu0 0
      %932 = vmatpush1.bf16.xpose.msra.mxu0 0
      %933 = vmatprep.subr.bf16.mxu0 0
      %934 = vmatpush1.bf16.xpose.msra.mxu0 0
      %935 = vmatprep.subr.bf16.mxu0 0
      %936 = vmatpush1.bf16.xpose.msra.mxu0 0
      %937 = vmatprep.subr.bf16.mxu0 0
      %938 = vmatpush1.bf16.xpose.msra.mxu0 0
      %939 = vmatprep.mubr.bf16.mxu0 0
      %940 = vmatmul.mubr.bf16.gmra.mrb[0].mxu0 %v902
      %v941 = vpop.f32.mrb[0].mxu0
      %v942 = vadd.f32 0.0, %v941
      %v943 = vpop.f32.mrb[0].mxu0
      %v944 = vpop.f32.mrb[0].mxu0
      %v945 = vpop.f32.mrb[0].mxu0
      %946 = vdwg.mxu0
      %v947 = vsel %vm717, %v890, -inf
      %948 = vmax.xlane.f32.xlu0 %v947
      %v949 = vpop.xlane.xlu0 %948
      %v950 = vsel %vm717, %v942, -inf
      %951 = vmax.xlane.f32.xlu0 %v950
      %v952 = vpop.xlane.xlu0 %951
      %v953 = vsub.f32 %v890, %v949
      %v954 = vsub.f32 %v942, %v952
      %v955 = vmul.f32 %v953, 1.442695
      %v956 = vpow.pop %v955
      %v957 = vmul.f32 %v954, 1.442695
      %v958 = vpow.pop %v957
      %v959 = vsel %vm717, %v956, 0.0
      %960 = vadd.xlane.f32.xlu0 %v959
      %v961 = vpop.xlane.xlu0 %960
      %v962 = vsel %vm717, %v958, 0.0
      %963 = vadd.xlane.f32.xlu0 %v962
      %v964 = vpop.xlane.xlu0 %963
      %v965 = vrcp.pop %v961
      %v966 = vrcp.pop %v964
      %v967 = vmul.f32 %v956, %v965
      %v968 = vmul.f32 %v958, %v966
      %v969 = vpack.c.bf16 %v967, %v967
      %v970 = vpack.c.bf16 %v968, %v968
      %972 = vrot.lane.b32.xlu0 %v622, 112
      %v973 = vpop.permute.xlu0 %972
      %v975 = vsel %vm742, %v969, 0
      %v978 = vsel %vm746, %v973, 0
      %980 = vmatprep.subr.bf16.mxu0 0
      %981 = vmatpush1.bf16.msra.mxu0 %v978
      %982 = vmatprep.subr.bf16.mxu0 0
      %983 = vmatpush1.bf16.msra.mxu0 0
      %984 = vmatprep.subr.bf16.mxu0 0
      %985 = vmatpush1.bf16.msra.mxu0 0
      %986 = vmatprep.subr.bf16.mxu0 0
      %987 = vmatpush1.bf16.msra.mxu0 0
      %988 = vmatprep.subr.bf16.mxu0 0
      %989 = vmatpush1.bf16.msra.mxu0 0
      %990 = vmatprep.subr.bf16.mxu0 0
      %991 = vmatpush1.bf16.msra.mxu0 0
      %992 = vmatprep.subr.bf16.mxu0 0
      %993 = vmatpush1.bf16.msra.mxu0 0
      %994 = vmatprep.subr.bf16.mxu0 0
      %995 = vmatpush1.bf16.msra.mxu0 0
      %996 = vmatprep.subr.bf16.mxu0 0
      %997 = vmatpush1.bf16.msra.mxu0 0
      %998 = vmatprep.subr.bf16.mxu0 0
      %999 = vmatpush1.bf16.msra.mxu0 0
      %1000 = vmatprep.subr.bf16.mxu0 0
      %1001 = vmatpush1.bf16.msra.mxu0 0
      %1002 = vmatprep.subr.bf16.mxu0 0
      %1003 = vmatpush1.bf16.msra.mxu0 0
      %1004 = vmatprep.subr.bf16.mxu0 0
      %1005 = vmatpush1.bf16.msra.mxu0 0
      %1006 = vmatprep.subr.bf16.mxu0 0
      %1007 = vmatpush1.bf16.msra.mxu0 0
      %1008 = vmatprep.subr.bf16.mxu0 0
      %1009 = vmatpush1.bf16.msra.mxu0 0
      %1010 = vmatprep.subr.bf16.mxu0 0
      %1011 = vmatpush1.bf16.msra.mxu0 0
      %1012 = vmatprep.mubr.bf16.mxu0 0
      %1013 = vmatmul.mubr.bf16.gmra.mrb[0].mxu0 %v975
      %v1014 = vpop.f32.mrb[0].mxu0
      %v1015 = vadd.f32 0.0, %v1014
      %v1016 = vpop.f32.mrb[0].mxu0
      %v1017 = vpop.f32.mrb[0].mxu0
      %v1018 = vpop.f32.mrb[0].mxu0
      %1019 = vdwg.mxu0
      %1021 = vrot.lane.b32.xlu0 %v623, 112
      %v1022 = vpop.permute.xlu0 %1021
      %v1024 = vsel %vm742, %v970, 0
      %v1027 = vsel %vm746, %v1022, 0
      %1029 = vmatprep.subr.bf16.mxu0 0
      %1030 = vmatpush1.bf16.msra.mxu0 %v1027
      %1031 = vmatprep.subr.bf16.mxu0 0
      %1032 = vmatpush1.bf16.msra.mxu0 0
      %1033 = vmatprep.subr.bf16.mxu0 0
      %1034 = vmatpush1.bf16.msra.mxu0 0
      %1035 = vmatprep.subr.bf16.mxu0 0
      %1036 = vmatpush1.bf16.msra.mxu0 0
      %1037 = vmatprep.subr.bf16.mxu0 0
      %1038 = vmatpush1.bf16.msra.mxu0 0
      %1039 = vmatprep.subr.bf16.mxu0 0
      %1040 = vmatpush1.bf16.msra.mxu0 0
      %1041 = vmatprep.subr.bf16.mxu0 0
      %1042 = vmatpush1.bf16.msra.mxu0 0
      %1043 = vmatprep.subr.bf16.mxu0 0
      %1044 = vmatpush1.bf16.msra.mxu0 0
      %1045 = vmatprep.subr.bf16.mxu0 0
      %1046 = vmatpush1.bf16.msra.mxu0 0
      %1047 = vmatprep.subr.bf16.mxu0 0
      %1048 = vmatpush1.bf16.msra.mxu0 0
      %1049 = vmatprep.subr.bf16.mxu0 0
      %1050 = vmatpush1.bf16.msra.mxu0 0
      %1051 = vmatprep.subr.bf16.mxu0 0
      %1052 = vmatpush1.bf16.msra.mxu0 0
      %1053 = vmatprep.subr.bf16.mxu0 0
      %1054 = vmatpush1.bf16.msra.mxu0 0
      %1055 = vmatprep.subr.bf16.mxu0 0
      %1056 = vmatpush1.bf16.msra.mxu0 0
      %1057 = vmatprep.subr.bf16.mxu0 0
      %1058 = vmatpush1.bf16.msra.mxu0 0
      %1059 = vmatprep.subr.bf16.mxu0 0
      %1060 = vmatpush1.bf16.msra.mxu0 0
      %1061 = vmatprep.mubr.bf16.mxu0 0
      %1062 = vmatmul.mubr.bf16.gmra.mrb[0].mxu0 %v1024
      %v1063 = vpop.f32.mrb[0].mxu0
      %v1064 = vadd.f32 0.0, %v1063
      %v1065 = vpop.f32.mrb[0].mxu0
      %v1066 = vpop.f32.mrb[0].mxu0
      %v1067 = vpop.f32.mrb[0].mxu0
      %1068 = vdwg.mxu0
      %v1071 = vcombine.low %v1015, %v1064
      %v1073 = vpack.c.bf16 %v1071, %v1071
      %v1074 = vld [vmem:[%s5 + $0x8] sm:$0xf]
      %v1075 = vld [vmem:[%s5 + $0xc] sm:$0xf]
      %v1078 = vunpack.c.l.b16 %v1074
      %v1079 = vunpack.c.l.b16 %v1075
      %v1080 = vpack.c.b16 %v1079, %v1078
      %v1083 = vsel %vm624, %v1073, 0
      %1085 = vmatprep.subr.bf16.mxu0 0
      %1086 = vmatpush1.bf16.msra.mxu0 %v1080
      %1087 = vmatprep.subr.bf16.mxu0 0
      %1088 = vmatpush1.bf16.msra.mxu0 0
      %1089 = vmatprep.subr.bf16.mxu0 0
      %1090 = vmatpush1.bf16.msra.mxu0 0
      %1091 = vmatprep.subr.bf16.mxu0 0
      %1092 = vmatpush1.bf16.msra.mxu0 0
      %1093 = vmatprep.subr.bf16.mxu0 0
      %1094 = vmatpush1.bf16.msra.mxu0 0
      %1095 = vmatprep.subr.bf16.mxu0 0
      %1096 = vmatpush1.bf16.msra.mxu0 0
      %1097 = vmatprep.subr.bf16.mxu0 0
      %1098 = vmatpush1.bf16.msra.mxu0 0
      %1099 = vmatprep.subr.bf16.mxu0 0
      %1100 = vmatpush1.bf16.msra.mxu0 0
      %1101 = vmatprep.subr.bf16.mxu0 0
      %1102 = vmatpush1.bf16.msra.mxu0 0
      %1103 = vmatprep.subr.bf16.mxu0 0
      %1104 = vmatpush1.bf16.msra.mxu0 0
      %1105 = vmatprep.subr.bf16.mxu0 0
      %1106 = vmatpush1.bf16.msra.mxu0 0
      %1107 = vmatprep.subr.bf16.mxu0 0
      %1108 = vmatpush1.bf16.msra.mxu0 0
      %1109 = vmatprep.subr.bf16.mxu0 0
      %1110 = vmatpush1.bf16.msra.mxu0 0
      %1111 = vmatprep.subr.bf16.mxu0 0
      %1112 = vmatpush1.bf16.msra.mxu0 0
      %1113 = vmatprep.subr.bf16.mxu0 0
      %1114 = vmatpush1.bf16.msra.mxu0 0
      %1115 = vmatprep.subr.bf16.mxu0 0
      %1116 = vmatpush1.bf16.msra.mxu0 0
      %1117 = vmatprep.mubr.bf16.mxu0 0
      %1118 = vmatmul.mubr.bf16.gmra.mrb[0].mxu0 %v1083
      %v1119 = vpop.f32.mrb[0].mxu0
      %v1120 = vadd.f32 0.0, %v1119
      %v1121 = vpop.f32.mrb[0].mxu0
      %v1122 = vpop.f32.mrb[0].mxu0
      %v1123 = vpop.f32.mrb[0].mxu0
      %1124 = vdwg.mxu0
      %v1127 = vunpack.c.l.b16 %v841
      %v1128 = vunpack.c.l.b16 %v842
      %v1129 = vpack.c.b16 %v1128, %v1127
      %v1132 = vsel %vm624, %v840, 0
      %1134 = vmatprep.subr.bf16.mxu0 0
      %1135 = vmatpush1.bf16.msra.mxu0 %v1129
      %1136 = vmatprep.subr.bf16.mxu0 0
      %1137 = vmatpush1.bf16.msra.mxu0 0
      %1138 = vmatprep.subr.bf16.mxu0 0
      %1139 = vmatpush1.bf16.msra.mxu0 0
      %1140 = vmatprep.subr.bf16.mxu0 0
      %1141 = vmatpush1.bf16.msra.mxu0 0
      %1142 = vmatprep.subr.bf16.mxu0 0
      %1143 = vmatpush1.bf16.msra.mxu0 0
      %1144 = vmatprep.subr.bf16.mxu0 0
      %1145 = vmatpush1.bf16.msra.mxu0 0
      %1146 = vmatprep.subr.bf16.mxu0 0
      %1147 = vmatpush1.bf16.msra.mxu0 0
      %1148 = vmatprep.subr.bf16.mxu0 0
      %1149 = vmatpush1.bf16.msra.mxu0 0
      %1150 = vmatprep.subr.bf16.mxu0 0
      %1151 = vmatpush1.bf16.msra.mxu0 0
      %1152 = vmatprep.subr.bf16.mxu0 0
      %1153 = vmatpush1.bf16.msra.mxu0 0
      %1154 = vmatprep.subr.bf16.mxu0 0
      %1155 = vmatpush1.bf16.msra.mxu0 0
      %1156 = vmatprep.subr.bf16.mxu0 0
      %1157 = vmatpush1.bf16.msra.mxu0 0
      %1158 = vmatprep.subr.bf16.mxu0 0
      %1159 = vmatpush1.bf16.msra.mxu0 0
      %1160 = vmatprep.subr.bf16.mxu0 0
      %1161 = vmatpush1.bf16.msra.mxu0 0
      %1162 = vmatprep.subr.bf16.mxu0 0
      %1163 = vmatpush1.bf16.msra.mxu0 0
      %1164 = vmatprep.subr.bf16.mxu0 0
      %1165 = vmatpush1.bf16.msra.mxu0 0
      %1166 = vmatprep.mubr.bf16.mxu0 0
      %1167 = vmatmul.mubr.bf16.gmra.mrb[0].mxu0 %v1132
      %v1168 = vpop.f32.mrb[0].mxu0
      %v1169 = vadd.f32 %v1120, %v1168
      %v1170 = vpop.f32.mrb[0].mxu0
      %v1171 = vpop.f32.mrb[0].mxu0
      %v1172 = vpop.f32.mrb[0].mxu0
      %1173 = vdwg.mxu0
      %v1174 = vld [vmem:[%s6] sm:$0x1]
      %v1176 = vlaneseq
      %v1177 = vshrl.u32 %v1176, 7
      %v1178 = vsub.s32 0, %v1177
      %v1179 = vrot.slane %v1174, %v1178
      %v1181 = vadd.f32 %v1169, %v1179
      %v1183 = vcombine.high %v1181, %v1181
      %v1185 = vadd.f32 %v378, %v1181
      %v1186 = vadd.f32 %v379, %v1183
      %vm1187 = vcmask 257024
      %1188 = vst.msk [vmem:[%s369] sm:$0xf] %vm1187, %v1185
      %1189 = vst.msk [vmem:[%s369 + $0x4] sm:$0xf] %vm1187, %v1186
      %v1190 = vld [vmem:[%s7] sm:$0x1]
      %v1191 = vld [vmem:[%s8] sm:$0x1]
      %v1194 = vcombine.low %v1185, %v1186
      %v1196 = vsel %vm386, %v1194, 0.0
      %1197 = vadd.xlane.f32.xlu0 %v1196
      %v1198 = vpop.xlane.xlu0 %1197
      %v1199 = vmul.f32 %v1198, %v390
      %v1202 = vunpack.c.l.s4 839922192
      %v1203 = vunpack.c.0.s8 %v1202
      %v1204 = vlaneseq
      %v1205 = vshrl.u32 %v1204, 7
      %v1206 = vsub.s32 %v1203, %v1205
      %v1207 = vrot.slane %v1199, %v1206
      %v1209 = vunpack.c.l.s4 1985246804
      %v1210 = vunpack.c.0.s8 %v1209
      %v1211 = vlaneseq
      %v1212 = vshrl.u32 %v1211, 7
      %v1213 = vsub.s32 %v1210, %v1212
      %v1214 = vrot.slane %v1199, %v1213
      %v1217 = vsub.f32 %v1185, %v1207
      %v1218 = vsub.f32 %v1186, %v1214
      %v1219 = vmul.f32 %v1217, %v1217
      %v1220 = vmul.f32 %v1218, %v1218
      %v1223 = vcombine.low %v1219, %v1220
      %v1225 = vsel %vm386, %v1223, 0.0
      %1226 = vadd.xlane.f32.xlu0 %v1225
      %v1227 = vpop.xlane.xlu0 %1226
      %v1228 = vmul.f32 %v1227, %v390
      %v1229 = vadd.f32 %v1228, 1e-05
      %v1230 = vrsqrt.pop %v1229
      %v1233 = vunpack.c.l.s4 839922192
      %v1234 = vunpack.c.0.s8 %v1233
      %v1235 = vlaneseq
      %v1236 = vshrl.u32 %v1235, 7
      %v1237 = vsub.s32 %v1234, %v1236
      %v1238 = vrot.slane %v1230, %v1237
      %v1240 = vunpack.c.l.s4 1985246804
      %v1241 = vunpack.c.0.s8 %v1240
      %v1242 = vlaneseq
      %v1243 = vshrl.u32 %v1242, 7
      %v1244 = vsub.s32 %v1241, %v1243
      %v1245 = vrot.slane %v1230, %v1244
      %v1248 = vmul.f32 %v1217, %v1238
      %v1249 = vmul.f32 %v1218, %v1245
      %v1251 = vlaneseq
      %v1252 = vshrl.u32 %v1251, 7
      %v1253 = vsub.s32 0, %v1252
      %v1254 = vrot.slane %v1190, %v1253
      %v1256 = vcombine.high %v1254, %v1254
      %v1258 = vmul.f32 %v1248, %v1254
      %v1259 = vmul.f32 %v1249, %v1256
      %v1261 = vlaneseq
      %v1262 = vshrl.u32 %v1261, 7
      %v1263 = vsub.s32 0, %v1262
      %v1264 = vrot.slane %v1191, %v1263
      %v1266 = vcombine.high %v1264, %v1264
      %v1268 = vadd.f32 %v1258, %v1264
      %v1269 = vadd.f32 %v1259, %v1266
      %v1270 = vpack.c.bf16 %v1268, %v1268
      %v1271 = vpack.c.bf16 %v1269, %v1269
      %vm1272 = vcmask 254976
      %1273 = vst.msk [vmem:[%s375] sm:$0x3] %vm1272, %v1270
      %1274 = vst.msk [vmem:[%s375 + $0x2] sm:$0x3] %vm1272, %v1271
      %s1275 = smul.u32 2, %s22
      %p1276 = scmp.lt.s32.totalorder %s1275, 3
      %s1277 = scalar_select %p1276, %s1275, 3
      %s1278 = smul.addr %s1277, 4
      %s1279 = scalar_lea.vmem %s9, %s1278
      %s1280 = smul.u32 2, %s22
      %p1281 = scmp.lt.s32.totalorder %s1280, 3
      %s1282 = scalar_select %p1281, %s1280, 3
      %s1283 = smul.addr %s1282, 2
      %s1284 = scalar_lea.vmem %s10, %s1283
      // Predicated region
      $region57: #{parallel_block_cat_forward.7} parent=55 // pred_check
        %p1285 = pneg %p234
      $region58: #{parallel_block_cat_forward.7} parent=55 // pred_check_branch
        %1287 = sbr.rel (%p1285) target = $region60
      $region59: #{parallel_block_cat_forward.7} parent=55 // pred_region
        %s1288 = smul.u32 2, %s22
      $region60: #{parallel_block_cat_forward.7} parent=55 // pred_fallthru
        _
      // Predicated region
      $region61: #{parallel_block_cat_forward.7} parent=55 // pred_check
        %p1289 = pneg %p260
      $region62: #{parallel_block_cat_forward.7} parent=55 // pred_check_branch
        %1291 = sbr.rel (%p1289) target = $region64
      $region63: #{parallel_block_cat_forward.7} parent=55 // pred_region
        %s1292 = smul.u32 2, %s22
      $region64: #{parallel_block_cat_forward.7} parent=55 // pred_fallthru
        _
    $region56: #{parallel_block_cat_forward.7} parent=5 // pred_fallthru
      _
    %p1293 = scmp.le.s32.totalorder 2, %s17
    // Predicated region
    $region65: #{parallel_block_cat_forward.7} parent=5 // pred_check
      %p1294 = pneg %p1293
    $region66: #{parallel_block_cat_forward.7} parent=5 // pred_check_branch
      %1296 = sbr.rel (%p1294) target = $region68
    $region67: #{parallel_block_cat_forward.7} parent=5 // pred_region
      %s1297 = ssub.s32 %s17, 2
      // Predicated region
      $region69: #{parallel_block_cat_forward.7} parent=67 // pred_check
        %p1298 = pneg %p240
      $region70: #{parallel_block_cat_forward.7} parent=67 // pred_check_branch
        %1300 = sbr.rel (%p1298) target = $region72
      $region71: #{parallel_block_cat_forward.7} parent=67 // pred_region
        %s1301 = smul.u32 2, %s23
        %p1302 = scmp.lt.s32.totalorder %s1301, 3
        %s1303 = scalar_select %p1302, %s1301, 3
        %s1304 = smul.addr %s1303, 4
        %s1305 = scalar_lea.vmem %s9, %s1304
      $region72: #{parallel_block_cat_forward.7} parent=67 // pred_fallthru
        _
      // Predicated region
      $region73: #{parallel_block_cat_forward.7} parent=67 // pred_check
        %p1306 = pneg %p266
      $region74: #{parallel_block_cat_forward.7} parent=67 // pred_check_branch
        %1308 = sbr.rel (%p1306) target = $region76
      $region75: #{parallel_block_cat_forward.7} parent=67 // pred_region
        %s1309 = smul.u32 2, %s23
        %p1310 = scmp.lt.s32.totalorder %s1309, 3
        %s1311 = scalar_select %p1310, %s1309, 3
        %s1312 = smul.addr %s1311, 2
        %s1313 = scalar_lea.vmem %s10, %s1312
      $region76: #{parallel_block_cat_forward.7} parent=67 // pred_fallthru
        _
    $region68: #{parallel_block_cat_forward.7} parent=5 // pred_fallthru
      _
  $region6: #{parallel_block_cat_forward.7} parent=0 // loop_footer
    %s21 = sadd.s32 1, %s17
  $region7: #{parallel_block_cat_forward.7} parent=0 // loop_footer_branch
    %16 = sbr.rel target = $region3
  $region8: #{parallel_block_cat_forward.7} parent=0 // loop_exit
    _

// kernel: parallel_block_cat_forward.9
$region0: #{parallel_block_cat_forward.9}
  #allocation0 [shape = 'u32[]', space=smem, size = 0x4, offset = 0x4, fixed_abs, tag = 'smem constant byte address 0x4 - core index']
  #allocation1 [shape = 'u32[144,128]{1,0:T(1,128)}', space=vmem, size = 0x12000, scoped, tag = 'internal scratch']
  %s0 = inlined_call_operand.vmem [shape: bf16[16,8,16], index: 0, kind: input, shape index: {}]
  %s1 = inlined_call_operand.vmem [shape: bf16[16,8,32], index: 1, kind: input, shape index: {}]
  %s2 = inlined_call_operand.vmem [shape: bf16[16,8,64], index: 2, kind: input, shape index: {}]
  %s3 = inlined_call_operand.vmem [shape: f32[16,8,16], index: 3, kind: input, shape index: {}]
  %s4 = inlined_call_operand.vmem [shape: bf16[16,32], index: 4, kind: input, shape index: {}]
  %s5 = inlined_call_operand.vmem [shape: bf16[32,32], index: 5, kind: input, shape index: {}]
  %s6 = inlined_call_operand.vmem [shape: bf16[64,32], index: 6, kind: input, shape index: {}]
  %s7 = inlined_call_operand.vmem [shape: f32[1,32], index: 7, kind: input, shape index: {}]
  %s8 = inlined_call_operand.vmem [shape: bf16[32,16], index: 8, kind: input, shape index: {}]
  %s9 = inlined_call_operand.vmem [shape: f32[1,16], index: 9, kind: input, shape index: {}]
  %s10 = inlined_call_operand.vmem [shape: f32[16,8,16], index: 10, kind: output, shape index: {}]
  %s11 = sld [smem:[#allocation0]]
  $region73: #{parallel_block_cat_forward.9} parent=0
    _
  %s13 = ssub.s32 1, %s11
  %s14 = scalar_select 0, %s13, %s11
  loop: start=0, step=1, limit=4
  $region2: #{parallel_block_cat_forward.9} parent=0 // loop_pre_header
    _
  $region3: #{parallel_block_cat_forward.9} parent=0 // loop_header
    %s16 = sphi 0, %s20
    %p17 = scmp.ge.s32.totalorder %s16, 4
    %s26 = sphi 0, %s28
    %s29 = sphi 0, %s26
    %s30 = sphi 0, %s29
    %s46 = sphi 0, %s30
    %s52 = sphi 0, %s54
    %s55 = sphi 0, %s52
    %s56 = sphi 0, %s55
    %s72 = sphi 0, %s56
    %s78 = sphi 0, %s80
    %s81 = sphi 0, %s78
    %s82 = sphi 0, %s81
    %s98 = sphi 0, %s82
    %s104 = sphi 0, %s106
    %s107 = sphi 0, %s104
    %s108 = sphi 0, %s107
    %s124 = sphi 0, %s108
    %s128 = sphi 0, %s128
    %s130 = sphi 0, %s128
    %s131 = sphi 0, %s130
    %s145 = sphi 0, %s131
    %s149 = sphi 0, %s149
    %s151 = sphi 0, %s149
    %s152 = sphi 0, %s151
    %s166 = sphi 0, %s152
    %s170 = sphi 0, %s170
    %s172 = sphi 0, %s170
    %s173 = sphi 0, %s172
    %s187 = sphi 0, %s173
    %s191 = sphi 0, %s191
    %s193 = sphi 0, %s191
    %s194 = sphi 0, %s193
    %s208 = sphi 0, %s194
    %s212 = sphi 0, %s212
    %s214 = sphi 0, %s212
    %s215 = sphi 0, %s214
    %s229 = sphi 0, %s215
    %s233 = sphi 0, %s233
    %s235 = sphi 0, %s233
    %s236 = sphi 0, %s235
    %s250 = sphi 0, %s236
    %s256 = sphi 0, %s258
    %s259 = sphi 0, %s256
    %s260 = sphi 0, %s259
    %s276 = sphi 0, %s260
  $region4: #{parallel_block_cat_forward.9} parent=0 // loop_header_branch
    %19 = sbr.rel (%p17) target = $region8
  $region5: #{parallel_block_cat_forward.9} parent=0 // loop_body
    %s21 = ssub.s32 %s16, 1
    %s22 = ssub.s32 %s16, 2
    %s23 = sadd.s32 %s16, 1
    %s24 = ssub.s32 %s16, %s23
    %p25 = scmp.eq.s32.totalorder %s24, 0
    %s27 = sadd.s32 %s26, 1
    %s28 = scalar_select %p25, %s26, %s27
    %p31 = pneg %p25
    %p32 = scmp.eq.s32.totalorder %s16, 1
    %p33 = por %p31, %p32
    %p34 = scmp.ne.s32.totalorder %s26, %s29
    %p35 = scmp.eq.s32.totalorder %s16, 0
    %p36 = por %p34, %p35
    %p37 = scmp.ne.s32.totalorder %s26, %s29
    %p38 = scmp.eq.s32.totalorder %s21, 1
    %p39 = por %p37, %p38
    %p40 = scmp.ne.s32.totalorder %s29, %s30
    %p41 = scmp.eq.s32.totalorder %s21, 0
    %p42 = por %p40, %p41
    %p43 = scmp.ne.s32.totalorder %s29, %s30
    %p44 = scmp.eq.s32.totalorder %s22, 1
    %p45 = por %p43, %p44
    %p47 = scmp.ne.s32.totalorder %s30, %s46
    %p48 = scmp.eq.s32.totalorder %s22, 0
    %p49 = por %p47, %p48
    %s50 = ssub.s32 %s16, %s23
    %p51 = scmp.eq.s32.totalorder %s50, 0
    %s53 = sadd.s32 %s52, 1
    %s54 = scalar_select %p51, %s52, %s53
    %p57 = pneg %p51
    %p58 = scmp.eq.s32.totalorder %s16, 1
    %p59 = por %p57, %p58
    %p60 = scmp.ne.s32.totalorder %s52, %s55
    %p61 = scmp.eq.s32.totalorder %s16, 0
    %p62 = por %p60, %p61
    %p63 = scmp.ne.s32.totalorder %s52, %s55
    %p64 = scmp.eq.s32.totalorder %s21, 1
    %p65 = por %p63, %p64
    %p66 = scmp.ne.s32.totalorder %s55, %s56
    %p67 = scmp.eq.s32.totalorder %s21, 0
    %p68 = por %p66, %p67
    %p69 = scmp.ne.s32.totalorder %s55, %s56
    %p70 = scmp.eq.s32.totalorder %s22, 1
    %p71 = por %p69, %p70
    %p73 = scmp.ne.s32.totalorder %s56, %s72
    %p74 = scmp.eq.s32.totalorder %s22, 0
    %p75 = por %p73, %p74
    %s76 = ssub.s32 %s16, %s23
    %p77 = scmp.eq.s32.totalorder %s76, 0
    %s79 = sadd.s32 %s78, 1
    %s80 = scalar_select %p77, %s78, %s79
    %p83 = pneg %p77
    %p84 = scmp.eq.s32.totalorder %s16, 1
    %p85 = por %p83, %p84
    %p86 = scmp.ne.s32.totalorder %s78, %s81
    %p87 = scmp.eq.s32.totalorder %s16, 0
    %p88 = por %p86, %p87
    %p89 = scmp.ne.s32.totalorder %s78, %s81
    %p90 = scmp.eq.s32.totalorder %s21, 1
    %p91 = por %p89, %p90
    %p92 = scmp.ne.s32.totalorder %s81, %s82
    %p93 = scmp.eq.s32.totalorder %s21, 0
    %p94 = por %p92, %p93
    %p95 = scmp.ne.s32.totalorder %s81, %s82
    %p96 = scmp.eq.s32.totalorder %s22, 1
    %p97 = por %p95, %p96
    %p99 = scmp.ne.s32.totalorder %s82, %s98
    %p100 = scmp.eq.s32.totalorder %s22, 0
    %p101 = por %p99, %p100
    %s102 = ssub.s32 %s16, %s23
    %p103 = scmp.eq.s32.totalorder %s102, 0
    %s105 = sadd.s32 %s104, 1
    %s106 = scalar_select %p103, %s104, %s105
    %p109 = pneg %p103
    %p110 = scmp.eq.s32.totalorder %s16, 1
    %p111 = por %p109, %p110
    %p112 = scmp.ne.s32.totalorder %s104, %s107
    %p113 = scmp.eq.s32.totalorder %s16, 0
    %p114 = por %p112, %p113
    %p115 = scmp.ne.s32.totalorder %s104, %s107
    %p116 = scmp.eq.s32.totalorder %s21, 1
    %p117 = por %p115, %p116
    %p118 = scmp.ne.s32.totalorder %s107, %s108
    %p119 = scmp.eq.s32.totalorder %s21, 0
    %p120 = por %p118, %p119
    %p121 = scmp.ne.s32.totalorder %s107, %s108
    %p122 = scmp.eq.s32.totalorder %s22, 1
    %p123 = por %p121, %p122
    %p125 = scmp.ne.s32.totalorder %s108, %s124
    %p126 = scmp.eq.s32.totalorder %s22, 0
    %p127 = por %p125, %p126
    %s129 = sadd.s32 %s128, 1
    %p132 = scmp.eq.s32.totalorder %s16, 1
    %p133 = scmp.ne.s32.totalorder %s128, %s130
    %p134 = scmp.eq.s32.totalorder %s16, 0
    %p135 = por %p133, %p134
    %p136 = scmp.ne.s32.totalorder %s128, %s130
    %p137 = scmp.eq.s32.totalorder %s21, 1
    %p138 = por %p136, %p137
    %p139 = scmp.ne.s32.totalorder %s130, %s131
    %p140 = scmp.eq.s32.totalorder %s21, 0
    %p141 = por %p139, %p140
    %p142 = scmp.ne.s32.totalorder %s130, %s131
    %p143 = scmp.eq.s32.totalorder %s22, 1
    %p144 = por %p142, %p143
    %p146 = scmp.ne.s32.totalorder %s131, %s145
    %p147 = scmp.eq.s32.totalorder %s22, 0
    %p148 = por %p146, %p147
    %s150 = sadd.s32 %s149, 1
    %p153 = scmp.eq.s32.totalorder %s16, 1
    %p154 = scmp.ne.s32.totalorder %s149, %s151
    %p155 = scmp.eq.s32.totalorder %s16, 0
    %p156 = por %p154, %p155
    %p157 = scmp.ne.s32.totalorder %s149, %s151
    %p158 = scmp.eq.s32.totalorder %s21, 1
    %p159 = por %p157, %p158
    %p160 = scmp.ne.s32.totalorder %s151, %s152
    %p161 = scmp.eq.s32.totalorder %s21, 0
    %p162 = por %p160, %p161
    %p163 = scmp.ne.s32.totalorder %s151, %s152
    %p164 = scmp.eq.s32.totalorder %s22, 1
    %p165 = por %p163, %p164
    %p167 = scmp.ne.s32.totalorder %s152, %s166
    %p168 = scmp.eq.s32.totalorder %s22, 0
    %p169 = por %p167, %p168
    %s171 = sadd.s32 %s170, 1
    %p174 = scmp.eq.s32.totalorder %s16, 1
    %p175 = scmp.ne.s32.totalorder %s170, %s172
    %p176 = scmp.eq.s32.totalorder %s16, 0
    %p177 = por %p175, %p176
    %p178 = scmp.ne.s32.totalorder %s170, %s172
    %p179 = scmp.eq.s32.totalorder %s21, 1
    %p180 = por %p178, %p179
    %p181 = scmp.ne.s32.totalorder %s172, %s173
    %p182 = scmp.eq.s32.totalorder %s21, 0
    %p183 = por %p181, %p182
    %p184 = scmp.ne.s32.totalorder %s172, %s173
    %p185 = scmp.eq.s32.totalorder %s22, 1
    %p186 = por %p184, %p185
    %p188 = scmp.ne.s32.totalorder %s173, %s187
    %p189 = scmp.eq.s32.totalorder %s22, 0
    %p190 = por %p188, %p189
    %s192 = sadd.s32 %s191, 1
    %p195 = scmp.eq.s32.totalorder %s16, 1
    %p196 = scmp.ne.s32.totalorder %s191, %s193
    %p197 = scmp.eq.s32.totalorder %s16, 0
    %p198 = por %p196, %p197
    %p199 = scmp.ne.s32.totalorder %s191, %s193
    %p200 = scmp.eq.s32.totalorder %s21, 1
    %p201 = por %p199, %p200
    %p202 = scmp.ne.s32.totalorder %s193, %s194
    %p203 = scmp.eq.s32.totalorder %s21, 0
    %p204 = por %p202, %p203
    %p205 = scmp.ne.s32.totalorder %s193, %s194
    %p206 = scmp.eq.s32.totalorder %s22, 1
    %p207 = por %p205, %p206
    %p209 = scmp.ne.s32.totalorder %s194, %s208
    %p210 = scmp.eq.s32.totalorder %s22, 0
    %p211 = por %p209, %p210
    %s213 = sadd.s32 %s212, 1
    %p216 = scmp.eq.s32.totalorder %s16, 1
    %p217 = scmp.ne.s32.totalorder %s212, %s214
    %p218 = scmp.eq.s32.totalorder %s16, 0
    %p219 = por %p217, %p218
    %p220 = scmp.ne.s32.totalorder %s212, %s214
    %p221 = scmp.eq.s32.totalorder %s21, 1
    %p222 = por %p220, %p221
    %p223 = scmp.ne.s32.totalorder %s214, %s215
    %p224 = scmp.eq.s32.totalorder %s21, 0
    %p225 = por %p223, %p224
    %p226 = scmp.ne.s32.totalorder %s214, %s215
    %p227 = scmp.eq.s32.totalorder %s22, 1
    %p228 = por %p226, %p227
    %p230 = scmp.ne.s32.totalorder %s215, %s229
    %p231 = scmp.eq.s32.totalorder %s22, 0
    %p232 = por %p230, %p231
    %s234 = sadd.s32 %s233, 1
    %p237 = scmp.eq.s32.totalorder %s16, 1
    %p238 = scmp.ne.s32.totalorder %s233, %s235
    %p239 = scmp.eq.s32.totalorder %s16, 0
    %p240 = por %p238, %p239
    %p241 = scmp.ne.s32.totalorder %s233, %s235
    %p242 = scmp.eq.s32.totalorder %s21, 1
    %p243 = por %p241, %p242
    %p244 = scmp.ne.s32.totalorder %s235, %s236
    %p245 = scmp.eq.s32.totalorder %s21, 0
    %p246 = por %p244, %p245
    %p247 = scmp.ne.s32.totalorder %s235, %s236
    %p248 = scmp.eq.s32.totalorder %s22, 1
    %p249 = por %p247, %p248
    %p251 = scmp.ne.s32.totalorder %s236, %s250
    %p252 = scmp.eq.s32.totalorder %s22, 0
    %p253 = por %p251, %p252
    %s254 = ssub.s32 %s16, %s23
    %p255 = scmp.eq.s32.totalorder %s254, 0
    %s257 = sadd.s32 %s256, 1
    %s258 = scalar_select %p255, %s256, %s257
    %p261 = pneg %p255
    %p262 = scmp.eq.s32.totalorder %s16, 1
    %p263 = por %p261, %p262
    %p264 = scmp.ne.s32.totalorder %s256, %s259
    %p265 = scmp.eq.s32.totalorder %s16, 0
    %p266 = por %p264, %p265
    %p267 = scmp.ne.s32.totalorder %s256, %s259
    %p268 = scmp.eq.s32.totalorder %s21, 1
    %p269 = por %p267, %p268
    %p270 = scmp.ne.s32.totalorder %s259, %s260
    %p271 = scmp.eq.s32.totalorder %s21, 0
    %p272 = por %p270, %p271
    %p273 = scmp.ne.s32.totalorder %s259, %s260
    %p274 = scmp.eq.s32.totalorder %s22, 1
    %p275 = por %p273, %p274
    %p277 = scmp.ne.s32.totalorder %s260, %s276
    %p278 = scmp.eq.s32.totalorder %s22, 0
    %p279 = por %p277, %p278
    %p280 = scmp.le.s32.totalorder 1, %s16
    %p281 = scmp.lt.s32.totalorder %s16, 3
    %p282 = pnand %p280, %p281
    %p283 = pneg %p282
    // Predicated region
    $region9: #{parallel_block_cat_forward.9} parent=5 // pred_check
      _
    $region10: #{parallel_block_cat_forward.9} parent=5 // pred_check_branch
      %285 = sbr.rel (%p282) target = $region12
    $region11: #{parallel_block_cat_forward.9} parent=5 // pred_region
      %s286 = ssub.s32 %s16, 1
      // Predicated region
      $region13: #{parallel_block_cat_forward.9} parent=11 // pred_check
        %p287 = pneg %p141
      $region14: #{parallel_block_cat_forward.9} parent=11 // pred_check_branch
        %289 = sbr.rel (%p287) target = $region16
      $region15: #{parallel_block_cat_forward.9} parent=11 // pred_region
        _
      $region16: #{parallel_block_cat_forward.9} parent=11 // pred_fallthru
        _
      // Predicated region
      $region17: #{parallel_block_cat_forward.9} parent=11 // pred_check
        %p290 = pneg %p162
      $region18: #{parallel_block_cat_forward.9} parent=11 // pred_check_branch
        %292 = sbr.rel (%p290) target = $region20
      $region19: #{parallel_block_cat_forward.9} parent=11 // pred_region
        _
      $region20: #{parallel_block_cat_forward.9} parent=11 // pred_fallthru
        _
      // Predicated region
      $region21: #{parallel_block_cat_forward.9} parent=11 // pred_check
        %p293 = pneg %p183
      $region22: #{parallel_block_cat_forward.9} parent=11 // pred_check_branch
        %295 = sbr.rel (%p293) target = $region24
      $region23: #{parallel_block_cat_forward.9} parent=11 // pred_region
        _
      $region24: #{parallel_block_cat_forward.9} parent=11 // pred_fallthru
        _
      // Predicated region
      $region25: #{parallel_block_cat_forward.9} parent=11 // pred_check
        %p296 = pneg %p204
      $region26: #{parallel_block_cat_forward.9} parent=11 // pred_check_branch
        %298 = sbr.rel (%p296) target = $region28
      $region27: #{parallel_block_cat_forward.9} parent=11 // pred_region
        _
      $region28: #{parallel_block_cat_forward.9} parent=11 // pred_fallthru
        _
      // Predicated region
      $region29: #{parallel_block_cat_forward.9} parent=11 // pred_check
        %p299 = pneg %p225
      $region30: #{parallel_block_cat_forward.9} parent=11 // pred_check_branch
        %301 = sbr.rel (%p299) target = $region32
      $region31: #{parallel_block_cat_forward.9} parent=11 // pred_region
        _
      $region32: #{parallel_block_cat_forward.9} parent=11 // pred_fallthru
        _
      // Predicated region
      $region33: #{parallel_block_cat_forward.9} parent=11 // pred_check
        %p302 = pneg %p246
      $region34: #{parallel_block_cat_forward.9} parent=11 // pred_check_branch
        %304 = sbr.rel (%p302) target = $region36
      $region35: #{parallel_block_cat_forward.9} parent=11 // pred_region
        _
      $region36: #{parallel_block_cat_forward.9} parent=11 // pred_fallthru
        _
    $region12: #{parallel_block_cat_forward.9} parent=5 // pred_fallthru
      _
    %p305 = scmp.lt.s32.totalorder %s16, 2
    // Predicated region
    $region37: #{parallel_block_cat_forward.9} parent=5 // pred_check
      %p306 = pneg %p305
    $region38: #{parallel_block_cat_forward.9} parent=5 // pred_check_branch
      %308 = sbr.rel (%p306) target = $region40
    $region39: #{parallel_block_cat_forward.9} parent=5 // pred_region
      // Predicated region
      $region41: #{parallel_block_cat_forward.9} parent=39 // pred_check
        %p309 = pneg %p36
      $region42: #{parallel_block_cat_forward.9} parent=39 // pred_check_branch
        %311 = sbr.rel (%p309) target = $region44
      $region43: #{parallel_block_cat_forward.9} parent=39 // pred_region
        %s312 = smul.u32 8, %s16
        %p313 = scmp.lt.s32.totalorder %s312, 15
        %s314 = scalar_select %p313, %s312, 15
        %s315 = smul.addr %s314, 4
        %s316 = scalar_lea.vmem %s0, %s315
        %s317 = smul.u32 8, %s16
      $region44: #{parallel_block_cat_forward.9} parent=39 // pred_fallthru
        _
      // Predicated region
      $region45: #{parallel_block_cat_forward.9} parent=39 // pred_check
        %p318 = pneg %p62
      $region46: #{parallel_block_cat_forward.9} parent=39 // pred_check_branch
        %320 = sbr.rel (%p318) target = $region48
      $region47: #{parallel_block_cat_forward.9} parent=39 // pred_region
        %s321 = smul.u32 8, %s16
        %p322 = scmp.lt.s32.totalorder %s321, 15
        %s323 = scalar_select %p322, %s321, 15
        %s324 = smul.addr %s323, 4
        %s325 = scalar_lea.vmem %s1, %s324
        %s326 = smul.u32 8, %s16
      $region48: #{parallel_block_cat_forward.9} parent=39 // pred_fallthru
        _
      // Predicated region
      $region49: #{parallel_block_cat_forward.9} parent=39 // pred_check
        %p327 = pneg %p88
      $region50: #{parallel_block_cat_forward.9} parent=39 // pred_check_branch
        %329 = sbr.rel (%p327) target = $region52
      $region51: #{parallel_block_cat_forward.9} parent=39 // pred_region
        %s330 = smul.u32 8, %s16
        %p331 = scmp.lt.s32.totalorder %s330, 15
        %s332 = scalar_select %p331, %s330, 15
        %s333 = smul.addr %s332, 4
        %s334 = scalar_lea.vmem %s2, %s333
        %s335 = smul.u32 8, %s16
      $region52: #{parallel_block_cat_forward.9} parent=39 // pred_fallthru
        _
      // Predicated region
      $region53: #{parallel_block_cat_forward.9} parent=39 // pred_check
        %p336 = pneg %p114
      $region54: #{parallel_block_cat_forward.9} parent=39 // pred_check_branch
        %338 = sbr.rel (%p336) target = $region56
      $region55: #{parallel_block_cat_forward.9} parent=39 // pred_region
        %s339 = smul.u32 8, %s16
        %p340 = scmp.lt.s32.totalorder %s339, 15
        %s341 = scalar_select %p340, %s339, 15
        %s342 = smul.addr %s341, 8
        %s343 = scalar_lea.vmem %s3, %s342
        %s344 = smul.u32 8, %s16
      $region56: #{parallel_block_cat_forward.9} parent=39 // pred_fallthru
        _
    $region40: #{parallel_block_cat_forward.9} parent=5 // pred_fallthru
      _
    %p345 = scmp.le.s32.totalorder 1, %s16
    %p346 = scmp.lt.s32.totalorder %s16, 3
    %p347 = pnand %p345, %p346
    %p348 = pneg %p347
    // Predicated region
    $region57: #{parallel_block_cat_forward.9} parent=5 // pred_check
      _
    $region58: #{parallel_block_cat_forward.9} parent=5 // pred_check_branch
      %350 = sbr.rel (%p347) target = $region60
    $region59: #{parallel_block_cat_forward.9} parent=5 // pred_region
      %s351 = ssub.s32 %s16, 1
      %s352 = smul.u32 8, %s21
      %p353 = scmp.lt.s32.totalorder %s352, 15
      %s354 = scalar_select %p353, %s352, 15
      %s355 = smul.addr %s354, 4
      %s356 = scalar_lea.vmem %s0, %s355
      %p357 = pneg %p42
      %p358 = pneg %p39
      %s359 = smul.u32 8, %s21
      %p360 = scmp.lt.s32.totalorder %s359, 15
      %s361 = scalar_select %p360, %s359, 15
      %s362 = smul.addr %s361, 4
      %s363 = scalar_lea.vmem %s1, %s362
      %p364 = pneg %p68
      %p365 = pneg %p65
      %s366 = smul.u32 8, %s21
      %p367 = scmp.lt.s32.totalorder %s366, 15
      %s368 = scalar_select %p367, %s366, 15
      %s369 = smul.addr %s368, 4
      %s370 = scalar_lea.vmem %s2, %s369
      %p371 = pneg %p94
      %p372 = pneg %p91
      %s373 = smul.u32 8, %s21
      %p374 = scmp.lt.s32.totalorder %s373, 15
      %s375 = scalar_select %p374, %s373, 15
      %s376 = smul.addr %s375, 8
      %s377 = scalar_lea.vmem %s3, %s376
      %p378 = pneg %p120
      %p379 = pneg %p117
      %p380 = pneg %p141
      %p381 = pneg %p138
      %p382 = pneg %p162
      %p383 = pneg %p159
      %p384 = pneg %p183
      %p385 = pneg %p180
      %p386 = pneg %p204
      %p387 = pneg %p201
      %p388 = pneg %p225
      %p389 = pneg %p222
      %p390 = pneg %p246
      %p391 = pneg %p243
      %p392 = pneg %p272
      %p393 = pneg %p269
      %s394 = smul.u32 8, %s21
      %p395 = scmp.lt.s32.totalorder %s394, 15
      %s396 = scalar_select %p395, %s394, 15
      %s397 = smul.addr %s396, 8
      %s398 = scalar_lea.vmem %s10, %s397
      %s399 = smul.u32 8, %s21
      %p400 = scmp.lt.s32.totalorder %s399, 15
      %s401 = scalar_select %p400, %s399, 15
      %s402 = smul.addr %s401, 4
      %s403 = scalar_lea.vmem %s0, %s402
      %s404 = smul.u32 8, %s21
      %s405 = smul.u32 8, %s21
      %p406 = scmp.lt.s32.totalorder %s405, 15
      %s407 = scalar_select %p406, %s405, 15
      %s408 = smul.addr %s407, 4
      %s409 = scalar_lea.vmem %s1, %s408
      %s410 = smul.u32 8, %s21
      %s411 = smul.u32 8, %s21
      %p412 = scmp.lt.s32.totalorder %s411, 15
      %s413 = scalar_select %p412, %s411, 15
      %s414 = smul.addr %s413, 4
      %s415 = scalar_lea.vmem %s2, %s414
      %s416 = smul.u32 8, %s21
      %s417 = smul.u32 8, %s21
      %p418 = scmp.lt.s32.totalorder %s417, 15
      %s419 = scalar_select %p418, %s417, 15
      %s420 = smul.addr %s419, 8
      %s421 = scalar_lea.vmem %s3, %s420
      %s422 = smul.u32 8, %s21
      %s423 = smul.u32 8, %s21
      %p424 = scmp.lt.s32.totalorder %s423, 15
      %s425 = scalar_select %p424, %s423, 15
      %s426 = smul.addr %s425, 8
      %s427 = scalar_lea.vmem %s10, %s426
      %s428 = smul.u32 8, %s21
      %v430 = vld [vmem:[%s403] sm:$0xf]
      %v431 = vld [vmem:[%s403 + $0x4] sm:$0xf]
      %v432 = vld [vmem:[%s403 + $0x8] sm:$0xf]
      %v433 = vld [vmem:[%s403 + $0xc] sm:$0xf]
      %v434 = vld [vmem:[%s403 + $0x10] sm:$0xf]
      %v435 = vld [vmem:[%s403 + $0x14] sm:$0xf]
      %v436 = vld [vmem:[%s403 + $0x18] sm:$0xf]
      %v437 = vld [vmem:[%s403 + $0x1c] sm:$0xf]
      %v438 = vld [vmem:[%s409] sm:$0xf]
      %v439 = vld [vmem:[%s409 + $0x4] sm:$0xf]
      %v440 = vld [vmem:[%s409 + $0x8] sm:$0xf]
      %v441 = vld [vmem:[%s409 + $0xc] sm:$0xf]
      %v442 = vld [vmem:[%s409 + $0x10] sm:$0xf]
      %v443 = vld [vmem:[%s409 + $0x14] sm:$0xf]
      %v444 = vld [vmem:[%s409 + $0x18] sm:$0xf]
      %v445 = vld [vmem:[%s409 + $0x1c] sm:$0xf]
      %v446 = vld [vmem:[%s415] sm:$0xf]
      %v447 = vld [vmem:[%s415 + $0x4] sm:$0xf]
      %v448 = vld [vmem:[%s415 + $0x8] sm:$0xf]
      %v449 = vld [vmem:[%s415 + $0xc] sm:$0xf]
      %v450 = vld [vmem:[%s415 + $0x10] sm:$0xf]
      %v451 = vld [vmem:[%s415 + $0x14] sm:$0xf]
      %v452 = vld [vmem:[%s415 + $0x18] sm:$0xf]
      %v453 = vld [vmem:[%s415 + $0x1c] sm:$0xf]
      %v454 = vld [vmem:[%s4] sm:$0xf]
      %v455 = vld [vmem:[%s4 + $0x4] sm:$0xf]
      %v456 = vld [vmem:[%s5] sm:$0xf]
      %v457 = vld [vmem:[%s5 + $0x4] sm:$0xf]
      %v458 = vld [vmem:[%s5 + $0x8] sm:$0xf]
      %v459 = vld [vmem:[%s5 + $0xc] sm:$0xf]
      %v468 = vunpack.c.l.b16 %v438
      %v469 = vunpack.c.l.b16 %v439
      %v470 = vunpack.c.l.b16 %v440
      %v471 = vunpack.c.l.b16 %v441
      %v472 = vunpack.c.l.b16 %v442
      %v473 = vunpack.c.l.b16 %v443
      %v474 = vunpack.c.l.b16 %v444
      %v475 = vunpack.c.l.b16 %v445
      %v476 = vpack.c.b16 %v469, %v468
      %v477 = vpack.c.b16 %v471, %v470
      %v478 = vpack.c.b16 %v473, %v472
      %v479 = vpack.c.b16 %v475, %v474
      %v484 = vunpack.c.l.b16 %v456
      %v485 = vunpack.c.l.b16 %v457
      %v486 = vunpack.c.l.b16 %v458
      %v487 = vunpack.c.l.b16 %v459
      %v488 = vpack.c.b16 %v485, %v484
      %v489 = vpack.c.b16 %v487, %v486
      %vm492 = vcmask 261120
      %v494 = vsel %vm492, %v476, 0
      %v497 = vsel %vm492, %v477, 0
      %v500 = vsel %vm492, %v478, 0
      %v503 = vsel %vm492, %v479, 0
      %505 = vmatprep.subr.bf16.mxu0 0
      %506 = vmatpush1.bf16.msra.mxu0 %v488
      %507 = vmatprep.subr.bf16.mxu0 0
      %508 = vmatpush1.bf16.msra.mxu0 %v489
      %509 = vmatprep.subr.bf16.mxu0 0
      %510 = vmatpush1.bf16.msra.mxu0 0
      %511 = vmatprep.subr.bf16.mxu0 0
      %512 = vmatpush1.bf16.msra.mxu0 0
      %513 = vmatprep.subr.bf16.mxu0 0
      %514 = vmatpush1.bf16.msra.mxu0 0
      %515 = vmatprep.subr.bf16.mxu0 0
      %516 = vmatpush1.bf16.msra.mxu0 0
      %517 = vmatprep.subr.bf16.mxu0 0
      %518 = vmatpush1.bf16.msra.mxu0 0
      %519 = vmatprep.subr.bf16.mxu0 0
      %520 = vmatpush1.bf16.msra.mxu0 0
      %521 = vmatprep.subr.bf16.mxu0 0
      %522 = vmatpush1.bf16.msra.mxu0 0
      %523 = vmatprep.subr.bf16.mxu0 0
      %524 = vmatpush1.bf16.msra.mxu0 0
      %525 = vmatprep.subr.bf16.mxu0 0
      %526 = vmatpush1.bf16.msra.mxu0 0
      %527 = vmatprep.subr.bf16.mxu0 0
      %528 = vmatpush1.bf16.msra.mxu0 0
      %529 = vmatprep.subr.bf16.mxu0 0
      %530 = vmatpush1.bf16.msra.mxu0 0
      %531 = vmatprep.subr.bf16.mxu0 0
      %532 = vmatpush1.bf16.msra.mxu0 0
      %533 = vmatprep.subr.bf16.mxu0 0
      %534 = vmatpush1.bf16.msra.mxu0 0
      %535 = vmatprep.subr.bf16.mxu0 0
      %536 = vmatpush1.bf16.msra.mxu0 0
      %537 = vmatprep.mubr.bf16.mxu0 0
      %538 = vmatmul.mubr.bf16.gmra.mrb[0].mxu0 %v494
      %v539 = vpop.f32.mrb[0].mxu0
      %v540 = vadd.f32 0.0, %v539
      %v541 = vpop.f32.mrb[0].mxu0
      %v542 = vpop.f32.mrb[0].mxu0
      %v543 = vadd.f32 0.0, %v542
      %v544 = vpop.f32.mrb[0].mxu0
      %545 = vmatprep.mubr.bf16.mxu0 0
      %546 = vmatmul.mubr.bf16.gmra.mrb[0].mxu0 %v497
      %v547 = vpop.f32.mrb[0].mxu0
      %v548 = vadd.f32 0.0, %v547
      %v549 = vpop.f32.mrb[0].mxu0
      %v550 = vpop.f32.mrb[0].mxu0
      %v551 = vadd.f32 0.0, %v550
      %v552 = vpop.f32.mrb[0].mxu0
      %553 = vmatprep.mubr.bf16.mxu0 0
      %554 = vmatmul.mubr.bf16.gmra.mrb[0].mxu0 %v500
      %v555 = vpop.f32.mrb[0].mxu0
      %v556 = vadd.f32 0.0, %v555
      %v557 = vpop.f32.mrb[0].mxu0
      %v558 = vpop.f32.mrb[0].mxu0
      %v559 = vadd.f32 0.0, %v558
      %v560 = vpop.f32.mrb[0].mxu0
      %561 = vmatprep.mubr.bf16.mxu0 0
      %562 = vmatmul.mubr.bf16.gmra.mrb[0].mxu0 %v503
      %v563 = vpop.f32.mrb[0].mxu0
      %v564 = vadd.f32 0.0, %v563
      %v565 = vpop.f32.mrb[0].mxu0
      %v566 = vpop.f32.mrb[0].mxu0
      %v567 = vadd.f32 0.0, %v566
      %v568 = vpop.f32.mrb[0].mxu0
      %569 = vdwg.mxu0
      %v578 = vunpack.c.l.b16 %v430
      %v579 = vunpack.c.l.b16 %v431
      %v580 = vunpack.c.l.b16 %v432
      %v581 = vunpack.c.l.b16 %v433
      %v582 = vunpack.c.l.b16 %v434
      %v583 = vunpack.c.l.b16 %v435
      %v584 = vunpack.c.l.b16 %v436
      %v585 = vunpack.c.l.b16 %v437
      %v586 = vpack.c.b16 %v579, %v578
      %v587 = vpack.c.b16 %v581, %v580
      %v588 = vpack.c.b16 %v583, %v582
      %v589 = vpack.c.b16 %v585, %v584
      %v592 = vunpack.c.l.b16 %v454
      %v593 = vunpack.c.l.b16 %v455
      %v594 = vpack.c.b16 %v593, %v592
      %vm596 = vcmask 130048
      %v598 = vsel %vm596, %v586, 0
      %v601 = vsel %vm596, %v587, 0
      %v604 = vsel %vm596, %v588, 0
      %v607 = vsel %vm596, %v589, 0
      %609 = vmatprep.subr.bf16.mxu0 0
      %610 = vmatpush1.bf16.msra.mxu0 %v594
      %611 = vmatprep.subr.bf16.mxu0 0
      %612 = vmatpush1.bf16.msra.mxu0 0
      %613 = vmatprep.subr.bf16.mxu0 0
      %614 = vmatpush1.bf16.msra.mxu0 0
      %615 = vmatprep.subr.bf16.mxu0 0
      %616 = vmatpush1.bf16.msra.mxu0 0
      %617 = vmatprep.subr.bf16.mxu0 0
      %618 = vmatpush1.bf16.msra.mxu0 0
      %619 = vmatprep.subr.bf16.mxu0 0
      %620 = vmatpush1.bf16.msra.mxu0 0
      %621 = vmatprep.subr.bf16.mxu0 0
      %622 = vmatpush1.bf16.msra.mxu0 0
      %623 = vmatprep.subr.bf16.mxu0 0
      %624 = vmatpush1.bf16.msra.mxu0 0
      %625 = vmatprep.subr.bf16.mxu0 0
      %626 = vmatpush1.bf16.msra.mxu0 0
      %627 = vmatprep.subr.bf16.mxu0 0
      %628 = vmatpush1.bf16.msra.mxu0 0
      %629 = vmatprep.subr.bf16.mxu0 0
      %630 = vmatpush1.bf16.msra.mxu0 0
      %631 = vmatprep.subr.bf16.mxu0 0
      %632 = vmatpush1.bf16.msra.mxu0 0
      %633 = vmatprep.subr.bf16.mxu0 0
      %634 = vmatpush1.bf16.msra.mxu0 0
      %635 = vmatprep.subr.bf16.mxu0 0
      %636 = vmatpush1.bf16.msra.mxu0 0
      %637 = vmatprep.subr.bf16.mxu0 0
      %638 = vmatpush1.bf16.msra.mxu0 0
      %639 = vmatprep.subr.bf16.mxu0 0
      %640 = vmatpush1.bf16.msra.mxu0 0
      %641 = vmatprep.mubr.bf16.mxu0 0
      %642 = vmatmul.mubr.bf16.gmra.mrb[0].mxu0 %v598
      %v643 = vpop.f32.mrb[0].mxu0
      %v644 = vadd.f32 %v540, %v643
      %v645 = vpop.f32.mrb[0].mxu0
      %v646 = vpop.f32.mrb[0].mxu0
      %v647 = vadd.f32 %v543, %v646
      %v648 = vpop.f32.mrb[0].mxu0
      %649 = vmatprep.mubr.bf16.mxu0 0
      %650 = vmatmul.mubr.bf16.gmra.mrb[0].mxu0 %v601
      %v651 = vpop.f32.mrb[0].mxu0
      %v652 = vadd.f32 %v548, %v651
      %v653 = vpop.f32.mrb[0].mxu0
      %v654 = vpop.f32.mrb[0].mxu0
      %v655 = vadd.f32 %v551, %v654
      %v656 = vpop.f32.mrb[0].mxu0
      %657 = vmatprep.mubr.bf16.mxu0 0
      %658 = vmatmul.mubr.bf16.gmra.mrb[0].mxu0 %v604
      %v659 = vpop.f32.mrb[0].mxu0
      %v660 = vadd.f32 %v556, %v659
      %v661 = vpop.f32.mrb[0].mxu0
      %v662 = vpop.f32.mrb[0].mxu0
      %v663 = vadd.f32 %v559, %v662
      %v664 = vpop.f32.mrb[0].mxu0
      %665 = vmatprep.mubr.bf16.mxu0 0
      %666 = vmatmul.mubr.bf16.gmra.mrb[0].mxu0 %v607
      %v667 = vpop.f32.mrb[0].mxu0
      %v668 = vadd.f32 %v564, %v667
      %v669 = vpop.f32.mrb[0].mxu0
      %v670 = vpop.f32.mrb[0].mxu0
      %v671 = vadd.f32 %v567, %v670
      %v672 = vpop.f32.mrb[0].mxu0
      %673 = vdwg.mxu0
      %v674 = vld [vmem:[%s6] sm:$0xf]
      %v675 = vld [vmem:[%s6 + $0x4] sm:$0xf]
      %v676 = vld [vmem:[%s6 + $0x8] sm:$0xf]
      %v677 = vld [vmem:[%s6 + $0xc] sm:$0xf]
      %v678 = vld [vmem:[%s6 + $0x10] sm:$0xf]
      %v679 = vld [vmem:[%s6 + $0x14] sm:$0xf]
      %v680 = vld [vmem:[%s6 + $0x18] sm:$0xf]
      %v681 = vld [vmem:[%s6 + $0x1c] sm:$0xf]
      %v690 = vunpack.c.l.b16 %v446
      %v691 = vunpack.c.l.b16 %v447
      %v692 = vunpack.c.l.b16 %v448
      %v693 = vunpack.c.l.b16 %v449
      %v694 = vunpack.c.l.b16 %v450
      %v695 = vunpack.c.l.b16 %v451
      %v696 = vunpack.c.l.b16 %v452
      %v697 = vunpack.c.l.b16 %v453
      %v698 = vpack.c.b16 %v691, %v690
      %v699 = vpack.c.b16 %v693, %v692
      %v700 = vpack.c.b16 %v695, %v694
      %v701 = vpack.c.b16 %v697, %v696
      %v710 = vunpack.c.l.b16 %v674
      %v711 = vunpack.c.l.b16 %v675
      %v712 = vunpack.c.l.b16 %v676
      %v713 = vunpack.c.l.b16 %v677
      %v714 = vunpack.c.l.b16 %v678
      %v715 = vunpack.c.l.b16 %v679
      %v716 = vunpack.c.l.b16 %v680
      %v717 = vunpack.c.l.b16 %v681
      %v718 = vpack.c.b16 %v711, %v710
      %v719 = vpack.c.b16 %v713, %v712
      %v720 = vpack.c.b16 %v715, %v714
      %v721 = vpack.c.b16 %v717, %v716
      %vm726 = vcmask 523264
      %v728 = vsel %vm726, %v698, 0
      %v731 = vsel %vm726, %v699, 0
      %v734 = vsel %vm726, %v700, 0
      %v737 = vsel %vm726, %v701, 0
      %739 = vmatprep.subr.bf16.mxu0 0
      %740 = vmatpush1.bf16.msra.mxu0 %v718
      %741 = vmatprep.subr.bf16.mxu0 0
      %742 = vmatpush1.bf16.msra.mxu0 %v719
      %743 = vmatprep.subr.bf16.mxu0 0
      %744 = vmatpush1.bf16.msra.mxu0 %v720
      %745 = vmatprep.subr.bf16.mxu0 0
      %746 = vmatpush1.bf16.msra.mxu0 %v721
      %747 = vmatprep.subr.bf16.mxu0 0
      %748 = vmatpush1.bf16.msra.mxu0 0
      %749 = vmatprep.subr.bf16.mxu0 0
      %750 = vmatpush1.bf16.msra.mxu0 0
      %751 = vmatprep.subr.bf16.mxu0 0
      %752 = vmatpush1.bf16.msra.mxu0 0
      %753 = vmatprep.subr.bf16.mxu0 0
      %754 = vmatpush1.bf16.msra.mxu0 0
      %755 = vmatprep.subr.bf16.mxu0 0
      %756 = vmatpush1.bf16.msra.mxu0 0
      %757 = vmatprep.subr.bf16.mxu0 0
      %758 = vmatpush1.bf16.msra.mxu0 0
      %759 = vmatprep.subr.bf16.mxu0 0
      %760 = vmatpush1.bf16.msra.mxu0 0
      %761 = vmatprep.subr.bf16.mxu0 0
      %762 = vmatpush1.bf16.msra.mxu0 0
      %763 = vmatprep.subr.bf16.mxu0 0
      %764 = vmatpush1.bf16.msra.mxu0 0
      %765 = vmatprep.subr.bf16.mxu0 0
      %766 = vmatpush1.bf16.msra.mxu0 0
      %767 = vmatprep.subr.bf16.mxu0 0
      %768 = vmatpush1.bf16.msra.mxu0 0
      %769 = vmatprep.subr.bf16.mxu0 0
      %770 = vmatpush1.bf16.msra.mxu0 0
      %771 = vmatprep.mubr.bf16.mxu0 0
      %772 = vmatmul.mubr.bf16.gmra.mrb[0].mxu0 %v728
      %v773 = vpop.f32.mrb[0].mxu0
      %v774 = vadd.f32 0.0, %v773
      %v775 = vpop.f32.mrb[0].mxu0
      %v776 = vpop.f32.mrb[0].mxu0
      %v777 = vadd.f32 0.0, %v776
      %v778 = vpop.f32.mrb[0].mxu0
      %779 = vmatprep.mubr.bf16.mxu0 0
      %780 = vmatmul.mubr.bf16.gmra.mrb[0].mxu0 %v731
      %v781 = vpop.f32.mrb[0].mxu0
      %v782 = vadd.f32 0.0, %v781
      %v783 = vpop.f32.mrb[0].mxu0
      %v784 = vpop.f32.mrb[0].mxu0
      %v785 = vadd.f32 0.0, %v784
      %v786 = vpop.f32.mrb[0].mxu0
      %787 = vmatprep.mubr.bf16.mxu0 0
      %788 = vmatmul.mubr.bf16.gmra.mrb[0].mxu0 %v734
      %v789 = vpop.f32.mrb[0].mxu0
      %v790 = vadd.f32 0.0, %v789
      %v791 = vpop.f32.mrb[0].mxu0
      %v792 = vpop.f32.mrb[0].mxu0
      %v793 = vadd.f32 0.0, %v792
      %v794 = vpop.f32.mrb[0].mxu0
      %795 = vmatprep.mubr.bf16.mxu0 0
      %796 = vmatmul.mubr.bf16.gmra.mrb[0].mxu0 %v737
      %v797 = vpop.f32.mrb[0].mxu0
      %v798 = vadd.f32 0.0, %v797
      %v799 = vpop.f32.mrb[0].mxu0
      %v800 = vpop.f32.mrb[0].mxu0
      %v801 = vadd.f32 0.0, %v800
      %v802 = vpop.f32.mrb[0].mxu0
      %803 = vdwg.mxu0
      %v804 = vadd.f32 %v644, %v774
      %v805 = vadd.f32 %v647, %v777
      %v806 = vadd.f32 %v652, %v782
      %v807 = vadd.f32 %v655, %v785
      %v808 = vadd.f32 %v660, %v790
      %v809 = vadd.f32 %v663, %v793
      %v810 = vadd.f32 %v668, %v798
      %v811 = vadd.f32 %v671, %v801
      %v812 = vld [vmem:[%s7] sm:$0x1]
      %v814 = vlaneseq
      %v815 = vshrl.u32 %v814, 7
      %v816 = vsub.s32 0, %v815
      %v817 = vrot.slane %v812, %v816
      %v819 = vadd.f32 %v804, %v817
      %v820 = vadd.f32 %v805, %v817
      %v821 = vadd.f32 %v806, %v817
      %v822 = vadd.f32 %v807, %v817
      %v823 = vadd.f32 %v808, %v817
      %v824 = vadd.f32 %v809, %v817
      %v825 = vadd.f32 %v810, %v817
      %v826 = vadd.f32 %v811, %v817
      %v827 = vmul.f32 %v819, 0.5
      %v828 = vmul.f32 %v820, 0.5
      %v829 = vmul.f32 %v821, 0.5
      %v830 = vmul.f32 %v822, 0.5
      %v831 = vmul.f32 %v823, 0.5
      %v832 = vmul.f32 %v824, 0.5
      %v833 = vmul.f32 %v825, 0.5
      %v834 = vmul.f32 %v826, 0.5
      %v835 = vmul.f32 %v819, 0.70710677
      %v836 = vmul.f32 %v820, 0.70710677
      %v837 = vmul.f32 %v821, 0.70710677
      %v838 = vmul.f32 %v822, 0.70710677
      %v839 = vmul.f32 %v823, 0.70710677
      %v840 = vmul.f32 %v824, 0.70710677
      %v841 = vmul.f32 %v825, 0.70710677
      %v842 = vmul.f32 %v826, 0.70710677
      %v843 = verf.f32.pop %v835
      %v844 = verf.f32.pop %v836
      %v845 = verf.f32.pop %v837
      %v846 = verf.f32.pop %v838
      %v847 = verf.f32.pop %v839
      %v848 = verf.f32.pop %v840
      %v849 = verf.f32.pop %v841
      %v850 = verf.f32.pop %v842
      %v851 = vadd.f32 %v843, 1.0
      %v852 = vadd.f32 %v844, 1.0
      %v853 = vadd.f32 %v845, 1.0
      %v854 = vadd.f32 %v846, 1.0
      %v855 = vadd.f32 %v847, 1.0
      %v856 = vadd.f32 %v848, 1.0
      %v857 = vadd.f32 %v849, 1.0
      %v858 = vadd.f32 %v850, 1.0
      %v859 = vmul.f32 %v827, %v851
      %v860 = vmul.f32 %v828, %v852
      %v861 = vmul.f32 %v829, %v853
      %v862 = vmul.f32 %v830, %v854
      %v863 = vmul.f32 %v831, %v855
      %v864 = vmul.f32 %v832, %v856
      %v865 = vmul.f32 %v833, %v857
      %v866 = vmul.f32 %v834, %v858
      %v867 = vpack.c.bf16 %v860, %v859
      %v868 = vpack.c.bf16 %v862, %v861
      %v869 = vpack.c.bf16 %v864, %v863
      %v870 = vpack.c.bf16 %v866, %v865
      %v871 = vld [vmem:[%s8] sm:$0xf]
      %v872 = vld [vmem:[%s8 + $0x4] sm:$0xf]
      %v873 = vld [vmem:[%s8 + $0x8] sm:$0xf]
      %v874 = vld [vmem:[%s8 + $0xc] sm:$0xf]
      %v875 = vld [vmem:[%s9] sm:$0x1]
      %v877 = vlaneseq
      %v878 = vshrl.u32 %v877, 7
      %v879 = vsub.s32 0, %v878
      %v880 = vrot.slane %v875, %v879
      %v886 = vunpack.c.l.b16 %v871
      %v887 = vunpack.c.l.b16 %v872
      %v888 = vunpack.c.l.b16 %v873
      %v889 = vunpack.c.l.b16 %v874
      %v890 = vpack.c.b16 %v887, %v886
      %v891 = vpack.c.b16 %v889, %v888
      %v895 = vsel %vm492, %v867, 0
      %v898 = vsel %vm492, %v868, 0
      %v901 = vsel %vm492, %v869, 0
      %v904 = vsel %vm492, %v870, 0
      %906 = vmatprep.subr.bf16.mxu0 0
      %907 = vmatpush1.bf16.msra.mxu0 %v890
      %908 = vmatprep.subr.bf16.mxu0 0
      %909 = vmatpush1.bf16.msra.mxu0 %v891
      %910 = vmatprep.subr.bf16.mxu0 0
      %911 = vmatpush1.bf16.msra.mxu0 0
      %912 = vmatprep.subr.bf16.mxu0 0
      %913 = vmatpush1.bf16.msra.mxu0 0
      %914 = vmatprep.subr.bf16.mxu0 0
      %915 = vmatpush1.bf16.msra.mxu0 0
      %916 = vmatprep.subr.bf16.mxu0 0
      %917 = vmatpush1.bf16.msra.mxu0 0
      %918 = vmatprep.subr.bf16.mxu0 0
      %919 = vmatpush1.bf16.msra.mxu0 0
      %920 = vmatprep.subr.bf16.mxu0 0
      %921 = vmatpush1.bf16.msra.mxu0 0
      %922 = vmatprep.subr.bf16.mxu0 0
      %923 = vmatpush1.bf16.msra.mxu0 0
      %924 = vmatprep.subr.bf16.mxu0 0
      %925 = vmatpush1.bf16.msra.mxu0 0
      %926 = vmatprep.subr.bf16.mxu0 0
      %927 = vmatpush1.bf16.msra.mxu0 0
      %928 = vmatprep.subr.bf16.mxu0 0
      %929 = vmatpush1.bf16.msra.mxu0 0
      %930 = vmatprep.subr.bf16.mxu0 0
      %931 = vmatpush1.bf16.msra.mxu0 0
      %932 = vmatprep.subr.bf16.mxu0 0
      %933 = vmatpush1.bf16.msra.mxu0 0
      %934 = vmatprep.subr.bf16.mxu0 0
      %935 = vmatpush1.bf16.msra.mxu0 0
      %936 = vmatprep.subr.bf16.mxu0 0
      %937 = vmatpush1.bf16.msra.mxu0 0
      %938 = vmatprep.mubr.bf16.mxu0 0
      %939 = vmatmul.mubr.bf16.gmra.mrb[0].mxu0 %v895
      %v940 = vpop.f32.mrb[0].mxu0
      %v941 = vadd.f32 %v880, %v940
      %v942 = vpop.f32.mrb[0].mxu0
      %v943 = vpop.f32.mrb[0].mxu0
      %v944 = vadd.f32 %v880, %v943
      %v945 = vpop.f32.mrb[0].mxu0
      %946 = vmatprep.mubr.bf16.mxu0 0
      %947 = vmatmul.mubr.bf16.gmra.mrb[0].mxu0 %v898
      %v948 = vpop.f32.mrb[0].mxu0
      %v949 = vadd.f32 %v880, %v948
      %v950 = vpop.f32.mrb[0].mxu0
      %v951 = vpop.f32.mrb[0].mxu0
      %v952 = vadd.f32 %v880, %v951
      %v953 = vpop.f32.mrb[0].mxu0
      %954 = vmatprep.mubr.bf16.mxu0 0
      %955 = vmatmul.mubr.bf16.gmra.mrb[0].mxu0 %v901
      %v956 = vpop.f32.mrb[0].mxu0
      %v957 = vadd.f32 %v880, %v956
      %v958 = vpop.f32.mrb[0].mxu0
      %v959 = vpop.f32.mrb[0].mxu0
      %v960 = vadd.f32 %v880, %v959
      %v961 = vpop.f32.mrb[0].mxu0
      %962 = vmatprep.mubr.bf16.mxu0 0
      %963 = vmatmul.mubr.bf16.gmra.mrb[0].mxu0 %v904
      %v964 = vpop.f32.mrb[0].mxu0
      %v965 = vadd.f32 %v880, %v964
      %v966 = vpop.f32.mrb[0].mxu0
      %v967 = vpop.f32.mrb[0].mxu0
      %v968 = vadd.f32 %v880, %v967
      %v969 = vpop.f32.mrb[0].mxu0
      %970 = vdwg.mxu0
      %v971 = vld [vmem:[%s421] sm:$0xff]
      %v972 = vld [vmem:[%s421 + $0x8] sm:$0xff]
      %v973 = vld [vmem:[%s421 + $0x10] sm:$0xff]
      %v974 = vld [vmem:[%s421 + $0x18] sm:$0xff]
      %v975 = vld [vmem:[%s421 + $0x20] sm:$0xff]
      %v976 = vld [vmem:[%s421 + $0x28] sm:$0xff]
      %v977 = vld [vmem:[%s421 + $0x30] sm:$0xff]
      %v978 = vld [vmem:[%s421 + $0x38] sm:$0xff]
      %v979 = vadd.f32 %v971, %v941
      %v980 = vadd.f32 %v972, %v944
      %v981 = vadd.f32 %v973, %v949
      %v982 = vadd.f32 %v974, %v952
      %v983 = vadd.f32 %v975, %v957
      %v984 = vadd.f32 %v976, %v960
      %v985 = vadd.f32 %v977, %v965
      %v986 = vadd.f32 %v978, %v968
      %987 = vst.msk [vmem:[%s427] sm:$0xff] %vm596, %v979
      %988 = vst.msk [vmem:[%s427 + $0x8] sm:$0xff] %vm596, %v980
      %989 = vst.msk [vmem:[%s427 + $0x10] sm:$0xff] %vm596, %v981
      %990 = vst.msk [vmem:[%s427 + $0x18] sm:$0xff] %vm596, %v982
      %991 = vst.msk [vmem:[%s427 + $0x20] sm:$0xff] %vm596, %v983
      %992 = vst.msk [vmem:[%s427 + $0x28] sm:$0xff] %vm596, %v984
      %993 = vst.msk [vmem:[%s427 + $0x30] sm:$0xff] %vm596, %v985
      %994 = vst.msk [vmem:[%s427 + $0x38] sm:$0xff] %vm596, %v986
      %s995 = smul.u32 8, %s21
      %p996 = scmp.lt.s32.totalorder %s995, 15
      %s997 = scalar_select %p996, %s995, 15
      %s998 = smul.addr %s997, 8
      %s999 = scalar_lea.vmem %s10, %s998
      // Predicated region
      $region61: #{parallel_block_cat_forward.9} parent=59 // pred_check
        %p1000 = pneg %p269
      $region62: #{parallel_block_cat_forward.9} parent=59 // pred_check_branch
        %1002 = sbr.rel (%p1000) target = $region64
      $region63: #{parallel_block_cat_forward.9} parent=59 // pred_region
        %s1003 = smul.u32 8, %s21
      $region64: #{parallel_block_cat_forward.9} parent=59 // pred_fallthru
        _
    $region60: #{parallel_block_cat_forward.9} parent=5 // pred_fallthru
      _
    %p1004 = scmp.le.s32.totalorder 2, %s16
    // Predicated region
    $region65: #{parallel_block_cat_forward.9} parent=5 // pred_check
      %p1005 = pneg %p1004
    $region66: #{parallel_block_cat_forward.9} parent=5 // pred_check_branch
      %1007 = sbr.rel (%p1005) target = $region68
    $region67: #{parallel_block_cat_forward.9} parent=5 // pred_region
      %s1008 = ssub.s32 %s16, 2
      // Predicated region
      $region69: #{parallel_block_cat_forward.9} parent=67 // pred_check
        %p1009 = pneg %p275
      $region70: #{parallel_block_cat_forward.9} parent=67 // pred_check_branch
        %1011 = sbr.rel (%p1009) target = $region72
      $region71: #{parallel_block_cat_forward.9} parent=67 // pred_region
        %s1012 = smul.u32 8, %s22
        %p1013 = scmp.lt.s32.totalorder %s1012, 15
        %s1014 = scalar_select %p1013, %s1012, 15
        %s1015 = smul.addr %s1014, 8
        %s1016 = scalar_lea.vmem %s10, %s1015
      $region72: #{parallel_block_cat_forward.9} parent=67 // pred_fallthru
        _
    $region68: #{parallel_block_cat_forward.9} parent=5 // pred_fallthru
      _
  $region6: #{parallel_block_cat_forward.9} parent=0 // loop_footer
    %s20 = sadd.s32 1, %s16
  $region7: #{parallel_block_cat_forward.9} parent=0 // loop_footer_branch
    %15 = sbr.rel target = $region3
  $region8: #{parallel_block_cat_forward.9} parent=0 // loop_exit
    _

// kernel: parallel_block_cat_forward.6
$region0: #{parallel_block_cat_forward.6}
  #allocation0 [shape = 'u32[]', space=smem, size = 0x4, offset = 0x4, fixed_abs, tag = 'smem constant byte address 0x4 - core index']
  #allocation1 [shape = 'u32[144,128]{1,0:T(1,128)}', space=vmem, size = 0x12000, scoped, tag = 'internal scratch']
  %s0 = inlined_call_operand.vmem [shape: f32[16,8,16], index: 0, kind: input, shape index: {}]
  %s1 = inlined_call_operand.vmem [shape: f32[1,16], index: 1, kind: input, shape index: {}]
  %s2 = inlined_call_operand.vmem [shape: f32[1,16], index: 2, kind: input, shape index: {}]
  %s3 = inlined_call_operand.vmem [shape: bf16[16,384], index: 3, kind: input, shape index: {}]
  %s4 = inlined_call_operand.vmem [shape: f32[1,384], index: 4, kind: input, shape index: {}]
  %s5 = inlined_call_operand.vmem [shape: bf16[16,16], index: 5, kind: input, shape index: {}]
  %s6 = inlined_call_operand.vmem [shape: f32[1,16], index: 6, kind: input, shape index: {}]
  %s7 = inlined_call_operand.vmem [shape: f32[1,16], index: 7, kind: input, shape index: {}]
  %s8 = inlined_call_operand.vmem [shape: f32[1,16], index: 8, kind: input, shape index: {}]
  %s9 = inlined_call_operand.vmem [shape: f32[16,8,16], index: 9, kind: output, shape index: {0}]
  %s10 = inlined_call_operand.vmem [shape: bf16[16,8,16], index: 10, kind: output, shape index: {1}]
  %11 = xla_tuple %s9, %s10
  %s12 = sld [smem:[#allocation0]]
  $region77: #{parallel_block_cat_forward.6} parent=0
    _
  %s14 = ssub.s32 1, %s12
  %s15 = scalar_select 0, %s14, %s12
  loop: start=0, step=1, limit=4
  $region2: #{parallel_block_cat_forward.6} parent=0 // loop_pre_header
    _
  $region3: #{parallel_block_cat_forward.6} parent=0 // loop_header
    %s17 = sphi 0, %s21
    %p18 = scmp.ge.s32.totalorder %s17, 4
    %s27 = sphi 0, %s29
    %s30 = sphi 0, %s27
    %s31 = sphi 0, %s30
    %s47 = sphi 0, %s31
    %s51 = sphi 0, %s51
    %s53 = sphi 0, %s51
    %s54 = sphi 0, %s53
    %s68 = sphi 0, %s54
    %s72 = sphi 0, %s72
    %s74 = sphi 0, %s72
    %s75 = sphi 0, %s74
    %s89 = sphi 0, %s75
    %s93 = sphi 0, %s93
    %s95 = sphi 0, %s93
    %s96 = sphi 0, %s95
    %s110 = sphi 0, %s96
    %s114 = sphi 0, %s114
    %s116 = sphi 0, %s114
    %s117 = sphi 0, %s116
    %s131 = sphi 0, %s117
    %s135 = sphi 0, %s135
    %s137 = sphi 0, %s135
    %s138 = sphi 0, %s137
    %s152 = sphi 0, %s138
    %s156 = sphi 0, %s156
    %s158 = sphi 0, %s156
    %s159 = sphi 0, %s158
    %s173 = sphi 0, %s159
    %s177 = sphi 0, %s177
    %s179 = sphi 0, %s177
    %s180 = sphi 0, %s179
    %s194 = sphi 0, %s180
    %s198 = sphi 0, %s198
    %s200 = sphi 0, %s198
    %s201 = sphi 0, %s200
    %s215 = sphi 0, %s201
    %s221 = sphi 0, %s223
    %s224 = sphi 0, %s221
    %s225 = sphi 0, %s224
    %s241 = sphi 0, %s225
    %s247 = sphi 0, %s249
    %s250 = sphi 0, %s247
    %s251 = sphi 0, %s250
    %s267 = sphi 0, %s251
  $region4: #{parallel_block_cat_forward.6} parent=0 // loop_header_branch
    %20 = sbr.rel (%p18) target = $region8
  $region5: #{parallel_block_cat_forward.6} parent=0 // loop_body
    %s22 = ssub.s32 %s17, 1
    %s23 = ssub.s32 %s17, 2
    %s24 = sadd.s32 %s17, 1
    %s25 = ssub.s32 %s17, %s24
    %p26 = scmp.eq.s32.totalorder %s25, 0
    %s28 = sadd.s32 %s27, 1
    %s29 = scalar_select %p26, %s27, %s28
    %p32 = pneg %p26
    %p33 = scmp.eq.s32.totalorder %s17, 1
    %p34 = por %p32, %p33
    %p35 = scmp.ne.s32.totalorder %s27, %s30
    %p36 = scmp.eq.s32.totalorder %s17, 0
    %p37 = por %p35, %p36
    %p38 = scmp.ne.s32.totalorder %s27, %s30
    %p39 = scmp.eq.s32.totalorder %s22, 1
    %p40 = por %p38, %p39
    %p41 = scmp.ne.s32.totalorder %s30, %s31
    %p42 = scmp.eq.s32.totalorder %s22, 0
    %p43 = por %p41, %p42
    %p44 = scmp.ne.s32.totalorder %s30, %s31
    %p45 = scmp.eq.s32.totalorder %s23, 1
    %p46 = por %p44, %p45
    %p48 = scmp.ne.s32.totalorder %s31, %s47
    %p49 = scmp.eq.s32.totalorder %s23, 0
    %p50 = por %p48, %p49
    %s52 = sadd.s32 %s51, 1
    %p55 = scmp.eq.s32.totalorder %s17, 1
    %p56 = scmp.ne.s32.totalorder %s51, %s53
    %p57 = scmp.eq.s32.totalorder %s17, 0
    %p58 = por %p56, %p57
    %p59 = scmp.ne.s32.totalorder %s51, %s53
    %p60 = scmp.eq.s32.totalorder %s22, 1
    %p61 = por %p59, %p60
    %p62 = scmp.ne.s32.totalorder %s53, %s54
    %p63 = scmp.eq.s32.totalorder %s22, 0
    %p64 = por %p62, %p63
    %p65 = scmp.ne.s32.totalorder %s53, %s54
    %p66 = scmp.eq.s32.totalorder %s23, 1
    %p67 = por %p65, %p66
    %p69 = scmp.ne.s32.totalorder %s54, %s68
    %p70 = scmp.eq.s32.totalorder %s23, 0
    %p71 = por %p69, %p70
    %s73 = sadd.s32 %s72, 1
    %p76 = scmp.eq.s32.totalorder %s17, 1
    %p77 = scmp.ne.s32.totalorder %s72, %s74
    %p78 = scmp.eq.s32.totalorder %s17, 0
    %p79 = por %p77, %p78
    %p80 = scmp.ne.s32.totalorder %s72, %s74
    %p81 = scmp.eq.s32.totalorder %s22, 1
    %p82 = por %p80, %p81
    %p83 = scmp.ne.s32.totalorder %s74, %s75
    %p84 = scmp.eq.s32.totalorder %s22, 0
    %p85 = por %p83, %p84
    %p86 = scmp.ne.s32.totalorder %s74, %s75
    %p87 = scmp.eq.s32.totalorder %s23, 1
    %p88 = por %p86, %p87
    %p90 = scmp.ne.s32.totalorder %s75, %s89
    %p91 = scmp.eq.s32.totalorder %s23, 0
    %p92 = por %p90, %p91
    %s94 = sadd.s32 %s93, 1
    %p97 = scmp.eq.s32.totalorder %s17, 1
    %p98 = scmp.ne.s32.totalorder %s93, %s95
    %p99 = scmp.eq.s32.totalorder %s17, 0
    %p100 = por %p98, %p99
    %p101 = scmp.ne.s32.totalorder %s93, %s95
    %p102 = scmp.eq.s32.totalorder %s22, 1
    %p103 = por %p101, %p102
    %p104 = scmp.ne.s32.totalorder %s95, %s96
    %p105 = scmp.eq.s32.totalorder %s22, 0
    %p106 = por %p104, %p105
    %p107 = scmp.ne.s32.totalorder %s95, %s96
    %p108 = scmp.eq.s32.totalorder %s23, 1
    %p109 = por %p107, %p108
    %p111 = scmp.ne.s32.totalorder %s96, %s110
    %p112 = scmp.eq.s32.totalorder %s23, 0
    %p113 = por %p111, %p112
    %s115 = sadd.s32 %s114, 1
    %p118 = scmp.eq.s32.totalorder %s17, 1
    %p119 = scmp.ne.s32.totalorder %s114, %s116
    %p120 = scmp.eq.s32.totalorder %s17, 0
    %p121 = por %p119, %p120
    %p122 = scmp.ne.s32.totalorder %s114, %s116
    %p123 = scmp.eq.s32.totalorder %s22, 1
    %p124 = por %p122, %p123
    %p125 = scmp.ne.s32.totalorder %s116, %s117
    %p126 = scmp.eq.s32.totalorder %s22, 0
    %p127 = por %p125, %p126
    %p128 = scmp.ne.s32.totalorder %s116, %s117
    %p129 = scmp.eq.s32.totalorder %s23, 1
    %p130 = por %p128, %p129
    %p132 = scmp.ne.s32.totalorder %s117, %s131
    %p133 = scmp.eq.s32.totalorder %s23, 0
    %p134 = por %p132, %p133
    %s136 = sadd.s32 %s135, 1
    %p139 = scmp.eq.s32.totalorder %s17, 1
    %p140 = scmp.ne.s32.totalorder %s135, %s137
    %p141 = scmp.eq.s32.totalorder %s17, 0
    %p142 = por %p140, %p141
    %p143 = scmp.ne.s32.totalorder %s135, %s137
    %p144 = scmp.eq.s32.totalorder %s22, 1
    %p145 = por %p143, %p144
    %p146 = scmp.ne.s32.totalorder %s137, %s138
    %p147 = scmp.eq.s32.totalorder %s22, 0
    %p148 = por %p146, %p147
    %p149 = scmp.ne.s32.totalorder %s137, %s138
    %p150 = scmp.eq.s32.totalorder %s23, 1
    %p151 = por %p149, %p150
    %p153 = scmp.ne.s32.totalorder %s138, %s152
    %p154 = scmp.eq.s32.totalorder %s23, 0
    %p155 = por %p153, %p154
    %s157 = sadd.s32 %s156, 1
    %p160 = scmp.eq.s32.totalorder %s17, 1
    %p161 = scmp.ne.s32.totalorder %s156, %s158
    %p162 = scmp.eq.s32.totalorder %s17, 0
    %p163 = por %p161, %p162
    %p164 = scmp.ne.s32.totalorder %s156, %s158
    %p165 = scmp.eq.s32.totalorder %s22, 1
    %p166 = por %p164, %p165
    %p167 = scmp.ne.s32.totalorder %s158, %s159
    %p168 = scmp.eq.s32.totalorder %s22, 0
    %p169 = por %p167, %p168
    %p170 = scmp.ne.s32.totalorder %s158, %s159
    %p171 = scmp.eq.s32.totalorder %s23, 1
    %p172 = por %p170, %p171
    %p174 = scmp.ne.s32.totalorder %s159, %s173
    %p175 = scmp.eq.s32.totalorder %s23, 0
    %p176 = por %p174, %p175
    %s178 = sadd.s32 %s177, 1
    %p181 = scmp.eq.s32.totalorder %s17, 1
    %p182 = scmp.ne.s32.totalorder %s177, %s179
    %p183 = scmp.eq.s32.totalorder %s17, 0
    %p184 = por %p182, %p183
    %p185 = scmp.ne.s32.totalorder %s177, %s179
    %p186 = scmp.eq.s32.totalorder %s22, 1
    %p187 = por %p185, %p186
    %p188 = scmp.ne.s32.totalorder %s179, %s180
    %p189 = scmp.eq.s32.totalorder %s22, 0
    %p190 = por %p188, %p189
    %p191 = scmp.ne.s32.totalorder %s179, %s180
    %p192 = scmp.eq.s32.totalorder %s23, 1
    %p193 = por %p191, %p192
    %p195 = scmp.ne.s32.totalorder %s180, %s194
    %p196 = scmp.eq.s32.totalorder %s23, 0
    %p197 = por %p195, %p196
    %s199 = sadd.s32 %s198, 1
    %p202 = scmp.eq.s32.totalorder %s17, 1
    %p203 = scmp.ne.s32.totalorder %s198, %s200
    %p204 = scmp.eq.s32.totalorder %s17, 0
    %p205 = por %p203, %p204
    %p206 = scmp.ne.s32.totalorder %s198, %s200
    %p207 = scmp.eq.s32.totalorder %s22, 1
    %p208 = por %p206, %p207
    %p209 = scmp.ne.s32.totalorder %s200, %s201
    %p210 = scmp.eq.s32.totalorder %s22, 0
    %p211 = por %p209, %p210
    %p212 = scmp.ne.s32.totalorder %s200, %s201
    %p213 = scmp.eq.s32.totalorder %s23, 1
    %p214 = por %p212, %p213
    %p216 = scmp.ne.s32.totalorder %s201, %s215
    %p217 = scmp.eq.s32.totalorder %s23, 0
    %p218 = por %p216, %p217
    %s219 = ssub.s32 %s17, %s24
    %p220 = scmp.eq.s32.totalorder %s219, 0
    %s222 = sadd.s32 %s221, 1
    %s223 = scalar_select %p220, %s221, %s222
    %p226 = pneg %p220
    %p227 = scmp.eq.s32.totalorder %s17, 1
    %p228 = por %p226, %p227
    %p229 = scmp.ne.s32.totalorder %s221, %s224
    %p230 = scmp.eq.s32.totalorder %s17, 0
    %p231 = por %p229, %p230
    %p232 = scmp.ne.s32.totalorder %s221, %s224
    %p233 = scmp.eq.s32.totalorder %s22, 1
    %p234 = por %p232, %p233
    %p235 = scmp.ne.s32.totalorder %s224, %s225
    %p236 = scmp.eq.s32.totalorder %s22, 0
    %p237 = por %p235, %p236
    %p238 = scmp.ne.s32.totalorder %s224, %s225
    %p239 = scmp.eq.s32.totalorder %s23, 1
    %p240 = por %p238, %p239
    %p242 = scmp.ne.s32.totalorder %s225, %s241
    %p243 = scmp.eq.s32.totalorder %s23, 0
    %p244 = por %p242, %p243
    %s245 = ssub.s32 %s17, %s24
    %p246 = scmp.eq.s32.totalorder %s245, 0
    %s248 = sadd.s32 %s247, 1
    %s249 = scalar_select %p246, %s247, %s248
    %p252 = pneg %p246
    %p253 = scmp.eq.s32.totalorder %s17, 1
    %p254 = por %p252, %p253
    %p255 = scmp.ne.s32.totalorder %s247, %s250
    %p256 = scmp.eq.s32.totalorder %s17, 0
    %p257 = por %p255, %p256
    %p258 = scmp.ne.s32.totalorder %s247, %s250
    %p259 = scmp.eq.s32.totalorder %s22, 1
    %p260 = por %p258, %p259
    %p261 = scmp.ne.s32.totalorder %s250, %s251
    %p262 = scmp.eq.s32.totalorder %s22, 0
    %p263 = por %p261, %p262
    %p264 = scmp.ne.s32.totalorder %s250, %s251
    %p265 = scmp.eq.s32.totalorder %s23, 1
    %p266 = por %p264, %p265
    %p268 = scmp.ne.s32.totalorder %s251, %s267
    %p269 = scmp.eq.s32.totalorder %s23, 0
    %p270 = por %p268, %p269
    %p271 = scmp.le.s32.totalorder 1, %s17
    %p272 = scmp.lt.s32.totalorder %s17, 3
    %p273 = pnand %p271, %p272
    %p274 = pneg %p273
    // Predicated region
    $region9: #{parallel_block_cat_forward.6} parent=5 // pred_check
      _
    $region10: #{parallel_block_cat_forward.6} parent=5 // pred_check_branch
      %276 = sbr.rel (%p273) target = $region12
    $region11: #{parallel_block_cat_forward.6} parent=5 // pred_region
      %s277 = ssub.s32 %s17, 1
      // Predicated region
      $region13: #{parallel_block_cat_forward.6} parent=11 // pred_check
        %p278 = pneg %p64
      $region14: #{parallel_block_cat_forward.6} parent=11 // pred_check_branch
        %280 = sbr.rel (%p278) target = $region16
      $region15: #{parallel_block_cat_forward.6} parent=11 // pred_region
        _
      $region16: #{parallel_block_cat_forward.6} parent=11 // pred_fallthru
        _
      // Predicated region
      $region17: #{parallel_block_cat_forward.6} parent=11 // pred_check
        %p281 = pneg %p85
      $region18: #{parallel_block_cat_forward.6} parent=11 // pred_check_branch
        %283 = sbr.rel (%p281) target = $region20
      $region19: #{parallel_block_cat_forward.6} parent=11 // pred_region
        _
      $region20: #{parallel_block_cat_forward.6} parent=11 // pred_fallthru
        _
      // Predicated region
      $region21: #{parallel_block_cat_forward.6} parent=11 // pred_check
        %p284 = pneg %p106
      $region22: #{parallel_block_cat_forward.6} parent=11 // pred_check_branch
        %286 = sbr.rel (%p284) target = $region24
      $region23: #{parallel_block_cat_forward.6} parent=11 // pred_region
        _
      $region24: #{parallel_block_cat_forward.6} parent=11 // pred_fallthru
        _
      // Predicated region
      $region25: #{parallel_block_cat_forward.6} parent=11 // pred_check
        %p287 = pneg %p127
      $region26: #{parallel_block_cat_forward.6} parent=11 // pred_check_branch
        %289 = sbr.rel (%p287) target = $region28
      $region27: #{parallel_block_cat_forward.6} parent=11 // pred_region
        _
      $region28: #{parallel_block_cat_forward.6} parent=11 // pred_fallthru
        _
      // Predicated region
      $region29: #{parallel_block_cat_forward.6} parent=11 // pred_check
        %p290 = pneg %p148
      $region30: #{parallel_block_cat_forward.6} parent=11 // pred_check_branch
        %292 = sbr.rel (%p290) target = $region32
      $region31: #{parallel_block_cat_forward.6} parent=11 // pred_region
        _
      $region32: #{parallel_block_cat_forward.6} parent=11 // pred_fallthru
        _
      // Predicated region
      $region33: #{parallel_block_cat_forward.6} parent=11 // pred_check
        %p293 = pneg %p169
      $region34: #{parallel_block_cat_forward.6} parent=11 // pred_check_branch
        %295 = sbr.rel (%p293) target = $region36
      $region35: #{parallel_block_cat_forward.6} parent=11 // pred_region
        _
      $region36: #{parallel_block_cat_forward.6} parent=11 // pred_fallthru
        _
      // Predicated region
      $region37: #{parallel_block_cat_forward.6} parent=11 // pred_check
        %p296 = pneg %p190
      $region38: #{parallel_block_cat_forward.6} parent=11 // pred_check_branch
        %298 = sbr.rel (%p296) target = $region40
      $region39: #{parallel_block_cat_forward.6} parent=11 // pred_region
        _
      $region40: #{parallel_block_cat_forward.6} parent=11 // pred_fallthru
        _
      // Predicated region
      $region41: #{parallel_block_cat_forward.6} parent=11 // pred_check
        %p299 = pneg %p211
      $region42: #{parallel_block_cat_forward.6} parent=11 // pred_check_branch
        %301 = sbr.rel (%p299) target = $region44
      $region43: #{parallel_block_cat_forward.6} parent=11 // pred_region
        _
      $region44: #{parallel_block_cat_forward.6} parent=11 // pred_fallthru
        _
    $region12: #{parallel_block_cat_forward.6} parent=5 // pred_fallthru
      _
    %p302 = scmp.lt.s32.totalorder %s17, 2
    // Predicated region
    $region45: #{parallel_block_cat_forward.6} parent=5 // pred_check
      %p303 = pneg %p302
    $region46: #{parallel_block_cat_forward.6} parent=5 // pred_check_branch
      %305 = sbr.rel (%p303) target = $region48
    $region47: #{parallel_block_cat_forward.6} parent=5 // pred_region
      // Predicated region
      $region49: #{parallel_block_cat_forward.6} parent=47 // pred_check
        %p306 = pneg %p37
      $region50: #{parallel_block_cat_forward.6} parent=47 // pred_check_branch
        %308 = sbr.rel (%p306) target = $region52
      $region51: #{parallel_block_cat_forward.6} parent=47 // pred_region
        %s309 = smul.u32 8, %s17
        %p310 = scmp.lt.s32.totalorder %s309, 15
        %s311 = scalar_select %p310, %s309, 15
        %s312 = smul.addr %s311, 8
        %s313 = scalar_lea.vmem %s0, %s312
        %s314 = smul.u32 8, %s17
      $region52: #{parallel_block_cat_forward.6} parent=47 // pred_fallthru
        _
    $region48: #{parallel_block_cat_forward.6} parent=5 // pred_fallthru
      _
    %p315 = scmp.le.s32.totalorder 1, %s17
    %p316 = scmp.lt.s32.totalorder %s17, 3
    %p317 = pnand %p315, %p316
    %p318 = pneg %p317
    // Predicated region
    $region53: #{parallel_block_cat_forward.6} parent=5 // pred_check
      _
    $region54: #{parallel_block_cat_forward.6} parent=5 // pred_check_branch
      %320 = sbr.rel (%p317) target = $region56
    $region55: #{parallel_block_cat_forward.6} parent=5 // pred_region
      %s321 = ssub.s32 %s17, 1
      %s322 = smul.u32 8, %s22
      %p323 = scmp.lt.s32.totalorder %s322, 15
      %s324 = scalar_select %p323, %s322, 15
      %s325 = smul.addr %s324, 8
      %s326 = scalar_lea.vmem %s0, %s325
      %p327 = pneg %p43
      %p328 = pneg %p40
      %p329 = pneg %p64
      %p330 = pneg %p61
      %p331 = pneg %p85
      %p332 = pneg %p82
      %p333 = pneg %p106
      %p334 = pneg %p103
      %p335 = pneg %p127
      %p336 = pneg %p124
      %p337 = pneg %p148
      %p338 = pneg %p145
      %p339 = pneg %p169
      %p340 = pneg %p166
      %p341 = pneg %p190
      %p342 = pneg %p187
      %p343 = pneg %p211
      %p344 = pneg %p208
      %p345 = pneg %p237
      %p346 = pneg %p234
      %s347 = smul.u32 8, %s22
      %p348 = scmp.lt.s32.totalorder %s347, 15
      %s349 = scalar_select %p348, %s347, 15
      %s350 = smul.addr %s349, 8
      %s351 = scalar_lea.vmem %s9, %s350
      %p352 = pneg %p263
      %p353 = pneg %p260
      %s354 = smul.u32 8, %s22
      %p355 = scmp.lt.s32.totalorder %s354, 15
      %s356 = scalar_select %p355, %s354, 15
      %s357 = smul.addr %s356, 4
      %s358 = scalar_lea.vmem %s10, %s357
      %s359 = smul.u32 8, %s22
      %p360 = scmp.lt.s32.totalorder %s359, 15
      %s361 = scalar_select %p360, %s359, 15
      %s362 = smul.addr %s361, 8
      %s363 = scalar_lea.vmem %s0, %s362
      %s364 = smul.u32 8, %s22
      %s365 = smul.u32 8, %s22
      %p366 = scmp.lt.s32.totalorder %s365, 15
      %s367 = scalar_select %p366, %s365, 15
      %s368 = smul.addr %s367, 8
      %s369 = scalar_lea.vmem %s9, %s368
      %s370 = smul.u32 8, %s22
      %s371 = smul.u32 8, %s22
      %p372 = scmp.lt.s32.totalorder %s371, 15
      %s373 = scalar_select %p372, %s371, 15
      %s374 = smul.addr %s373, 4
      %s375 = scalar_lea.vmem %s10, %s374
      %s376 = smul.u32 8, %s22
      %v378 = vld [vmem:[%s363] sm:$0xff]
      %v379 = vld [vmem:[%s363 + $0x8] sm:$0xff]
      %v380 = vld [vmem:[%s363 + $0x10] sm:$0xff]
      %v381 = vld [vmem:[%s363 + $0x18] sm:$0xff]
      %v382 = vld [vmem:[%s363 + $0x20] sm:$0xff]
      %v383 = vld [vmem:[%s363 + $0x28] sm:$0xff]
      %v384 = vld [vmem:[%s363 + $0x30] sm:$0xff]
      %v385 = vld [vmem:[%s363 + $0x38] sm:$0xff]
      %v386 = vld [vmem:[%s1] sm:$0x1]
      %v387 = vld [vmem:[%s2] sm:$0x1]
      %vm388 = vcmask 130048
      %v389 = vsel %vm388, %v378, 0.0
      %390 = vadd.xlane.f32.xlu0 %v389
      %v391 = vpop.xlane.xlu0 %390
      %v392 = vsel %vm388, %v379, 0.0
      %393 = vadd.xlane.f32.xlu0 %v392
      %v394 = vpop.xlane.xlu0 %393
      %v395 = vsel %vm388, %v380, 0.0
      %396 = vadd.xlane.f32.xlu0 %v395
      %v397 = vpop.xlane.xlu0 %396
      %v398 = vsel %vm388, %v381, 0.0
      %399 = vadd.xlane.f32.xlu0 %v398
      %v400 = vpop.xlane.xlu0 %399
      %v401 = vsel %vm388, %v382, 0.0
      %402 = vadd.xlane.f32.xlu0 %v401
      %v403 = vpop.xlane.xlu0 %402
      %v404 = vsel %vm388, %v383, 0.0
      %405 = vadd.xlane.f32.xlu0 %v404
      %v406 = vpop.xlane.xlu0 %405
      %v407 = vsel %vm388, %v384, 0.0
      %408 = vadd.xlane.f32.xlu0 %v407
      %v409 = vpop.xlane.xlu0 %408
      %v410 = vsel %vm388, %v385, 0.0
      %411 = vadd.xlane.f32.xlu0 %v410
      %v412 = vpop.xlane.xlu0 %411
      %v413 = vrcp.pop 16.0
      %v414 = vmul.f32 %v391, %v413
      %v415 = vmul.f32 %v394, %v413
      %v416 = vmul.f32 %v397, %v413
      %v417 = vmul.f32 %v400, %v413
      %v418 = vmul.f32 %v403, %v413
      %v419 = vmul.f32 %v406, %v413
      %v420 = vmul.f32 %v409, %v413
      %v421 = vmul.f32 %v412, %v413
      %v422 = vsub.f32 %v378, %v414
      %v423 = vsub.f32 %v379, %v415
      %v424 = vsub.f32 %v380, %v416
      %v425 = vsub.f32 %v381, %v417
      %v426 = vsub.f32 %v382, %v418
      %v427 = vsub.f32 %v383, %v419
      %v428 = vsub.f32 %v384, %v420
      %v429 = vsub.f32 %v385, %v421
      %v430 = vmul.f32 %v422, %v422
      %v431 = vmul.f32 %v423, %v423
      %v432 = vmul.f32 %v424, %v424
      %v433 = vmul.f32 %v425, %v425
      %v434 = vmul.f32 %v426, %v426
      %v435 = vmul.f32 %v427, %v427
      %v436 = vmul.f32 %v428, %v428
      %v437 = vmul.f32 %v429, %v429
      %v438 = vsel %vm388, %v430, 0.0
      %439 = vadd.xlane.f32.xlu0 %v438
      %v440 = vpop.xlane.xlu0 %439
      %v441 = vsel %vm388, %v431, 0.0
      %442 = vadd.xlane.f32.xlu0 %v441
      %v443 = vpop.xlane.xlu0 %442
      %v444 = vsel %vm388, %v432, 0.0
      %445 = vadd.xlane.f32.xlu0 %v444
      %v446 = vpop.xlane.xlu0 %445
      %v447 = vsel %vm388, %v433, 0.0
      %448 = vadd.xlane.f32.xlu0 %v447
      %v449 = vpop.xlane.xlu0 %448
      %v450 = vsel %vm388, %v434, 0.0
      %451 = vadd.xlane.f32.xlu0 %v450
      %v452 = vpop.xlane.xlu0 %451
      %v453 = vsel %vm388, %v435, 0.0
      %454 = vadd.xlane.f32.xlu0 %v453
      %v455 = vpop.xlane.xlu0 %454
      %v456 = vsel %vm388, %v436, 0.0
      %457 = vadd.xlane.f32.xlu0 %v456
      %v458 = vpop.xlane.xlu0 %457
      %v459 = vsel %vm388, %v437, 0.0
      %460 = vadd.xlane.f32.xlu0 %v459
      %v461 = vpop.xlane.xlu0 %460
      %v462 = vmul.f32 %v440, %v413
      %v463 = vmul.f32 %v443, %v413
      %v464 = vmul.f32 %v446, %v413
      %v465 = vmul.f32 %v449, %v413
      %v466 = vmul.f32 %v452, %v413
      %v467 = vmul.f32 %v455, %v413
      %v468 = vmul.f32 %v458, %v413
      %v469 = vmul.f32 %v461, %v413
      %v470 = vadd.f32 %v462, 1e-05
      %v471 = vadd.f32 %v463, 1e-05
      %v472 = vadd.f32 %v464, 1e-05
      %v473 = vadd.f32 %v465, 1e-05
      %v474 = vadd.f32 %v466, 1e-05
      %v475 = vadd.f32 %v467, 1e-05
      %v476 = vadd.f32 %v468, 1e-05
      %v477 = vadd.f32 %v469, 1e-05
      %v478 = vrsqrt.pop %v470
      %v479 = vrsqrt.pop %v471
      %v480 = vrsqrt.pop %v472
      %v481 = vrsqrt.pop %v473
      %v482 = vrsqrt.pop %v474
      %v483 = vrsqrt.pop %v475
      %v484 = vrsqrt.pop %v476
      %v485 = vrsqrt.pop %v477
      %v486 = vmul.f32 %v422, %v478
      %v487 = vmul.f32 %v423, %v479
      %v488 = vmul.f32 %v424, %v480
      %v489 = vmul.f32 %v425, %v481
      %v490 = vmul.f32 %v426, %v482
      %v491 = vmul.f32 %v427, %v483
      %v492 = vmul.f32 %v428, %v484
      %v493 = vmul.f32 %v429, %v485
      %v495 = vlaneseq
      %v496 = vshrl.u32 %v495, 7
      %v497 = vsub.s32 0, %v496
      %v498 = vrot.slane %v386, %v497
      %v500 = vmul.f32 %v486, %v498
      %v501 = vmul.f32 %v487, %v498
      %v502 = vmul.f32 %v488, %v498
      %v503 = vmul.f32 %v489, %v498
      %v504 = vmul.f32 %v490, %v498
      %v505 = vmul.f32 %v491, %v498
      %v506 = vmul.f32 %v492, %v498
      %v507 = vmul.f32 %v493, %v498
      %v509 = vlaneseq
      %v510 = vshrl.u32 %v509, 7
      %v511 = vsub.s32 0, %v510
      %v512 = vrot.slane %v387, %v511
      %v514 = vadd.f32 %v500, %v512
      %v515 = vadd.f32 %v501, %v512
      %v516 = vadd.f32 %v502, %v512
      %v517 = vadd.f32 %v503, %v512
      %v518 = vadd.f32 %v504, %v512
      %v519 = vadd.f32 %v505, %v512
      %v520 = vadd.f32 %v506, %v512
      %v521 = vadd.f32 %v507, %v512
      %v522 = vpack.c.bf16 %v515, %v514
      %v523 = vpack.c.bf16 %v517, %v516
      %v524 = vpack.c.bf16 %v519, %v518
      %v525 = vpack.c.bf16 %v521, %v520
      %v526 = vld [vmem:[%s3] sm:$0xff]
      %v527 = vld [vmem:[%s3 + $0x8] sm:$0xf]
      %v528 = vld [vmem:[%s3 + $0xc] sm:$0xff]
      %v529 = vld [vmem:[%s3 + $0x14] sm:$0xf]
      %v530 = vld [vmem:[%s4] sm:$0x7]
      %v532 = vlaneseq
      %v533 = vshrl.u32 %v532, 7
      %v534 = vsub.s32 0, %v533
      %v535 = vrot.slane %v530, %v534
      %v536 = vlaneseq
      %v537 = vshrl.u32 %v536, 7
      %v538 = vsub.s32 1, %v537
      %v539 = vrot.slane %v530, %v538
      %v540 = vlaneseq
      %v541 = vshrl.u32 %v540, 7
      %v542 = vsub.s32 2, %v541
      %v543 = vrot.slane %v530, %v542
      %v551 = vunpack.c.l.b16 %v526
      %v552 = vunpack.c.h.b16 %v526
      %v553 = vunpack.c.l.b16 %v527
      %v554 = vunpack.c.l.b16 %v528
      %v555 = vunpack.c.h.b16 %v528
      %v556 = vunpack.c.l.b16 %v529
      %v557 = vpack.c.b16 %v554, %v551
      %v558 = vpack.c.b16 %v555, %v552
      %v559 = vpack.c.b16 %v556, %v553
      %v564 = vsel %vm388, %v522, 0
      %v567 = vsel %vm388, %v523, 0
      %v570 = vsel %vm388, %v524, 0
      %v573 = vsel %vm388, %v525, 0
      %575 = vmatprep.subr.bf16.mxu0 %v558
      %576 = vmatpush1.bf16.msra.mxu0 %v557
      %577 = vmatprep.subr.bf16.mxu0 0
      %578 = vmatpush1.bf16.msra.mxu0 0
      %579 = vmatprep.subr.bf16.mxu0 0
      %580 = vmatpush1.bf16.msra.mxu0 0
      %581 = vmatprep.subr.bf16.mxu0 0
      %582 = vmatpush1.bf16.msra.mxu0 0
      %583 = vmatprep.subr.bf16.mxu0 0
      %584 = vmatpush1.bf16.msra.mxu0 0
      %585 = vmatprep.subr.bf16.mxu0 0
      %586 = vmatpush1.bf16.msra.mxu0 0
      %587 = vmatprep.subr.bf16.mxu0 0
      %588 = vmatpush1.bf16.msra.mxu0 0
      %589 = vmatprep.subr.bf16.mxu0 0
      %590 = vmatpush1.bf16.msra.mxu0 0
      %591 = vmatprep.subr.bf16.mxu0 0
      %592 = vmatpush1.bf16.msra.mxu0 0
      %593 = vmatprep.subr.bf16.mxu0 0
      %594 = vmatpush1.bf16.msra.mxu0 0
      %595 = vmatprep.subr.bf16.mxu0 0
      %596 = vmatpush1.bf16.msra.mxu0 0
      %597 = vmatprep.subr.bf16.mxu0 0
      %598 = vmatpush1.bf16.msra.mxu0 0
      %599 = vmatprep.subr.bf16.mxu0 0
      %600 = vmatpush1.bf16.msra.mxu0 0
      %601 = vmatprep.subr.bf16.mxu0 0
      %602 = vmatpush1.bf16.msra.mxu0 0
      %603 = vmatprep.subr.bf16.mxu0 0
      %604 = vmatpush1.bf16.msra.mxu0 0
      %605 = vmatprep.subr.bf16.mxu0 0
      %606 = vmatpush1.bf16.msra.mxu0 0
      %607 = vmatprep.mubr.bf16.mxu0 0
      %608 = vmatmul.mubr.bf16.gmra.mrb[0].mxu0 %v564
      %v609 = vpop.f32.mrb[0].mxu0
      %v610 = vadd.f32 %v535, %v609
      %v611 = vpop.f32.mrb[0].mxu0
      %v612 = vadd.f32 %v539, %v611
      %v613 = vpop.f32.mrb[0].mxu0
      %v614 = vadd.f32 %v535, %v613
      %v615 = vpop.f32.mrb[0].mxu0
      %v616 = vadd.f32 %v539, %v615
      %617 = vmatprep.mubr.bf16.mxu0 0
      %618 = vmatmul.mubr.bf16.gmra.mrb[0].mxu0 %v567
      %v619 = vpop.f32.mrb[0].mxu0
      %v620 = vadd.f32 %v535, %v619
      %v621 = vpop.f32.mrb[0].mxu0
      %v622 = vadd.f32 %v539, %v621
      %v623 = vpop.f32.mrb[0].mxu0
      %v624 = vadd.f32 %v535, %v623
      %v625 = vpop.f32.mrb[0].mxu0
      %v626 = vadd.f32 %v539, %v625
      %627 = vmatprep.mubr.bf16.mxu0 0
      %628 = vmatmul.mubr.bf16.gmra.mrb[0].mxu0 %v570
      %v629 = vpop.f32.mrb[0].mxu0
      %v630 = vadd.f32 %v535, %v629
      %v631 = vpop.f32.mrb[0].mxu0
      %v632 = vadd.f32 %v539, %v631
      %v633 = vpop.f32.mrb[0].mxu0
      %v634 = vadd.f32 %v535, %v633
      %v635 = vpop.f32.mrb[0].mxu0
      %v636 = vadd.f32 %v539, %v635
      %637 = vmatprep.mubr.bf16.mxu0 0
      %638 = vmatmul.mubr.bf16.gmra.mrb[0].mxu0 %v573
      %v639 = vpop.f32.mrb[0].mxu0
      %v640 = vadd.f32 %v535, %v639
      %v641 = vpop.f32.mrb[0].mxu0
      %v642 = vadd.f32 %v539, %v641
      %v643 = vpop.f32.mrb[0].mxu0
      %v644 = vadd.f32 %v535, %v643
      %v645 = vpop.f32.mrb[0].mxu0
      %v646 = vadd.f32 %v539, %v645
      %647 = vdwg.mxu0
      %648 = vmatprep.subr.bf16.mxu0 0
      %649 = vmatpush1.bf16.msra.mxu0 %v559
      %650 = vmatprep.subr.bf16.mxu0 0
      %651 = vmatpush1.bf16.msra.mxu0 0
      %652 = vmatprep.subr.bf16.mxu0 0
      %653 = vmatpush1.bf16.msra.mxu0 0
      %654 = vmatprep.subr.bf16.mxu0 0
      %655 = vmatpush1.bf16.msra.mxu0 0
      %656 = vmatprep.subr.bf16.mxu0 0
      %657 = vmatpush1.bf16.msra.mxu0 0
      %658 = vmatprep.subr.bf16.mxu0 0
      %659 = vmatpush1.bf16.msra.mxu0 0
      %660 = vmatprep.subr.bf16.mxu0 0
      %661 = vmatpush1.bf16.msra.mxu0 0
      %662 = vmatprep.subr.bf16.mxu0 0
      %663 = vmatpush1.bf16.msra.mxu0 0
      %664 = vmatprep.subr.bf16.mxu0 0
      %665 = vmatpush1.bf16.msra.mxu0 0
      %666 = vmatprep.subr.bf16.mxu0 0
      %667 = vmatpush1.bf16.msra.mxu0 0
      %668 = vmatprep.subr.bf16.mxu0 0
      %669 = vmatpush1.bf16.msra.mxu0 0
      %670 = vmatprep.subr.bf16.mxu0 0
      %671 = vmatpush1.bf16.msra.mxu0 0
      %672 = vmatprep.subr.bf16.mxu0 0
      %673 = vmatpush1.bf16.msra.mxu0 0
      %674 = vmatprep.subr.bf16.mxu0 0
      %675 = vmatpush1.bf16.msra.mxu0 0
      %676 = vmatprep.subr.bf16.mxu0 0
      %677 = vmatpush1.bf16.msra.mxu0 0
      %678 = vmatprep.subr.bf16.mxu0 0
      %679 = vmatpush1.bf16.msra.mxu0 0
      %680 = vmatprep.mubr.bf16.mxu0 0
      %681 = vmatmul.mubr.bf16.gmra.mrb[0].mxu0 %v564
      %v682 = vpop.f32.mrb[0].mxu0
      %v683 = vadd.f32 %v543, %v682
      %v684 = vpop.f32.mrb[0].mxu0
      %v685 = vpop.f32.mrb[0].mxu0
      %v686 = vadd.f32 %v543, %v685
      %v687 = vpop.f32.mrb[0].mxu0
      %688 = vmatprep.mubr.bf16.mxu0 0
      %689 = vmatmul.mubr.bf16.gmra.mrb[0].mxu0 %v567
      %v690 = vpop.f32.mrb[0].mxu0
      %v691 = vadd.f32 %v543, %v690
      %v692 = vpop.f32.mrb[0].mxu0
      %v693 = vpop.f32.mrb[0].mxu0
      %v694 = vadd.f32 %v543, %v693
      %v695 = vpop.f32.mrb[0].mxu0
      %696 = vmatprep.mubr.bf16.mxu0 0
      %697 = vmatmul.mubr.bf16.gmra.mrb[0].mxu0 %v570
      %v698 = vpop.f32.mrb[0].mxu0
      %v699 = vadd.f32 %v543, %v698
      %v700 = vpop.f32.mrb[0].mxu0
      %v701 = vpop.f32.mrb[0].mxu0
      %v702 = vadd.f32 %v543, %v701
      %v703 = vpop.f32.mrb[0].mxu0
      %704 = vmatprep.mubr.bf16.mxu0 0
      %705 = vmatmul.mubr.bf16.gmra.mrb[0].mxu0 %v573
      %v706 = vpop.f32.mrb[0].mxu0
      %v707 = vadd.f32 %v543, %v706
      %v708 = vpop.f32.mrb[0].mxu0
      %v709 = vpop.f32.mrb[0].mxu0
      %v710 = vadd.f32 %v543, %v709
      %v711 = vpop.f32.mrb[0].mxu0
      %712 = vdwg.mxu0
      %v713 = vmul.f32 %v610, 0.35355338
      %v714 = vmul.f32 %v614, 0.35355338
      %v715 = vmul.f32 %v620, 0.35355338
      %v716 = vmul.f32 %v624, 0.35355338
      %v717 = vmul.f32 %v630, 0.35355338
      %v718 = vmul.f32 %v634, 0.35355338
      %v719 = vmul.f32 %v640, 0.35355338
      %v720 = vmul.f32 %v644, 0.35355338
      %v721 = vpack.c.bf16 %v713, %v713
      %v722 = vpack.c.bf16 %v714, %v714
      %v723 = vpack.c.bf16 %v715, %v715
      %v724 = vpack.c.bf16 %v716, %v716
      %v725 = vpack.c.bf16 %v717, %v717
      %v726 = vpack.c.bf16 %v718, %v718
      %v727 = vpack.c.bf16 %v719, %v719
      %v728 = vpack.c.bf16 %v720, %v720
      %v729 = vpack.c.bf16 %v612, %v612
      %v730 = vpack.c.bf16 %v616, %v616
      %v731 = vpack.c.bf16 %v622, %v622
      %v732 = vpack.c.bf16 %v626, %v626
      %v733 = vpack.c.bf16 %v632, %v632
      %v734 = vpack.c.bf16 %v636, %v636
      %v735 = vpack.c.bf16 %v642, %v642
      %v736 = vpack.c.bf16 %v646, %v646
      %v737 = vpack.c.bf16 %v683, %v683
      %v738 = vpack.c.bf16 %v686, %v686
      %v739 = vpack.c.bf16 %v691, %v691
      %v740 = vpack.c.bf16 %v694, %v694
      %v741 = vpack.c.bf16 %v699, %v699
      %v742 = vpack.c.bf16 %v702, %v702
      %v743 = vpack.c.bf16 %v707, %v707
      %v744 = vpack.c.bf16 %v710, %v710
      %vm745 = vcmask 64512
      %v747 = vsel %vm745, %v721, 0
      %v750 = vsel %vm745, %v729, 0
      %752 = vmatprep.subr.bf16.mxu0 0
      %753 = vmatpush1.bf16.xpose.msra.mxu0 %v750
      %754 = vmatprep.subr.bf16.mxu0 0
      %755 = vmatpush1.bf16.xpose.msra.mxu0 0
      %756 = vmatprep.subr.bf16.mxu0 0
      %757 = vmatpush1.bf16.xpose.msra.mxu0 0
      %758 = vmatprep.subr.bf16.mxu0 0
      %759 = vmatpush1.bf16.xpose.msra.mxu0 0
      %760 = vmatprep.subr.bf16.mxu0 0
      %761 = vmatpush1.bf16.xpose.msra.mxu0 0
      %762 = vmatprep.subr.bf16.mxu0 0
      %763 = vmatpush1.bf16.xpose.msra.mxu0 0
      %764 = vmatprep.subr.bf16.mxu0 0
      %765 = vmatpush1.bf16.xpose.msra.mxu0 0
      %766 = vmatprep.subr.bf16.mxu0 0
      %767 = vmatpush1.bf16.xpose.msra.mxu0 0
      %768 = vmatprep.subr.bf16.mxu0 0
      %769 = vmatpush1.bf16.xpose.msra.mxu0 0
      %770 = vmatprep.subr.bf16.mxu0 0
      %771 = vmatpush1.bf16.xpose.msra.mxu0 0
      %772 = vmatprep.subr.bf16.mxu0 0
      %773 = vmatpush1.bf16.xpose.msra.mxu0 0
      %774 = vmatprep.subr.bf16.mxu0 0
      %775 = vmatpush1.bf16.xpose.msra.mxu0 0
      %776 = vmatprep.subr.bf16.mxu0 0
      %777 = vmatpush1.bf16.xpose.msra.mxu0 0
      %778 = vmatprep.subr.bf16.mxu0 0
      %779 = vmatpush1.bf16.xpose.msra.mxu0 0
      %780 = vmatprep.subr.bf16.mxu0 0
      %781 = vmatpush1.bf16.xpose.msra.mxu0 0
      %782 = vmatprep.subr.bf16.mxu0 0
      %783 = vmatpush1.bf16.xpose.msra.mxu0 0
      %784 = vmatprep.mubr.bf16.mxu0 0
      %785 = vmatmul.mubr.bf16.gmra.mrb[0].mxu0 %v747
      %v786 = vpop.f32.mrb[0].mxu0
      %v787 = vadd.f32 0.0, %v786
      %v788 = vpop.f32.mrb[0].mxu0
      %v789 = vpop.f32.mrb[0].mxu0
      %v790 = vpop.f32.mrb[0].mxu0
      %791 = vdwg.mxu0
      %v793 = vsel %vm745, %v722, 0
      %v796 = vsel %vm745, %v730, 0
      %798 = vmatprep.subr.bf16.mxu0 0
      %799 = vmatpush1.bf16.xpose.msra.mxu0 %v796
      %800 = vmatprep.subr.bf16.mxu0 0
      %801 = vmatpush1.bf16.xpose.msra.mxu0 0
      %802 = vmatprep.subr.bf16.mxu0 0
      %803 = vmatpush1.bf16.xpose.msra.mxu0 0
      %804 = vmatprep.subr.bf16.mxu0 0
      %805 = vmatpush1.bf16.xpose.msra.mxu0 0
      %806 = vmatprep.subr.bf16.mxu0 0
      %807 = vmatpush1.bf16.xpose.msra.mxu0 0
      %808 = vmatprep.subr.bf16.mxu0 0
      %809 = vmatpush1.bf16.xpose.msra.mxu0 0
      %810 = vmatprep.subr.bf16.mxu0 0
      %811 = vmatpush1.bf16.xpose.msra.mxu0 0
      %812 = vmatprep.subr.bf16.mxu0 0
      %813 = vmatpush1.bf16.xpose.msra.mxu0 0
      %814 = vmatprep.subr.bf16.mxu0 0
      %815 = vmatpush1.bf16.xpose.msra.mxu0 0
      %816 = vmatprep.subr.bf16.mxu0 0
      %817 = vmatpush1.bf16.xpose.msra.mxu0 0
      %818 = vmatprep.subr.bf16.mxu0 0
      %819 = vmatpush1.bf16.xpose.msra.mxu0 0
      %820 = vmatprep.subr.bf16.mxu0 0
      %821 = vmatpush1.bf16.xpose.msra.mxu0 0
      %822 = vmatprep.subr.bf16.mxu0 0
      %823 = vmatpush1.bf16.xpose.msra.mxu0 0
      %824 = vmatprep.subr.bf16.mxu0 0
      %825 = vmatpush1.bf16.xpose.msra.mxu0 0
      %826 = vmatprep.subr.bf16.mxu0 0
      %827 = vmatpush1.bf16.xpose.msra.mxu0 0
      %828 = vmatprep.subr.bf16.mxu0 0
      %829 = vmatpush1.bf16.xpose.msra.mxu0 0
      %830 = vmatprep.mubr.bf16.mxu0 0
      %831 = vmatmul.mubr.bf16.gmra.mrb[0].mxu0 %v793
      %v832 = vpop.f32.mrb[0].mxu0
      %v833 = vadd.f32 0.0, %v832
      %v834 = vpop.f32.mrb[0].mxu0
      %v835 = vpop.f32.mrb[0].mxu0
      %v836 = vpop.f32.mrb[0].mxu0
      %837 = vdwg.mxu0
      %v839 = vsel %vm745, %v723, 0
      %v842 = vsel %vm745, %v731, 0
      %844 = vmatprep.subr.bf16.mxu0 0
      %845 = vmatpush1.bf16.xpose.msra.mxu0 %v842
      %846 = vmatprep.subr.bf16.mxu0 0
      %847 = vmatpush1.bf16.xpose.msra.mxu0 0
      %848 = vmatprep.subr.bf16.mxu0 0
      %849 = vmatpush1.bf16.xpose.msra.mxu0 0
      %850 = vmatprep.subr.bf16.mxu0 0
      %851 = vmatpush1.bf16.xpose.msra.mxu0 0
      %852 = vmatprep.subr.bf16.mxu0 0
      %853 = vmatpush1.bf16.xpose.msra.mxu0 0
      %854 = vmatprep.subr.bf16.mxu0 0
      %855 = vmatpush1.bf16.xpose.msra.mxu0 0
      %856 = vmatprep.subr.bf16.mxu0 0
      %857 = vmatpush1.bf16.xpose.msra.mxu0 0
      %858 = vmatprep.subr.bf16.mxu0 0
      %859 = vmatpush1.bf16.xpose.msra.mxu0 0
      %860 = vmatprep.subr.bf16.mxu0 0
      %861 = vmatpush1.bf16.xpose.msra.mxu0 0
      %862 = vmatprep.subr.bf16.mxu0 0
      %863 = vmatpush1.bf16.xpose.msra.mxu0 0
      %864 = vmatprep.subr.bf16.mxu0 0
      %865 = vmatpush1.bf16.xpose.msra.mxu0 0
      %866 = vmatprep.subr.bf16.mxu0 0
      %867 = vmatpush1.bf16.xpose.msra.mxu0 0
      %868 = vmatprep.subr.bf16.mxu0 0
      %869 = vmatpush1.bf16.xpose.msra.mxu0 0
      %870 = vmatprep.subr.bf16.mxu0 0
      %871 = vmatpush1.bf16.xpose.msra.mxu0 0
      %872 = vmatprep.subr.bf16.mxu0 0
      %873 = vmatpush1.bf16.xpose.msra.mxu0 0
      %874 = vmatprep.subr.bf16.mxu0 0
      %875 = vmatpush1.bf16.xpose.msra.mxu0 0
      %876 = vmatprep.mubr.bf16.mxu0 0
      %877 = vmatmul.mubr.bf16.gmra.mrb[0].mxu0 %v839
      %v878 = vpop.f32.mrb[0].mxu0
      %v879 = vadd.f32 0.0, %v878
      %v880 = vpop.f32.mrb[0].mxu0
      %v881 = vpop.f32.mrb[0].mxu0
      %v882 = vpop.f32.mrb[0].mxu0
      %883 = vdwg.mxu0
      %v885 = vsel %vm745, %v724, 0
      %v888 = vsel %vm745, %v732, 0
      %890 = vmatprep.subr.bf16.mxu0 0
      %891 = vmatpush1.bf16.xpose.msra.mxu0 %v888
      %892 = vmatprep.subr.bf16.mxu0 0
      %893 = vmatpush1.bf16.xpose.msra.mxu0 0
      %894 = vmatprep.subr.bf16.mxu0 0
      %895 = vmatpush1.bf16.xpose.msra.mxu0 0
      %896 = vmatprep.subr.bf16.mxu0 0
      %897 = vmatpush1.bf16.xpose.msra.mxu0 0
      %898 = vmatprep.subr.bf16.mxu0 0
      %899 = vmatpush1.bf16.xpose.msra.mxu0 0
      %900 = vmatprep.subr.bf16.mxu0 0
      %901 = vmatpush1.bf16.xpose.msra.mxu0 0
      %902 = vmatprep.subr.bf16.mxu0 0
      %903 = vmatpush1.bf16.xpose.msra.mxu0 0
      %904 = vmatprep.subr.bf16.mxu0 0
      %905 = vmatpush1.bf16.xpose.msra.mxu0 0
      %906 = vmatprep.subr.bf16.mxu0 0
      %907 = vmatpush1.bf16.xpose.msra.mxu0 0
      %908 = vmatprep.subr.bf16.mxu0 0
      %909 = vmatpush1.bf16.xpose.msra.mxu0 0
      %910 = vmatprep.subr.bf16.mxu0 0
      %911 = vmatpush1.bf16.xpose.msra.mxu0 0
      %912 = vmatprep.subr.bf16.mxu0 0
      %913 = vmatpush1.bf16.xpose.msra.mxu0 0
      %914 = vmatprep.subr.bf16.mxu0 0
      %915 = vmatpush1.bf16.xpose.msra.mxu0 0
      %916 = vmatprep.subr.bf16.mxu0 0
      %917 = vmatpush1.bf16.xpose.msra.mxu0 0
      %918 = vmatprep.subr.bf16.mxu0 0
      %919 = vmatpush1.bf16.xpose.msra.mxu0 0
      %920 = vmatprep.subr.bf16.mxu0 0
      %921 = vmatpush1.bf16.xpose.msra.mxu0 0
      %922 = vmatprep.mubr.bf16.mxu0 0
      %923 = vmatmul.mubr.bf16.gmra.mrb[0].mxu0 %v885
      %v924 = vpop.f32.mrb[0].mxu0
      %v925 = vadd.f32 0.0, %v924
      %v926 = vpop.f32.mrb[0].mxu0
      %v927 = vpop.f32.mrb[0].mxu0
      %v928 = vpop.f32.mrb[0].mxu0
      %929 = vdwg.mxu0
      %v931 = vsel %vm745, %v725, 0
      %v934 = vsel %vm745, %v733, 0
      %936 = vmatprep.subr.bf16.mxu0 0
      %937 = vmatpush1.bf16.xpose.msra.mxu0 %v934
      %938 = vmatprep.subr.bf16.mxu0 0
      %939 = vmatpush1.bf16.xpose.msra.mxu0 0
      %940 = vmatprep.subr.bf16.mxu0 0
      %941 = vmatpush1.bf16.xpose.msra.mxu0 0
      %942 = vmatprep.subr.bf16.mxu0 0
      %943 = vmatpush1.bf16.xpose.msra.mxu0 0
      %944 = vmatprep.subr.bf16.mxu0 0
      %945 = vmatpush1.bf16.xpose.msra.mxu0 0
      %946 = vmatprep.subr.bf16.mxu0 0
      %947 = vmatpush1.bf16.xpose.msra.mxu0 0
      %948 = vmatprep.subr.bf16.mxu0 0
      %949 = vmatpush1.bf16.xpose.msra.mxu0 0
      %950 = vmatprep.subr.bf16.mxu0 0
      %951 = vmatpush1.bf16.xpose.msra.mxu0 0
      %952 = vmatprep.subr.bf16.mxu0 0
      %953 = vmatpush1.bf16.xpose.msra.mxu0 0
      %954 = vmatprep.subr.bf16.mxu0 0
      %955 = vmatpush1.bf16.xpose.msra.mxu0 0
      %956 = vmatprep.subr.bf16.mxu0 0
      %957 = vmatpush1.bf16.xpose.msra.mxu0 0
      %958 = vmatprep.subr.bf16.mxu0 0
      %959 = vmatpush1.bf16.xpose.msra.mxu0 0
      %960 = vmatprep.subr.bf16.mxu0 0
      %961 = vmatpush1.bf16.xpose.msra.mxu0 0
      %962 = vmatprep.subr.bf16.mxu0 0
      %963 = vmatpush1.bf16.xpose.msra.mxu0 0
      %964 = vmatprep.subr.bf16.mxu0 0
      %965 = vmatpush1.bf16.xpose.msra.mxu0 0
      %966 = vmatprep.subr.bf16.mxu0 0
      %967 = vmatpush1.bf16.xpose.msra.mxu0 0
      %968 = vmatprep.mubr.bf16.mxu0 0
      %969 = vmatmul.mubr.bf16.gmra.mrb[0].mxu0 %v931
      %v970 = vpop.f32.mrb[0].mxu0
      %v971 = vadd.f32 0.0, %v970
      %v972 = vpop.f32.mrb[0].mxu0
      %v973 = vpop.f32.mrb[0].mxu0
      %v974 = vpop.f32.mrb[0].mxu0
      %975 = vdwg.mxu0
      %v977 = vsel %vm745, %v726, 0
      %v980 = vsel %vm745, %v734, 0
      %982 = vmatprep.subr.bf16.mxu0 0
      %983 = vmatpush1.bf16.xpose.msra.mxu0 %v980
      %984 = vmatprep.subr.bf16.mxu0 0
      %985 = vmatpush1.bf16.xpose.msra.mxu0 0
      %986 = vmatprep.subr.bf16.mxu0 0
      %987 = vmatpush1.bf16.xpose.msra.mxu0 0
      %988 = vmatprep.subr.bf16.mxu0 0
      %989 = vmatpush1.bf16.xpose.msra.mxu0 0
      %990 = vmatprep.subr.bf16.mxu0 0
      %991 = vmatpush1.bf16.xpose.msra.mxu0 0
      %992 = vmatprep.subr.bf16.mxu0 0
      %993 = vmatpush1.bf16.xpose.msra.mxu0 0
      %994 = vmatprep.subr.bf16.mxu0 0
      %995 = vmatpush1.bf16.xpose.msra.mxu0 0
      %996 = vmatprep.subr.bf16.mxu0 0
      %997 = vmatpush1.bf16.xpose.msra.mxu0 0
      %998 = vmatprep.subr.bf16.mxu0 0
      %999 = vmatpush1.bf16.xpose.msra.mxu0 0
      %1000 = vmatprep.subr.bf16.mxu0 0
      %1001 = vmatpush1.bf16.xpose.msra.mxu0 0
      %1002 = vmatprep.subr.bf16.mxu0 0
      %1003 = vmatpush1.bf16.xpose.msra.mxu0 0
      %1004 = vmatprep.subr.bf16.mxu0 0
      %1005 = vmatpush1.bf16.xpose.msra.mxu0 0
      %1006 = vmatprep.subr.bf16.mxu0 0
      %1007 = vmatpush1.bf16.xpose.msra.mxu0 0
      %1008 = vmatprep.subr.bf16.mxu0 0
      %1009 = vmatpush1.bf16.xpose.msra.mxu0 0
      %1010 = vmatprep.subr.bf16.mxu0 0
      %1011 = vmatpush1.bf16.xpose.msra.mxu0 0
      %1012 = vmatprep.subr.bf16.mxu0 0
      %1013 = vmatpush1.bf16.xpose.msra.mxu0 0
      %1014 = vmatprep.mubr.bf16.mxu0 0
      %1015 = vmatmul.mubr.bf16.gmra.mrb[0].mxu0 %v977
      %v1016 = vpop.f32.mrb[0].mxu0
      %v1017 = vadd.f32 0.0, %v1016
      %v1018 = vpop.f32.mrb[0].mxu0
      %v1019 = vpop.f32.mrb[0].mxu0
      %v1020 = vpop.f32.mrb[0].mxu0
      %1021 = vdwg.mxu0
      %v1023 = vsel %vm745, %v727, 0
      %v1026 = vsel %vm745, %v735, 0
      %1028 = vmatprep.subr.bf16.mxu0 0
      %1029 = vmatpush1.bf16.xpose.msra.mxu0 %v1026
      %1030 = vmatprep.subr.bf16.mxu0 0
      %1031 = vmatpush1.bf16.xpose.msra.mxu0 0
      %1032 = vmatprep.subr.bf16.mxu0 0
      %1033 = vmatpush1.bf16.xpose.msra.mxu0 0
      %1034 = vmatprep.subr.bf16.mxu0 0
      %1035 = vmatpush1.bf16.xpose.msra.mxu0 0
      %1036 = vmatprep.subr.bf16.mxu0 0
      %1037 = vmatpush1.bf16.xpose.msra.mxu0 0
      %1038 = vmatprep.subr.bf16.mxu0 0
      %1039 = vmatpush1.bf16.xpose.msra.mxu0 0
      %1040 = vmatprep.subr.bf16.mxu0 0
      %1041 = vmatpush1.bf16.xpose.msra.mxu0 0
      %1042 = vmatprep.subr.bf16.mxu0 0
      %1043 = vmatpush1.bf16.xpose.msra.mxu0 0
      %1044 = vmatprep.subr.bf16.mxu0 0
      %1045 = vmatpush1.bf16.xpose.msra.mxu0 0
      %1046 = vmatprep.subr.bf16.mxu0 0
      %1047 = vmatpush1.bf16.xpose.msra.mxu0 0
      %1048 = vmatprep.subr.bf16.mxu0 0
      %1049 = vmatpush1.bf16.xpose.msra.mxu0 0
      %1050 = vmatprep.subr.bf16.mxu0 0
      %1051 = vmatpush1.bf16.xpose.msra.mxu0 0
      %1052 = vmatprep.subr.bf16.mxu0 0
      %1053 = vmatpush1.bf16.xpose.msra.mxu0 0
      %1054 = vmatprep.subr.bf16.mxu0 0
      %1055 = vmatpush1.bf16.xpose.msra.mxu0 0
      %1056 = vmatprep.subr.bf16.mxu0 0
      %1057 = vmatpush1.bf16.xpose.msra.mxu0 0
      %1058 = vmatprep.subr.bf16.mxu0 0
      %1059 = vmatpush1.bf16.xpose.msra.mxu0 0
      %1060 = vmatprep.mubr.bf16.mxu0 0
      %1061 = vmatmul.mubr.bf16.gmra.mrb[0].mxu0 %v1023
      %v1062 = vpop.f32.mrb[0].mxu0
      %v1063 = vadd.f32 0.0, %v1062
      %v1064 = vpop.f32.mrb[0].mxu0
      %v1065 = vpop.f32.mrb[0].mxu0
      %v1066 = vpop.f32.mrb[0].mxu0
      %1067 = vdwg.mxu0
      %v1069 = vsel %vm745, %v728, 0
      %v1072 = vsel %vm745, %v736, 0
      %1074 = vmatprep.subr.bf16.mxu0 0
      %1075 = vmatpush1.bf16.xpose.msra.mxu0 %v1072
      %1076 = vmatprep.subr.bf16.mxu0 0
      %1077 = vmatpush1.bf16.xpose.msra.mxu0 0
      %1078 = vmatprep.subr.bf16.mxu0 0
      %1079 = vmatpush1.bf16.xpose.msra.mxu0 0
      %1080 = vmatprep.subr.bf16.mxu0 0
      %1081 = vmatpush1.bf16.xpose.msra.mxu0 0
      %1082 = vmatprep.subr.bf16.mxu0 0
      %1083 = vmatpush1.bf16.xpose.msra.mxu0 0
      %1084 = vmatprep.subr.bf16.mxu0 0
      %1085 = vmatpush1.bf16.xpose.msra.mxu0 0
      %1086 = vmatprep.subr.bf16.mxu0 0
      %1087 = vmatpush1.bf16.xpose.msra.mxu0 0
      %1088 = vmatprep.subr.bf16.mxu0 0
      %1089 = vmatpush1.bf16.xpose.msra.mxu0 0
      %1090 = vmatprep.subr.bf16.mxu0 0
      %1091 = vmatpush1.bf16.xpose.msra.mxu0 0
      %1092 = vmatprep.subr.bf16.mxu0 0
      %1093 = vmatpush1.bf16.xpose.msra.mxu0 0
      %1094 = vmatprep.subr.bf16.mxu0 0
      %1095 = vmatpush1.bf16.xpose.msra.mxu0 0
      %1096 = vmatprep.subr.bf16.mxu0 0
      %1097 = vmatpush1.bf16.xpose.msra.mxu0 0
      %1098 = vmatprep.subr.bf16.mxu0 0
      %1099 = vmatpush1.bf16.xpose.msra.mxu0 0
      %1100 = vmatprep.subr.bf16.mxu0 0
      %1101 = vmatpush1.bf16.xpose.msra.mxu0 0
      %1102 = vmatprep.subr.bf16.mxu0 0
      %1103 = vmatpush1.bf16.xpose.msra.mxu0 0
      %1104 = vmatprep.subr.bf16.mxu0 0
      %1105 = vmatpush1.bf16.xpose.msra.mxu0 0
      %1106 = vmatprep.mubr.bf16.mxu0 0
      %1107 = vmatmul.mubr.bf16.gmra.mrb[0].mxu0 %v1069
      %v1108 = vpop.f32.mrb[0].mxu0
      %v1109 = vadd.f32 0.0, %v1108
      %v1110 = vpop.f32.mrb[0].mxu0
      %v1111 = vpop.f32.mrb[0].mxu0
      %v1112 = vpop.f32.mrb[0].mxu0
      %1113 = vdwg.mxu0
      %v1114 = vsel %vm745, %v787, -inf
      %1115 = vmax.xlane.f32.xlu0 %v1114
      %v1116 = vpop.xlane.xlu0 %1115
      %v1117 = vsel %vm745, %v833, -inf
      %1118 = vmax.xlane.f32.xlu0 %v1117
      %v1119 = vpop.xlane.xlu0 %1118
      %v1120 = vsel %vm745, %v879, -inf
      %1121 = vmax.xlane.f32.xlu0 %v1120
      %v1122 = vpop.xlane.xlu0 %1121
      %v1123 = vsel %vm745, %v925, -inf
      %1124 = vmax.xlane.f32.xlu0 %v1123
      %v1125 = vpop.xlane.xlu0 %1124
      %v1126 = vsel %vm745, %v971, -inf
      %1127 = vmax.xlane.f32.xlu0 %v1126
      %v1128 = vpop.xlane.xlu0 %1127
      %v1129 = vsel %vm745, %v1017, -inf
      %1130 = vmax.xlane.f32.xlu0 %v1129
      %v1131 = vpop.xlane.xlu0 %1130
      %v1132 = vsel %vm745, %v1063, -inf
      %1133 = vmax.xlane.f32.xlu0 %v1132
      %v1134 = vpop.xlane.xlu0 %1133
      %v1135 = vsel %vm745, %v1109, -inf
      %1136 = vmax.xlane.f32.xlu0 %v1135
      %v1137 = vpop.xlane.xlu0 %1136
      %v1138 = vsub.f32 %v787, %v1116
      %v1139 = vsub.f32 %v833, %v1119
      %v1140 = vsub.f32 %v879, %v1122
      %v1141 = vsub.f32 %v925, %v1125
      %v1142 = vsub.f32 %v971, %v1128
      %v1143 = vsub.f32 %v1017, %v1131
      %v1144 = vsub.f32 %v1063, %v1134
      %v1145 = vsub.f32 %v1109, %v1137
      %v1146 = vmul.f32 %v1138, 1.442695
      %v1147 = vpow.pop %v1146
      %v1148 = vmul.f32 %v1139, 1.442695
      %v1149 = vpow.pop %v1148
      %v1150 = vmul.f32 %v1140, 1.442695
      %v1151 = vpow.pop %v1150
      %v1152 = vmul.f32 %v1141, 1.442695
      %v1153 = vpow.pop %v1152
      %v1154 = vmul.f32 %v1142, 1.442695
      %v1155 = vpow.pop %v1154
      %v1156 = vmul.f32 %v1143, 1.442695
      %v1157 = vpow.pop %v1156
      %v1158 = vmul.f32 %v1144, 1.442695
      %v1159 = vpow.pop %v1158
      %v1160 = vmul.f32 %v1145, 1.442695
      %v1161 = vpow.pop %v1160
      %v1162 = vsel %vm745, %v1147, 0.0
      %1163 = vadd.xlane.f32.xlu0 %v1162
      %v1164 = vpop.xlane.xlu0 %1163
      %v1165 = vsel %vm745, %v1149, 0.0
      %1166 = vadd.xlane.f32.xlu0 %v1165
      %v1167 = vpop.xlane.xlu0 %1166
      %v1168 = vsel %vm745, %v1151, 0.0
      %1169 = vadd.xlane.f32.xlu0 %v1168
      %v1170 = vpop.xlane.xlu0 %1169
      %v1171 = vsel %vm745, %v1153, 0.0
      %1172 = vadd.xlane.f32.xlu0 %v1171
      %v1173 = vpop.xlane.xlu0 %1172
      %v1174 = vsel %vm745, %v1155, 0.0
      %1175 = vadd.xlane.f32.xlu0 %v1174
      %v1176 = vpop.xlane.xlu0 %1175
      %v1177 = vsel %vm745, %v1157, 0.0
      %1178 = vadd.xlane.f32.xlu0 %v1177
      %v1179 = vpop.xlane.xlu0 %1178
      %v1180 = vsel %vm745, %v1159, 0.0
      %1181 = vadd.xlane.f32.xlu0 %v1180
      %v1182 = vpop.xlane.xlu0 %1181
      %v1183 = vsel %vm745, %v1161, 0.0
      %1184 = vadd.xlane.f32.xlu0 %v1183
      %v1185 = vpop.xlane.xlu0 %1184
      %v1186 = vrcp.pop %v1164
      %v1187 = vrcp.pop %v1167
      %v1188 = vrcp.pop %v1170
      %v1189 = vrcp.pop %v1173
      %v1190 = vrcp.pop %v1176
      %v1191 = vrcp.pop %v1179
      %v1192 = vrcp.pop %v1182
      %v1193 = vrcp.pop %v1185
      %v1194 = vmul.f32 %v1147, %v1186
      %v1195 = vmul.f32 %v1149, %v1187
      %v1196 = vmul.f32 %v1151, %v1188
      %v1197 = vmul.f32 %v1153, %v1189
      %v1198 = vmul.f32 %v1155, %v1190
      %v1199 = vmul.f32 %v1157, %v1191
      %v1200 = vmul.f32 %v1159, %v1192
      %v1201 = vmul.f32 %v1161, %v1193
      %v1202 = vpack.c.bf16 %v1194, %v1194
      %v1203 = vpack.c.bf16 %v1195, %v1195
      %v1204 = vpack.c.bf16 %v1196, %v1196
      %v1205 = vpack.c.bf16 %v1197, %v1197
      %v1206 = vpack.c.bf16 %v1198, %v1198
      %v1207 = vpack.c.bf16 %v1199, %v1199
      %v1208 = vpack.c.bf16 %v1200, %v1200
      %v1209 = vpack.c.bf16 %v1201, %v1201
      %v1211 = vsel %vm745, %v1202, 0
      %vm1213 = vcmask 1043456
      %v1215 = vsel %vm1213, %v737, 0
      %1217 = vmatprep.subr.bf16.mxu0 0
      %1218 = vmatpush1.bf16.msra.mxu0 %v1215
      %1219 = vmatprep.subr.bf16.mxu0 0
      %1220 = vmatpush1.bf16.msra.mxu0 0
      %1221 = vmatprep.subr.bf16.mxu0 0
      %1222 = vmatpush1.bf16.msra.mxu0 0
      %1223 = vmatprep.subr.bf16.mxu0 0
      %1224 = vmatpush1.bf16.msra.mxu0 0
      %1225 = vmatprep.subr.bf16.mxu0 0
      %1226 = vmatpush1.bf16.msra.mxu0 0
      %1227 = vmatprep.subr.bf16.mxu0 0
      %1228 = vmatpush1.bf16.msra.mxu0 0
      %1229 = vmatprep.subr.bf16.mxu0 0
      %1230 = vmatpush1.bf16.msra.mxu0 0
      %1231 = vmatprep.subr.bf16.mxu0 0
      %1232 = vmatpush1.bf16.msra.mxu0 0
      %1233 = vmatprep.subr.bf16.mxu0 0
      %1234 = vmatpush1.bf16.msra.mxu0 0
      %1235 = vmatprep.subr.bf16.mxu0 0
      %1236 = vmatpush1.bf16.msra.mxu0 0
      %1237 = vmatprep.subr.bf16.mxu0 0
      %1238 = vmatpush1.bf16.msra.mxu0 0
      %1239 = vmatprep.subr.bf16.mxu0 0
      %1240 = vmatpush1.bf16.msra.mxu0 0
      %1241 = vmatprep.subr.bf16.mxu0 0
      %1242 = vmatpush1.bf16.msra.mxu0 0
      %1243 = vmatprep.subr.bf16.mxu0 0
      %1244 = vmatpush1.bf16.msra.mxu0 0
      %1245 = vmatprep.subr.bf16.mxu0 0
      %1246 = vmatpush1.bf16.msra.mxu0 0
      %1247 = vmatprep.subr.bf16.mxu0 0
      %1248 = vmatpush1.bf16.msra.mxu0 0
      %1249 = vmatprep.mubr.bf16.mxu0 0
      %1250 = vmatmul.mubr.bf16.gmra.mrb[0].mxu0 %v1211
      %v1251 = vpop.f32.mrb[0].mxu0
      %v1252 = vadd.f32 0.0, %v1251
      %v1253 = vpop.f32.mrb[0].mxu0
      %v1254 = vpop.f32.mrb[0].mxu0
      %v1255 = vpop.f32.mrb[0].mxu0
      %1256 = vdwg.mxu0
      %v1258 = vsel %vm745, %v1203, 0
      %v1261 = vsel %vm1213, %v738, 0
      %1263 = vmatprep.subr.bf16.mxu0 0
      %1264 = vmatpush1.bf16.msra.mxu0 %v1261
      %1265 = vmatprep.subr.bf16.mxu0 0
      %1266 = vmatpush1.bf16.msra.mxu0 0
      %1267 = vmatprep.subr.bf16.mxu0 0
      %1268 = vmatpush1.bf16.msra.mxu0 0
      %1269 = vmatprep.subr.bf16.mxu0 0
      %1270 = vmatpush1.bf16.msra.mxu0 0
      %1271 = vmatprep.subr.bf16.mxu0 0
      %1272 = vmatpush1.bf16.msra.mxu0 0
      %1273 = vmatprep.subr.bf16.mxu0 0
      %1274 = vmatpush1.bf16.msra.mxu0 0
      %1275 = vmatprep.subr.bf16.mxu0 0
      %1276 = vmatpush1.bf16.msra.mxu0 0
      %1277 = vmatprep.subr.bf16.mxu0 0
      %1278 = vmatpush1.bf16.msra.mxu0 0
      %1279 = vmatprep.subr.bf16.mxu0 0
      %1280 = vmatpush1.bf16.msra.mxu0 0
      %1281 = vmatprep.subr.bf16.mxu0 0
      %1282 = vmatpush1.bf16.msra.mxu0 0
      %1283 = vmatprep.subr.bf16.mxu0 0
      %1284 = vmatpush1.bf16.msra.mxu0 0
      %1285 = vmatprep.subr.bf16.mxu0 0
      %1286 = vmatpush1.bf16.msra.mxu0 0
      %1287 = vmatprep.subr.bf16.mxu0 0
      %1288 = vmatpush1.bf16.msra.mxu0 0
      %1289 = vmatprep.subr.bf16.mxu0 0
      %1290 = vmatpush1.bf16.msra.mxu0 0
      %1291 = vmatprep.subr.bf16.mxu0 0
      %1292 = vmatpush1.bf16.msra.mxu0 0
      %1293 = vmatprep.subr.bf16.mxu0 0
      %1294 = vmatpush1.bf16.msra.mxu0 0
      %1295 = vmatprep.mubr.bf16.mxu0 0
      %1296 = vmatmul.mubr.bf16.gmra.mrb[0].mxu0 %v1258
      %v1297 = vpop.f32.mrb[0].mxu0
      %v1298 = vadd.f32 0.0, %v1297
      %v1299 = vpop.f32.mrb[0].mxu0
      %v1300 = vpop.f32.mrb[0].mxu0
      %v1301 = vpop.f32.mrb[0].mxu0
      %1302 = vdwg.mxu0
      %v1304 = vsel %vm745, %v1204, 0
      %v1307 = vsel %vm1213, %v739, 0
      %1309 = vmatprep.subr.bf16.mxu0 0
      %1310 = vmatpush1.bf16.msra.mxu0 %v1307
      %1311 = vmatprep.subr.bf16.mxu0 0
      %1312 = vmatpush1.bf16.msra.mxu0 0
      %1313 = vmatprep.subr.bf16.mxu0 0
      %1314 = vmatpush1.bf16.msra.mxu0 0
      %1315 = vmatprep.subr.bf16.mxu0 0
      %1316 = vmatpush1.bf16.msra.mxu0 0
      %1317 = vmatprep.subr.bf16.mxu0 0
      %1318 = vmatpush1.bf16.msra.mxu0 0
      %1319 = vmatprep.subr.bf16.mxu0 0
      %1320 = vmatpush1.bf16.msra.mxu0 0
      %1321 = vmatprep.subr.bf16.mxu0 0
      %1322 = vmatpush1.bf16.msra.mxu0 0
      %1323 = vmatprep.subr.bf16.mxu0 0
      %1324 = vmatpush1.bf16.msra.mxu0 0
      %1325 = vmatprep.subr.bf16.mxu0 0
      %1326 = vmatpush1.bf16.msra.mxu0 0
      %1327 = vmatprep.subr.bf16.mxu0 0
      %1328 = vmatpush1.bf16.msra.mxu0 0
      %1329 = vmatprep.subr.bf16.mxu0 0
      %1330 = vmatpush1.bf16.msra.mxu0 0
      %1331 = vmatprep.subr.bf16.mxu0 0
      %1332 = vmatpush1.bf16.msra.mxu0 0
      %1333 = vmatprep.subr.bf16.mxu0 0
      %1334 = vmatpush1.bf16.msra.mxu0 0
      %1335 = vmatprep.subr.bf16.mxu0 0
      %1336 = vmatpush1.bf16.msra.mxu0 0
      %1337 = vmatprep.subr.bf16.mxu0 0
      %1338 = vmatpush1.bf16.msra.mxu0 0
      %1339 = vmatprep.subr.bf16.mxu0 0
      %1340 = vmatpush1.bf16.msra.mxu0 0
      %1341 = vmatprep.mubr.bf16.mxu0 0
      %1342 = vmatmul.mubr.bf16.gmra.mrb[0].mxu0 %v1304
      %v1343 = vpop.f32.mrb[0].mxu0
      %v1344 = vadd.f32 0.0, %v1343
      %v1345 = vpop.f32.mrb[0].mxu0
      %v1346 = vpop.f32.mrb[0].mxu0
      %v1347 = vpop.f32.mrb[0].mxu0
      %1348 = vdwg.mxu0
      %v1350 = vsel %vm745, %v1205, 0
      %v1353 = vsel %vm1213, %v740, 0
      %1355 = vmatprep.subr.bf16.mxu0 0
      %1356 = vmatpush1.bf16.msra.mxu0 %v1353
      %1357 = vmatprep.subr.bf16.mxu0 0
      %1358 = vmatpush1.bf16.msra.mxu0 0
      %1359 = vmatprep.subr.bf16.mxu0 0
      %1360 = vmatpush1.bf16.msra.mxu0 0
      %1361 = vmatprep.subr.bf16.mxu0 0
      %1362 = vmatpush1.bf16.msra.mxu0 0
      %1363 = vmatprep.subr.bf16.mxu0 0
      %1364 = vmatpush1.bf16.msra.mxu0 0
      %1365 = vmatprep.subr.bf16.mxu0 0
      %1366 = vmatpush1.bf16.msra.mxu0 0
      %1367 = vmatprep.subr.bf16.mxu0 0
      %1368 = vmatpush1.bf16.msra.mxu0 0
      %1369 = vmatprep.subr.bf16.mxu0 0
      %1370 = vmatpush1.bf16.msra.mxu0 0
      %1371 = vmatprep.subr.bf16.mxu0 0
      %1372 = vmatpush1.bf16.msra.mxu0 0
      %1373 = vmatprep.subr.bf16.mxu0 0
      %1374 = vmatpush1.bf16.msra.mxu0 0
      %1375 = vmatprep.subr.bf16.mxu0 0
      %1376 = vmatpush1.bf16.msra.mxu0 0
      %1377 = vmatprep.subr.bf16.mxu0 0
      %1378 = vmatpush1.bf16.msra.mxu0 0
      %1379 = vmatprep.subr.bf16.mxu0 0
      %1380 = vmatpush1.bf16.msra.mxu0 0
      %1381 = vmatprep.subr.bf16.mxu0 0
      %1382 = vmatpush1.bf16.msra.mxu0 0
      %1383 = vmatprep.subr.bf16.mxu0 0
      %1384 = vmatpush1.bf16.msra.mxu0 0
      %1385 = vmatprep.subr.bf16.mxu0 0
      %1386 = vmatpush1.bf16.msra.mxu0 0
      %1387 = vmatprep.mubr.bf16.mxu0 0
      %1388 = vmatmul.mubr.bf16.gmra.mrb[0].mxu0 %v1350
      %v1389 = vpop.f32.mrb[0].mxu0
      %v1390 = vadd.f32 0.0, %v1389
      %v1391 = vpop.f32.mrb[0].mxu0
      %v1392 = vpop.f32.mrb[0].mxu0
      %v1393 = vpop.f32.mrb[0].mxu0
      %1394 = vdwg.mxu0
      %v1396 = vsel %vm745, %v1206, 0
      %v1399 = vsel %vm1213, %v741, 0
      %1401 = vmatprep.subr.bf16.mxu0 0
      %1402 = vmatpush1.bf16.msra.mxu0 %v1399
      %1403 = vmatprep.subr.bf16.mxu0 0
      %1404 = vmatpush1.bf16.msra.mxu0 0
      %1405 = vmatprep.subr.bf16.mxu0 0
      %1406 = vmatpush1.bf16.msra.mxu0 0
      %1407 = vmatprep.subr.bf16.mxu0 0
      %1408 = vmatpush1.bf16.msra.mxu0 0
      %1409 = vmatprep.subr.bf16.mxu0 0
      %1410 = vmatpush1.bf16.msra.mxu0 0
      %1411 = vmatprep.subr.bf16.mxu0 0
      %1412 = vmatpush1.bf16.msra.mxu0 0
      %1413 = vmatprep.subr.bf16.mxu0 0
      %1414 = vmatpush1.bf16.msra.mxu0 0
      %1415 = vmatprep.subr.bf16.mxu0 0
      %1416 = vmatpush1.bf16.msra.mxu0 0
      %1417 = vmatprep.subr.bf16.mxu0 0
      %1418 = vmatpush1.bf16.msra.mxu0 0
      %1419 = vmatprep.subr.bf16.mxu0 0
      %1420 = vmatpush1.bf16.msra.mxu0 0
      %1421 = vmatprep.subr.bf16.mxu0 0
      %1422 = vmatpush1.bf16.msra.mxu0 0
      %1423 = vmatprep.subr.bf16.mxu0 0
      %1424 = vmatpush1.bf16.msra.mxu0 0
      %1425 = vmatprep.subr.bf16.mxu0 0
      %1426 = vmatpush1.bf16.msra.mxu0 0
      %1427 = vmatprep.subr.bf16.mxu0 0
      %1428 = vmatpush1.bf16.msra.mxu0 0
      %1429 = vmatprep.subr.bf16.mxu0 0
      %1430 = vmatpush1.bf16.msra.mxu0 0
      %1431 = vmatprep.subr.bf16.mxu0 0
      %1432 = vmatpush1.bf16.msra.mxu0 0
      %1433 = vmatprep.mubr.bf16.mxu0 0
      %1434 = vmatmul.mubr.bf16.gmra.mrb[0].mxu0 %v1396
      %v1435 = vpop.f32.mrb[0].mxu0
      %v1436 = vadd.f32 0.0, %v1435
      %v1437 = vpop.f32.mrb[0].mxu0
      %v1438 = vpop.f32.mrb[0].mxu0
      %v1439 = vpop.f32.mrb[0].mxu0
      %1440 = vdwg.mxu0
      %v1442 = vsel %vm745, %v1207, 0
      %v1445 = vsel %vm1213, %v742, 0
      %1447 = vmatprep.subr.bf16.mxu0 0
      %1448 = vmatpush1.bf16.msra.mxu0 %v1445
      %1449 = vmatprep.subr.bf16.mxu0 0
      %1450 = vmatpush1.bf16.msra.mxu0 0
      %1451 = vmatprep.subr.bf16.mxu0 0
      %1452 = vmatpush1.bf16.msra.mxu0 0
      %1453 = vmatprep.subr.bf16.mxu0 0
      %1454 = vmatpush1.bf16.msra.mxu0 0
      %1455 = vmatprep.subr.bf16.mxu0 0
      %1456 = vmatpush1.bf16.msra.mxu0 0
      %1457 = vmatprep.subr.bf16.mxu0 0
      %1458 = vmatpush1.bf16.msra.mxu0 0
      %1459 = vmatprep.subr.bf16.mxu0 0
      %1460 = vmatpush1.bf16.msra.mxu0 0
      %1461 = vmatprep.subr.bf16.mxu0 0
      %1462 = vmatpush1.bf16.msra.mxu0 0
      %1463 = vmatprep.subr.bf16.mxu0 0
      %1464 = vmatpush1.bf16.msra.mxu0 0
      %1465 = vmatprep.subr.bf16.mxu0 0
      %1466 = vmatpush1.bf16.msra.mxu0 0
      %1467 = vmatprep.subr.bf16.mxu0 0
      %1468 = vmatpush1.bf16.msra.mxu0 0
      %1469 = vmatprep.subr.bf16.mxu0 0
      %1470 = vmatpush1.bf16.msra.mxu0 0
      %1471 = vmatprep.subr.bf16.mxu0 0
      %1472 = vmatpush1.bf16.msra.mxu0 0
      %1473 = vmatprep.subr.bf16.mxu0 0
      %1474 = vmatpush1.bf16.msra.mxu0 0
      %1475 = vmatprep.subr.bf16.mxu0 0
      %1476 = vmatpush1.bf16.msra.mxu0 0
      %1477 = vmatprep.subr.bf16.mxu0 0
      %1478 = vmatpush1.bf16.msra.mxu0 0
      %1479 = vmatprep.mubr.bf16.mxu0 0
      %1480 = vmatmul.mubr.bf16.gmra.mrb[0].mxu0 %v1442
      %v1481 = vpop.f32.mrb[0].mxu0
      %v1482 = vadd.f32 0.0, %v1481
      %v1483 = vpop.f32.mrb[0].mxu0
      %v1484 = vpop.f32.mrb[0].mxu0
      %v1485 = vpop.f32.mrb[0].mxu0
      %1486 = vdwg.mxu0
      %v1488 = vsel %vm745, %v1208, 0
      %v1491 = vsel %vm1213, %v743, 0
      %1493 = vmatprep.subr.bf16.mxu0 0
      %1494 = vmatpush1.bf16.msra.mxu0 %v1491
      %1495 = vmatprep.subr.bf16.mxu0 0
      %1496 = vmatpush1.bf16.msra.mxu0 0
      %1497 = vmatprep.subr.bf16.mxu0 0
      %1498 = vmatpush1.bf16.msra.mxu0 0
      %1499 = vmatprep.subr.bf16.mxu0 0
      %1500 = vmatpush1.bf16.msra.mxu0 0
      %1501 = vmatprep.subr.bf16.mxu0 0
      %1502 = vmatpush1.bf16.msra.mxu0 0
      %1503 = vmatprep.subr.bf16.mxu0 0
      %1504 = vmatpush1.bf16.msra.mxu0 0
      %1505 = vmatprep.subr.bf16.mxu0 0
      %1506 = vmatpush1.bf16.msra.mxu0 0
      %1507 = vmatprep.subr.bf16.mxu0 0
      %1508 = vmatpush1.bf16.msra.mxu0 0
      %1509 = vmatprep.subr.bf16.mxu0 0
      %1510 = vmatpush1.bf16.msra.mxu0 0
      %1511 = vmatprep.subr.bf16.mxu0 0
      %1512 = vmatpush1.bf16.msra.mxu0 0
      %1513 = vmatprep.subr.bf16.mxu0 0
      %1514 = vmatpush1.bf16.msra.mxu0 0
      %1515 = vmatprep.subr.bf16.mxu0 0
      %1516 = vmatpush1.bf16.msra.mxu0 0
      %1517 = vmatprep.subr.bf16.mxu0 0
      %1518 = vmatpush1.bf16.msra.mxu0 0
      %1519 = vmatprep.subr.bf16.mxu0 0
      %1520 = vmatpush1.bf16.msra.mxu0 0
      %1521 = vmatprep.subr.bf16.mxu0 0
      %1522 = vmatpush1.bf16.msra.mxu0 0
      %1523 = vmatprep.subr.bf16.mxu0 0
      %1524 = vmatpush1.bf16.msra.mxu0 0
      %1525 = vmatprep.mubr.bf16.mxu0 0
      %1526 = vmatmul.mubr.bf16.gmra.mrb[0].mxu0 %v1488
      %v1527 = vpop.f32.mrb[0].mxu0
      %v1528 = vadd.f32 0.0, %v1527
      %v1529 = vpop.f32.mrb[0].mxu0
      %v1530 = vpop.f32.mrb[0].mxu0
      %v1531 = vpop.f32.mrb[0].mxu0
      %1532 = vdwg.mxu0
      %v1534 = vsel %vm745, %v1209, 0
      %v1537 = vsel %vm1213, %v744, 0
      %1539 = vmatprep.subr.bf16.mxu0 0
      %1540 = vmatpush1.bf16.msra.mxu0 %v1537
      %1541 = vmatprep.subr.bf16.mxu0 0
      %1542 = vmatpush1.bf16.msra.mxu0 0
      %1543 = vmatprep.subr.bf16.mxu0 0
      %1544 = vmatpush1.bf16.msra.mxu0 0
      %1545 = vmatprep.subr.bf16.mxu0 0
      %1546 = vmatpush1.bf16.msra.mxu0 0
      %1547 = vmatprep.subr.bf16.mxu0 0
      %1548 = vmatpush1.bf16.msra.mxu0 0
      %1549 = vmatprep.subr.bf16.mxu0 0
      %1550 = vmatpush1.bf16.msra.mxu0 0
      %1551 = vmatprep.subr.bf16.mxu0 0
      %1552 = vmatpush1.bf16.msra.mxu0 0
      %1553 = vmatprep.subr.bf16.mxu0 0
      %1554 = vmatpush1.bf16.msra.mxu0 0
      %1555 = vmatprep.subr.bf16.mxu0 0
      %1556 = vmatpush1.bf16.msra.mxu0 0
      %1557 = vmatprep.subr.bf16.mxu0 0
      %1558 = vmatpush1.bf16.msra.mxu0 0
      %1559 = vmatprep.subr.bf16.mxu0 0
      %1560 = vmatpush1.bf16.msra.mxu0 0
      %1561 = vmatprep.subr.bf16.mxu0 0
      %1562 = vmatpush1.bf16.msra.mxu0 0
      %1563 = vmatprep.subr.bf16.mxu0 0
      %1564 = vmatpush1.bf16.msra.mxu0 0
      %1565 = vmatprep.subr.bf16.mxu0 0
      %1566 = vmatpush1.bf16.msra.mxu0 0
      %1567 = vmatprep.subr.bf16.mxu0 0
      %1568 = vmatpush1.bf16.msra.mxu0 0
      %1569 = vmatprep.subr.bf16.mxu0 0
      %1570 = vmatpush1.bf16.msra.mxu0 0
      %1571 = vmatprep.mubr.bf16.mxu0 0
      %1572 = vmatmul.mubr.bf16.gmra.mrb[0].mxu0 %v1534
      %v1573 = vpop.f32.mrb[0].mxu0
      %v1574 = vadd.f32 0.0, %v1573
      %v1575 = vpop.f32.mrb[0].mxu0
      %v1576 = vpop.f32.mrb[0].mxu0
      %v1577 = vpop.f32.mrb[0].mxu0
      %1578 = vdwg.mxu0
      %v1579 = vpack.c.bf16 %v1298, %v1252
      %v1580 = vpack.c.bf16 %v1390, %v1344
      %v1581 = vpack.c.bf16 %v1482, %v1436
      %v1582 = vpack.c.bf16 %v1574, %v1528
      %v1583 = vld [vmem:[%s5] sm:$0xf]
      %1585 = vrot.lane.b32.xlu0 %v721, 120
      %v1586 = vpop.permute.xlu0 %1585
      %1588 = vrot.lane.b32.xlu0 %v729, 120
      %v1589 = vpop.permute.xlu0 %1588
      %v1591 = vsel %vm745, %v1586, 0
      %v1594 = vsel %vm745, %v1589, 0
      %1596 = vmatprep.subr.bf16.mxu0 0
      %1597 = vmatpush1.bf16.xpose.msra.mxu0 %v1594
      %1598 = vmatprep.subr.bf16.mxu0 0
      %1599 = vmatpush1.bf16.xpose.msra.mxu0 0
      %1600 = vmatprep.subr.bf16.mxu0 0
      %1601 = vmatpush1.bf16.xpose.msra.mxu0 0
      %1602 = vmatprep.subr.bf16.mxu0 0
      %1603 = vmatpush1.bf16.xpose.msra.mxu0 0
      %1604 = vmatprep.subr.bf16.mxu0 0
      %1605 = vmatpush1.bf16.xpose.msra.mxu0 0
      %1606 = vmatprep.subr.bf16.mxu0 0
      %1607 = vmatpush1.bf16.xpose.msra.mxu0 0
      %1608 = vmatprep.subr.bf16.mxu0 0
      %1609 = vmatpush1.bf16.xpose.msra.mxu0 0
      %1610 = vmatprep.subr.bf16.mxu0 0
      %1611 = vmatpush1.bf16.xpose.msra.mxu0 0
      %1612 = vmatprep.subr.bf16.mxu0 0
      %1613 = vmatpush1.bf16.xpose.msra.mxu0 0
      %1614 = vmatprep.subr.bf16.mxu0 0
      %1615 = vmatpush1.bf16.xpose.msra.mxu0 0
      %1616 = vmatprep.subr.bf16.mxu0 0
      %1617 = vmatpush1.bf16.xpose.msra.mxu0 0
      %1618 = vmatprep.subr.bf16.mxu0 0
      %1619 = vmatpush1.bf16.xpose.msra.mxu0 0
      %1620 = vmatprep.subr.bf16.mxu0 0
      %1621 = vmatpush1.bf16.xpose.msra.mxu0 0
      %1622 = vmatprep.subr.bf16.mxu0 0
      %1623 = vmatpush1.bf16.xpose.msra.mxu0 0
      %1624 = vmatprep.subr.bf16.mxu0 0
      %1625 = vmatpush1.bf16.xpose.msra.mxu0 0
      %1626 = vmatprep.subr.bf16.mxu0 0
      %1627 = vmatpush1.bf16.xpose.msra.mxu0 0
      %1628 = vmatprep.mubr.bf16.mxu0 0
      %1629 = vmatmul.mubr.bf16.gmra.mrb[0].mxu0 %v1591
      %v1630 = vpop.f32.mrb[0].mxu0
      %v1631 = vadd.f32 0.0, %v1630
      %v1632 = vpop.f32.mrb[0].mxu0
      %v1633 = vpop.f32.mrb[0].mxu0
      %v1634 = vpop.f32.mrb[0].mxu0
      %1635 = vdwg.mxu0
      %1637 = vrot.lane.b32.xlu0 %v722, 120
      %v1638 = vpop.permute.xlu0 %1637
      %1640 = vrot.lane.b32.xlu0 %v730, 120
      %v1641 = vpop.permute.xlu0 %1640
      %v1643 = vsel %vm745, %v1638, 0
      %v1646 = vsel %vm745, %v1641, 0
      %1648 = vmatprep.subr.bf16.mxu0 0
      %1649 = vmatpush1.bf16.xpose.msra.mxu0 %v1646
      %1650 = vmatprep.subr.bf16.mxu0 0
      %1651 = vmatpush1.bf16.xpose.msra.mxu0 0
      %1652 = vmatprep.subr.bf16.mxu0 0
      %1653 = vmatpush1.bf16.xpose.msra.mxu0 0
      %1654 = vmatprep.subr.bf16.mxu0 0
      %1655 = vmatpush1.bf16.xpose.msra.mxu0 0
      %1656 = vmatprep.subr.bf16.mxu0 0
      %1657 = vmatpush1.bf16.xpose.msra.mxu0 0
      %1658 = vmatprep.subr.bf16.mxu0 0
      %1659 = vmatpush1.bf16.xpose.msra.mxu0 0
      %1660 = vmatprep.subr.bf16.mxu0 0
      %1661 = vmatpush1.bf16.xpose.msra.mxu0 0
      %1662 = vmatprep.subr.bf16.mxu0 0
      %1663 = vmatpush1.bf16.xpose.msra.mxu0 0
      %1664 = vmatprep.subr.bf16.mxu0 0
      %1665 = vmatpush1.bf16.xpose.msra.mxu0 0
      %1666 = vmatprep.subr.bf16.mxu0 0
      %1667 = vmatpush1.bf16.xpose.msra.mxu0 0
      %1668 = vmatprep.subr.bf16.mxu0 0
      %1669 = vmatpush1.bf16.xpose.msra.mxu0 0
      %1670 = vmatprep.subr.bf16.mxu0 0
      %1671 = vmatpush1.bf16.xpose.msra.mxu0 0
      %1672 = vmatprep.subr.bf16.mxu0 0
      %1673 = vmatpush1.bf16.xpose.msra.mxu0 0
      %1674 = vmatprep.subr.bf16.mxu0 0
      %1675 = vmatpush1.bf16.xpose.msra.mxu0 0
      %1676 = vmatprep.subr.bf16.mxu0 0
      %1677 = vmatpush1.bf16.xpose.msra.mxu0 0
      %1678 = vmatprep.subr.bf16.mxu0 0
      %1679 = vmatpush1.bf16.xpose.msra.mxu0 0
      %1680 = vmatprep.mubr.bf16.mxu0 0
      %1681 = vmatmul.mubr.bf16.gmra.mrb[0].mxu0 %v1643
      %v1682 = vpop.f32.mrb[0].mxu0
      %v1683 = vadd.f32 0.0, %v1682
      %v1684 = vpop.f32.mrb[0].mxu0
      %v1685 = vpop.f32.mrb[0].mxu0
      %v1686 = vpop.f32.mrb[0].mxu0
      %1687 = vdwg.mxu0
      %1689 = vrot.lane.b32.xlu0 %v723, 120
      %v1690 = vpop.permute.xlu0 %1689
      %1692 = vrot.lane.b32.xlu0 %v731, 120
      %v1693 = vpop.permute.xlu0 %1692
      %v1695 = vsel %vm745, %v1690, 0
      %v1698 = vsel %vm745, %v1693, 0
      %1700 = vmatprep.subr.bf16.mxu0 0
      %1701 = vmatpush1.bf16.xpose.msra.mxu0 %v1698
      %1702 = vmatprep.subr.bf16.mxu0 0
      %1703 = vmatpush1.bf16.xpose.msra.mxu0 0
      %1704 = vmatprep.subr.bf16.mxu0 0
      %1705 = vmatpush1.bf16.xpose.msra.mxu0 0
      %1706 = vmatprep.subr.bf16.mxu0 0
      %1707 = vmatpush1.bf16.xpose.msra.mxu0 0
      %1708 = vmatprep.subr.bf16.mxu0 0
      %1709 = vmatpush1.bf16.xpose.msra.mxu0 0
      %1710 = vmatprep.subr.bf16.mxu0 0
      %1711 = vmatpush1.bf16.xpose.msra.mxu0 0
      %1712 = vmatprep.subr.bf16.mxu0 0
      %1713 = vmatpush1.bf16.xpose.msra.mxu0 0
      %1714 = vmatprep.subr.bf16.mxu0 0
      %1715 = vmatpush1.bf16.xpose.msra.mxu0 0
      %1716 = vmatprep.subr.bf16.mxu0 0
      %1717 = vmatpush1.bf16.xpose.msra.mxu0 0
      %1718 = vmatprep.subr.bf16.mxu0 0
      %1719 = vmatpush1.bf16.xpose.msra.mxu0 0
      %1720 = vmatprep.subr.bf16.mxu0 0
      %1721 = vmatpush1.bf16.xpose.msra.mxu0 0
      %1722 = vmatprep.subr.bf16.mxu0 0
      %1723 = vmatpush1.bf16.xpose.msra.mxu0 0
      %1724 = vmatprep.subr.bf16.mxu0 0
      %1725 = vmatpush1.bf16.xpose.msra.mxu0 0
      %1726 = vmatprep.subr.bf16.mxu0 0
      %1727 = vmatpush1.bf16.xpose.msra.mxu0 0
      %1728 = vmatprep.subr.bf16.mxu0 0
      %1729 = vmatpush1.bf16.xpose.msra.mxu0 0
      %1730 = vmatprep.subr.bf16.mxu0 0
      %1731 = vmatpush1.bf16.xpose.msra.mxu0 0
      %1732 = vmatprep.mubr.bf16.mxu0 0
      %1733 = vmatmul.mubr.bf16.gmra.mrb[0].mxu0 %v1695
      %v1734 = vpop.f32.mrb[0].mxu0
      %v1735 = vadd.f32 0.0, %v1734
      %v1736 = vpop.f32.mrb[0].mxu0
      %v1737 = vpop.f32.mrb[0].mxu0
      %v1738 = vpop.f32.mrb[0].mxu0
      %1739 = vdwg.mxu0
      %1741 = vrot.lane.b32.xlu0 %v724, 120
      %v1742 = vpop.permute.xlu0 %1741
      %1744 = vrot.lane.b32.xlu0 %v732, 120
      %v1745 = vpop.permute.xlu0 %1744
      %v1747 = vsel %vm745, %v1742, 0
      %v1750 = vsel %vm745, %v1745, 0
      %1752 = vmatprep.subr.bf16.mxu0 0
      %1753 = vmatpush1.bf16.xpose.msra.mxu0 %v1750
      %1754 = vmatprep.subr.bf16.mxu0 0
      %1755 = vmatpush1.bf16.xpose.msra.mxu0 0
      %1756 = vmatprep.subr.bf16.mxu0 0
      %1757 = vmatpush1.bf16.xpose.msra.mxu0 0
      %1758 = vmatprep.subr.bf16.mxu0 0
      %1759 = vmatpush1.bf16.xpose.msra.mxu0 0
      %1760 = vmatprep.subr.bf16.mxu0 0
      %1761 = vmatpush1.bf16.xpose.msra.mxu0 0
      %1762 = vmatprep.subr.bf16.mxu0 0
      %1763 = vmatpush1.bf16.xpose.msra.mxu0 0
      %1764 = vmatprep.subr.bf16.mxu0 0
      %1765 = vmatpush1.bf16.xpose.msra.mxu0 0
      %1766 = vmatprep.subr.bf16.mxu0 0
      %1767 = vmatpush1.bf16.xpose.msra.mxu0 0
      %1768 = vmatprep.subr.bf16.mxu0 0
      %1769 = vmatpush1.bf16.xpose.msra.mxu0 0
      %1770 = vmatprep.subr.bf16.mxu0 0
      %1771 = vmatpush1.bf16.xpose.msra.mxu0 0
      %1772 = vmatprep.subr.bf16.mxu0 0
      %1773 = vmatpush1.bf16.xpose.msra.mxu0 0
      %1774 = vmatprep.subr.bf16.mxu0 0
      %1775 = vmatpush1.bf16.xpose.msra.mxu0 0
      %1776 = vmatprep.subr.bf16.mxu0 0
      %1777 = vmatpush1.bf16.xpose.msra.mxu0 0
      %1778 = vmatprep.subr.bf16.mxu0 0
      %1779 = vmatpush1.bf16.xpose.msra.mxu0 0
      %1780 = vmatprep.subr.bf16.mxu0 0
      %1781 = vmatpush1.bf16.xpose.msra.mxu0 0
      %1782 = vmatprep.subr.bf16.mxu0 0
      %1783 = vmatpush1.bf16.xpose.msra.mxu0 0
      %1784 = vmatprep.mubr.bf16.mxu0 0
      %1785 = vmatmul.mubr.bf16.gmra.mrb[0].mxu0 %v1747
      %v1786 = vpop.f32.mrb[0].mxu0
      %v1787 = vadd.f32 0.0, %v1786
      %v1788 = vpop.f32.mrb[0].mxu0
      %v1789 = vpop.f32.mrb[0].mxu0
      %v1790 = vpop.f32.mrb[0].mxu0
      %1791 = vdwg.mxu0
      %1793 = vrot.lane.b32.xlu0 %v725, 120
      %v1794 = vpop.permute.xlu0 %1793
      %1796 = vrot.lane.b32.xlu0 %v733, 120
      %v1797 = vpop.permute.xlu0 %1796
      %v1799 = vsel %vm745, %v1794, 0
      %v1802 = vsel %vm745, %v1797, 0
      %1804 = vmatprep.subr.bf16.mxu0 0
      %1805 = vmatpush1.bf16.xpose.msra.mxu0 %v1802
      %1806 = vmatprep.subr.bf16.mxu0 0
      %1807 = vmatpush1.bf16.xpose.msra.mxu0 0
      %1808 = vmatprep.subr.bf16.mxu0 0
      %1809 = vmatpush1.bf16.xpose.msra.mxu0 0
      %1810 = vmatprep.subr.bf16.mxu0 0
      %1811 = vmatpush1.bf16.xpose.msra.mxu0 0
      %1812 = vmatprep.subr.bf16.mxu0 0
      %1813 = vmatpush1.bf16.xpose.msra.mxu0 0
      %1814 = vmatprep.subr.bf16.mxu0 0
      %1815 = vmatpush1.bf16.xpose.msra.mxu0 0
      %1816 = vmatprep.subr.bf16.mxu0 0
      %1817 = vmatpush1.bf16.xpose.msra.mxu0 0
      %1818 = vmatprep.subr.bf16.mxu0 0
      %1819 = vmatpush1.bf16.xpose.msra.mxu0 0
      %1820 = vmatprep.subr.bf16.mxu0 0
      %1821 = vmatpush1.bf16.xpose.msra.mxu0 0
      %1822 = vmatprep.subr.bf16.mxu0 0
      %1823 = vmatpush1.bf16.xpose.msra.mxu0 0
      %1824 = vmatprep.subr.bf16.mxu0 0
      %1825 = vmatpush1.bf16.xpose.msra.mxu0 0
      %1826 = vmatprep.subr.bf16.mxu0 0
      %1827 = vmatpush1.bf16.xpose.msra.mxu0 0
      %1828 = vmatprep.subr.bf16.mxu0 0
      %1829 = vmatpush1.bf16.xpose.msra.mxu0 0
      %1830 = vmatprep.subr.bf16.mxu0 0
      %1831 = vmatpush1.bf16.xpose.msra.mxu0 0
      %1832 = vmatprep.subr.bf16.mxu0 0
      %1833 = vmatpush1.bf16.xpose.msra.mxu0 0
      %1834 = vmatprep.subr.bf16.mxu0 0
      %1835 = vmatpush1.bf16.xpose.msra.mxu0 0
      %1836 = vmatprep.mubr.bf16.mxu0 0
      %1837 = vmatmul.mubr.bf16.gmra.mrb[0].mxu0 %v1799
      %v1838 = vpop.f32.mrb[0].mxu0
      %v1839 = vadd.f32 0.0, %v1838
      %v1840 = vpop.f32.mrb[0].mxu0
      %v1841 = vpop.f32.mrb[0].mxu0
      %v1842 = vpop.f32.mrb[0].mxu0
      %1843 = vdwg.mxu0
      %1845 = vrot.lane.b32.xlu0 %v726, 120
      %v1846 = vpop.permute.xlu0 %1845
      %1848 = vrot.lane.b32.xlu0 %v734, 120
      %v1849 = vpop.permute.xlu0 %1848
      %v1851 = vsel %vm745, %v1846, 0
      %v1854 = vsel %vm745, %v1849, 0
      %1856 = vmatprep.subr.bf16.mxu0 0
      %1857 = vmatpush1.bf16.xpose.msra.mxu0 %v1854
      %1858 = vmatprep.subr.bf16.mxu0 0
      %1859 = vmatpush1.bf16.xpose.msra.mxu0 0
      %1860 = vmatprep.subr.bf16.mxu0 0
      %1861 = vmatpush1.bf16.xpose.msra.mxu0 0
      %1862 = vmatprep.subr.bf16.mxu0 0
      %1863 = vmatpush1.bf16.xpose.msra.mxu0 0
      %1864 = vmatprep.subr.bf16.mxu0 0
      %1865 = vmatpush1.bf16.xpose.msra.mxu0 0
      %1866 = vmatprep.subr.bf16.mxu0 0
      %1867 = vmatpush1.bf16.xpose.msra.mxu0 0
      %1868 = vmatprep.subr.bf16.mxu0 0
      %1869 = vmatpush1.bf16.xpose.msra.mxu0 0
      %1870 = vmatprep.subr.bf16.mxu0 0
      %1871 = vmatpush1.bf16.xpose.msra.mxu0 0
      %1872 = vmatprep.subr.bf16.mxu0 0
      %1873 = vmatpush1.bf16.xpose.msra.mxu0 0
      %1874 = vmatprep.subr.bf16.mxu0 0
      %1875 = vmatpush1.bf16.xpose.msra.mxu0 0
      %1876 = vmatprep.subr.bf16.mxu0 0
      %1877 = vmatpush1.bf16.xpose.msra.mxu0 0
      %1878 = vmatprep.subr.bf16.mxu0 0
      %1879 = vmatpush1.bf16.xpose.msra.mxu0 0
      %1880 = vmatprep.subr.bf16.mxu0 0
      %1881 = vmatpush1.bf16.xpose.msra.mxu0 0
      %1882 = vmatprep.subr.bf16.mxu0 0
      %1883 = vmatpush1.bf16.xpose.msra.mxu0 0
      %1884 = vmatprep.subr.bf16.mxu0 0
      %1885 = vmatpush1.bf16.xpose.msra.mxu0 0
      %1886 = vmatprep.subr.bf16.mxu0 0
      %1887 = vmatpush1.bf16.xpose.msra.mxu0 0
      %1888 = vmatprep.mubr.bf16.mxu0 0
      %1889 = vmatmul.mubr.bf16.gmra.mrb[0].mxu0 %v1851
      %v1890 = vpop.f32.mrb[0].mxu0
      %v1891 = vadd.f32 0.0, %v1890
      %v1892 = vpop.f32.mrb[0].mxu0
      %v1893 = vpop.f32.mrb[0].mxu0
      %v1894 = vpop.f32.mrb[0].mxu0
      %1895 = vdwg.mxu0
      %1897 = vrot.lane.b32.xlu0 %v727, 120
      %v1898 = vpop.permute.xlu0 %1897
      %1900 = vrot.lane.b32.xlu0 %v735, 120
      %v1901 = vpop.permute.xlu0 %1900
      %v1903 = vsel %vm745, %v1898, 0
      %v1906 = vsel %vm745, %v1901, 0
      %1908 = vmatprep.subr.bf16.mxu0 0
      %1909 = vmatpush1.bf16.xpose.msra.mxu0 %v1906
      %1910 = vmatprep.subr.bf16.mxu0 0
      %1911 = vmatpush1.bf16.xpose.msra.mxu0 0
      %1912 = vmatprep.subr.bf16.mxu0 0
      %1913 = vmatpush1.bf16.xpose.msra.mxu0 0
      %1914 = vmatprep.subr.bf16.mxu0 0
      %1915 = vmatpush1.bf16.xpose.msra.mxu0 0
      %1916 = vmatprep.subr.bf16.mxu0 0
      %1917 = vmatpush1.bf16.xpose.msra.mxu0 0
      %1918 = vmatprep.subr.bf16.mxu0 0
      %1919 = vmatpush1.bf16.xpose.msra.mxu0 0
      %1920 = vmatprep.subr.bf16.mxu0 0
      %1921 = vmatpush1.bf16.xpose.msra.mxu0 0
      %1922 = vmatprep.subr.bf16.mxu0 0
      %1923 = vmatpush1.bf16.xpose.msra.mxu0 0
      %1924 = vmatprep.subr.bf16.mxu0 0
      %1925 = vmatpush1.bf16.xpose.msra.mxu0 0
      %1926 = vmatprep.subr.bf16.mxu0 0
      %1927 = vmatpush1.bf16.xpose.msra.mxu0 0
      %1928 = vmatprep.subr.bf16.mxu0 0
      %1929 = vmatpush1.bf16.xpose.msra.mxu0 0
      %1930 = vmatprep.subr.bf16.mxu0 0
      %1931 = vmatpush1.bf16.xpose.msra.mxu0 0
      %1932 = vmatprep.subr.bf16.mxu0 0
      %1933 = vmatpush1.bf16.xpose.msra.mxu0 0
      %1934 = vmatprep.subr.bf16.mxu0 0
      %1935 = vmatpush1.bf16.xpose.msra.mxu0 0
      %1936 = vmatprep.subr.bf16.mxu0 0
      %1937 = vmatpush1.bf16.xpose.msra.mxu0 0
      %1938 = vmatprep.subr.bf16.mxu0 0
      %1939 = vmatpush1.bf16.xpose.msra.mxu0 0
      %1940 = vmatprep.mubr.bf16.mxu0 0
      %1941 = vmatmul.mubr.bf16.gmra.mrb[0].mxu0 %v1903
      %v1942 = vpop.f32.mrb[0].mxu0
      %v1943 = vadd.f32 0.0, %v1942
      %v1944 = vpop.f32.mrb[0].mxu0
      %v1945 = vpop.f32.mrb[0].mxu0
      %v1946 = vpop.f32.mrb[0].mxu0
      %1947 = vdwg.mxu0
      %1949 = vrot.lane.b32.xlu0 %v728, 120
      %v1950 = vpop.permute.xlu0 %1949
      %1952 = vrot.lane.b32.xlu0 %v736, 120
      %v1953 = vpop.permute.xlu0 %1952
      %v1955 = vsel %vm745, %v1950, 0
      %v1958 = vsel %vm745, %v1953, 0
      %1960 = vmatprep.subr.bf16.mxu0 0
      %1961 = vmatpush1.bf16.xpose.msra.mxu0 %v1958
      %1962 = vmatprep.subr.bf16.mxu0 0
      %1963 = vmatpush1.bf16.xpose.msra.mxu0 0
      %1964 = vmatprep.subr.bf16.mxu0 0
      %1965 = vmatpush1.bf16.xpose.msra.mxu0 0
      %1966 = vmatprep.subr.bf16.mxu0 0
      %1967 = vmatpush1.bf16.xpose.msra.mxu0 0
      %1968 = vmatprep.subr.bf16.mxu0 0
      %1969 = vmatpush1.bf16.xpose.msra.mxu0 0
      %1970 = vmatprep.subr.bf16.mxu0 0
      %1971 = vmatpush1.bf16.xpose.msra.mxu0 0
      %1972 = vmatprep.subr.bf16.mxu0 0
      %1973 = vmatpush1.bf16.xpose.msra.mxu0 0
      %1974 = vmatprep.subr.bf16.mxu0 0
      %1975 = vmatpush1.bf16.xpose.msra.mxu0 0
      %1976 = vmatprep.subr.bf16.mxu0 0
      %1977 = vmatpush1.bf16.xpose.msra.mxu0 0
      %1978 = vmatprep.subr.bf16.mxu0 0
      %1979 = vmatpush1.bf16.xpose.msra.mxu0 0
      %1980 = vmatprep.subr.bf16.mxu0 0
      %1981 = vmatpush1.bf16.xpose.msra.mxu0 0
      %1982 = vmatprep.subr.bf16.mxu0 0
      %1983 = vmatpush1.bf16.xpose.msra.mxu0 0
      %1984 = vmatprep.subr.bf16.mxu0 0
      %1985 = vmatpush1.bf16.xpose.msra.mxu0 0
      %1986 = vmatprep.subr.bf16.mxu0 0
      %1987 = vmatpush1.bf16.xpose.msra.mxu0 0
      %1988 = vmatprep.subr.bf16.mxu0 0
      %1989 = vmatpush1.bf16.xpose.msra.mxu0 0
      %1990 = vmatprep.subr.bf16.mxu0 0
      %1991 = vmatpush1.bf16.xpose.msra.mxu0 0
      %1992 = vmatprep.mubr.bf16.mxu0 0
      %1993 = vmatmul.mubr.bf16.gmra.mrb[0].mxu0 %v1955
      %v1994 = vpop.f32.mrb[0].mxu0
      %v1995 = vadd.f32 0.0, %v1994
      %v1996 = vpop.f32.mrb[0].mxu0
      %v1997 = vpop.f32.mrb[0].mxu0
      %v1998 = vpop.f32.mrb[0].mxu0
      %1999 = vdwg.mxu0
      %v2000 = vsel %vm745, %v1631, -inf
      %2001 = vmax.xlane.f32.xlu0 %v2000
      %v2002 = vpop.xlane.xlu0 %2001
      %v2003 = vsel %vm745, %v1683, -inf
      %2004 = vmax.xlane.f32.xlu0 %v2003
      %v2005 = vpop.xlane.xlu0 %2004
      %v2006 = vsel %vm745, %v1735, -inf
      %2007 = vmax.xlane.f32.xlu0 %v2006
      %v2008 = vpop.xlane.xlu0 %2007
      %v2009 = vsel %vm745, %v1787, -inf
      %2010 = vmax.xlane.f32.xlu0 %v2009
      %v2011 = vpop.xlane.xlu0 %2010
      %v2012 = vsel %vm745, %v1839, -inf
      %2013 = vmax.xlane.f32.xlu0 %v2012
      %v2014 = vpop.xlane.xlu0 %2013
      %v2015 = vsel %vm745, %v1891, -inf
      %2016 = vmax.xlane.f32.xlu0 %v2015
      %v2017 = vpop.xlane.xlu0 %2016
      %v2018 = vsel %vm745, %v1943, -inf
      %2019 = vmax.xlane.f32.xlu0 %v2018
      %v2020 = vpop.xlane.xlu0 %2019
      %v2021 = vsel %vm745, %v1995, -inf
      %2022 = vmax.xlane.f32.xlu0 %v2021
      %v2023 = vpop.xlane.xlu0 %2022
      %v2024 = vsub.f32 %v1631, %v2002
      %v2025 = vsub.f32 %v1683, %v2005
      %v2026 = vsub.f32 %v1735, %v2008
      %v2027 = vsub.f32 %v1787, %v2011
      %v2028 = vsub.f32 %v1839, %v2014
      %v2029 = vsub.f32 %v1891, %v2017
      %v2030 = vsub.f32 %v1943, %v2020
      %v2031 = vsub.f32 %v1995, %v2023
      %v2032 = vmul.f32 %v2024, 1.442695
      %v2033 = vpow.pop %v2032
      %v2034 = vmul.f32 %v2025, 1.442695
      %v2035 = vpow.pop %v2034
      %v2036 = vmul.f32 %v2026, 1.442695
      %v2037 = vpow.pop %v2036
      %v2038 = vmul.f32 %v2027, 1.442695
      %v2039 = vpow.pop %v2038
      %v2040 = vmul.f32 %v2028, 1.442695
      %v2041 = vpow.pop %v2040
      %v2042 = vmul.f32 %v2029, 1.442695
      %v2043 = vpow.pop %v2042
      %v2044 = vmul.f32 %v2030, 1.442695
      %v2045 = vpow.pop %v2044
      %v2046 = vmul.f32 %v2031, 1.442695
      %v2047 = vpow.pop %v2046
      %v2048 = vsel %vm745, %v2033, 0.0
      %2049 = vadd.xlane.f32.xlu0 %v2048
      %v2050 = vpop.xlane.xlu0 %2049
      %v2051 = vsel %vm745, %v2035, 0.0
      %2052 = vadd.xlane.f32.xlu0 %v2051
      %v2053 = vpop.xlane.xlu0 %2052
      %v2054 = vsel %vm745, %v2037, 0.0
      %2055 = vadd.xlane.f32.xlu0 %v2054
      %v2056 = vpop.xlane.xlu0 %2055
      %v2057 = vsel %vm745, %v2039, 0.0
      %2058 = vadd.xlane.f32.xlu0 %v2057
      %v2059 = vpop.xlane.xlu0 %2058
      %v2060 = vsel %vm745, %v2041, 0.0
      %2061 = vadd.xlane.f32.xlu0 %v2060
      %v2062 = vpop.xlane.xlu0 %2061
      %v2063 = vsel %vm745, %v2043, 0.0
      %2064 = vadd.xlane.f32.xlu0 %v2063
      %v2065 = vpop.xlane.xlu0 %2064
      %v2066 = vsel %vm745, %v2045, 0.0
      %2067 = vadd.xlane.f32.xlu0 %v2066
      %v2068 = vpop.xlane.xlu0 %2067
      %v2069 = vsel %vm745, %v2047, 0.0
      %2070 = vadd.xlane.f32.xlu0 %v2069
      %v2071 = vpop.xlane.xlu0 %2070
      %v2072 = vrcp.pop %v2050
      %v2073 = vrcp.pop %v2053
      %v2074 = vrcp.pop %v2056
      %v2075 = vrcp.pop %v2059
      %v2076 = vrcp.pop %v2062
      %v2077 = vrcp.pop %v2065
      %v2078 = vrcp.pop %v2068
      %v2079 = vrcp.pop %v2071
      %v2080 = vmul.f32 %v2033, %v2072
      %v2081 = vmul.f32 %v2035, %v2073
      %v2082 = vmul.f32 %v2037, %v2074
      %v2083 = vmul.f32 %v2039, %v2075
      %v2084 = vmul.f32 %v2041, %v2076
      %v2085 = vmul.f32 %v2043, %v2077
      %v2086 = vmul.f32 %v2045, %v2078
      %v2087 = vmul.f32 %v2047, %v2079
      %v2088 = vpack.c.bf16 %v2080, %v2080
      %v2089 = vpack.c.bf16 %v2081, %v2081
      %v2090 = vpack.c.bf16 %v2082, %v2082
      %v2091 = vpack.c.bf16 %v2083, %v2083
      %v2092 = vpack.c.bf16 %v2084, %v2084
      %v2093 = vpack.c.bf16 %v2085, %v2085
      %v2094 = vpack.c.bf16 %v2086, %v2086
      %v2095 = vpack.c.bf16 %v2087, %v2087
      %2097 = vrot.lane.b32.xlu0 %v737, 120
      %v2098 = vpop.permute.xlu0 %2097
      %v2100 = vsel %vm745, %v2088, 0
      %v2103 = vsel %vm1213, %v2098, 0
      %2105 = vmatprep.subr.bf16.mxu0 0
      %2106 = vmatpush1.bf16.msra.mxu0 %v2103
      %2107 = vmatprep.subr.bf16.mxu0 0
      %2108 = vmatpush1.bf16.msra.mxu0 0
      %2109 = vmatprep.subr.bf16.mxu0 0
      %2110 = vmatpush1.bf16.msra.mxu0 0
      %2111 = vmatprep.subr.bf16.mxu0 0
      %2112 = vmatpush1.bf16.msra.mxu0 0
      %2113 = vmatprep.subr.bf16.mxu0 0
      %2114 = vmatpush1.bf16.msra.mxu0 0
      %2115 = vmatprep.subr.bf16.mxu0 0
      %2116 = vmatpush1.bf16.msra.mxu0 0
      %2117 = vmatprep.subr.bf16.mxu0 0
      %2118 = vmatpush1.bf16.msra.mxu0 0
      %2119 = vmatprep.subr.bf16.mxu0 0
      %2120 = vmatpush1.bf16.msra.mxu0 0
      %2121 = vmatprep.subr.bf16.mxu0 0
      %2122 = vmatpush1.bf16.msra.mxu0 0
      %2123 = vmatprep.subr.bf16.mxu0 0
      %2124 = vmatpush1.bf16.msra.mxu0 0
      %2125 = vmatprep.subr.bf16.mxu0 0
      %2126 = vmatpush1.bf16.msra.mxu0 0
      %2127 = vmatprep.subr.bf16.mxu0 0
      %2128 = vmatpush1.bf16.msra.mxu0 0
      %2129 = vmatprep.subr.bf16.mxu0 0
      %2130 = vmatpush1.bf16.msra.mxu0 0
      %2131 = vmatprep.subr.bf16.mxu0 0
      %2132 = vmatpush1.bf16.msra.mxu0 0
      %2133 = vmatprep.subr.bf16.mxu0 0
      %2134 = vmatpush1.bf16.msra.mxu0 0
      %2135 = vmatprep.subr.bf16.mxu0 0
      %2136 = vmatpush1.bf16.msra.mxu0 0
      %2137 = vmatprep.mubr.bf16.mxu0 0
      %2138 = vmatmul.mubr.bf16.gmra.mrb[0].mxu0 %v2100
      %v2139 = vpop.f32.mrb[0].mxu0
      %v2140 = vadd.f32 0.0, %v2139
      %v2141 = vpop.f32.mrb[0].mxu0
      %v2142 = vpop.f32.mrb[0].mxu0
      %v2143 = vpop.f32.mrb[0].mxu0
      %2144 = vdwg.mxu0
      %2146 = vrot.lane.b32.xlu0 %v738, 120
      %v2147 = vpop.permute.xlu0 %2146
      %v2149 = vsel %vm745, %v2089, 0
      %v2152 = vsel %vm1213, %v2147, 0
      %2154 = vmatprep.subr.bf16.mxu0 0
      %2155 = vmatpush1.bf16.msra.mxu0 %v2152
      %2156 = vmatprep.subr.bf16.mxu0 0
      %2157 = vmatpush1.bf16.msra.mxu0 0
      %2158 = vmatprep.subr.bf16.mxu0 0
      %2159 = vmatpush1.bf16.msra.mxu0 0
      %2160 = vmatprep.subr.bf16.mxu0 0
      %2161 = vmatpush1.bf16.msra.mxu0 0
      %2162 = vmatprep.subr.bf16.mxu0 0
      %2163 = vmatpush1.bf16.msra.mxu0 0
      %2164 = vmatprep.subr.bf16.mxu0 0
      %2165 = vmatpush1.bf16.msra.mxu0 0
      %2166 = vmatprep.subr.bf16.mxu0 0
      %2167 = vmatpush1.bf16.msra.mxu0 0
      %2168 = vmatprep.subr.bf16.mxu0 0
      %2169 = vmatpush1.bf16.msra.mxu0 0
      %2170 = vmatprep.subr.bf16.mxu0 0
      %2171 = vmatpush1.bf16.msra.mxu0 0
      %2172 = vmatprep.subr.bf16.mxu0 0
      %2173 = vmatpush1.bf16.msra.mxu0 0
      %2174 = vmatprep.subr.bf16.mxu0 0
      %2175 = vmatpush1.bf16.msra.mxu0 0
      %2176 = vmatprep.subr.bf16.mxu0 0
      %2177 = vmatpush1.bf16.msra.mxu0 0
      %2178 = vmatprep.subr.bf16.mxu0 0
      %2179 = vmatpush1.bf16.msra.mxu0 0
      %2180 = vmatprep.subr.bf16.mxu0 0
      %2181 = vmatpush1.bf16.msra.mxu0 0
      %2182 = vmatprep.subr.bf16.mxu0 0
      %2183 = vmatpush1.bf16.msra.mxu0 0
      %2184 = vmatprep.subr.bf16.mxu0 0
      %2185 = vmatpush1.bf16.msra.mxu0 0
      %2186 = vmatprep.mubr.bf16.mxu0 0
      %2187 = vmatmul.mubr.bf16.gmra.mrb[0].mxu0 %v2149
      %v2188 = vpop.f32.mrb[0].mxu0
      %v2189 = vadd.f32 0.0, %v2188
      %v2190 = vpop.f32.mrb[0].mxu0
      %v2191 = vpop.f32.mrb[0].mxu0
      %v2192 = vpop.f32.mrb[0].mxu0
      %2193 = vdwg.mxu0
      %2195 = vrot.lane.b32.xlu0 %v739, 120
      %v2196 = vpop.permute.xlu0 %2195
      %v2198 = vsel %vm745, %v2090, 0
      %v2201 = vsel %vm1213, %v2196, 0
      %2203 = vmatprep.subr.bf16.mxu0 0
      %2204 = vmatpush1.bf16.msra.mxu0 %v2201
      %2205 = vmatprep.subr.bf16.mxu0 0
      %2206 = vmatpush1.bf16.msra.mxu0 0
      %2207 = vmatprep.subr.bf16.mxu0 0
      %2208 = vmatpush1.bf16.msra.mxu0 0
      %2209 = vmatprep.subr.bf16.mxu0 0
      %2210 = vmatpush1.bf16.msra.mxu0 0
      %2211 = vmatprep.subr.bf16.mxu0 0
      %2212 = vmatpush1.bf16.msra.mxu0 0
      %2213 = vmatprep.subr.bf16.mxu0 0
      %2214 = vmatpush1.bf16.msra.mxu0 0
      %2215 = vmatprep.subr.bf16.mxu0 0
      %2216 = vmatpush1.bf16.msra.mxu0 0
      %2217 = vmatprep.subr.bf16.mxu0 0
      %2218 = vmatpush1.bf16.msra.mxu0 0
      %2219 = vmatprep.subr.bf16.mxu0 0
      %2220 = vmatpush1.bf16.msra.mxu0 0
      %2221 = vmatprep.subr.bf16.mxu0 0
      %2222 = vmatpush1.bf16.msra.mxu0 0
      %2223 = vmatprep.subr.bf16.mxu0 0
      %2224 = vmatpush1.bf16.msra.mxu0 0
      %2225 = vmatprep.subr.bf16.mxu0 0
      %2226 = vmatpush1.bf16.msra.mxu0 0
      %2227 = vmatprep.subr.bf16.mxu0 0
      %2228 = vmatpush1.bf16.msra.mxu0 0
      %2229 = vmatprep.subr.bf16.mxu0 0
      %2230 = vmatpush1.bf16.msra.mxu0 0
      %2231 = vmatprep.subr.bf16.mxu0 0
      %2232 = vmatpush1.bf16.msra.mxu0 0
      %2233 = vmatprep.subr.bf16.mxu0 0
      %2234 = vmatpush1.bf16.msra.mxu0 0
      %2235 = vmatprep.mubr.bf16.mxu0 0
      %2236 = vmatmul.mubr.bf16.gmra.mrb[0].mxu0 %v2198
      %v2237 = vpop.f32.mrb[0].mxu0
      %v2238 = vadd.f32 0.0, %v2237
      %v2239 = vpop.f32.mrb[0].mxu0
      %v2240 = vpop.f32.mrb[0].mxu0
      %v2241 = vpop.f32.mrb[0].mxu0
      %2242 = vdwg.mxu0
      %2244 = vrot.lane.b32.xlu0 %v740, 120
      %v2245 = vpop.permute.xlu0 %2244
      %v2247 = vsel %vm745, %v2091, 0
      %v2250 = vsel %vm1213, %v2245, 0
      %2252 = vmatprep.subr.bf16.mxu0 0
      %2253 = vmatpush1.bf16.msra.mxu0 %v2250
      %2254 = vmatprep.subr.bf16.mxu0 0
      %2255 = vmatpush1.bf16.msra.mxu0 0
      %2256 = vmatprep.subr.bf16.mxu0 0
      %2257 = vmatpush1.bf16.msra.mxu0 0
      %2258 = vmatprep.subr.bf16.mxu0 0
      %2259 = vmatpush1.bf16.msra.mxu0 0
      %2260 = vmatprep.subr.bf16.mxu0 0
      %2261 = vmatpush1.bf16.msra.mxu0 0
      %2262 = vmatprep.subr.bf16.mxu0 0
      %2263 = vmatpush1.bf16.msra.mxu0 0
      %2264 = vmatprep.subr.bf16.mxu0 0
      %2265 = vmatpush1.bf16.msra.mxu0 0
      %2266 = vmatprep.subr.bf16.mxu0 0
      %2267 = vmatpush1.bf16.msra.mxu0 0
      %2268 = vmatprep.subr.bf16.mxu0 0
      %2269 = vmatpush1.bf16.msra.mxu0 0
      %2270 = vmatprep.subr.bf16.mxu0 0
      %2271 = vmatpush1.bf16.msra.mxu0 0
      %2272 = vmatprep.subr.bf16.mxu0 0
      %2273 = vmatpush1.bf16.msra.mxu0 0
      %2274 = vmatprep.subr.bf16.mxu0 0
      %2275 = vmatpush1.bf16.msra.mxu0 0
      %2276 = vmatprep.subr.bf16.mxu0 0
      %2277 = vmatpush1.bf16.msra.mxu0 0
      %2278 = vmatprep.subr.bf16.mxu0 0
      %2279 = vmatpush1.bf16.msra.mxu0 0
      %2280 = vmatprep.subr.bf16.mxu0 0
      %2281 = vmatpush1.bf16.msra.mxu0 0
      %2282 = vmatprep.subr.bf16.mxu0 0
      %2283 = vmatpush1.bf16.msra.mxu0 0
      %2284 = vmatprep.mubr.bf16.mxu0 0
      %2285 = vmatmul.mubr.bf16.gmra.mrb[0].mxu0 %v2247
      %v2286 = vpop.f32.mrb[0].mxu0
      %v2287 = vadd.f32 0.0, %v2286
      %v2288 = vpop.f32.mrb[0].mxu0
      %v2289 = vpop.f32.mrb[0].mxu0
      %v2290 = vpop.f32.mrb[0].mxu0
      %2291 = vdwg.mxu0
      %2293 = vrot.lane.b32.xlu0 %v741, 120
      %v2294 = vpop.permute.xlu0 %2293
      %v2296 = vsel %vm745, %v2092, 0
      %v2299 = vsel %vm1213, %v2294, 0
      %2301 = vmatprep.subr.bf16.mxu0 0
      %2302 = vmatpush1.bf16.msra.mxu0 %v2299
      %2303 = vmatprep.subr.bf16.mxu0 0
      %2304 = vmatpush1.bf16.msra.mxu0 0
      %2305 = vmatprep.subr.bf16.mxu0 0
      %2306 = vmatpush1.bf16.msra.mxu0 0
      %2307 = vmatprep.subr.bf16.mxu0 0
      %2308 = vmatpush1.bf16.msra.mxu0 0
      %2309 = vmatprep.subr.bf16.mxu0 0
      %2310 = vmatpush1.bf16.msra.mxu0 0
      %2311 = vmatprep.subr.bf16.mxu0 0
      %2312 = vmatpush1.bf16.msra.mxu0 0
      %2313 = vmatprep.subr.bf16.mxu0 0
      %2314 = vmatpush1.bf16.msra.mxu0 0
      %2315 = vmatprep.subr.bf16.mxu0 0
      %2316 = vmatpush1.bf16.msra.mxu0 0
      %2317 = vmatprep.subr.bf16.mxu0 0
      %2318 = vmatpush1.bf16.msra.mxu0 0
      %2319 = vmatprep.subr.bf16.mxu0 0
      %2320 = vmatpush1.bf16.msra.mxu0 0
      %2321 = vmatprep.subr.bf16.mxu0 0
      %2322 = vmatpush1.bf16.msra.mxu0 0
      %2323 = vmatprep.subr.bf16.mxu0 0
      %2324 = vmatpush1.bf16.msra.mxu0 0
      %2325 = vmatprep.subr.bf16.mxu0 0
      %2326 = vmatpush1.bf16.msra.mxu0 0
      %2327 = vmatprep.subr.bf16.mxu0 0
      %2328 = vmatpush1.bf16.msra.mxu0 0
      %2329 = vmatprep.subr.bf16.mxu0 0
      %2330 = vmatpush1.bf16.msra.mxu0 0
      %2331 = vmatprep.subr.bf16.mxu0 0
      %2332 = vmatpush1.bf16.msra.mxu0 0
      %2333 = vmatprep.mubr.bf16.mxu0 0
      %2334 = vmatmul.mubr.bf16.gmra.mrb[0].mxu0 %v2296
      %v2335 = vpop.f32.mrb[0].mxu0
      %v2336 = vadd.f32 0.0, %v2335
      %v2337 = vpop.f32.mrb[0].mxu0
      %v2338 = vpop.f32.mrb[0].mxu0
      %v2339 = vpop.f32.mrb[0].mxu0
      %2340 = vdwg.mxu0
      %2342 = vrot.lane.b32.xlu0 %v742, 120
      %v2343 = vpop.permute.xlu0 %2342
      %v2345 = vsel %vm745, %v2093, 0
      %v2348 = vsel %vm1213, %v2343, 0
      %2350 = vmatprep.subr.bf16.mxu0 0
      %2351 = vmatpush1.bf16.msra.mxu0 %v2348
      %2352 = vmatprep.subr.bf16.mxu0 0
      %2353 = vmatpush1.bf16.msra.mxu0 0
      %2354 = vmatprep.subr.bf16.mxu0 0
      %2355 = vmatpush1.bf16.msra.mxu0 0
      %2356 = vmatprep.subr.bf16.mxu0 0
      %2357 = vmatpush1.bf16.msra.mxu0 0
      %2358 = vmatprep.subr.bf16.mxu0 0
      %2359 = vmatpush1.bf16.msra.mxu0 0
      %2360 = vmatprep.subr.bf16.mxu0 0
      %2361 = vmatpush1.bf16.msra.mxu0 0
      %2362 = vmatprep.subr.bf16.mxu0 0
      %2363 = vmatpush1.bf16.msra.mxu0 0
      %2364 = vmatprep.subr.bf16.mxu0 0
      %2365 = vmatpush1.bf16.msra.mxu0 0
      %2366 = vmatprep.subr.bf16.mxu0 0
      %2367 = vmatpush1.bf16.msra.mxu0 0
      %2368 = vmatprep.subr.bf16.mxu0 0
      %2369 = vmatpush1.bf16.msra.mxu0 0
      %2370 = vmatprep.subr.bf16.mxu0 0
      %2371 = vmatpush1.bf16.msra.mxu0 0
      %2372 = vmatprep.subr.bf16.mxu0 0
      %2373 = vmatpush1.bf16.msra.mxu0 0
      %2374 = vmatprep.subr.bf16.mxu0 0
      %2375 = vmatpush1.bf16.msra.mxu0 0
      %2376 = vmatprep.subr.bf16.mxu0 0
      %2377 = vmatpush1.bf16.msra.mxu0 0
      %2378 = vmatprep.subr.bf16.mxu0 0
      %2379 = vmatpush1.bf16.msra.mxu0 0
      %2380 = vmatprep.subr.bf16.mxu0 0
      %2381 = vmatpush1.bf16.msra.mxu0 0
      %2382 = vmatprep.mubr.bf16.mxu0 0
      %2383 = vmatmul.mubr.bf16.gmra.mrb[0].mxu0 %v2345
      %v2384 = vpop.f32.mrb[0].mxu0
      %v2385 = vadd.f32 0.0, %v2384
      %v2386 = vpop.f32.mrb[0].mxu0
      %v2387 = vpop.f32.mrb[0].mxu0
      %v2388 = vpop.f32.mrb[0].mxu0
      %2389 = vdwg.mxu0
      %2391 = vrot.lane.b32.xlu0 %v743, 120
      %v2392 = vpop.permute.xlu0 %2391
      %v2394 = vsel %vm745, %v2094, 0
      %v2397 = vsel %vm1213, %v2392, 0
      %2399 = vmatprep.subr.bf16.mxu0 0
      %2400 = vmatpush1.bf16.msra.mxu0 %v2397
      %2401 = vmatprep.subr.bf16.mxu0 0
      %2402 = vmatpush1.bf16.msra.mxu0 0
      %2403 = vmatprep.subr.bf16.mxu0 0
      %2404 = vmatpush1.bf16.msra.mxu0 0
      %2405 = vmatprep.subr.bf16.mxu0 0
      %2406 = vmatpush1.bf16.msra.mxu0 0
      %2407 = vmatprep.subr.bf16.mxu0 0
      %2408 = vmatpush1.bf16.msra.mxu0 0
      %2409 = vmatprep.subr.bf16.mxu0 0
      %2410 = vmatpush1.bf16.msra.mxu0 0
      %2411 = vmatprep.subr.bf16.mxu0 0
      %2412 = vmatpush1.bf16.msra.mxu0 0
      %2413 = vmatprep.subr.bf16.mxu0 0
      %2414 = vmatpush1.bf16.msra.mxu0 0
      %2415 = vmatprep.subr.bf16.mxu0 0
      %2416 = vmatpush1.bf16.msra.mxu0 0
      %2417 = vmatprep.subr.bf16.mxu0 0
      %2418 = vmatpush1.bf16.msra.mxu0 0
      %2419 = vmatprep.subr.bf16.mxu0 0
      %2420 = vmatpush1.bf16.msra.mxu0 0
      %2421 = vmatprep.subr.bf16.mxu0 0
      %2422 = vmatpush1.bf16.msra.mxu0 0
      %2423 = vmatprep.subr.bf16.mxu0 0
      %2424 = vmatpush1.bf16.msra.mxu0 0
      %2425 = vmatprep.subr.bf16.mxu0 0
      %2426 = vmatpush1.bf16.msra.mxu0 0
      %2427 = vmatprep.subr.bf16.mxu0 0
      %2428 = vmatpush1.bf16.msra.mxu0 0
      %2429 = vmatprep.subr.bf16.mxu0 0
      %2430 = vmatpush1.bf16.msra.mxu0 0
      %2431 = vmatprep.mubr.bf16.mxu0 0
      %2432 = vmatmul.mubr.bf16.gmra.mrb[0].mxu0 %v2394
      %v2433 = vpop.f32.mrb[0].mxu0
      %v2434 = vadd.f32 0.0, %v2433
      %v2435 = vpop.f32.mrb[0].mxu0
      %v2436 = vpop.f32.mrb[0].mxu0
      %v2437 = vpop.f32.mrb[0].mxu0
      %2438 = vdwg.mxu0
      %2440 = vrot.lane.b32.xlu0 %v744, 120
      %v2441 = vpop.permute.xlu0 %2440
      %v2443 = vsel %vm745, %v2095, 0
      %v2446 = vsel %vm1213, %v2441, 0
      %2448 = vmatprep.subr.bf16.mxu0 0
      %2449 = vmatpush1.bf16.msra.mxu0 %v2446
      %2450 = vmatprep.subr.bf16.mxu0 0
      %2451 = vmatpush1.bf16.msra.mxu0 0
      %2452 = vmatprep.subr.bf16.mxu0 0
      %2453 = vmatpush1.bf16.msra.mxu0 0
      %2454 = vmatprep.subr.bf16.mxu0 0
      %2455 = vmatpush1.bf16.msra.mxu0 0
      %2456 = vmatprep.subr.bf16.mxu0 0
      %2457 = vmatpush1.bf16.msra.mxu0 0
      %2458 = vmatprep.subr.bf16.mxu0 0
      %2459 = vmatpush1.bf16.msra.mxu0 0
      %2460 = vmatprep.subr.bf16.mxu0 0
      %2461 = vmatpush1.bf16.msra.mxu0 0
      %2462 = vmatprep.subr.bf16.mxu0 0
      %2463 = vmatpush1.bf16.msra.mxu0 0
      %2464 = vmatprep.subr.bf16.mxu0 0
      %2465 = vmatpush1.bf16.msra.mxu0 0
      %2466 = vmatprep.subr.bf16.mxu0 0
      %2467 = vmatpush1.bf16.msra.mxu0 0
      %2468 = vmatprep.subr.bf16.mxu0 0
      %2469 = vmatpush1.bf16.msra.mxu0 0
      %2470 = vmatprep.subr.bf16.mxu0 0
      %2471 = vmatpush1.bf16.msra.mxu0 0
      %2472 = vmatprep.subr.bf16.mxu0 0
      %2473 = vmatpush1.bf16.msra.mxu0 0
      %2474 = vmatprep.subr.bf16.mxu0 0
      %2475 = vmatpush1.bf16.msra.mxu0 0
      %2476 = vmatprep.subr.bf16.mxu0 0
      %2477 = vmatpush1.bf16.msra.mxu0 0
      %2478 = vmatprep.subr.bf16.mxu0 0
      %2479 = vmatpush1.bf16.msra.mxu0 0
      %2480 = vmatprep.mubr.bf16.mxu0 0
      %2481 = vmatmul.mubr.bf16.gmra.mrb[0].mxu0 %v2443
      %v2482 = vpop.f32.mrb[0].mxu0
      %v2483 = vadd.f32 0.0, %v2482
      %v2484 = vpop.f32.mrb[0].mxu0
      %v2485 = vpop.f32.mrb[0].mxu0
      %v2486 = vpop.f32.mrb[0].mxu0
      %2487 = vdwg.mxu0
      %v2488 = vpack.c.bf16 %v2189, %v2140
      %v2489 = vpack.c.bf16 %v2287, %v2238
      %v2490 = vpack.c.bf16 %v2385, %v2336
      %v2491 = vpack.c.bf16 %v2483, %v2434
      %v2492 = vld [vmem:[%s5 + $0x4] sm:$0xf]
      %v2494 = vsel %vm745, %v2488, 0
      %v2497 = vsel %vm745, %v2489, 0
      %v2500 = vsel %vm745, %v2490, 0
      %v2503 = vsel %vm745, %v2491, 0
      %v2506 = vsel %vm1213, %v2492, 0
      %2508 = vmatprep.subr.bf16.mxu0 0
      %2509 = vmatpush1.bf16.msra.mxu0 %v2506
      %2510 = vmatprep.subr.bf16.mxu0 0
      %2511 = vmatpush1.bf16.msra.mxu0 0
      %2512 = vmatprep.subr.bf16.mxu0 0
      %2513 = vmatpush1.bf16.msra.mxu0 0
      %2514 = vmatprep.subr.bf16.mxu0 0
      %2515 = vmatpush1.bf16.msra.mxu0 0
      %2516 = vmatprep.subr.bf16.mxu0 0
      %2517 = vmatpush1.bf16.msra.mxu0 0
      %2518 = vmatprep.subr.bf16.mxu0 0
      %2519 = vmatpush1.bf16.msra.mxu0 0
      %2520 = vmatprep.subr.bf16.mxu0 0
      %2521 = vmatpush1.bf16.msra.mxu0 0
      %2522 = vmatprep.subr.bf16.mxu0 0
      %2523 = vmatpush1.bf16.msra.mxu0 0
      %2524 = vmatprep.subr.bf16.mxu0 0
      %2525 = vmatpush1.bf16.msra.mxu0 0
      %2526 = vmatprep.subr.bf16.mxu0 0
      %2527 = vmatpush1.bf16.msra.mxu0 0
      %2528 = vmatprep.subr.bf16.mxu0 0
      %2529 = vmatpush1.bf16.msra.mxu0 0
      %2530 = vmatprep.subr.bf16.mxu0 0
      %2531 = vmatpush1.bf16.msra.mxu0 0
      %2532 = vmatprep.subr.bf16.mxu0 0
      %2533 = vmatpush1.bf16.msra.mxu0 0
      %2534 = vmatprep.subr.bf16.mxu0 0
      %2535 = vmatpush1.bf16.msra.mxu0 0
      %2536 = vmatprep.subr.bf16.mxu0 0
      %2537 = vmatpush1.bf16.msra.mxu0 0
      %2538 = vmatprep.subr.bf16.mxu0 0
      %2539 = vmatpush1.bf16.msra.mxu0 0
      %2540 = vmatprep.mubr.bf16.mxu0 0
      %2541 = vmatmul.mubr.bf16.gmra.mrb[0].mxu0 %v2494
      %v2542 = vpop.f32.mrb[0].mxu0
      %v2543 = vadd.f32 0.0, %v2542
      %v2544 = vpop.f32.mrb[0].mxu0
      %v2545 = vpop.f32.mrb[0].mxu0
      %v2546 = vadd.f32 0.0, %v2545
      %v2547 = vpop.f32.mrb[0].mxu0
      %2548 = vmatprep.mubr.bf16.mxu0 0
      %2549 = vmatmul.mubr.bf16.gmra.mrb[0].mxu0 %v2497
      %v2550 = vpop.f32.mrb[0].mxu0
      %v2551 = vadd.f32 0.0, %v2550
      %v2552 = vpop.f32.mrb[0].mxu0
      %v2553 = vpop.f32.mrb[0].mxu0
      %v2554 = vadd.f32 0.0, %v2553
      %v2555 = vpop.f32.mrb[0].mxu0
      %2556 = vmatprep.mubr.bf16.mxu0 0
      %2557 = vmatmul.mubr.bf16.gmra.mrb[0].mxu0 %v2500
      %v2558 = vpop.f32.mrb[0].mxu0
      %v2559 = vadd.f32 0.0, %v2558
      %v2560 = vpop.f32.mrb[0].mxu0
      %v2561 = vpop.f32.mrb[0].mxu0
      %v2562 = vadd.f32 0.0, %v2561
      %v2563 = vpop.f32.mrb[0].mxu0
      %2564 = vmatprep.mubr.bf16.mxu0 0
      %2565 = vmatmul.mubr.bf16.gmra.mrb[0].mxu0 %v2503
      %v2566 = vpop.f32.mrb[0].mxu0
      %v2567 = vadd.f32 0.0, %v2566
      %v2568 = vpop.f32.mrb[0].mxu0
      %v2569 = vpop.f32.mrb[0].mxu0
      %v2570 = vadd.f32 0.0, %v2569
      %v2571 = vpop.f32.mrb[0].mxu0
      %2572 = vdwg.mxu0
      %v2574 = vsel %vm745, %v1579, 0
      %v2577 = vsel %vm745, %v1580, 0
      %v2580 = vsel %vm745, %v1581, 0
      %v2583 = vsel %vm745, %v1582, 0
      %v2586 = vsel %vm1213, %v1583, 0
      %2588 = vmatprep.subr.bf16.mxu0 0
      %2589 = vmatpush1.bf16.msra.mxu0 %v2586
      %2590 = vmatprep.subr.bf16.mxu0 0
      %2591 = vmatpush1.bf16.msra.mxu0 0
      %2592 = vmatprep.subr.bf16.mxu0 0
      %2593 = vmatpush1.bf16.msra.mxu0 0
      %2594 = vmatprep.subr.bf16.mxu0 0
      %2595 = vmatpush1.bf16.msra.mxu0 0
      %2596 = vmatprep.subr.bf16.mxu0 0
      %2597 = vmatpush1.bf16.msra.mxu0 0
      %2598 = vmatprep.subr.bf16.mxu0 0
      %2599 = vmatpush1.bf16.msra.mxu0 0
      %2600 = vmatprep.subr.bf16.mxu0 0
      %2601 = vmatpush1.bf16.msra.mxu0 0
      %2602 = vmatprep.subr.bf16.mxu0 0
      %2603 = vmatpush1.bf16.msra.mxu0 0
      %2604 = vmatprep.subr.bf16.mxu0 0
      %2605 = vmatpush1.bf16.msra.mxu0 0
      %2606 = vmatprep.subr.bf16.mxu0 0
      %2607 = vmatpush1.bf16.msra.mxu0 0
      %2608 = vmatprep.subr.bf16.mxu0 0
      %2609 = vmatpush1.bf16.msra.mxu0 0
      %2610 = vmatprep.subr.bf16.mxu0 0
      %2611 = vmatpush1.bf16.msra.mxu0 0
      %2612 = vmatprep.subr.bf16.mxu0 0
      %2613 = vmatpush1.bf16.msra.mxu0 0
      %2614 = vmatprep.subr.bf16.mxu0 0
      %2615 = vmatpush1.bf16.msra.mxu0 0
      %2616 = vmatprep.subr.bf16.mxu0 0
      %2617 = vmatpush1.bf16.msra.mxu0 0
      %2618 = vmatprep.subr.bf16.mxu0 0
      %2619 = vmatpush1.bf16.msra.mxu0 0
      %2620 = vmatprep.mubr.bf16.mxu0 0
      %2621 = vmatmul.mubr.bf16.gmra.mrb[0].mxu0 %v2574
      %v2622 = vpop.f32.mrb[0].mxu0
      %v2623 = vadd.f32 %v2543, %v2622
      %v2624 = vpop.f32.mrb[0].mxu0
      %v2625 = vpop.f32.mrb[0].mxu0
      %v2626 = vadd.f32 %v2546, %v2625
      %v2627 = vpop.f32.mrb[0].mxu0
      %2628 = vmatprep.mubr.bf16.mxu0 0
      %2629 = vmatmul.mubr.bf16.gmra.mrb[0].mxu0 %v2577
      %v2630 = vpop.f32.mrb[0].mxu0
      %v2631 = vadd.f32 %v2551, %v2630
      %v2632 = vpop.f32.mrb[0].mxu0
      %v2633 = vpop.f32.mrb[0].mxu0
      %v2634 = vadd.f32 %v2554, %v2633
      %v2635 = vpop.f32.mrb[0].mxu0
      %2636 = vmatprep.mubr.bf16.mxu0 0
      %2637 = vmatmul.mubr.bf16.gmra.mrb[0].mxu0 %v2580
      %v2638 = vpop.f32.mrb[0].mxu0
      %v2639 = vadd.f32 %v2559, %v2638
      %v2640 = vpop.f32.mrb[0].mxu0
      %v2641 = vpop.f32.mrb[0].mxu0
      %v2642 = vadd.f32 %v2562, %v2641
      %v2643 = vpop.f32.mrb[0].mxu0
      %2644 = vmatprep.mubr.bf16.mxu0 0
      %2645 = vmatmul.mubr.bf16.gmra.mrb[0].mxu0 %v2583
      %v2646 = vpop.f32.mrb[0].mxu0
      %v2647 = vadd.f32 %v2567, %v2646
      %v2648 = vpop.f32.mrb[0].mxu0
      %v2649 = vpop.f32.mrb[0].mxu0
      %v2650 = vadd.f32 %v2570, %v2649
      %v2651 = vpop.f32.mrb[0].mxu0
      %2652 = vdwg.mxu0
      %v2653 = vld [vmem:[%s6] sm:$0x1]
      %v2655 = vlaneseq
      %v2656 = vshrl.u32 %v2655, 7
      %v2657 = vsub.s32 0, %v2656
      %v2658 = vrot.slane %v2653, %v2657
      %v2660 = vadd.f32 %v2623, %v2658
      %v2661 = vadd.f32 %v2626, %v2658
      %v2662 = vadd.f32 %v2631, %v2658
      %v2663 = vadd.f32 %v2634, %v2658
      %v2664 = vadd.f32 %v2639, %v2658
      %v2665 = vadd.f32 %v2642, %v2658
      %v2666 = vadd.f32 %v2647, %v2658
      %v2667 = vadd.f32 %v2650, %v2658
      %v2668 = vadd.f32 %v378, %v2660
      %v2669 = vadd.f32 %v379, %v2661
      %v2670 = vadd.f32 %v380, %v2662
      %v2671 = vadd.f32 %v381, %v2663
      %v2672 = vadd.f32 %v382, %v2664
      %v2673 = vadd.f32 %v383, %v2665
      %v2674 = vadd.f32 %v384, %v2666
      %v2675 = vadd.f32 %v385, %v2667
      %2676 = vst.msk [vmem:[%s369] sm:$0xff] %vm388, %v2668
      %2677 = vst.msk [vmem:[%s369 + $0x8] sm:$0xff] %vm388, %v2669
      %2678 = vst.msk [vmem:[%s369 + $0x10] sm:$0xff] %vm388, %v2670
      %2679 = vst.msk [vmem:[%s369 + $0x18] sm:$0xff] %vm388, %v2671
      %2680 = vst.msk [vmem:[%s369 + $0x20] sm:$0xff] %vm388, %v2672
      %2681 = vst.msk [vmem:[%s369 + $0x28] sm:$0xff] %vm388, %v2673
      %2682 = vst.msk [vmem:[%s369 + $0x30] sm:$0xff] %vm388, %v2674
      %2683 = vst.msk [vmem:[%s369 + $0x38] sm:$0xff] %vm388, %v2675
      %v2684 = vld [vmem:[%s7] sm:$0x1]
      %v2685 = vld [vmem:[%s8] sm:$0x1]
      %v2686 = vsel %vm388, %v2668, 0.0
      %2687 = vadd.xlane.f32.xlu0 %v2686
      %v2688 = vpop.xlane.xlu0 %2687
      %v2689 = vsel %vm388, %v2669, 0.0
      %2690 = vadd.xlane.f32.xlu0 %v2689
      %v2691 = vpop.xlane.xlu0 %2690
      %v2692 = vsel %vm388, %v2670, 0.0
      %2693 = vadd.xlane.f32.xlu0 %v2692
      %v2694 = vpop.xlane.xlu0 %2693
      %v2695 = vsel %vm388, %v2671, 0.0
      %2696 = vadd.xlane.f32.xlu0 %v2695
      %v2697 = vpop.xlane.xlu0 %2696
      %v2698 = vsel %vm388, %v2672, 0.0
      %2699 = vadd.xlane.f32.xlu0 %v2698
      %v2700 = vpop.xlane.xlu0 %2699
      %v2701 = vsel %vm388, %v2673, 0.0
      %2702 = vadd.xlane.f32.xlu0 %v2701
      %v2703 = vpop.xlane.xlu0 %2702
      %v2704 = vsel %vm388, %v2674, 0.0
      %2705 = vadd.xlane.f32.xlu0 %v2704
      %v2706 = vpop.xlane.xlu0 %2705
      %v2707 = vsel %vm388, %v2675, 0.0
      %2708 = vadd.xlane.f32.xlu0 %v2707
      %v2709 = vpop.xlane.xlu0 %2708
      %v2710 = vmul.f32 %v2688, %v413
      %v2711 = vmul.f32 %v2691, %v413
      %v2712 = vmul.f32 %v2694, %v413
      %v2713 = vmul.f32 %v2697, %v413
      %v2714 = vmul.f32 %v2700, %v413
      %v2715 = vmul.f32 %v2703, %v413
      %v2716 = vmul.f32 %v2706, %v413
      %v2717 = vmul.f32 %v2709, %v413
      %v2718 = vsub.f32 %v2668, %v2710
      %v2719 = vsub.f32 %v2669, %v2711
      %v2720 = vsub.f32 %v2670, %v2712
      %v2721 = vsub.f32 %v2671, %v2713
      %v2722 = vsub.f32 %v2672, %v2714
      %v2723 = vsub.f32 %v2673, %v2715
      %v2724 = vsub.f32 %v2674, %v2716
      %v2725 = vsub.f32 %v2675, %v2717
      %v2726 = vmul.f32 %v2718, %v2718
      %v2727 = vmul.f32 %v2719, %v2719
      %v2728 = vmul.f32 %v2720, %v2720
      %v2729 = vmul.f32 %v2721, %v2721
      %v2730 = vmul.f32 %v2722, %v2722
      %v2731 = vmul.f32 %v2723, %v2723
      %v2732 = vmul.f32 %v2724, %v2724
      %v2733 = vmul.f32 %v2725, %v2725
      %v2734 = vsel %vm388, %v2726, 0.0
      %2735 = vadd.xlane.f32.xlu0 %v2734
      %v2736 = vpop.xlane.xlu0 %2735
      %v2737 = vsel %vm388, %v2727, 0.0
      %2738 = vadd.xlane.f32.xlu0 %v2737
      %v2739 = vpop.xlane.xlu0 %2738
      %v2740 = vsel %vm388, %v2728, 0.0
      %2741 = vadd.xlane.f32.xlu0 %v2740
      %v2742 = vpop.xlane.xlu0 %2741
      %v2743 = vsel %vm388, %v2729, 0.0
      %2744 = vadd.xlane.f32.xlu0 %v2743
      %v2745 = vpop.xlane.xlu0 %2744
      %v2746 = vsel %vm388, %v2730, 0.0
      %2747 = vadd.xlane.f32.xlu0 %v2746
      %v2748 = vpop.xlane.xlu0 %2747
      %v2749 = vsel %vm388, %v2731, 0.0
      %2750 = vadd.xlane.f32.xlu0 %v2749
      %v2751 = vpop.xlane.xlu0 %2750
      %v2752 = vsel %vm388, %v2732, 0.0
      %2753 = vadd.xlane.f32.xlu0 %v2752
      %v2754 = vpop.xlane.xlu0 %2753
      %v2755 = vsel %vm388, %v2733, 0.0
      %2756 = vadd.xlane.f32.xlu0 %v2755
      %v2757 = vpop.xlane.xlu0 %2756
      %v2758 = vmul.f32 %v2736, %v413
      %v2759 = vmul.f32 %v2739, %v413
      %v2760 = vmul.f32 %v2742, %v413
      %v2761 = vmul.f32 %v2745, %v413
      %v2762 = vmul.f32 %v2748, %v413
      %v2763 = vmul.f32 %v2751, %v413
      %v2764 = vmul.f32 %v2754, %v413
      %v2765 = vmul.f32 %v2757, %v413
      %v2766 = vadd.f32 %v2758, 1e-05
      %v2767 = vadd.f32 %v2759, 1e-05
      %v2768 = vadd.f32 %v2760, 1e-05
      %v2769 = vadd.f32 %v2761, 1e-05
      %v2770 = vadd.f32 %v2762, 1e-05
      %v2771 = vadd.f32 %v2763, 1e-05
      %v2772 = vadd.f32 %v2764, 1e-05
      %v2773 = vadd.f32 %v2765, 1e-05
      %v2774 = vrsqrt.pop %v2766
      %v2775 = vrsqrt.pop %v2767
      %v2776 = vrsqrt.pop %v2768
      %v2777 = vrsqrt.pop %v2769
      %v2778 = vrsqrt.pop %v2770
      %v2779 = vrsqrt.pop %v2771
      %v2780 = vrsqrt.pop %v2772
      %v2781 = vrsqrt.pop %v2773
      %v2782 = vmul.f32 %v2718, %v2774
      %v2783 = vmul.f32 %v2719, %v2775
      %v2784 = vmul.f32 %v2720, %v2776
      %v2785 = vmul.f32 %v2721, %v2777
      %v2786 = vmul.f32 %v2722, %v2778
      %v2787 = vmul.f32 %v2723, %v2779
      %v2788 = vmul.f32 %v2724, %v2780
      %v2789 = vmul.f32 %v2725, %v2781
      %v2791 = vlaneseq
      %v2792 = vshrl.u32 %v2791, 7
      %v2793 = vsub.s32 0, %v2792
      %v2794 = vrot.slane %v2684, %v2793
      %v2796 = vmul.f32 %v2782, %v2794
      %v2797 = vmul.f32 %v2783, %v2794
      %v2798 = vmul.f32 %v2784, %v2794
      %v2799 = vmul.f32 %v2785, %v2794
      %v2800 = vmul.f32 %v2786, %v2794
      %v2801 = vmul.f32 %v2787, %v2794
      %v2802 = vmul.f32 %v2788, %v2794
      %v2803 = vmul.f32 %v2789, %v2794
      %v2805 = vlaneseq
      %v2806 = vshrl.u32 %v2805, 7
      %v2807 = vsub.s32 0, %v2806
      %v2808 = vrot.slane %v2685, %v2807
      %v2810 = vadd.f32 %v2796, %v2808
      %v2811 = vadd.f32 %v2797, %v2808
      %v2812 = vadd.f32 %v2798, %v2808
      %v2813 = vadd.f32 %v2799, %v2808
      %v2814 = vadd.f32 %v2800, %v2808
      %v2815 = vadd.f32 %v2801, %v2808
      %v2816 = vadd.f32 %v2802, %v2808
      %v2817 = vadd.f32 %v2803, %v2808
      %v2818 = vpack.c.bf16 %v2810, %v2810
      %v2819 = vpack.c.bf16 %v2811, %v2811
      %v2820 = vpack.c.bf16 %v2812, %v2812
      %v2821 = vpack.c.bf16 %v2813, %v2813
      %v2822 = vpack.c.bf16 %v2814, %v2814
      %v2823 = vpack.c.bf16 %v2815, %v2815
      %v2824 = vpack.c.bf16 %v2816, %v2816
      %v2825 = vpack.c.bf16 %v2817, %v2817
      %vm2826 = vcmask 125952
      %2827 = vst.msk [vmem:[%s375] sm:$0xf] %vm2826, %v2818
      %2828 = vst.msk [vmem:[%s375 + $0x4] sm:$0xf] %vm2826, %v2819
      %2829 = vst.msk [vmem:[%s375 + $0x8] sm:$0xf] %vm2826, %v2820
      %2830 = vst.msk [vmem:[%s375 + $0xc] sm:$0xf] %vm2826, %v2821
      %2831 = vst.msk [vmem:[%s375 + $0x10] sm:$0xf] %vm2826, %v2822
      %2832 = vst.msk [vmem:[%s375 + $0x14] sm:$0xf] %vm2826, %v2823
      %2833 = vst.msk [vmem:[%s375 + $0x18] sm:$0xf] %vm2826, %v2824
      %2834 = vst.msk [vmem:[%s375 + $0x1c] sm:$0xf] %vm2826, %v2825
      %s2835 = smul.u32 8, %s22
      %p2836 = scmp.lt.s32.totalorder %s2835, 15
      %s2837 = scalar_select %p2836, %s2835, 15
      %s2838 = smul.addr %s2837, 8
      %s2839 = scalar_lea.vmem %s9, %s2838
      %s2840 = smul.u32 8, %s22
      %p2841 = scmp.lt.s32.totalorder %s2840, 15
      %s2842 = scalar_select %p2841, %s2840, 15
      %s2843 = smul.addr %s2842, 4
      %s2844 = scalar_lea.vmem %s10, %s2843
      // Predicated region
      $region57: #{parallel_block_cat_forward.6} parent=55 // pred_check
        %p2845 = pneg %p234
      $region58: #{parallel_block_cat_forward.6} parent=55 // pred_check_branch
        %2847 = sbr.rel (%p2845) target = $region60
      $region59: #{parallel_block_cat_forward.6} parent=55 // pred_region
        %s2848 = smul.u32 8, %s22
      $region60: #{parallel_block_cat_forward.6} parent=55 // pred_fallthru
        _
      // Predicated region
      $region61: #{parallel_block_cat_forward.6} parent=55 // pred_check
        %p2849 = pneg %p260
      $region62: #{parallel_block_cat_forward.6} parent=55 // pred_check_branch
        %2851 = sbr.rel (%p2849) target = $region64
      $region63: #{parallel_block_cat_forward.6} parent=55 // pred_region
        %s2852 = smul.u32 8, %s22
      $region64: #{parallel_block_cat_forward.6} parent=55 // pred_fallthru
        _
    $region56: #{parallel_block_cat_forward.6} parent=5 // pred_fallthru
      _
    %p2853 = scmp.le.s32.totalorder 2, %s17
    // Predicated region
    $region65: #{parallel_block_cat_forward.6} parent=5 // pred_check
      %p2854 = pneg %p2853
    $region66: #{parallel_block_cat_forward.6} parent=5 // pred_check_branch
      %2856 = sbr.rel (%p2854) target = $region68
    $region67: #{parallel_block_cat_forward.6} parent=5 // pred_region
      %s2857 = ssub.s32 %s17, 2
      // Predicated region
      $region69: #{parallel_block_cat_forward.6} parent=67 // pred_check
        %p2858 = pneg %p240
      $region70: #{parallel_block_cat_forward.6} parent=67 // pred_check_branch
        %2860 = sbr.rel (%p2858) target = $region72
      $region71: #{parallel_block_cat_forward.6} parent=67 // pred_region
        %s2861 = smul.u32 8, %s23
        %p2862 = scmp.lt.s32.totalorder %s2861, 15
        %s2863 = scalar_select %p2862, %s2861, 15
        %s2864 = smul.addr %s2863, 8
        %s2865 = scalar_lea.vmem %s9, %s2864
      $region72: #{parallel_block_cat_forward.6} parent=67 // pred_fallthru
        _
      // Predicated region
      $region73: #{parallel_block_cat_forward.6} parent=67 // pred_check
        %p2866 = pneg %p266
      $region74: #{parallel_block_cat_forward.6} parent=67 // pred_check_branch
        %2868 = sbr.rel (%p2866) target = $region76
      $region75: #{parallel_block_cat_forward.6} parent=67 // pred_region
        %s2869 = smul.u32 8, %s23
        %p2870 = scmp.lt.s32.totalorder %s2869, 15
        %s2871 = scalar_select %p2870, %s2869, 15
        %s2872 = smul.addr %s2871, 4
        %s2873 = scalar_lea.vmem %s10, %s2872
      $region76: #{parallel_block_cat_forward.6} parent=67 // pred_fallthru
        _
    $region68: #{parallel_block_cat_forward.6} parent=5 // pred_fallthru
      _
  $region6: #{parallel_block_cat_forward.6} parent=0 // loop_footer
    %s21 = sadd.s32 1, %s17
  $region7: #{parallel_block_cat_forward.6} parent=0 // loop_footer_branch
    %16 = sbr.rel target = $region3
  $region8: #{parallel_block_cat_forward.6} parent=0 // loop_exit
    _

// kernel: parallel_block_cat_forward.10
$region0: #{parallel_block_cat_forward.10}
  #allocation0 [shape = 'u32[]', space=smem, size = 0x4, offset = 0x4, fixed_abs, tag = 'smem constant byte address 0x4 - core index']
  #allocation1 [shape = 'u32[144,128]{1,0:T(1,128)}', space=vmem, size = 0x12000, scoped, tag = 'internal scratch']
  %s0 = inlined_call_operand.vmem [shape: bf16[4,4,32], index: 0, kind: input, shape index: {}]
  %s1 = inlined_call_operand.vmem [shape: bf16[4,4,64], index: 1, kind: input, shape index: {}]
  %s2 = inlined_call_operand.vmem [shape: bf16[4,4,16], index: 2, kind: input, shape index: {}]
  %s3 = inlined_call_operand.vmem [shape: f32[4,4,32], index: 3, kind: input, shape index: {}]
  %s4 = inlined_call_operand.vmem [shape: bf16[32,64], index: 4, kind: input, shape index: {}]
  %s5 = inlined_call_operand.vmem [shape: bf16[64,64], index: 5, kind: input, shape index: {}]
  %s6 = inlined_call_operand.vmem [shape: bf16[16,64], index: 6, kind: input, shape index: {}]
  %s7 = inlined_call_operand.vmem [shape: f32[1,64], index: 7, kind: input, shape index: {}]
  %s8 = inlined_call_operand.vmem [shape: bf16[64,32], index: 8, kind: input, shape index: {}]
  %s9 = inlined_call_operand.vmem [shape: f32[1,32], index: 9, kind: input, shape index: {}]
  %s10 = inlined_call_operand.vmem [shape: f32[4,4,32], index: 10, kind: output, shape index: {}]
  %s11 = sld [smem:[#allocation0]]
  $region73: #{parallel_block_cat_forward.10} parent=0
    _
  %s13 = ssub.s32 1, %s11
  %s14 = scalar_select 0, %s13, %s11
  loop: start=0, step=1, limit=4
  $region2: #{parallel_block_cat_forward.10} parent=0 // loop_pre_header
    _
  $region3: #{parallel_block_cat_forward.10} parent=0 // loop_header
    %s16 = sphi 0, %s20
    %p17 = scmp.ge.s32.totalorder %s16, 4
    %s26 = sphi 0, %s28
    %s29 = sphi 0, %s26
    %s30 = sphi 0, %s29
    %s46 = sphi 0, %s30
    %s52 = sphi 0, %s54
    %s55 = sphi 0, %s52
    %s56 = sphi 0, %s55
    %s72 = sphi 0, %s56
    %s78 = sphi 0, %s80
    %s81 = sphi 0, %s78
    %s82 = sphi 0, %s81
    %s98 = sphi 0, %s82
    %s104 = sphi 0, %s106
    %s107 = sphi 0, %s104
    %s108 = sphi 0, %s107
    %s124 = sphi 0, %s108
    %s128 = sphi 0, %s128
    %s130 = sphi 0, %s128
    %s131 = sphi 0, %s130
    %s145 = sphi 0, %s131
    %s149 = sphi 0, %s149
    %s151 = sphi 0, %s149
    %s152 = sphi 0, %s151
    %s166 = sphi 0, %s152
    %s170 = sphi 0, %s170
    %s172 = sphi 0, %s170
    %s173 = sphi 0, %s172
    %s187 = sphi 0, %s173
    %s191 = sphi 0, %s191
    %s193 = sphi 0, %s191
    %s194 = sphi 0, %s193
    %s208 = sphi 0, %s194
    %s212 = sphi 0, %s212
    %s214 = sphi 0, %s212
    %s215 = sphi 0, %s214
    %s229 = sphi 0, %s215
    %s233 = sphi 0, %s233
    %s235 = sphi 0, %s233
    %s236 = sphi 0, %s235
    %s250 = sphi 0, %s236
    %s256 = sphi 0, %s258
    %s259 = sphi 0, %s256
    %s260 = sphi 0, %s259
    %s276 = sphi 0, %s260
  $region4: #{parallel_block_cat_forward.10} parent=0 // loop_header_branch
    %19 = sbr.rel (%p17) target = $region8
  $region5: #{parallel_block_cat_forward.10} parent=0 // loop_body
    %s21 = ssub.s32 %s16, 1
    %s22 = ssub.s32 %s16, 2
    %s23 = sadd.s32 %s16, 1
    %s24 = ssub.s32 %s16, %s23
    %p25 = scmp.eq.s32.totalorder %s24, 0
    %s27 = sadd.s32 %s26, 1
    %s28 = scalar_select %p25, %s26, %s27
    %p31 = pneg %p25
    %p32 = scmp.eq.s32.totalorder %s16, 1
    %p33 = por %p31, %p32
    %p34 = scmp.ne.s32.totalorder %s26, %s29
    %p35 = scmp.eq.s32.totalorder %s16, 0
    %p36 = por %p34, %p35
    %p37 = scmp.ne.s32.totalorder %s26, %s29
    %p38 = scmp.eq.s32.totalorder %s21, 1
    %p39 = por %p37, %p38
    %p40 = scmp.ne.s32.totalorder %s29, %s30
    %p41 = scmp.eq.s32.totalorder %s21, 0
    %p42 = por %p40, %p41
    %p43 = scmp.ne.s32.totalorder %s29, %s30
    %p44 = scmp.eq.s32.totalorder %s22, 1
    %p45 = por %p43, %p44
    %p47 = scmp.ne.s32.totalorder %s30, %s46
    %p48 = scmp.eq.s32.totalorder %s22, 0
    %p49 = por %p47, %p48
    %s50 = ssub.s32 %s16, %s23
    %p51 = scmp.eq.s32.totalorder %s50, 0
    %s53 = sadd.s32 %s52, 1
    %s54 = scalar_select %p51, %s52, %s53
    %p57 = pneg %p51
    %p58 = scmp.eq.s32.totalorder %s16, 1
    %p59 = por %p57, %p58
    %p60 = scmp.ne.s32.totalorder %s52, %s55
    %p61 = scmp.eq.s32.totalorder %s16, 0
    %p62 = por %p60, %p61
    %p63 = scmp.ne.s32.totalorder %s52, %s55
    %p64 = scmp.eq.s32.totalorder %s21, 1
    %p65 = por %p63, %p64
    %p66 = scmp.ne.s32.totalorder %s55, %s56
    %p67 = scmp.eq.s32.totalorder %s21, 0
    %p68 = por %p66, %p67
    %p69 = scmp.ne.s32.totalorder %s55, %s56
    %p70 = scmp.eq.s32.totalorder %s22, 1
    %p71 = por %p69, %p70
    %p73 = scmp.ne.s32.totalorder %s56, %s72
    %p74 = scmp.eq.s32.totalorder %s22, 0
    %p75 = por %p73, %p74
    %s76 = ssub.s32 %s16, %s23
    %p77 = scmp.eq.s32.totalorder %s76, 0
    %s79 = sadd.s32 %s78, 1
    %s80 = scalar_select %p77, %s78, %s79
    %p83 = pneg %p77
    %p84 = scmp.eq.s32.totalorder %s16, 1
    %p85 = por %p83, %p84
    %p86 = scmp.ne.s32.totalorder %s78, %s81
    %p87 = scmp.eq.s32.totalorder %s16, 0
    %p88 = por %p86, %p87
    %p89 = scmp.ne.s32.totalorder %s78, %s81
    %p90 = scmp.eq.s32.totalorder %s21, 1
    %p91 = por %p89, %p90
    %p92 = scmp.ne.s32.totalorder %s81, %s82
    %p93 = scmp.eq.s32.totalorder %s21, 0
    %p94 = por %p92, %p93
    %p95 = scmp.ne.s32.totalorder %s81, %s82
    %p96 = scmp.eq.s32.totalorder %s22, 1
    %p97 = por %p95, %p96
    %p99 = scmp.ne.s32.totalorder %s82, %s98
    %p100 = scmp.eq.s32.totalorder %s22, 0
    %p101 = por %p99, %p100
    %s102 = ssub.s32 %s16, %s23
    %p103 = scmp.eq.s32.totalorder %s102, 0
    %s105 = sadd.s32 %s104, 1
    %s106 = scalar_select %p103, %s104, %s105
    %p109 = pneg %p103
    %p110 = scmp.eq.s32.totalorder %s16, 1
    %p111 = por %p109, %p110
    %p112 = scmp.ne.s32.totalorder %s104, %s107
    %p113 = scmp.eq.s32.totalorder %s16, 0
    %p114 = por %p112, %p113
    %p115 = scmp.ne.s32.totalorder %s104, %s107
    %p116 = scmp.eq.s32.totalorder %s21, 1
    %p117 = por %p115, %p116
    %p118 = scmp.ne.s32.totalorder %s107, %s108
    %p119 = scmp.eq.s32.totalorder %s21, 0
    %p120 = por %p118, %p119
    %p121 = scmp.ne.s32.totalorder %s107, %s108
    %p122 = scmp.eq.s32.totalorder %s22, 1
    %p123 = por %p121, %p122
    %p125 = scmp.ne.s32.totalorder %s108, %s124
    %p126 = scmp.eq.s32.totalorder %s22, 0
    %p127 = por %p125, %p126
    %s129 = sadd.s32 %s128, 1
    %p132 = scmp.eq.s32.totalorder %s16, 1
    %p133 = scmp.ne.s32.totalorder %s128, %s130
    %p134 = scmp.eq.s32.totalorder %s16, 0
    %p135 = por %p133, %p134
    %p136 = scmp.ne.s32.totalorder %s128, %s130
    %p137 = scmp.eq.s32.totalorder %s21, 1
    %p138 = por %p136, %p137
    %p139 = scmp.ne.s32.totalorder %s130, %s131
    %p140 = scmp.eq.s32.totalorder %s21, 0
    %p141 = por %p139, %p140
    %p142 = scmp.ne.s32.totalorder %s130, %s131
    %p143 = scmp.eq.s32.totalorder %s22, 1
    %p144 = por %p142, %p143
    %p146 = scmp.ne.s32.totalorder %s131, %s145
    %p147 = scmp.eq.s32.totalorder %s22, 0
    %p148 = por %p146, %p147
    %s150 = sadd.s32 %s149, 1
    %p153 = scmp.eq.s32.totalorder %s16, 1
    %p154 = scmp.ne.s32.totalorder %s149, %s151
    %p155 = scmp.eq.s32.totalorder %s16, 0
    %p156 = por %p154, %p155
    %p157 = scmp.ne.s32.totalorder %s149, %s151
    %p158 = scmp.eq.s32.totalorder %s21, 1
    %p159 = por %p157, %p158
    %p160 = scmp.ne.s32.totalorder %s151, %s152
    %p161 = scmp.eq.s32.totalorder %s21, 0
    %p162 = por %p160, %p161
    %p163 = scmp.ne.s32.totalorder %s151, %s152
    %p164 = scmp.eq.s32.totalorder %s22, 1
    %p165 = por %p163, %p164
    %p167 = scmp.ne.s32.totalorder %s152, %s166
    %p168 = scmp.eq.s32.totalorder %s22, 0
    %p169 = por %p167, %p168
    %s171 = sadd.s32 %s170, 1
    %p174 = scmp.eq.s32.totalorder %s16, 1
    %p175 = scmp.ne.s32.totalorder %s170, %s172
    %p176 = scmp.eq.s32.totalorder %s16, 0
    %p177 = por %p175, %p176
    %p178 = scmp.ne.s32.totalorder %s170, %s172
    %p179 = scmp.eq.s32.totalorder %s21, 1
    %p180 = por %p178, %p179
    %p181 = scmp.ne.s32.totalorder %s172, %s173
    %p182 = scmp.eq.s32.totalorder %s21, 0
    %p183 = por %p181, %p182
    %p184 = scmp.ne.s32.totalorder %s172, %s173
    %p185 = scmp.eq.s32.totalorder %s22, 1
    %p186 = por %p184, %p185
    %p188 = scmp.ne.s32.totalorder %s173, %s187
    %p189 = scmp.eq.s32.totalorder %s22, 0
    %p190 = por %p188, %p189
    %s192 = sadd.s32 %s191, 1
    %p195 = scmp.eq.s32.totalorder %s16, 1
    %p196 = scmp.ne.s32.totalorder %s191, %s193
    %p197 = scmp.eq.s32.totalorder %s16, 0
    %p198 = por %p196, %p197
    %p199 = scmp.ne.s32.totalorder %s191, %s193
    %p200 = scmp.eq.s32.totalorder %s21, 1
    %p201 = por %p199, %p200
    %p202 = scmp.ne.s32.totalorder %s193, %s194
    %p203 = scmp.eq.s32.totalorder %s21, 0
    %p204 = por %p202, %p203
    %p205 = scmp.ne.s32.totalorder %s193, %s194
    %p206 = scmp.eq.s32.totalorder %s22, 1
    %p207 = por %p205, %p206
    %p209 = scmp.ne.s32.totalorder %s194, %s208
    %p210 = scmp.eq.s32.totalorder %s22, 0
    %p211 = por %p209, %p210
    %s213 = sadd.s32 %s212, 1
    %p216 = scmp.eq.s32.totalorder %s16, 1
    %p217 = scmp.ne.s32.totalorder %s212, %s214
    %p218 = scmp.eq.s32.totalorder %s16, 0
    %p219 = por %p217, %p218
    %p220 = scmp.ne.s32.totalorder %s212, %s214
    %p221 = scmp.eq.s32.totalorder %s21, 1
    %p222 = por %p220, %p221
    %p223 = scmp.ne.s32.totalorder %s214, %s215
    %p224 = scmp.eq.s32.totalorder %s21, 0
    %p225 = por %p223, %p224
    %p226 = scmp.ne.s32.totalorder %s214, %s215
    %p227 = scmp.eq.s32.totalorder %s22, 1
    %p228 = por %p226, %p227
    %p230 = scmp.ne.s32.totalorder %s215, %s229
    %p231 = scmp.eq.s32.totalorder %s22, 0
    %p232 = por %p230, %p231
    %s234 = sadd.s32 %s233, 1
    %p237 = scmp.eq.s32.totalorder %s16, 1
    %p238 = scmp.ne.s32.totalorder %s233, %s235
    %p239 = scmp.eq.s32.totalorder %s16, 0
    %p240 = por %p238, %p239
    %p241 = scmp.ne.s32.totalorder %s233, %s235
    %p242 = scmp.eq.s32.totalorder %s21, 1
    %p243 = por %p241, %p242
    %p244 = scmp.ne.s32.totalorder %s235, %s236
    %p245 = scmp.eq.s32.totalorder %s21, 0
    %p246 = por %p244, %p245
    %p247 = scmp.ne.s32.totalorder %s235, %s236
    %p248 = scmp.eq.s32.totalorder %s22, 1
    %p249 = por %p247, %p248
    %p251 = scmp.ne.s32.totalorder %s236, %s250
    %p252 = scmp.eq.s32.totalorder %s22, 0
    %p253 = por %p251, %p252
    %s254 = ssub.s32 %s16, %s23
    %p255 = scmp.eq.s32.totalorder %s254, 0
    %s257 = sadd.s32 %s256, 1
    %s258 = scalar_select %p255, %s256, %s257
    %p261 = pneg %p255
    %p262 = scmp.eq.s32.totalorder %s16, 1
    %p263 = por %p261, %p262
    %p264 = scmp.ne.s32.totalorder %s256, %s259
    %p265 = scmp.eq.s32.totalorder %s16, 0
    %p266 = por %p264, %p265
    %p267 = scmp.ne.s32.totalorder %s256, %s259
    %p268 = scmp.eq.s32.totalorder %s21, 1
    %p269 = por %p267, %p268
    %p270 = scmp.ne.s32.totalorder %s259, %s260
    %p271 = scmp.eq.s32.totalorder %s21, 0
    %p272 = por %p270, %p271
    %p273 = scmp.ne.s32.totalorder %s259, %s260
    %p274 = scmp.eq.s32.totalorder %s22, 1
    %p275 = por %p273, %p274
    %p277 = scmp.ne.s32.totalorder %s260, %s276
    %p278 = scmp.eq.s32.totalorder %s22, 0
    %p279 = por %p277, %p278
    %p280 = scmp.le.s32.totalorder 1, %s16
    %p281 = scmp.lt.s32.totalorder %s16, 3
    %p282 = pnand %p280, %p281
    %p283 = pneg %p282
    // Predicated region
    $region9: #{parallel_block_cat_forward.10} parent=5 // pred_check
      _
    $region10: #{parallel_block_cat_forward.10} parent=5 // pred_check_branch
      %285 = sbr.rel (%p282) target = $region12
    $region11: #{parallel_block_cat_forward.10} parent=5 // pred_region
      %s286 = ssub.s32 %s16, 1
      // Predicated region
      $region13: #{parallel_block_cat_forward.10} parent=11 // pred_check
        %p287 = pneg %p141
      $region14: #{parallel_block_cat_forward.10} parent=11 // pred_check_branch
        %289 = sbr.rel (%p287) target = $region16
      $region15: #{parallel_block_cat_forward.10} parent=11 // pred_region
        _
      $region16: #{parallel_block_cat_forward.10} parent=11 // pred_fallthru
        _
      // Predicated region
      $region17: #{parallel_block_cat_forward.10} parent=11 // pred_check
        %p290 = pneg %p162
      $region18: #{parallel_block_cat_forward.10} parent=11 // pred_check_branch
        %292 = sbr.rel (%p290) target = $region20
      $region19: #{parallel_block_cat_forward.10} parent=11 // pred_region
        _
      $region20: #{parallel_block_cat_forward.10} parent=11 // pred_fallthru
        _
      // Predicated region
      $region21: #{parallel_block_cat_forward.10} parent=11 // pred_check
        %p293 = pneg %p183
      $region22: #{parallel_block_cat_forward.10} parent=11 // pred_check_branch
        %295 = sbr.rel (%p293) target = $region24
      $region23: #{parallel_block_cat_forward.10} parent=11 // pred_region
        _
      $region24: #{parallel_block_cat_forward.10} parent=11 // pred_fallthru
        _
      // Predicated region
      $region25: #{parallel_block_cat_forward.10} parent=11 // pred_check
        %p296 = pneg %p204
      $region26: #{parallel_block_cat_forward.10} parent=11 // pred_check_branch
        %298 = sbr.rel (%p296) target = $region28
      $region27: #{parallel_block_cat_forward.10} parent=11 // pred_region
        _
      $region28: #{parallel_block_cat_forward.10} parent=11 // pred_fallthru
        _
      // Predicated region
      $region29: #{parallel_block_cat_forward.10} parent=11 // pred_check
        %p299 = pneg %p225
      $region30: #{parallel_block_cat_forward.10} parent=11 // pred_check_branch
        %301 = sbr.rel (%p299) target = $region32
      $region31: #{parallel_block_cat_forward.10} parent=11 // pred_region
        _
      $region32: #{parallel_block_cat_forward.10} parent=11 // pred_fallthru
        _
      // Predicated region
      $region33: #{parallel_block_cat_forward.10} parent=11 // pred_check
        %p302 = pneg %p246
      $region34: #{parallel_block_cat_forward.10} parent=11 // pred_check_branch
        %304 = sbr.rel (%p302) target = $region36
      $region35: #{parallel_block_cat_forward.10} parent=11 // pred_region
        _
      $region36: #{parallel_block_cat_forward.10} parent=11 // pred_fallthru
        _
    $region12: #{parallel_block_cat_forward.10} parent=5 // pred_fallthru
      _
    %p305 = scmp.lt.s32.totalorder %s16, 2
    // Predicated region
    $region37: #{parallel_block_cat_forward.10} parent=5 // pred_check
      %p306 = pneg %p305
    $region38: #{parallel_block_cat_forward.10} parent=5 // pred_check_branch
      %308 = sbr.rel (%p306) target = $region40
    $region39: #{parallel_block_cat_forward.10} parent=5 // pred_region
      // Predicated region
      $region41: #{parallel_block_cat_forward.10} parent=39 // pred_check
        %p309 = pneg %p36
      $region42: #{parallel_block_cat_forward.10} parent=39 // pred_check_branch
        %311 = sbr.rel (%p309) target = $region44
      $region43: #{parallel_block_cat_forward.10} parent=39 // pred_region
        %s312 = smul.u32 2, %s16
        %p313 = scmp.lt.s32.totalorder %s312, 3
        %s314 = scalar_select %p313, %s312, 3
        %s315 = smul.addr %s314, 2
        %s316 = scalar_lea.vmem %s0, %s315
        %s317 = smul.u32 2, %s16
      $region44: #{parallel_block_cat_forward.10} parent=39 // pred_fallthru
        _
      // Predicated region
      $region45: #{parallel_block_cat_forward.10} parent=39 // pred_check
        %p318 = pneg %p62
      $region46: #{parallel_block_cat_forward.10} parent=39 // pred_check_branch
        %320 = sbr.rel (%p318) target = $region48
      $region47: #{parallel_block_cat_forward.10} parent=39 // pred_region
        %s321 = smul.u32 2, %s16
        %p322 = scmp.lt.s32.totalorder %s321, 3
        %s323 = scalar_select %p322, %s321, 3
        %s324 = smul.addr %s323, 2
        %s325 = scalar_lea.vmem %s1, %s324
        %s326 = smul.u32 2, %s16
      $region48: #{parallel_block_cat_forward.10} parent=39 // pred_fallthru
        _
      // Predicated region
      $region49: #{parallel_block_cat_forward.10} parent=39 // pred_check
        %p327 = pneg %p88
      $region50: #{parallel_block_cat_forward.10} parent=39 // pred_check_branch
        %329 = sbr.rel (%p327) target = $region52
      $region51: #{parallel_block_cat_forward.10} parent=39 // pred_region
        %s330 = smul.u32 2, %s16
        %p331 = scmp.lt.s32.totalorder %s330, 3
        %s332 = scalar_select %p331, %s330, 3
        %s333 = smul.addr %s332, 2
        %s334 = scalar_lea.vmem %s2, %s333
        %s335 = smul.u32 2, %s16
      $region52: #{parallel_block_cat_forward.10} parent=39 // pred_fallthru
        _
      // Predicated region
      $region53: #{parallel_block_cat_forward.10} parent=39 // pred_check
        %p336 = pneg %p114
      $region54: #{parallel_block_cat_forward.10} parent=39 // pred_check_branch
        %338 = sbr.rel (%p336) target = $region56
      $region55: #{parallel_block_cat_forward.10} parent=39 // pred_region
        %s339 = smul.u32 2, %s16
        %p340 = scmp.lt.s32.totalorder %s339, 3
        %s341 = scalar_select %p340, %s339, 3
        %s342 = smul.addr %s341, 4
        %s343 = scalar_lea.vmem %s3, %s342
        %s344 = smul.u32 2, %s16
      $region56: #{parallel_block_cat_forward.10} parent=39 // pred_fallthru
        _
    $region40: #{parallel_block_cat_forward.10} parent=5 // pred_fallthru
      _
    %p345 = scmp.le.s32.totalorder 1, %s16
    %p346 = scmp.lt.s32.totalorder %s16, 3
    %p347 = pnand %p345, %p346
    %p348 = pneg %p347
    // Predicated region
    $region57: #{parallel_block_cat_forward.10} parent=5 // pred_check
      _
    $region58: #{parallel_block_cat_forward.10} parent=5 // pred_check_branch
      %350 = sbr.rel (%p347) target = $region60
    $region59: #{parallel_block_cat_forward.10} parent=5 // pred_region
      %s351 = ssub.s32 %s16, 1
      %s352 = smul.u32 2, %s21
      %p353 = scmp.lt.s32.totalorder %s352, 3
      %s354 = scalar_select %p353, %s352, 3
      %s355 = smul.addr %s354, 2
      %s356 = scalar_lea.vmem %s0, %s355
      %p357 = pneg %p42
      %p358 = pneg %p39
      %s359 = smul.u32 2, %s21
      %p360 = scmp.lt.s32.totalorder %s359, 3
      %s361 = scalar_select %p360, %s359, 3
      %s362 = smul.addr %s361, 2
      %s363 = scalar_lea.vmem %s1, %s362
      %p364 = pneg %p68
      %p365 = pneg %p65
      %s366 = smul.u32 2, %s21
      %p367 = scmp.lt.s32.totalorder %s366, 3
      %s368 = scalar_select %p367, %s366, 3
      %s369 = smul.addr %s368, 2
      %s370 = scalar_lea.vmem %s2, %s369
      %p371 = pneg %p94
      %p372 = pneg %p91
      %s373 = smul.u32 2, %s21
      %p374 = scmp.lt.s32.totalorder %s373, 3
      %s375 = scalar_select %p374, %s373, 3
      %s376 = smul.addr %s375, 4
      %s377 = scalar_lea.vmem %s3, %s376
      %p378 = pneg %p120
      %p379 = pneg %p117
      %p380 = pneg %p141
      %p381 = pneg %p138
      %p382 = pneg %p162
      %p383 = pneg %p159
      %p384 = pneg %p183
      %p385 = pneg %p180
      %p386 = pneg %p204
      %p387 = pneg %p201
      %p388 = pneg %p225
      %p389 = pneg %p222
      %p390 = pneg %p246
      %p391 = pneg %p243
      %p392 = pneg %p272
      %p393 = pneg %p269
      %s394 = smul.u32 2, %s21
      %p395 = scmp.lt.s32.totalorder %s394, 3
      %s396 = scalar_select %p395, %s394, 3
      %s397 = smul.addr %s396, 4
      %s398 = scalar_lea.vmem %s10, %s397
      %s399 = smul.u32 2, %s21
      %p400 = scmp.lt.s32.totalorder %s399, 3
      %s401 = scalar_select %p400, %s399, 3
      %s402 = smul.addr %s401, 2
      %s403 = scalar_lea.vmem %s0, %s402
      %s404 = smul.u32 2, %s21
      %s405 = smul.u32 2, %s21
      %p406 = scmp.lt.s32.totalorder %s405, 3
      %s407 = scalar_select %p406, %s405, 3
      %s408 = smul.addr %s407, 2
      %s409 = scalar_lea.vmem %s1, %s408
      %s410 = smul.u32 2, %s21
      %s411 = smul.u32 2, %s21
      %p412 = scmp.lt.s32.totalorder %s411, 3
      %s413 = scalar_select %p412, %s411, 3
      %s414 = smul.addr %s413, 2
      %s415 = scalar_lea.vmem %s2, %s414
      %s416 = smul.u32 2, %s21
      %s417 = smul.u32 2, %s21
      %p418 = scmp.lt.s32.totalorder %s417, 3
      %s419 = scalar_select %p418, %s417, 3
      %s420 = smul.addr %s419, 4
      %s421 = scalar_lea.vmem %s3, %s420
      %s422 = smul.u32 2, %s21
      %s423 = smul.u32 2, %s21
      %p424 = scmp.lt.s32.totalorder %s423, 3
      %s425 = scalar_select %p424, %s423, 3
      %s426 = smul.addr %s425, 4
      %s427 = scalar_lea.vmem %s10, %s426
      %s428 = smul.u32 2, %s21
      %v430 = vld [vmem:[%s403] sm:$0x3]
      %v431 = vld [vmem:[%s403 + $0x2] sm:$0x3]
      %v432 = vld [vmem:[%s409] sm:$0x3]
      %v433 = vld [vmem:[%s409 + $0x2] sm:$0x3]
      %v434 = vld [vmem:[%s415] sm:$0x3]
      %v435 = vld [vmem:[%s415 + $0x2] sm:$0x3]
      %v436 = vld [vmem:[%s4] sm:$0xf]
      %v437 = vld [vmem:[%s4 + $0x4] sm:$0xf]
      %v438 = vld [vmem:[%s4 + $0x8] sm:$0xf]
      %v439 = vld [vmem:[%s4 + $0xc] sm:$0xf]
      %v440 = vld [vmem:[%s5] sm:$0xf]
      %v441 = vld [vmem:[%s5 + $0x4] sm:$0xf]
      %v442 = vld [vmem:[%s5 + $0x8] sm:$0xf]
      %v443 = vld [vmem:[%s5 + $0xc] sm:$0xf]
      %v444 = vld [vmem:[%s5 + $0x10] sm:$0xf]
      %v445 = vld [vmem:[%s5 + $0x14] sm:$0xf]
      %v446 = vld [vmem:[%s5 + $0x18] sm:$0xf]
      %v447 = vld [vmem:[%s5 + $0x1c] sm:$0xf]
      %v450 = vcombine.low %v432, %v433
      %v452 = vunpack.c.l.s4 1983009808
      %v453 = vunpack.c.0.s8 %v452
      %v454 = vlaneseq
      %v455 = vshrl.u32 %v454, 7
      %v456 = vsub.s32 %v453, %v455
      %v457 = vrot.slane %v450, %v456
      %v466 = vunpack.c.l.b16 %v440
      %v467 = vunpack.c.l.b16 %v441
      %v468 = vunpack.c.l.b16 %v442
      %v469 = vunpack.c.l.b16 %v443
      %v470 = vunpack.c.l.b16 %v444
      %v471 = vunpack.c.l.b16 %v445
      %v472 = vunpack.c.l.b16 %v446
      %v473 = vunpack.c.l.b16 %v447
      %v474 = vpack.c.b16 %v467, %v466
      %v475 = vpack.c.b16 %v469, %v468
      %v476 = vpack.c.b16 %v471, %v470
      %v477 = vpack.c.b16 %v473, %v472
      %vm482 = vcmask 523264
      %v484 = vsel %vm482, %v457, 0
      %486 = vmatprep.subr.bf16.mxu0 0
      %487 = vmatpush1.bf16.msra.mxu0 %v474
      %488 = vmatprep.subr.bf16.mxu0 0
      %489 = vmatpush1.bf16.msra.mxu0 %v475
      %490 = vmatprep.subr.bf16.mxu0 0
      %491 = vmatpush1.bf16.msra.mxu0 %v476
      %492 = vmatprep.subr.bf16.mxu0 0
      %493 = vmatpush1.bf16.msra.mxu0 %v477
      %494 = vmatprep.subr.bf16.mxu0 0
      %495 = vmatpush1.bf16.msra.mxu0 0
      %496 = vmatprep.subr.bf16.mxu0 0
      %497 = vmatpush1.bf16.msra.mxu0 0
      %498 = vmatprep.subr.bf16.mxu0 0
      %499 = vmatpush1.bf16.msra.mxu0 0
      %500 = vmatprep.subr.bf16.mxu0 0
      %501 = vmatpush1.bf16.msra.mxu0 0
      %502 = vmatprep.subr.bf16.mxu0 0
      %503 = vmatpush1.bf16.msra.mxu0 0
      %504 = vmatprep.subr.bf16.mxu0 0
      %505 = vmatpush1.bf16.msra.mxu0 0
      %506 = vmatprep.subr.bf16.mxu0 0
      %507 = vmatpush1.bf16.msra.mxu0 0
      %508 = vmatprep.subr.bf16.mxu0 0
      %509 = vmatpush1.bf16.msra.mxu0 0
      %510 = vmatprep.subr.bf16.mxu0 0
      %511 = vmatpush1.bf16.msra.mxu0 0
      %512 = vmatprep.subr.bf16.mxu0 0
      %513 = vmatpush1.bf16.msra.mxu0 0
      %514 = vmatprep.subr.bf16.mxu0 0
      %515 = vmatpush1.bf16.msra.mxu0 0
      %516 = vmatprep.subr.bf16.mxu0 0
      %517 = vmatpush1.bf16.msra.mxu0 0
      %518 = vmatprep.mubr.bf16.mxu0 0
      %519 = vmatmul.mubr.bf16.gmra.mrb[0].mxu0 %v484
      %v520 = vpop.f32.mrb[0].mxu0
      %v521 = vadd.f32 0.0, %v520
      %v522 = vpop.f32.mrb[0].mxu0
      %v523 = vpop.f32.mrb[0].mxu0
      %v524 = vpop.f32.mrb[0].mxu0
      %525 = vdwg.mxu0
      %v528 = vcombine.low %v430, %v431
      %v530 = vunpack.c.l.s4 1983009808
      %v531 = vunpack.c.0.s8 %v530
      %v532 = vlaneseq
      %v533 = vshrl.u32 %v532, 7
      %v534 = vsub.s32 %v531, %v533
      %v535 = vrot.slane %v528, %v534
      %v540 = vunpack.c.l.b16 %v436
      %v541 = vunpack.c.l.b16 %v437
      %v542 = vunpack.c.l.b16 %v438
      %v543 = vunpack.c.l.b16 %v439
      %v544 = vpack.c.b16 %v541, %v540
      %v545 = vpack.c.b16 %v543, %v542
      %vm548 = vcmask 261120
      %v550 = vsel %vm548, %v535, 0
      %552 = vmatprep.subr.bf16.mxu0 0
      %553 = vmatpush1.bf16.msra.mxu0 %v544
      %554 = vmatprep.subr.bf16.mxu0 0
      %555 = vmatpush1.bf16.msra.mxu0 %v545
      %556 = vmatprep.subr.bf16.mxu0 0
      %557 = vmatpush1.bf16.msra.mxu0 0
      %558 = vmatprep.subr.bf16.mxu0 0
      %559 = vmatpush1.bf16.msra.mxu0 0
      %560 = vmatprep.subr.bf16.mxu0 0
      %561 = vmatpush1.bf16.msra.mxu0 0
      %562 = vmatprep.subr.bf16.mxu0 0
      %563 = vmatpush1.bf16.msra.mxu0 0
      %564 = vmatprep.subr.bf16.mxu0 0
      %565 = vmatpush1.bf16.msra.mxu0 0
      %566 = vmatprep.subr.bf16.mxu0 0
      %567 = vmatpush1.bf16.msra.mxu0 0
      %568 = vmatprep.subr.bf16.mxu0 0
      %569 = vmatpush1.bf16.msra.mxu0 0
      %570 = vmatprep.subr.bf16.mxu0 0
      %571 = vmatpush1.bf16.msra.mxu0 0
      %572 = vmatprep.subr.bf16.mxu0 0
      %573 = vmatpush1.bf16.msra.mxu0 0
      %574 = vmatprep.subr.bf16.mxu0 0
      %575 = vmatpush1.bf16.msra.mxu0 0
      %576 = vmatprep.subr.bf16.mxu0 0
      %577 = vmatpush1.bf16.msra.mxu0 0
      %578 = vmatprep.subr.bf16.mxu0 0
      %579 = vmatpush1.bf16.msra.mxu0 0
      %580 = vmatprep.subr.bf16.mxu0 0
      %581 = vmatpush1.bf16.msra.mxu0 0
      %582 = vmatprep.subr.bf16.mxu0 0
      %583 = vmatpush1.bf16.msra.mxu0 0
      %584 = vmatprep.mubr.bf16.mxu0 0
      %585 = vmatmul.mubr.bf16.gmra.mrb[0].mxu0 %v550
      %v586 = vpop.f32.mrb[0].mxu0
      %v587 = vadd.f32 %v521, %v586
      %v588 = vpop.f32.mrb[0].mxu0
      %v589 = vpop.f32.mrb[0].mxu0
      %v590 = vpop.f32.mrb[0].mxu0
      %591 = vdwg.mxu0
      %v592 = vld [vmem:[%s6] sm:$0xf]
      %v593 = vld [vmem:[%s6 + $0x4] sm:$0xf]
      %v596 = vcombine.low %v434, %v435
      %v598 = vunpack.c.l.s4 1983009808
      %v599 = vunpack.c.0.s8 %v598
      %v600 = vlaneseq
      %v601 = vshrl.u32 %v600, 7
      %v602 = vsub.s32 %v599, %v601
      %v603 = vrot.slane %v596, %v602
      %v606 = vunpack.c.l.b16 %v592
      %v607 = vunpack.c.l.b16 %v593
      %v608 = vpack.c.b16 %v607, %v606
      %vm610 = vcmask 130048
      %v612 = vsel %vm610, %v603, 0
      %614 = vmatprep.subr.bf16.mxu0 0
      %615 = vmatpush1.bf16.msra.mxu0 %v608
      %616 = vmatprep.subr.bf16.mxu0 0
      %617 = vmatpush1.bf16.msra.mxu0 0
      %618 = vmatprep.subr.bf16.mxu0 0
      %619 = vmatpush1.bf16.msra.mxu0 0
      %620 = vmatprep.subr.bf16.mxu0 0
      %621 = vmatpush1.bf16.msra.mxu0 0
      %622 = vmatprep.subr.bf16.mxu0 0
      %623 = vmatpush1.bf16.msra.mxu0 0
      %624 = vmatprep.subr.bf16.mxu0 0
      %625 = vmatpush1.bf16.msra.mxu0 0
      %626 = vmatprep.subr.bf16.mxu0 0
      %627 = vmatpush1.bf16.msra.mxu0 0
      %628 = vmatprep.subr.bf16.mxu0 0
      %629 = vmatpush1.bf16.msra.mxu0 0
      %630 = vmatprep.subr.bf16.mxu0 0
      %631 = vmatpush1.bf16.msra.mxu0 0
      %632 = vmatprep.subr.bf16.mxu0 0
      %633 = vmatpush1.bf16.msra.mxu0 0
      %634 = vmatprep.subr.bf16.mxu0 0
      %635 = vmatpush1.bf16.msra.mxu0 0
      %636 = vmatprep.subr.bf16.mxu0 0
      %637 = vmatpush1.bf16.msra.mxu0 0
      %638 = vmatprep.subr.bf16.mxu0 0
      %639 = vmatpush1.bf16.msra.mxu0 0
      %640 = vmatprep.subr.bf16.mxu0 0
      %641 = vmatpush1.bf16.msra.mxu0 0
      %642 = vmatprep.subr.bf16.mxu0 0
      %643 = vmatpush1.bf16.msra.mxu0 0
      %644 = vmatprep.subr.bf16.mxu0 0
      %645 = vmatpush1.bf16.msra.mxu0 0
      %646 = vmatprep.mubr.bf16.mxu0 0
      %647 = vmatmul.mubr.bf16.gmra.mrb[0].mxu0 %v612
      %v648 = vpop.f32.mrb[0].mxu0
      %v649 = vadd.f32 0.0, %v648
      %v650 = vpop.f32.mrb[0].mxu0
      %v651 = vpop.f32.mrb[0].mxu0
      %v652 = vpop.f32.mrb[0].mxu0
      %653 = vdwg.mxu0
      %v654 = vadd.f32 %v587, %v649
      %v655 = vld [vmem:[%s7] sm:$0x1]
      %v657 = vlaneseq
      %v658 = vshrl.u32 %v657, 7
      %v659 = vsub.s32 0, %v658
      %v660 = vrot.slane %v655, %v659
      %v662 = vadd.f32 %v654, %v660
      %v663 = vmul.f32 %v662, 0.5
      %v664 = vmul.f32 %v662, 0.70710677
      %v665 = verf.f32.pop %v664
      %v666 = vadd.f32 %v665, 1.0
      %v667 = vmul.f32 %v663, %v666
      %v668 = vpack.c.bf16 %v667, %v667
      %v669 = vld [vmem:[%s8] sm:$0xf]
      %v670 = vld [vmem:[%s8 + $0x4] sm:$0xf]
      %v671 = vld [vmem:[%s8 + $0x8] sm:$0xf]
      %v672 = vld [vmem:[%s8 + $0xc] sm:$0xf]
      %v673 = vld [vmem:[%s8 + $0x10] sm:$0xf]
      %v674 = vld [vmem:[%s8 + $0x14] sm:$0xf]
      %v675 = vld [vmem:[%s8 + $0x18] sm:$0xf]
      %v676 = vld [vmem:[%s8 + $0x1c] sm:$0xf]
      %v677 = vld [vmem:[%s9] sm:$0x1]
      %v679 = vlaneseq
      %v680 = vshrl.u32 %v679, 7
      %v681 = vsub.s32 0, %v680
      %v682 = vrot.slane %v677, %v681
      %v692 = vunpack.c.l.b16 %v669
      %v693 = vunpack.c.l.b16 %v670
      %v694 = vunpack.c.l.b16 %v671
      %v695 = vunpack.c.l.b16 %v672
      %v696 = vunpack.c.l.b16 %v673
      %v697 = vunpack.c.l.b16 %v674
      %v698 = vunpack.c.l.b16 %v675
      %v699 = vunpack.c.l.b16 %v676
      %v700 = vpack.c.b16 %v693, %v692
      %v701 = vpack.c.b16 %v695, %v694
      %v702 = vpack.c.b16 %v697, %v696
      %v703 = vpack.c.b16 %v699, %v698
      %v709 = vsel %vm482, %v668, 0
      %711 = vmatprep.subr.bf16.mxu0 0
      %712 = vmatpush1.bf16.msra.mxu0 %v700
      %713 = vmatprep.subr.bf16.mxu0 0
      %714 = vmatpush1.bf16.msra.mxu0 %v701
      %715 = vmatprep.subr.bf16.mxu0 0
      %716 = vmatpush1.bf16.msra.mxu0 %v702
      %717 = vmatprep.subr.bf16.mxu0 0
      %718 = vmatpush1.bf16.msra.mxu0 %v703
      %719 = vmatprep.subr.bf16.mxu0 0
      %720 = vmatpush1.bf16.msra.mxu0 0
      %721 = vmatprep.subr.bf16.mxu0 0
      %722 = vmatpush1.bf16.msra.mxu0 0
      %723 = vmatprep.subr.bf16.mxu0 0
      %724 = vmatpush1.bf16.msra.mxu0 0
      %725 = vmatprep.subr.bf16.mxu0 0
      %726 = vmatpush1.bf16.msra.mxu0 0
      %727 = vmatprep.subr.bf16.mxu0 0
      %728 = vmatpush1.bf16.msra.mxu0 0
      %729 = vmatprep.subr.bf16.mxu0 0
      %730 = vmatpush1.bf16.msra.mxu0 0
      %731 = vmatprep.subr.bf16.mxu0 0
      %732 = vmatpush1.bf16.msra.mxu0 0
      %733 = vmatprep.subr.bf16.mxu0 0
      %734 = vmatpush1.bf16.msra.mxu0 0
      %735 = vmatprep.subr.bf16.mxu0 0
      %736 = vmatpush1.bf16.msra.mxu0 0
      %737 = vmatprep.subr.bf16.mxu0 0
      %738 = vmatpush1.bf16.msra.mxu0 0
      %739 = vmatprep.subr.bf16.mxu0 0
      %740 = vmatpush1.bf16.msra.mxu0 0
      %741 = vmatprep.subr.bf16.mxu0 0
      %742 = vmatpush1.bf16.msra.mxu0 0
      %743 = vmatprep.mubr.bf16.mxu0 0
      %744 = vmatmul.mubr.bf16.gmra.mrb[0].mxu0 %v709
      %v745 = vpop.f32.mrb[0].mxu0
      %v746 = vadd.f32 %v682, %v745
      %v747 = vpop.f32.mrb[0].mxu0
      %v748 = vpop.f32.mrb[0].mxu0
      %v749 = vpop.f32.mrb[0].mxu0
      %750 = vdwg.mxu0
      %v751 = vld [vmem:[%s421] sm:$0xf]
      %v752 = vld [vmem:[%s421 + $0x4] sm:$0xf]
      %v754 = vcombine.high %v746, %v746
      %v756 = vadd.f32 %v751, %v746
      %v757 = vadd.f32 %v752, %v754
      %vm758 = vcmask 257024
      %759 = vst.msk [vmem:[%s427] sm:$0xf] %vm758, %v756
      %760 = vst.msk [vmem:[%s427 + $0x4] sm:$0xf] %vm758, %v757
      %s761 = smul.u32 2, %s21
      %p762 = scmp.lt.s32.totalorder %s761, 3
      %s763 = scalar_select %p762, %s761, 3
      %s764 = smul.addr %s763, 4
      %s765 = scalar_lea.vmem %s10, %s764
      // Predicated region
      $region61: #{parallel_block_cat_forward.10} parent=59 // pred_check
        %p766 = pneg %p269
      $region62: #{parallel_block_cat_forward.10} parent=59 // pred_check_branch
        %768 = sbr.rel (%p766) target = $region64
      $region63: #{parallel_block_cat_forward.10} parent=59 // pred_region
        %s769 = smul.u32 2, %s21
      $region64: #{parallel_block_cat_forward.10} parent=59 // pred_fallthru
        _
    $region60: #{parallel_block_cat_forward.10} parent=5 // pred_fallthru
      _
    %p770 = scmp.le.s32.totalorder 2, %s16
    // Predicated region
    $region65: #{parallel_block_cat_forward.10} parent=5 // pred_check
      %p771 = pneg %p770
    $region66: #{parallel_block_cat_forward.10} parent=5 // pred_check_branch
      %773 = sbr.rel (%p771) target = $region68
    $region67: #{parallel_block_cat_forward.10} parent=5 // pred_region
      %s774 = ssub.s32 %s16, 2
      // Predicated region
      $region69: #{parallel_block_cat_forward.10} parent=67 // pred_check
        %p775 = pneg %p275
      $region70: #{parallel_block_cat_forward.10} parent=67 // pred_check_branch
        %777 = sbr.rel (%p775) target = $region72
      $region71: #{parallel_block_cat_forward.10} parent=67 // pred_region
        %s778 = smul.u32 2, %s22
        %p779 = scmp.lt.s32.totalorder %s778, 3
        %s780 = scalar_select %p779, %s778, 3
        %s781 = smul.addr %s780, 4
        %s782 = scalar_lea.vmem %s10, %s781
      $region72: #{parallel_block_cat_forward.10} parent=67 // pred_fallthru
        _
    $region68: #{parallel_block_cat_forward.10} parent=5 // pred_fallthru
      _
  $region6: #{parallel_block_cat_forward.10} parent=0 // loop_footer
    %s20 = sadd.s32 1, %s16
  $region7: #{parallel_block_cat_forward.10} parent=0 // loop_footer_branch
    %15 = sbr.rel target = $region3
  $region8: #{parallel_block_cat_forward.10} parent=0 // loop_exit
    _

// kernel: parallel_block_cat_forward.11
$region0: #{parallel_block_cat_forward.11}
  #allocation0 [shape = 'u32[]', space=smem, size = 0x4, offset = 0x4, fixed_abs, tag = 'smem constant byte address 0x4 - core index']
  #allocation1 [shape = 'u32[144,128]{1,0:T(1,128)}', space=vmem, size = 0x12000, scoped, tag = 'internal scratch']
  %s0 = inlined_call_operand.vmem [shape: bf16[4,2,64], index: 0, kind: input, shape index: {}]
  %s1 = inlined_call_operand.vmem [shape: bf16[4,2,32], index: 1, kind: input, shape index: {}]
  %s2 = inlined_call_operand.vmem [shape: bf16[4,2,16], index: 2, kind: input, shape index: {}]
  %s3 = inlined_call_operand.vmem [shape: f32[4,2,64], index: 3, kind: input, shape index: {}]
  %s4 = inlined_call_operand.vmem [shape: bf16[64,128], index: 4, kind: input, shape index: {}]
  %s5 = inlined_call_operand.vmem [shape: bf16[32,128], index: 5, kind: input, shape index: {}]
  %s6 = inlined_call_operand.vmem [shape: bf16[16,128], index: 6, kind: input, shape index: {}]
  %s7 = inlined_call_operand.vmem [shape: f32[1,128], index: 7, kind: input, shape index: {}]
  %s8 = inlined_call_operand.vmem [shape: bf16[128,64], index: 8, kind: input, shape index: {}]
  %s9 = inlined_call_operand.vmem [shape: f32[1,64], index: 9, kind: input, shape index: {}]
  %s10 = inlined_call_operand.vmem [shape: f32[4,2,64], index: 10, kind: output, shape index: {}]
  %s11 = sld [smem:[#allocation0]]
  $region73: #{parallel_block_cat_forward.11} parent=0
    _
  %s13 = ssub.s32 1, %s11
  %s14 = scalar_select 0, %s13, %s11
  loop: start=0, step=1, limit=4
  $region2: #{parallel_block_cat_forward.11} parent=0 // loop_pre_header
    _
  $region3: #{parallel_block_cat_forward.11} parent=0 // loop_header
    %s16 = sphi 0, %s20
    %p17 = scmp.ge.s32.totalorder %s16, 4
    %s26 = sphi 0, %s28
    %s29 = sphi 0, %s26
    %s30 = sphi 0, %s29
    %s46 = sphi 0, %s30
    %s52 = sphi 0, %s54
    %s55 = sphi 0, %s52
    %s56 = sphi 0, %s55
    %s72 = sphi 0, %s56
    %s78 = sphi 0, %s80
    %s81 = sphi 0, %s78
    %s82 = sphi 0, %s81
    %s98 = sphi 0, %s82
    %s104 = sphi 0, %s106
    %s107 = sphi 0, %s104
    %s108 = sphi 0, %s107
    %s124 = sphi 0, %s108
    %s128 = sphi 0, %s128
    %s130 = sphi 0, %s128
    %s131 = sphi 0, %s130
    %s145 = sphi 0, %s131
    %s149 = sphi 0, %s149
    %s151 = sphi 0, %s149
    %s152 = sphi 0, %s151
    %s166 = sphi 0, %s152
    %s170 = sphi 0, %s170
    %s172 = sphi 0, %s170
    %s173 = sphi 0, %s172
    %s187 = sphi 0, %s173
    %s191 = sphi 0, %s191
    %s193 = sphi 0, %s191
    %s194 = sphi 0, %s193
    %s208 = sphi 0, %s194
    %s212 = sphi 0, %s212
    %s214 = sphi 0, %s212
    %s215 = sphi 0, %s214
    %s229 = sphi 0, %s215
    %s233 = sphi 0, %s233
    %s235 = sphi 0, %s233
    %s236 = sphi 0, %s235
    %s250 = sphi 0, %s236
    %s256 = sphi 0, %s258
    %s259 = sphi 0, %s256
    %s260 = sphi 0, %s259
    %s276 = sphi 0, %s260
  $region4: #{parallel_block_cat_forward.11} parent=0 // loop_header_branch
    %19 = sbr.rel (%p17) target = $region8
  $region5: #{parallel_block_cat_forward.11} parent=0 // loop_body
    %s21 = ssub.s32 %s16, 1
    %s22 = ssub.s32 %s16, 2
    %s23 = sadd.s32 %s16, 1
    %s24 = ssub.s32 %s16, %s23
    %p25 = scmp.eq.s32.totalorder %s24, 0
    %s27 = sadd.s32 %s26, 1
    %s28 = scalar_select %p25, %s26, %s27
    %p31 = pneg %p25
    %p32 = scmp.eq.s32.totalorder %s16, 1
    %p33 = por %p31, %p32
    %p34 = scmp.ne.s32.totalorder %s26, %s29
    %p35 = scmp.eq.s32.totalorder %s16, 0
    %p36 = por %p34, %p35
    %p37 = scmp.ne.s32.totalorder %s26, %s29
    %p38 = scmp.eq.s32.totalorder %s21, 1
    %p39 = por %p37, %p38
    %p40 = scmp.ne.s32.totalorder %s29, %s30
    %p41 = scmp.eq.s32.totalorder %s21, 0
    %p42 = por %p40, %p41
    %p43 = scmp.ne.s32.totalorder %s29, %s30
    %p44 = scmp.eq.s32.totalorder %s22, 1
    %p45 = por %p43, %p44
    %p47 = scmp.ne.s32.totalorder %s30, %s46
    %p48 = scmp.eq.s32.totalorder %s22, 0
    %p49 = por %p47, %p48
    %s50 = ssub.s32 %s16, %s23
    %p51 = scmp.eq.s32.totalorder %s50, 0
    %s53 = sadd.s32 %s52, 1
    %s54 = scalar_select %p51, %s52, %s53
    %p57 = pneg %p51
    %p58 = scmp.eq.s32.totalorder %s16, 1
    %p59 = por %p57, %p58
    %p60 = scmp.ne.s32.totalorder %s52, %s55
    %p61 = scmp.eq.s32.totalorder %s16, 0
    %p62 = por %p60, %p61
    %p63 = scmp.ne.s32.totalorder %s52, %s55
    %p64 = scmp.eq.s32.totalorder %s21, 1
    %p65 = por %p63, %p64
    %p66 = scmp.ne.s32.totalorder %s55, %s56
    %p67 = scmp.eq.s32.totalorder %s21, 0
    %p68 = por %p66, %p67
    %p69 = scmp.ne.s32.totalorder %s55, %s56
    %p70 = scmp.eq.s32.totalorder %s22, 1
    %p71 = por %p69, %p70
    %p73 = scmp.ne.s32.totalorder %s56, %s72
    %p74 = scmp.eq.s32.totalorder %s22, 0
    %p75 = por %p73, %p74
    %s76 = ssub.s32 %s16, %s23
    %p77 = scmp.eq.s32.totalorder %s76, 0
    %s79 = sadd.s32 %s78, 1
    %s80 = scalar_select %p77, %s78, %s79
    %p83 = pneg %p77
    %p84 = scmp.eq.s32.totalorder %s16, 1
    %p85 = por %p83, %p84
    %p86 = scmp.ne.s32.totalorder %s78, %s81
    %p87 = scmp.eq.s32.totalorder %s16, 0
    %p88 = por %p86, %p87
    %p89 = scmp.ne.s32.totalorder %s78, %s81
    %p90 = scmp.eq.s32.totalorder %s21, 1
    %p91 = por %p89, %p90
    %p92 = scmp.ne.s32.totalorder %s81, %s82
    %p93 = scmp.eq.s32.totalorder %s21, 0
    %p94 = por %p92, %p93
    %p95 = scmp.ne.s32.totalorder %s81, %s82
    %p96 = scmp.eq.s32.totalorder %s22, 1
    %p97 = por %p95, %p96
    %p99 = scmp.ne.s32.totalorder %s82, %s98
    %p100 = scmp.eq.s32.totalorder %s22, 0
    %p101 = por %p99, %p100
    %s102 = ssub.s32 %s16, %s23
    %p103 = scmp.eq.s32.totalorder %s102, 0
    %s105 = sadd.s32 %s104, 1
    %s106 = scalar_select %p103, %s104, %s105
    %p109 = pneg %p103
    %p110 = scmp.eq.s32.totalorder %s16, 1
    %p111 = por %p109, %p110
    %p112 = scmp.ne.s32.totalorder %s104, %s107
    %p113 = scmp.eq.s32.totalorder %s16, 0
    %p114 = por %p112, %p113
    %p115 = scmp.ne.s32.totalorder %s104, %s107
    %p116 = scmp.eq.s32.totalorder %s21, 1
    %p117 = por %p115, %p116
    %p118 = scmp.ne.s32.totalorder %s107, %s108
    %p119 = scmp.eq.s32.totalorder %s21, 0
    %p120 = por %p118, %p119
    %p121 = scmp.ne.s32.totalorder %s107, %s108
    %p122 = scmp.eq.s32.totalorder %s22, 1
    %p123 = por %p121, %p122
    %p125 = scmp.ne.s32.totalorder %s108, %s124
    %p126 = scmp.eq.s32.totalorder %s22, 0
    %p127 = por %p125, %p126
    %s129 = sadd.s32 %s128, 1
    %p132 = scmp.eq.s32.totalorder %s16, 1
    %p133 = scmp.ne.s32.totalorder %s128, %s130
    %p134 = scmp.eq.s32.totalorder %s16, 0
    %p135 = por %p133, %p134
    %p136 = scmp.ne.s32.totalorder %s128, %s130
    %p137 = scmp.eq.s32.totalorder %s21, 1
    %p138 = por %p136, %p137
    %p139 = scmp.ne.s32.totalorder %s130, %s131
    %p140 = scmp.eq.s32.totalorder %s21, 0
    %p141 = por %p139, %p140
    %p142 = scmp.ne.s32.totalorder %s130, %s131
    %p143 = scmp.eq.s32.totalorder %s22, 1
    %p144 = por %p142, %p143
    %p146 = scmp.ne.s32.totalorder %s131, %s145
    %p147 = scmp.eq.s32.totalorder %s22, 0
    %p148 = por %p146, %p147
    %s150 = sadd.s32 %s149, 1
    %p153 = scmp.eq.s32.totalorder %s16, 1
    %p154 = scmp.ne.s32.totalorder %s149, %s151
    %p155 = scmp.eq.s32.totalorder %s16, 0
    %p156 = por %p154, %p155
    %p157 = scmp.ne.s32.totalorder %s149, %s151
    %p158 = scmp.eq.s32.totalorder %s21, 1
    %p159 = por %p157, %p158
    %p160 = scmp.ne.s32.totalorder %s151, %s152
    %p161 = scmp.eq.s32.totalorder %s21, 0
    %p162 = por %p160, %p161
    %p163 = scmp.ne.s32.totalorder %s151, %s152
    %p164 = scmp.eq.s32.totalorder %s22, 1
    %p165 = por %p163, %p164
    %p167 = scmp.ne.s32.totalorder %s152, %s166
    %p168 = scmp.eq.s32.totalorder %s22, 0
    %p169 = por %p167, %p168
    %s171 = sadd.s32 %s170, 1
    %p174 = scmp.eq.s32.totalorder %s16, 1
    %p175 = scmp.ne.s32.totalorder %s170, %s172
    %p176 = scmp.eq.s32.totalorder %s16, 0
    %p177 = por %p175, %p176
    %p178 = scmp.ne.s32.totalorder %s170, %s172
    %p179 = scmp.eq.s32.totalorder %s21, 1
    %p180 = por %p178, %p179
    %p181 = scmp.ne.s32.totalorder %s172, %s173
    %p182 = scmp.eq.s32.totalorder %s21, 0
    %p183 = por %p181, %p182
    %p184 = scmp.ne.s32.totalorder %s172, %s173
    %p185 = scmp.eq.s32.totalorder %s22, 1
    %p186 = por %p184, %p185
    %p188 = scmp.ne.s32.totalorder %s173, %s187
    %p189 = scmp.eq.s32.totalorder %s22, 0
    %p190 = por %p188, %p189
    %s192 = sadd.s32 %s191, 1
    %p195 = scmp.eq.s32.totalorder %s16, 1
    %p196 = scmp.ne.s32.totalorder %s191, %s193
    %p197 = scmp.eq.s32.totalorder %s16, 0
    %p198 = por %p196, %p197
    %p199 = scmp.ne.s32.totalorder %s191, %s193
    %p200 = scmp.eq.s32.totalorder %s21, 1
    %p201 = por %p199, %p200
    %p202 = scmp.ne.s32.totalorder %s193, %s194
    %p203 = scmp.eq.s32.totalorder %s21, 0
    %p204 = por %p202, %p203
    %p205 = scmp.ne.s32.totalorder %s193, %s194
    %p206 = scmp.eq.s32.totalorder %s22, 1
    %p207 = por %p205, %p206
    %p209 = scmp.ne.s32.totalorder %s194, %s208
    %p210 = scmp.eq.s32.totalorder %s22, 0
    %p211 = por %p209, %p210
    %s213 = sadd.s32 %s212, 1
    %p216 = scmp.eq.s32.totalorder %s16, 1
    %p217 = scmp.ne.s32.totalorder %s212, %s214
    %p218 = scmp.eq.s32.totalorder %s16, 0
    %p219 = por %p217, %p218
    %p220 = scmp.ne.s32.totalorder %s212, %s214
    %p221 = scmp.eq.s32.totalorder %s21, 1
    %p222 = por %p220, %p221
    %p223 = scmp.ne.s32.totalorder %s214, %s215
    %p224 = scmp.eq.s32.totalorder %s21, 0
    %p225 = por %p223, %p224
    %p226 = scmp.ne.s32.totalorder %s214, %s215
    %p227 = scmp.eq.s32.totalorder %s22, 1
    %p228 = por %p226, %p227
    %p230 = scmp.ne.s32.totalorder %s215, %s229
    %p231 = scmp.eq.s32.totalorder %s22, 0
    %p232 = por %p230, %p231
    %s234 = sadd.s32 %s233, 1
    %p237 = scmp.eq.s32.totalorder %s16, 1
    %p238 = scmp.ne.s32.totalorder %s233, %s235
    %p239 = scmp.eq.s32.totalorder %s16, 0
    %p240 = por %p238, %p239
    %p241 = scmp.ne.s32.totalorder %s233, %s235
    %p242 = scmp.eq.s32.totalorder %s21, 1
    %p243 = por %p241, %p242
    %p244 = scmp.ne.s32.totalorder %s235, %s236
    %p245 = scmp.eq.s32.totalorder %s21, 0
    %p246 = por %p244, %p245
    %p247 = scmp.ne.s32.totalorder %s235, %s236
    %p248 = scmp.eq.s32.totalorder %s22, 1
    %p249 = por %p247, %p248
    %p251 = scmp.ne.s32.totalorder %s236, %s250
    %p252 = scmp.eq.s32.totalorder %s22, 0
    %p253 = por %p251, %p252
    %s254 = ssub.s32 %s16, %s23
    %p255 = scmp.eq.s32.totalorder %s254, 0
    %s257 = sadd.s32 %s256, 1
    %s258 = scalar_select %p255, %s256, %s257
    %p261 = pneg %p255
    %p262 = scmp.eq.s32.totalorder %s16, 1
    %p263 = por %p261, %p262
    %p264 = scmp.ne.s32.totalorder %s256, %s259
    %p265 = scmp.eq.s32.totalorder %s16, 0
    %p266 = por %p264, %p265
    %p267 = scmp.ne.s32.totalorder %s256, %s259
    %p268 = scmp.eq.s32.totalorder %s21, 1
    %p269 = por %p267, %p268
    %p270 = scmp.ne.s32.totalorder %s259, %s260
    %p271 = scmp.eq.s32.totalorder %s21, 0
    %p272 = por %p270, %p271
    %p273 = scmp.ne.s32.totalorder %s259, %s260
    %p274 = scmp.eq.s32.totalorder %s22, 1
    %p275 = por %p273, %p274
    %p277 = scmp.ne.s32.totalorder %s260, %s276
    %p278 = scmp.eq.s32.totalorder %s22, 0
    %p279 = por %p277, %p278
    %p280 = scmp.le.s32.totalorder 1, %s16
    %p281 = scmp.lt.s32.totalorder %s16, 3
    %p282 = pnand %p280, %p281
    %p283 = pneg %p282
    // Predicated region
    $region9: #{parallel_block_cat_forward.11} parent=5 // pred_check
      _
    $region10: #{parallel_block_cat_forward.11} parent=5 // pred_check_branch
      %285 = sbr.rel (%p282) target = $region12
    $region11: #{parallel_block_cat_forward.11} parent=5 // pred_region
      %s286 = ssub.s32 %s16, 1
      // Predicated region
      $region13: #{parallel_block_cat_forward.11} parent=11 // pred_check
        %p287 = pneg %p141
      $region14: #{parallel_block_cat_forward.11} parent=11 // pred_check_branch
        %289 = sbr.rel (%p287) target = $region16
      $region15: #{parallel_block_cat_forward.11} parent=11 // pred_region
        _
      $region16: #{parallel_block_cat_forward.11} parent=11 // pred_fallthru
        _
      // Predicated region
      $region17: #{parallel_block_cat_forward.11} parent=11 // pred_check
        %p290 = pneg %p162
      $region18: #{parallel_block_cat_forward.11} parent=11 // pred_check_branch
        %292 = sbr.rel (%p290) target = $region20
      $region19: #{parallel_block_cat_forward.11} parent=11 // pred_region
        _
      $region20: #{parallel_block_cat_forward.11} parent=11 // pred_fallthru
        _
      // Predicated region
      $region21: #{parallel_block_cat_forward.11} parent=11 // pred_check
        %p293 = pneg %p183
      $region22: #{parallel_block_cat_forward.11} parent=11 // pred_check_branch
        %295 = sbr.rel (%p293) target = $region24
      $region23: #{parallel_block_cat_forward.11} parent=11 // pred_region
        _
      $region24: #{parallel_block_cat_forward.11} parent=11 // pred_fallthru
        _
      // Predicated region
      $region25: #{parallel_block_cat_forward.11} parent=11 // pred_check
        %p296 = pneg %p204
      $region26: #{parallel_block_cat_forward.11} parent=11 // pred_check_branch
        %298 = sbr.rel (%p296) target = $region28
      $region27: #{parallel_block_cat_forward.11} parent=11 // pred_region
        _
      $region28: #{parallel_block_cat_forward.11} parent=11 // pred_fallthru
        _
      // Predicated region
      $region29: #{parallel_block_cat_forward.11} parent=11 // pred_check
        %p299 = pneg %p225
      $region30: #{parallel_block_cat_forward.11} parent=11 // pred_check_branch
        %301 = sbr.rel (%p299) target = $region32
      $region31: #{parallel_block_cat_forward.11} parent=11 // pred_region
        _
      $region32: #{parallel_block_cat_forward.11} parent=11 // pred_fallthru
        _
      // Predicated region
      $region33: #{parallel_block_cat_forward.11} parent=11 // pred_check
        %p302 = pneg %p246
      $region34: #{parallel_block_cat_forward.11} parent=11 // pred_check_branch
        %304 = sbr.rel (%p302) target = $region36
      $region35: #{parallel_block_cat_forward.11} parent=11 // pred_region
        _
      $region36: #{parallel_block_cat_forward.11} parent=11 // pred_fallthru
        _
    $region12: #{parallel_block_cat_forward.11} parent=5 // pred_fallthru
      _
    %p305 = scmp.lt.s32.totalorder %s16, 2
    // Predicated region
    $region37: #{parallel_block_cat_forward.11} parent=5 // pred_check
      %p306 = pneg %p305
    $region38: #{parallel_block_cat_forward.11} parent=5 // pred_check_branch
      %308 = sbr.rel (%p306) target = $region40
    $region39: #{parallel_block_cat_forward.11} parent=5 // pred_region
      // Predicated region
      $region41: #{parallel_block_cat_forward.11} parent=39 // pred_check
        %p309 = pneg %p36
      $region42: #{parallel_block_cat_forward.11} parent=39 // pred_check_branch
        %311 = sbr.rel (%p309) target = $region44
      $region43: #{parallel_block_cat_forward.11} parent=39 // pred_region
        %s312 = smul.u32 2, %s16
        %p313 = scmp.lt.s32.totalorder %s312, 3
        %s314 = scalar_select %p313, %s312, 3
        %s315 = scalar_lea.vmem %s0, %s314
        %s316 = smul.u32 2, %s16
      $region44: #{parallel_block_cat_forward.11} parent=39 // pred_fallthru
        _
      // Predicated region
      $region45: #{parallel_block_cat_forward.11} parent=39 // pred_check
        %p317 = pneg %p62
      $region46: #{parallel_block_cat_forward.11} parent=39 // pred_check_branch
        %319 = sbr.rel (%p317) target = $region48
      $region47: #{parallel_block_cat_forward.11} parent=39 // pred_region
        %s320 = smul.u32 2, %s16
        %p321 = scmp.lt.s32.totalorder %s320, 3
        %s322 = scalar_select %p321, %s320, 3
        %s323 = scalar_lea.vmem %s1, %s322
        %s324 = smul.u32 2, %s16
      $region48: #{parallel_block_cat_forward.11} parent=39 // pred_fallthru
        _
      // Predicated region
      $region49: #{parallel_block_cat_forward.11} parent=39 // pred_check
        %p325 = pneg %p88
      $region50: #{parallel_block_cat_forward.11} parent=39 // pred_check_branch
        %327 = sbr.rel (%p325) target = $region52
      $region51: #{parallel_block_cat_forward.11} parent=39 // pred_region
        %s328 = smul.u32 2, %s16
        %p329 = scmp.lt.s32.totalorder %s328, 3
        %s330 = scalar_select %p329, %s328, 3
        %s331 = scalar_lea.vmem %s2, %s330
        %s332 = smul.u32 2, %s16
      $region52: #{parallel_block_cat_forward.11} parent=39 // pred_fallthru
        _
      // Predicated region
      $region53: #{parallel_block_cat_forward.11} parent=39 // pred_check
        %p333 = pneg %p114
      $region54: #{parallel_block_cat_forward.11} parent=39 // pred_check_branch
        %335 = sbr.rel (%p333) target = $region56
      $region55: #{parallel_block_cat_forward.11} parent=39 // pred_region
        %s336 = smul.u32 2, %s16
        %p337 = scmp.lt.s32.totalorder %s336, 3
        %s338 = scalar_select %p337, %s336, 3
        %s339 = smul.addr %s338, 2
        %s340 = scalar_lea.vmem %s3, %s339
        %s341 = smul.u32 2, %s16
      $region56: #{parallel_block_cat_forward.11} parent=39 // pred_fallthru
        _
    $region40: #{parallel_block_cat_forward.11} parent=5 // pred_fallthru
      _
    %p342 = scmp.le.s32.totalorder 1, %s16
    %p343 = scmp.lt.s32.totalorder %s16, 3
    %p344 = pnand %p342, %p343
    %p345 = pneg %p344
    // Predicated region
    $region57: #{parallel_block_cat_forward.11} parent=5 // pred_check
      _
    $region58: #{parallel_block_cat_forward.11} parent=5 // pred_check_branch
      %347 = sbr.rel (%p344) target = $region60
    $region59: #{parallel_block_cat_forward.11} parent=5 // pred_region
      %s348 = ssub.s32 %s16, 1
      %s349 = smul.u32 2, %s21
      %p350 = scmp.lt.s32.totalorder %s349, 3
      %s351 = scalar_select %p350, %s349, 3
      %s352 = scalar_lea.vmem %s0, %s351
      %p353 = pneg %p42
      %p354 = pneg %p39
      %s355 = smul.u32 2, %s21
      %p356 = scmp.lt.s32.totalorder %s355, 3
      %s357 = scalar_select %p356, %s355, 3
      %s358 = scalar_lea.vmem %s1, %s357
      %p359 = pneg %p68
      %p360 = pneg %p65
      %s361 = smul.u32 2, %s21
      %p362 = scmp.lt.s32.totalorder %s361, 3
      %s363 = scalar_select %p362, %s361, 3
      %s364 = scalar_lea.vmem %s2, %s363
      %p365 = pneg %p94
      %p366 = pneg %p91
      %s367 = smul.u32 2, %s21
      %p368 = scmp.lt.s32.totalorder %s367, 3
      %s369 = scalar_select %p368, %s367, 3
      %s370 = smul.addr %s369, 2
      %s371 = scalar_lea.vmem %s3, %s370
      %p372 = pneg %p120
      %p373 = pneg %p117
      %p374 = pneg %p141
      %p375 = pneg %p138
      %p376 = pneg %p162
      %p377 = pneg %p159
      %p378 = pneg %p183
      %p379 = pneg %p180
      %p380 = pneg %p204
      %p381 = pneg %p201
      %p382 = pneg %p225
      %p383 = pneg %p222
      %p384 = pneg %p246
      %p385 = pneg %p243
      %p386 = pneg %p272
      %p387 = pneg %p269
      %s388 = smul.u32 2, %s21
      %p389 = scmp.lt.s32.totalorder %s388, 3
      %s390 = scalar_select %p389, %s388, 3
      %s391 = smul.addr %s390, 2
      %s392 = scalar_lea.vmem %s10, %s391
      %s393 = smul.u32 2, %s21
      %p394 = scmp.lt.s32.totalorder %s393, 3
      %s395 = scalar_select %p394, %s393, 3
      %s396 = scalar_lea.vmem %s0, %s395
      %s397 = smul.u32 2, %s21
      %s398 = smul.u32 2, %s21
      %p399 = scmp.lt.s32.totalorder %s398, 3
      %s400 = scalar_select %p399, %s398, 3
      %s401 = scalar_lea.vmem %s1, %s400
      %s402 = smul.u32 2, %s21
      %s403 = smul.u32 2, %s21
      %p404 = scmp.lt.s32.totalorder %s403, 3
      %s405 = scalar_select %p404, %s403, 3
      %s406 = scalar_lea.vmem %s2, %s405
      %s407 = smul.u32 2, %s21
      %s408 = smul.u32 2, %s21
      %p409 = scmp.lt.s32.totalorder %s408, 3
      %s410 = scalar_select %p409, %s408, 3
      %s411 = smul.addr %s410, 2
      %s412 = scalar_lea.vmem %s3, %s411
      %s413 = smul.u32 2, %s21
      %s414 = smul.u32 2, %s21
      %p415 = scmp.lt.s32.totalorder %s414, 3
      %s416 = scalar_select %p415, %s414, 3
      %s417 = smul.addr %s416, 2
      %s418 = scalar_lea.vmem %s10, %s417
      %s419 = smul.u32 2, %s21
      %v421 = vld [vmem:[%s396] sm:$0x1]
      %v422 = vld [vmem:[%s396 + $0x1] sm:$0x1]
      %v423 = vld [vmem:[%s401] sm:$0x1]
      %v424 = vld [vmem:[%s401 + $0x1] sm:$0x1]
      %v425 = vld [vmem:[%s406] sm:$0x1]
      %v426 = vld [vmem:[%s406 + $0x1] sm:$0x1]
      %v427 = vld [vmem:[%s4] sm:$0xf]
      %v428 = vld [vmem:[%s4 + $0x4] sm:$0xf]
      %v429 = vld [vmem:[%s4 + $0x8] sm:$0xf]
      %v430 = vld [vmem:[%s4 + $0xc] sm:$0xf]
      %v431 = vld [vmem:[%s4 + $0x10] sm:$0xf]
      %v432 = vld [vmem:[%s4 + $0x14] sm:$0xf]
      %v433 = vld [vmem:[%s4 + $0x18] sm:$0xf]
      %v434 = vld [vmem:[%s4 + $0x1c] sm:$0xf]
      %v435 = vld [vmem:[%s5] sm:$0xf]
      %v436 = vld [vmem:[%s5 + $0x4] sm:$0xf]
      %v437 = vld [vmem:[%s5 + $0x8] sm:$0xf]
      %v438 = vld [vmem:[%s5 + $0xc] sm:$0xf]
      %v441 = vcombine.low %v423, %v424
      %v443 = vunpack.c.l.s4 1966171168
      %v444 = vunpack.c.0.s8 %v443
      %v445 = vlaneseq
      %v446 = vshrl.u32 %v445, 7
      %v447 = vsub.s32 %v444, %v446
      %v448 = vrot.slane %v441, %v447
      %v450 = vunpack.c.l.s4 1966171168
      %v451 = vunpack.c.0.s8 %v450
      %v452 = vlaneseq
      %v453 = vshrl.u32 %v452, 7
      %v454 = vsub.s32 %v451, %v453
      %v455 = vrot.slane %v448, %v454
      %v460 = vunpack.c.l.b16 %v435
      %v461 = vunpack.c.l.b16 %v436
      %v462 = vunpack.c.l.b16 %v437
      %v463 = vunpack.c.l.b16 %v438
      %v464 = vpack.c.b16 %v461, %v460
      %v465 = vpack.c.b16 %v463, %v462
      %vm468 = vcmask 261120
      %v470 = vsel %vm468, %v455, 0
      %472 = vmatprep.subr.bf16.mxu0 0
      %473 = vmatpush1.bf16.msra.mxu0 %v464
      %474 = vmatprep.subr.bf16.mxu0 0
      %475 = vmatpush1.bf16.msra.mxu0 %v465
      %476 = vmatprep.subr.bf16.mxu0 0
      %477 = vmatpush1.bf16.msra.mxu0 0
      %478 = vmatprep.subr.bf16.mxu0 0
      %479 = vmatpush1.bf16.msra.mxu0 0
      %480 = vmatprep.subr.bf16.mxu0 0
      %481 = vmatpush1.bf16.msra.mxu0 0
      %482 = vmatprep.subr.bf16.mxu0 0
      %483 = vmatpush1.bf16.msra.mxu0 0
      %484 = vmatprep.subr.bf16.mxu0 0
      %485 = vmatpush1.bf16.msra.mxu0 0
      %486 = vmatprep.subr.bf16.mxu0 0
      %487 = vmatpush1.bf16.msra.mxu0 0
      %488 = vmatprep.subr.bf16.mxu0 0
      %489 = vmatpush1.bf16.msra.mxu0 0
      %490 = vmatprep.subr.bf16.mxu0 0
      %491 = vmatpush1.bf16.msra.mxu0 0
      %492 = vmatprep.subr.bf16.mxu0 0
      %493 = vmatpush1.bf16.msra.mxu0 0
      %494 = vmatprep.subr.bf16.mxu0 0
      %495 = vmatpush1.bf16.msra.mxu0 0
      %496 = vmatprep.subr.bf16.mxu0 0
      %497 = vmatpush1.bf16.msra.mxu0 0
      %498 = vmatprep.subr.bf16.mxu0 0
      %499 = vmatpush1.bf16.msra.mxu0 0
      %500 = vmatprep.subr.bf16.mxu0 0
      %501 = vmatpush1.bf16.msra.mxu0 0
      %502 = vmatprep.subr.bf16.mxu0 0
      %503 = vmatpush1.bf16.msra.mxu0 0
      %504 = vmatprep.mubr.bf16.mxu0 0
      %505 = vmatmul.mubr.bf16.gmra.mrb[0].mxu0 %v470
      %v506 = vpop.f32.mrb[0].mxu0
      %v507 = vadd.f32 0.0, %v506
      %v508 = vpop.f32.mrb[0].mxu0
      %v509 = vpop.f32.mrb[0].mxu0
      %v510 = vpop.f32.mrb[0].mxu0
      %511 = vdwg.mxu0
      %v514 = vcombine.low %v421, %v422
      %v516 = vunpack.c.l.s4 1966171168
      %v517 = vunpack.c.0.s8 %v516
      %v518 = vlaneseq
      %v519 = vshrl.u32 %v518, 7
      %v520 = vsub.s32 %v517, %v519
      %v521 = vrot.slane %v514, %v520
      %v523 = vunpack.c.l.s4 1966171168
      %v524 = vunpack.c.0.s8 %v523
      %v525 = vlaneseq
      %v526 = vshrl.u32 %v525, 7
      %v527 = vsub.s32 %v524, %v526
      %v528 = vrot.slane %v521, %v527
      %v537 = vunpack.c.l.b16 %v427
      %v538 = vunpack.c.l.b16 %v428
      %v539 = vunpack.c.l.b16 %v429
      %v540 = vunpack.c.l.b16 %v430
      %v541 = vunpack.c.l.b16 %v431
      %v542 = vunpack.c.l.b16 %v432
      %v543 = vunpack.c.l.b16 %v433
      %v544 = vunpack.c.l.b16 %v434
      %v545 = vpack.c.b16 %v538, %v537
      %v546 = vpack.c.b16 %v540, %v539
      %v547 = vpack.c.b16 %v542, %v541
      %v548 = vpack.c.b16 %v544, %v543
      %vm553 = vcmask 523264
      %v555 = vsel %vm553, %v528, 0
      %557 = vmatprep.subr.bf16.mxu0 0
      %558 = vmatpush1.bf16.msra.mxu0 %v545
      %559 = vmatprep.subr.bf16.mxu0 0
      %560 = vmatpush1.bf16.msra.mxu0 %v546
      %561 = vmatprep.subr.bf16.mxu0 0
      %562 = vmatpush1.bf16.msra.mxu0 %v547
      %563 = vmatprep.subr.bf16.mxu0 0
      %564 = vmatpush1.bf16.msra.mxu0 %v548
      %565 = vmatprep.subr.bf16.mxu0 0
      %566 = vmatpush1.bf16.msra.mxu0 0
      %567 = vmatprep.subr.bf16.mxu0 0
      %568 = vmatpush1.bf16.msra.mxu0 0
      %569 = vmatprep.subr.bf16.mxu0 0
      %570 = vmatpush1.bf16.msra.mxu0 0
      %571 = vmatprep.subr.bf16.mxu0 0
      %572 = vmatpush1.bf16.msra.mxu0 0
      %573 = vmatprep.subr.bf16.mxu0 0
      %574 = vmatpush1.bf16.msra.mxu0 0
      %575 = vmatprep.subr.bf16.mxu0 0
      %576 = vmatpush1.bf16.msra.mxu0 0
      %577 = vmatprep.subr.bf16.mxu0 0
      %578 = vmatpush1.bf16.msra.mxu0 0
      %579 = vmatprep.subr.bf16.mxu0 0
      %580 = vmatpush1.bf16.msra.mxu0 0
      %581 = vmatprep.subr.bf16.mxu0 0
      %582 = vmatpush1.bf16.msra.mxu0 0
      %583 = vmatprep.subr.bf16.mxu0 0
      %584 = vmatpush1.bf16.msra.mxu0 0
      %585 = vmatprep.subr.bf16.mxu0 0
      %586 = vmatpush1.bf16.msra.mxu0 0
      %587 = vmatprep.subr.bf16.mxu0 0
      %588 = vmatpush1.bf16.msra.mxu0 0
      %589 = vmatprep.mubr.bf16.mxu0 0
      %590 = vmatmul.mubr.bf16.gmra.mrb[0].mxu0 %v555
      %v591 = vpop.f32.mrb[0].mxu0
      %v592 = vadd.f32 %v507, %v591
      %v593 = vpop.f32.mrb[0].mxu0
      %v594 = vpop.f32.mrb[0].mxu0
      %v595 = vpop.f32.mrb[0].mxu0
      %596 = vdwg.mxu0
      %v597 = vld [vmem:[%s6] sm:$0xf]
      %v598 = vld [vmem:[%s6 + $0x4] sm:$0xf]
      %v601 = vcombine.low %v425, %v426
      %v603 = vunpack.c.l.s4 1966171168
      %v604 = vunpack.c.0.s8 %v603
      %v605 = vlaneseq
      %v606 = vshrl.u32 %v605, 7
      %v607 = vsub.s32 %v604, %v606
      %v608 = vrot.slane %v601, %v607
      %v610 = vunpack.c.l.s4 1966171168
      %v611 = vunpack.c.0.s8 %v610
      %v612 = vlaneseq
      %v613 = vshrl.u32 %v612, 7
      %v614 = vsub.s32 %v611, %v613
      %v615 = vrot.slane %v608, %v614
      %v618 = vunpack.c.l.b16 %v597
      %v619 = vunpack.c.l.b16 %v598
      %v620 = vpack.c.b16 %v619, %v618
      %vm622 = vcmask 130048
      %v624 = vsel %vm622, %v615, 0
      %626 = vmatprep.subr.bf16.mxu0 0
      %627 = vmatpush1.bf16.msra.mxu0 %v620
      %628 = vmatprep.subr.bf16.mxu0 0
      %629 = vmatpush1.bf16.msra.mxu0 0
      %630 = vmatprep.subr.bf16.mxu0 0
      %631 = vmatpush1.bf16.msra.mxu0 0
      %632 = vmatprep.subr.bf16.mxu0 0
      %633 = vmatpush1.bf16.msra.mxu0 0
      %634 = vmatprep.subr.bf16.mxu0 0
      %635 = vmatpush1.bf16.msra.mxu0 0
      %636 = vmatprep.subr.bf16.mxu0 0
      %637 = vmatpush1.bf16.msra.mxu0 0
      %638 = vmatprep.subr.bf16.mxu0 0
      %639 = vmatpush1.bf16.msra.mxu0 0
      %640 = vmatprep.subr.bf16.mxu0 0
      %641 = vmatpush1.bf16.msra.mxu0 0
      %642 = vmatprep.subr.bf16.mxu0 0
      %643 = vmatpush1.bf16.msra.mxu0 0
      %644 = vmatprep.subr.bf16.mxu0 0
      %645 = vmatpush1.bf16.msra.mxu0 0
      %646 = vmatprep.subr.bf16.mxu0 0
      %647 = vmatpush1.bf16.msra.mxu0 0
      %648 = vmatprep.subr.bf16.mxu0 0
      %649 = vmatpush1.bf16.msra.mxu0 0
      %650 = vmatprep.subr.bf16.mxu0 0
      %651 = vmatpush1.bf16.msra.mxu0 0
      %652 = vmatprep.subr.bf16.mxu0 0
      %653 = vmatpush1.bf16.msra.mxu0 0
      %654 = vmatprep.subr.bf16.mxu0 0
      %655 = vmatpush1.bf16.msra.mxu0 0
      %656 = vmatprep.subr.bf16.mxu0 0
      %657 = vmatpush1.bf16.msra.mxu0 0
      %658 = vmatprep.mubr.bf16.mxu0 0
      %659 = vmatmul.mubr.bf16.gmra.mrb[0].mxu0 %v624
      %v660 = vpop.f32.mrb[0].mxu0
      %v661 = vadd.f32 0.0, %v660
      %v662 = vpop.f32.mrb[0].mxu0
      %v663 = vpop.f32.mrb[0].mxu0
      %v664 = vpop.f32.mrb[0].mxu0
      %665 = vdwg.mxu0
      %v666 = vadd.f32 %v592, %v661
      %v667 = vld [vmem:[%s7] sm:$0x1]
      %v669 = vlaneseq
      %v670 = vshrl.u32 %v669, 7
      %v671 = vsub.s32 0, %v670
      %v672 = vrot.slane %v667, %v671
      %v674 = vadd.f32 %v666, %v672
      %v675 = vmul.f32 %v674, 0.5
      %v676 = vmul.f32 %v674, 0.70710677
      %v677 = verf.f32.pop %v676
      %v678 = vadd.f32 %v677, 1.0
      %v679 = vmul.f32 %v675, %v678
      %v680 = vpack.c.bf16 %v679, %v679
      %v681 = vld [vmem:[%s8] sm:$0xf]
      %v682 = vld [vmem:[%s8 + $0x4] sm:$0xf]
      %v683 = vld [vmem:[%s8 + $0x8] sm:$0xf]
      %v684 = vld [vmem:[%s8 + $0xc] sm:$0xf]
      %v685 = vld [vmem:[%s8 + $0x10] sm:$0xf]
      %v686 = vld [vmem:[%s8 + $0x14] sm:$0xf]
      %v687 = vld [vmem:[%s8 + $0x18] sm:$0xf]
      %v688 = vld [vmem:[%s8 + $0x1c] sm:$0xf]
      %v689 = vld [vmem:[%s8 + $0x20] sm:$0xf]
      %v690 = vld [vmem:[%s8 + $0x24] sm:$0xf]
      %v691 = vld [vmem:[%s8 + $0x28] sm:$0xf]
      %v692 = vld [vmem:[%s8 + $0x2c] sm:$0xf]
      %v693 = vld [vmem:[%s8 + $0x30] sm:$0xf]
      %v694 = vld [vmem:[%s8 + $0x34] sm:$0xf]
      %v695 = vld [vmem:[%s8 + $0x38] sm:$0xf]
      %v696 = vld [vmem:[%s8 + $0x3c] sm:$0xf]
      %v697 = vld [vmem:[%s9] sm:$0x1]
      %v699 = vlaneseq
      %v700 = vshrl.u32 %v699, 7
      %v701 = vsub.s32 0, %v700
      %v702 = vrot.slane %v697, %v701
      %v720 = vunpack.c.l.b16 %v681
      %v721 = vunpack.c.l.b16 %v682
      %v722 = vunpack.c.l.b16 %v683
      %v723 = vunpack.c.l.b16 %v684
      %v724 = vunpack.c.l.b16 %v685
      %v725 = vunpack.c.l.b16 %v686
      %v726 = vunpack.c.l.b16 %v687
      %v727 = vunpack.c.l.b16 %v688
      %v728 = vunpack.c.l.b16 %v689
      %v729 = vunpack.c.l.b16 %v690
      %v730 = vunpack.c.l.b16 %v691
      %v731 = vunpack.c.l.b16 %v692
      %v732 = vunpack.c.l.b16 %v693
      %v733 = vunpack.c.l.b16 %v694
      %v734 = vunpack.c.l.b16 %v695
      %v735 = vunpack.c.l.b16 %v696
      %v736 = vpack.c.b16 %v721, %v720
      %v737 = vpack.c.b16 %v723, %v722
      %v738 = vpack.c.b16 %v725, %v724
      %v739 = vpack.c.b16 %v727, %v726
      %v740 = vpack.c.b16 %v729, %v728
      %v741 = vpack.c.b16 %v731, %v730
      %v742 = vpack.c.b16 %v733, %v732
      %v743 = vpack.c.b16 %v735, %v734
      %752 = vmatprep.subr.bf16.mxu0 0
      %753 = vmatpush1.bf16.msra.mxu0 %v736
      %754 = vmatprep.subr.bf16.mxu0 0
      %755 = vmatpush1.bf16.msra.mxu0 %v737
      %756 = vmatprep.subr.bf16.mxu0 0
      %757 = vmatpush1.bf16.msra.mxu0 %v738
      %758 = vmatprep.subr.bf16.mxu0 0
      %759 = vmatpush1.bf16.msra.mxu0 %v739
      %760 = vmatprep.subr.bf16.mxu0 0
      %761 = vmatpush1.bf16.msra.mxu0 %v740
      %762 = vmatprep.subr.bf16.mxu0 0
      %763 = vmatpush1.bf16.msra.mxu0 %v741
      %764 = vmatprep.subr.bf16.mxu0 0
      %765 = vmatpush1.bf16.msra.mxu0 %v742
      %766 = vmatprep.subr.bf16.mxu0 0
      %767 = vmatpush1.bf16.msra.mxu0 %v743
      %768 = vmatprep.subr.bf16.mxu0 0
      %769 = vmatpush1.bf16.msra.mxu0 0
      %770 = vmatprep.subr.bf16.mxu0 0
      %771 = vmatpush1.bf16.msra.mxu0 0
      %772 = vmatprep.subr.bf16.mxu0 0
      %773 = vmatpush1.bf16.msra.mxu0 0
      %774 = vmatprep.subr.bf16.mxu0 0
      %775 = vmatpush1.bf16.msra.mxu0 0
      %776 = vmatprep.subr.bf16.mxu0 0
      %777 = vmatpush1.bf16.msra.mxu0 0
      %778 = vmatprep.subr.bf16.mxu0 0
      %779 = vmatpush1.bf16.msra.mxu0 0
      %780 = vmatprep.subr.bf16.mxu0 0
      %781 = vmatpush1.bf16.msra.mxu0 0
      %782 = vmatprep.subr.bf16.mxu0 0
      %783 = vmatpush1.bf16.msra.mxu0 0
      %784 = vmatprep.mubr.bf16.mxu0 0
      %785 = vmatmul.mubr.bf16.gmra.mrb[0].mxu0 %v680
      %v786 = vpop.f32.mrb[0].mxu0
      %v787 = vadd.f32 %v702, %v786
      %v788 = vpop.f32.mrb[0].mxu0
      %v789 = vpop.f32.mrb[0].mxu0
      %v790 = vpop.f32.mrb[0].mxu0
      %791 = vdwg.mxu0
      %v792 = vld [vmem:[%s412] sm:$0x3]
      %v793 = vld [vmem:[%s412 + $0x2] sm:$0x3]
      %v796 = vunpack.c.l.s4 1983009808
      %v797 = vunpack.c.0.s8 %v796
      %v798 = vlaneseq
      %v799 = vshrl.u32 %v798, 7
      %v800 = vsub.s32 %v797, %v799
      %v801 = vrot.slane %v787, %v800
      %v802 = vcombine.high %v801, %v801
      %v805 = vadd.f32 %v792, %v801
      %v806 = vadd.f32 %v793, %v802
      %vm807 = vcmask 517120
      %808 = vst.msk [vmem:[%s418] sm:$0x3] %vm807, %v805
      %809 = vst.msk [vmem:[%s418 + $0x2] sm:$0x3] %vm807, %v806
      %s810 = smul.u32 2, %s21
      %p811 = scmp.lt.s32.totalorder %s810, 3
      %s812 = scalar_select %p811, %s810, 3
      %s813 = smul.addr %s812, 2
      %s814 = scalar_lea.vmem %s10, %s813
      // Predicated region
      $region61: #{parallel_block_cat_forward.11} parent=59 // pred_check
        %p815 = pneg %p269
      $region62: #{parallel_block_cat_forward.11} parent=59 // pred_check_branch
        %817 = sbr.rel (%p815) target = $region64
      $region63: #{parallel_block_cat_forward.11} parent=59 // pred_region
        %s818 = smul.u32 2, %s21
      $region64: #{parallel_block_cat_forward.11} parent=59 // pred_fallthru
        _
    $region60: #{parallel_block_cat_forward.11} parent=5 // pred_fallthru
      _
    %p819 = scmp.le.s32.totalorder 2, %s16
    // Predicated region
    $region65: #{parallel_block_cat_forward.11} parent=5 // pred_check
      %p820 = pneg %p819
    $region66: #{parallel_block_cat_forward.11} parent=5 // pred_check_branch
      %822 = sbr.rel (%p820) target = $region68
    $region67: #{parallel_block_cat_forward.11} parent=5 // pred_region
      %s823 = ssub.s32 %s16, 2
      // Predicated region
      $region69: #{parallel_block_cat_forward.11} parent=67 // pred_check
        %p824 = pneg %p275
      $region70: #{parallel_block_cat_forward.11} parent=67 // pred_check_branch
        %826 = sbr.rel (%p824) target = $region72
      $region71: #{parallel_block_cat_forward.11} parent=67 // pred_region
        %s827 = smul.u32 2, %s22
        %p828 = scmp.lt.s32.totalorder %s827, 3
        %s829 = scalar_select %p828, %s827, 3
        %s830 = smul.addr %s829, 2
        %s831 = scalar_lea.vmem %s10, %s830
      $region72: #{parallel_block_cat_forward.11} parent=67 // pred_fallthru
        _
    $region68: #{parallel_block_cat_forward.11} parent=5 // pred_fallthru
      _
  $region6: #{parallel_block_cat_forward.11} parent=0 // loop_footer
    %s20 = sadd.s32 1, %s16
  $region7: #{parallel_block_cat_forward.11} parent=0 // loop_footer_branch
    %15 = sbr.rel target = $region3
  $region8: #{parallel_block_cat_forward.11} parent=0 // loop_exit
    _

</llo_original>
